<compile_context>
chip_gen: v7x
topology: tpu7x:2x2x1
jax: 0.10.0
libtpu: 0.0.40
codegen_flags: <defaults>
</compile_context>

<pallas_src>
import jax
import jax.numpy as jnp
from jax import lax
from jax.experimental import pallas as pl
from jax.experimental.pallas import tpu as pltpu


def _predict_head_core_kernel(feat_ref, enc_ref, ps_ref,
                              w2_ref, b2_ref, w3_ref, b3_ref,
                              wf_ref, wa_ref,
                              x_ref, ax_ref, az0_ref):
    """Fused per-batch-element core of predict_head.

    feat_ref : (1, C, N)  `features`        (N = H*W, lane axis)
    enc_ref  : (1, C, N)  `encoder_feature`
    ps_ref   : (1, P, 1)  proj_subject(subject_embedding) + bs + bf (precomputed)
    w2_ref   : (A, C)     sal_layer_2 1x1-conv weight       b2_ref: (A, 1) bias
    w3_ref   : (A, C)     sal_layer_3 1x1-conv weight       b3_ref: (A, 1) bias
    wf_ref   : (P, C)     proj_feature weight pre-scaled by 1/N (spatial mean folded in)
    wa_ref   : (P, 1)     attention weight column (`ba` dropped: softmax-invariant)
    x_ref    : (1, A, N)  out: relu(sal_layer_3(features))   -> all_subject_action_map
    ax_ref   : (1, 1, N)  out: attn-weighted sum of x        -> action_map / aggr_z[1:]
    az0_ref  : (1, 1, 1)  out: attn-weighted sum of global_avg(sal_layer_2(features)) -> aggr_z[0]
    """
    feat = feat_ref[0]                                                  # (C, N)
    enc = enc_ref[0]                                                    # (C, N)

    # sal_layer_3: 1x1 conv == channel matmul (MXU M=A, K=C, N=HW), + ReLU.
    x = jnp.maximum(
        jnp.dot(w3_ref[...], feat, preferred_element_type=jnp.float32) + b3_ref[...],
        0.0)                                                            # (A, N)
    x_ref[0] = x

    # sal_layer_2 (no ReLU).  The global average pool is applied after the
    # attention weighting below (the mean and the weighted sum over A commute).
    y = jnp.dot(w2_ref[...], feat, preferred_element_type=jnp.float32) + b2_ref[...]  # (A, N)

    # attention_module:
    #   aggr_feature[a, c] = mean_n(enc[c, n] * x[a, n]), kept transposed as (C, A).
    #   Contracting the shared lane axis keeps enc in natural MXU orientation;
    #   only the small (A, N) operand is transposed internally.
    g = lax.dot_general(enc, x, dimension_numbers=(((1,), (1,)), ((), ())),
                        preferred_element_type=jnp.float32)             # (C, A)
    # proj_feature (1/N folded into wf) + proj_subject (+ both biases) -> tanh.
    t = jnp.tanh(jnp.dot(wf_ref[...], g, preferred_element_type=jnp.float32)
                 + ps_ref[0])                                           # (P, A)
    # attention Linear(P -> 1): VPU multiply + sublane reduce (no lane-sparse matmul).
    scores = jnp.sum(t * wa_ref[...], axis=0, keepdims=True)            # (1, A)
    # softmax over the A action maps (lane axis; `ba` dropped exactly).
    m = jnp.max(scores, axis=1, keepdims=True)
    e = jnp.exp(scores - m)
    attn = e * pl.reciprocal(jnp.sum(e, axis=1, keepdims=True), approx=False)   # (1, A)

    # attention-weighted aggregations (M=1 matmuls; lane axis stays N).
    ax_ref[0] = jnp.dot(attn, x, preferred_element_type=jnp.float32)    # (1, N)
    ay = jnp.dot(attn, y, preferred_element_type=jnp.float32)           # (1, N)
    az0_ref[0] = jnp.mean(ay, axis=1, keepdims=True)                    # (1, 1)


def predict_head_forward(encoder_feature, features, subject_embedding, params,
                         *, training=False):
    """JAX/Pallas forward of predict_head.

    encoder_feature, features : (B, C, H, W) float32 (NCHW, C=512, H=30, W=40)
    subject_embedding         : (B, embedding_dim) float32
    Returns the same dict of predictions as the PyTorch module.
    """
    B, C, H, W = features.shape
    N = H * W
    A = params["w_sal2"].shape[0]
    P = params["wf"].shape[0]

    # Free (contiguous) reshapes -- no HBM transposes.
    feats = features.reshape(B, C, N)
    enc = encoder_feature.reshape(B, C, N)

    # Subject projection + both Linear biases, once for the whole batch.
    ps = (subject_embedding @ params["ws"].T + params["bs"] + params["bf"]).reshape(B, P, 1)
    wf_scaled = params["wf"] * (1.0 / N)      # fold the spatial mean of aggr_feature into Wf
    wa_col = params["wa"].reshape(P, 1)       # `ba` never enters the kernel (softmax no-op)
    b2_col = params["b_sal2"].reshape(A, 1)
    b3_col = params["b_sal3"].reshape(A, 1)

    x_flat, aggr_x, aggr_z0 = pl.pallas_call(
        _predict_head_core_kernel,
        out_shape=(jax.ShapeDtypeStruct((B, A, N), jnp.float32),
                   jax.ShapeDtypeStruct((B, 1, N), jnp.float32),
                   jax.ShapeDtypeStruct((B, 1, 1), jnp.float32)),
        grid=(B,),
        in_specs=[
            pl.BlockSpec((1, C, N), lambda b: (b, 0, 0)),   # features
            pl.BlockSpec((1, C, N), lambda b: (b, 0, 0)),   # encoder_feature
            pl.BlockSpec((1, P, 1), lambda b: (b, 0, 0)),   # subject projection column
            pl.BlockSpec((A, C), lambda b: (0, 0)),         # sal_layer_2 W
            pl.BlockSpec((A, 1), lambda b: (0, 0)),         # sal_layer_2 b
            pl.BlockSpec((A, C), lambda b: (0, 0)),         # sal_layer_3 W
            pl.BlockSpec((A, 1), lambda b: (0, 0)),         # sal_layer_3 b
            pl.BlockSpec((P, C), lambda b: (0, 0)),         # proj_feature W / N
            pl.BlockSpec((P, 1), lambda b: (0, 0)),         # attention W column
        ],
        out_specs=(pl.BlockSpec((1, A, N), lambda b: (b, 0, 0)),
                   pl.BlockSpec((1, 1, N), lambda b: (b, 0, 0)),
                   pl.BlockSpec((1, 1, 1), lambda b: (b, 0, 0))),
        compiler_params=pltpu.CompilerParams(
            dimension_semantics=("parallel",)),
    )(feats, enc, ps, params["w_sal2"], b2_col, params["w_sal3"], b3_col,
      wf_scaled, wa_col)

    # z = cat([global_avg(sal_layer_2(features)), x], -1), attention-aggregated.
    aggr_z = jnp.concatenate([aggr_z0, aggr_x], axis=-1)                # (B, 1, 1 + N)
    if not training:
        aggr_z = jax.nn.softmax(aggr_z, axis=-1)                        # tiny; kept in XLA

    # TODO(synk): drt_layer_1 / drt_layer_2 strided convs have no clean
    # lane-aligned Pallas tiling at this size; kept on the XLA conv path.
    t = lax.conv_general_dilated(features, params["w_drt1"], window_strides=(5, 5),
                                 padding=[(2, 2), (2, 2)],
                                 dimension_numbers=("NCHW", "OIHW", "NCHW"))
    t = jnp.maximum(t + params["b_drt1"][None, :, None, None], 0.0)
    t = lax.conv_general_dilated(t, params["w_drt2"], window_strides=(1, 1),
                                 padding="VALID",
                                 dimension_numbers=("NCHW", "OIHW", "NCHW"))
    t = t + params["b_drt2"][None, :, None, None]                       # (B, 2, 1, 1)

    return {
        "actions": aggr_z,                                              # (B, 1, 1 + H*W)
        "log_normal_mu": t[:, 0].reshape(B, -1),                        # (B, 1)
        "log_normal_sigma2": jnp.exp(t[:, 1]).reshape(B, -1),           # (B, 1)
        "action_map": aggr_x.reshape(B, 1, H, W),
        "all_subject_action_map": x_flat.reshape(B, A, H, W),
    }


def reference_predict_head(encoder_feature, features, subject_embedding, params,
                           *, training=False):
    """Pure-JAX transliteration of the PyTorch forward (keeps `ba`, no refactoring)."""
    B, C, H, W = features.shape
    A = params["w_sal2"].shape[0]

    # sal_layer_2 + AvgPool2d((30, 40))
    y = jnp.einsum("ac,bchw->bahw", params["w_sal2"], features) \
        + params["b_sal2"][None, :, None, None]
    y = jnp.mean(y, axis=(2, 3), keepdims=True)                         # (B, A, 1, 1)

    # drt branch
    t = lax.conv_general_dilated(features, params["w_drt1"], (5, 5), [(2, 2), (2, 2)],
                                 dimension_numbers=("NCHW", "OIHW", "NCHW"))
    t = jnp.maximum(t + params["b_drt1"][None, :, None, None], 0.0)
    t = lax.conv_general_dilated(t, params["w_drt2"], (1, 1), "VALID",
                                 dimension_numbers=("NCHW", "OIHW", "NCHW"))
    t = t + params["b_drt2"][None, :, None, None]
    log_normal_mu = t[:, 0].reshape(B, -1)
    log_normal_sigma2 = jnp.exp(t[:, 1]).reshape(B, -1)

    # sal_layer_3 + ReLU
    x = jnp.einsum("ac,bchw->bahw", params["w_sal3"], features) \
        + params["b_sal3"][None, :, None, None]
    x = jnp.maximum(x, 0.0)

    z = jnp.concatenate([y.reshape(B, A, -1), x.reshape(B, A, -1)], axis=-1)

    # attention_module(encoder_feature, x, subject_embedding)
    aggr = jnp.einsum("bchw,bahw->bac", encoder_feature, x) / (H * W)   # (B, A, C)
    proj_f = aggr @ params["wf"].T + params["bf"]
    proj_s = subject_embedding @ params["ws"].T + params["bs"]
    scores = jnp.tanh(proj_f + proj_s[:, None, :]) @ params["wa"].T + params["ba"]
    attw = jax.nn.softmax(scores, axis=1)[..., 0]                       # (B, A)

    aggr_x = (x * attw[:, :, None, None]).sum(axis=1, keepdims=True)
    aggr_z = (z * attw[:, :, None]).sum(axis=1, keepdims=True)
    if not training:
        aggr_z = jax.nn.softmax(aggr_z, axis=-1)

    return {
        "actions": aggr_z,
        "log_normal_mu": log_normal_mu,
        "log_normal_sigma2": log_normal_sigma2,
        "action_map": aggr_x,
        "all_subject_action_map": x,
    }


def init_params(key, feature_size, action_map_num, embedding_dim):
    """Mirrors init_weights(): Conv2d ~ xavier_uniform(gain=sqrt(2)), Linear ~ normal.

    Biases are drawn small-but-nonzero (instead of zero) so the test exercises
    every bias path, including the softmax-invariant `ba` the kernel drops.
    Linear std is 0.05 (vs 0.01) so the attention softmax is non-degenerate."""
    C, A, E = feature_size, action_map_num, embedding_dim
    P = 2 * E
    ks = jax.random.split(key, 14)

    def xavier(k, shape, fan_in, fan_out):
        a = jnp.sqrt(2.0) * jnp.sqrt(6.0 / (fan_in + fan_out))
        return jax.random.uniform(k, shape, jnp.float32, -a, a)

    def small(k, shape):
        return 0.05 * jax.random.normal(k, shape, jnp.float32)

    return {
        # 1x1 convs stored as (out_channels, in_channels) matrices
        "w_sal2": xavier(ks[0], (A, C), C, A), "b_sal2": small(ks[1], (A,)),
        "w_sal3": xavier(ks[2], (A, C), C, A), "b_sal3": small(ks[3], (A,)),
        "w_drt1": xavier(ks[4], (1, C, 7, 7), C * 49, 1 * 49), "b_drt1": small(ks[5], (1,)),
        "w_drt2": xavier(ks[6], (2, 1, 6, 8), 1 * 48, 2 * 48), "b_drt2": small(ks[7], (2,)),
        # attention_module Linears (PyTorch (out_features, in_features) layout)
        "wf": 0.05 * jax.random.normal(ks[8], (P, C), jnp.float32), "bf": small(ks[9], (P,)),
        "ws": 0.05 * jax.random.normal(ks[10], (P, E), jnp.float32), "bs": small(ks[11], (P,)),
        "wa": 0.05 * jax.random.normal(ks[12], (1, P), jnp.float32),
        "ba": jnp.full((1,), 0.37, jnp.float32),   # nonzero: kernel drops it exactly
    }


if __name__ == "__main__":
    # Shapes implied by the module: 512-channel 30x40 maps (AvgPool2d((30,40)) and
    # the stride-5 7x7 -> (6,8) drt chain), small action_map_num / embedding_dim.
    B, C, H, W = 2, 512, 30, 40
    A = 8                      # action_map_num
    E = 16                     # embedding_dim -> project_size = 32

    key = jax.random.PRNGKey(0)
    k_enc, k_feat, k_subj, k_par = jax.random.split(key, 4)
    encoder_feature = jax.random.normal(k_enc, (B, C, H, W), jnp.float32)
    features = jax.random.normal(k_feat, (B, C, H, W), jnp.float32)
    subject_embedding = jax.random.normal(k_subj, (B, E), jnp.float32)
    params = init_params(k_par, C, A, E)

    out = predict_head_forward(encoder_feature, features, subject_embedding, params,
                               training=False)
    out = jax.block_until_ready(out)

    ref = reference_predict_head(encoder_feature, features, subject_embedding, params,
                                 training=False)

    expected_shapes = {
        "actions": (B, 1, 1 + H * W),
        "log_normal_mu": (B, 1),
        "log_normal_sigma2": (B, 1),
        "action_map": (B, 1, H, W),
        "all_subject_action_map": (B, A, H, W),
    }
    for name, shape in expected_shapes.items():
        assert out[name].shape == shape, (name, out[name].shape, shape)
        assert jnp.allclose(out[name], ref[name], atol=1e-4, rtol=1e-4), f"mismatch: {name}"
    # eval-mode `actions` is a softmax over 1 + H*W bins
    assert jnp.allclose(out["actions"].sum(-1), 1.0, atol=1e-5)

    print("KERNEL_OK")
</pallas_src>

<mosaic_0001>
module attributes {stable_mosaic.version = 11 : i64} {
  func.func @_predict_head_core_kernel(%arg0: i32, %arg1: memref<1x512x1200xf32, #tpu.memory_space<vmem>>, %arg2: memref<1x512x1200xf32, #tpu.memory_space<vmem>>, %arg3: memref<1x32x1xf32, #tpu.memory_space<vmem>>, %arg4: memref<8x512xf32, #tpu.memory_space<vmem>>, %arg5: memref<8x1xf32, #tpu.memory_space<vmem>>, %arg6: memref<8x512xf32, #tpu.memory_space<vmem>>, %arg7: memref<8x1xf32, #tpu.memory_space<vmem>>, %arg8: memref<32x512xf32, #tpu.memory_space<vmem>>, %arg9: memref<32x1xf32, #tpu.memory_space<vmem>>, %arg10: memref<1x8x1200xf32, #tpu.memory_space<vmem>>, %arg11: memref<1x1x1200xf32, #tpu.memory_space<vmem>>, %arg12: memref<1x1x1xf32, #tpu.memory_space<vmem>>) attributes {dimension_semantics = [#tpu.dimension_semantics<parallel>], iteration_bounds = array<i64: 2>, scalar_prefetch = 0 : i64, scratch_operands = 0 : i64, tpu.core_type = #tpu.core_type<tc>, window_params = [{transform_indices = @transform_0, window_bounds = array<i64: 1, 512, 1200>}, {transform_indices = @transform_1, window_bounds = array<i64: 1, 512, 1200>}, {transform_indices = @transform_2, window_bounds = array<i64: 1, 32, 1>}, {pipeline_mode = #tpu.pipeline_mode<synchronous>, transform_indices = @transform_3, window_bounds = array<i64: 8, 512>}, {pipeline_mode = #tpu.pipeline_mode<synchronous>, transform_indices = @transform_4, window_bounds = array<i64: 8, 1>}, {pipeline_mode = #tpu.pipeline_mode<synchronous>, transform_indices = @transform_5, window_bounds = array<i64: 8, 512>}, {pipeline_mode = #tpu.pipeline_mode<synchronous>, transform_indices = @transform_6, window_bounds = array<i64: 8, 1>}, {pipeline_mode = #tpu.pipeline_mode<synchronous>, transform_indices = @transform_7, window_bounds = array<i64: 32, 512>}, {pipeline_mode = #tpu.pipeline_mode<synchronous>, transform_indices = @transform_8, window_bounds = array<i64: 32, 1>}, {transform_indices = @transform_9, window_bounds = array<i64: 1, 8, 1200>}, {transform_indices = @transform_10, window_bounds = array<i64: 1, 1, 1200>}, {transform_indices = @transform_11, window_bounds = array<i64: 1, 1, 1>}]} {
    %c0 = arith.constant 0 : index
    %c0_0 = arith.constant 0 : index
    %c0_1 = arith.constant 0 : index
    %0 = vector.load %arg1[%c0, %c0_0, %c0_1] : memref<1x512x1200xf32, #tpu.memory_space<vmem>>, vector<1x512x1200xf32>
    %1 = vector.shape_cast %0 : vector<1x512x1200xf32> to vector<512x1200xf32>
    %c0_2 = arith.constant 0 : index
    %c0_3 = arith.constant 0 : index
    %c0_4 = arith.constant 0 : index
    %2 = vector.load %arg2[%c0_2, %c0_3, %c0_4] : memref<1x512x1200xf32, #tpu.memory_space<vmem>>, vector<1x512x1200xf32>
    %3 = vector.shape_cast %2 : vector<1x512x1200xf32> to vector<512x1200xf32>
    %c0_5 = arith.constant 0 : index
    %c0_6 = arith.constant 0 : index
    %4 = vector.load %arg6[%c0_5, %c0_6] : memref<8x512xf32, #tpu.memory_space<vmem>>, vector<8x512xf32>
    %cst = arith.constant dense<0.000000e+00> : vector<8x1200xf32>
    %5 = tpu.matmul %4, %1, %cst {dimension_numbers = #tpu.dot_dimension_numbers<[1], [0], [0], [1], [0, 0, 1, 1], [], []>} : vector<8x512xf32>, vector<512x1200xf32>, vector<8x1200xf32> -> vector<8x1200xf32>
    %c0_7 = arith.constant 0 : index
    %c0_8 = arith.constant 0 : index
    %6 = vector.load %arg7[%c0_7, %c0_8] : memref<8x1xf32, #tpu.memory_space<vmem>>, vector<8x1xf32>
    %7 = vector.broadcast %6 : vector<8x1xf32> to vector<8x1200xf32>
    %8 = arith.addf %5, %7 : vector<8x1200xf32>
    %cst_9 = arith.constant 0.000000e+00 : f32
    %9 = vector.broadcast %cst_9 : f32 to vector<8x1200xf32>
    %10 = arith.maximumf %8, %9 : vector<8x1200xf32>
    %c0_10 = arith.constant 0 : index
    %c0_11 = arith.constant 0 : index
    %c0_12 = arith.constant 0 : index
    %11 = vector.load %arg10[%c0_10, %c0_11, %c0_12] : memref<1x8x1200xf32, #tpu.memory_space<vmem>>, vector<1x8x1200xf32>
    %12 = vector.shape_cast %11 : vector<1x8x1200xf32> to vector<8x1200xf32>
    %13 = vector.shape_cast %10 : vector<8x1200xf32> to vector<1x8x1200xf32>
    tpu.vector_store %arg10[%c0_10, %c0_11, %c0_12], %13 {strides = array<i32>} : memref<1x8x1200xf32, #tpu.memory_space<vmem>>, vector<1x8x1200xf32>,
    %c0_13 = arith.constant 0 : index
    %c0_14 = arith.constant 0 : index
    %14 = vector.load %arg4[%c0_13, %c0_14] : memref<8x512xf32, #tpu.memory_space<vmem>>, vector<8x512xf32>
    %cst_15 = arith.constant dense<0.000000e+00> : vector<8x1200xf32>
    %15 = tpu.matmul %14, %1, %cst_15 {dimension_numbers = #tpu.dot_dimension_numbers<[1], [0], [0], [1], [0, 0, 1, 1], [], []>} : vector<8x512xf32>, vector<512x1200xf32>, vector<8x1200xf32> -> vector<8x1200xf32>
    %c0_16 = arith.constant 0 : index
    %c0_17 = arith.constant 0 : index
    %16 = vector.load %arg5[%c0_16, %c0_17] : memref<8x1xf32, #tpu.memory_space<vmem>>, vector<8x1xf32>
    %17 = vector.broadcast %16 : vector<8x1xf32> to vector<8x1200xf32>
    %18 = arith.addf %15, %17 : vector<8x1200xf32>
    %cst_18 = arith.constant dense<0.000000e+00> : vector<512x8xf32>
    %19 = tpu.matmul %3, %10, %cst_18 {dimension_numbers = #tpu.dot_dimension_numbers<[1], [1], [0], [0], [0, 0, 1, 0], [], []>} : vector<512x1200xf32>, vector<8x1200xf32>, vector<512x8xf32> -> vector<512x8xf32>
    %c0_19 = arith.constant 0 : index
    %c0_20 = arith.constant 0 : index
    %20 = vector.load %arg8[%c0_19, %c0_20] : memref<32x512xf32, #tpu.memory_space<vmem>>, vector<32x512xf32>
    %cst_21 = arith.constant dense<0.000000e+00> : vector<32x8xf32>
    %21 = tpu.matmul %20, %19, %cst_21 {dimension_numbers = #tpu.dot_dimension_numbers<[1], [0], [0], [1], [0, 0, 1, 1], [], []>} : vector<32x512xf32>, vector<512x8xf32>, vector<32x8xf32> -> vector<32x8xf32>
    %c0_22 = arith.constant 0 : index
    %c0_23 = arith.constant 0 : index
    %c0_24 = arith.constant 0 : index
    %22 = vector.load %arg3[%c0_22, %c0_23, %c0_24] : memref<1x32x1xf32, #tpu.memory_space<vmem>>, vector<1x32x1xf32>
    %23 = vector.shape_cast %22 : vector<1x32x1xf32> to vector<32x1xf32>
    %24 = vector.broadcast %23 : vector<32x1xf32> to vector<32x8xf32>
    %25 = arith.addf %21, %24 : vector<32x8xf32>
    %26 = math.tanh %25 : vector<32x8xf32>
    %c0_25 = arith.constant 0 : index
    %c0_26 = arith.constant 0 : index
    %27 = vector.load %arg9[%c0_25, %c0_26] : memref<32x1xf32, #tpu.memory_space<vmem>>, vector<32x1xf32>
    %28 = vector.broadcast %27 : vector<32x1xf32> to vector<32x8xf32>
    %29 = arith.mulf %26, %28 : vector<32x8xf32>
    %cst_27 = arith.constant dense<0.000000e+00> : vector<8xf32>
    %30 = vector.multi_reduction <add>, %29, %cst_27 [0] : vector<32x8xf32> to vector<8xf32>
    %31 = vector.shape_cast %30 : vector<8xf32> to vector<1x8xf32>
    %cst_28 = arith.constant dense<0xFF800000> : vector<1xf32>
    %32 = vector.multi_reduction <maximumf>, %31, %cst_28 [1] : vector<1x8xf32> to vector<1xf32>
    %33 = vector.shape_cast %32 : vector<1xf32> to vector<1x1xf32>
    %34 = vector.broadcast %33 : vector<1x1xf32> to vector<1x8xf32>
    %35 = arith.subf %31, %34 : vector<1x8xf32>
    %36 = math.exp %35 : vector<1x8xf32>
    %cst_29 = arith.constant dense<0.000000e+00> : vector<1xf32>
    %37 = vector.multi_reduction <add>, %36, %cst_29 [1] : vector<1x8xf32> to vector<1xf32>
    %38 = vector.shape_cast %37 : vector<1xf32> to vector<1x1xf32>
    %39 = tpu.reciprocal %38 : vector<1x1xf32> -> vector<1x1xf32>
    %40 = vector.broadcast %39 : vector<1x1xf32> to vector<1x8xf32>
    %41 = arith.mulf %36, %40 : vector<1x8xf32>
    %cst_30 = arith.constant dense<0.000000e+00> : vector<1x1200xf32>
    %42 = tpu.matmul %41, %10, %cst_30 {dimension_numbers = #tpu.dot_dimension_numbers<[1], [0], [0], [1], [0, 0, 1, 1], [], []>} : vector<1x8xf32>, vector<8x1200xf32>, vector<1x1200xf32> -> vector<1x1200xf32>
    %c0_31 = arith.constant 0 : index
    %c0_32 = arith.constant 0 : index
    %c0_33 = arith.constant 0 : index
    %43 = vector.load %arg11[%c0_31, %c0_32, %c0_33] : memref<1x1x1200xf32, #tpu.memory_space<vmem>>, vector<1x1x1200xf32>
    %44 = vector.shape_cast %43 : vector<1x1x1200xf32> to vector<1x1200xf32>
    %45 = vector.shape_cast %42 : vector<1x1200xf32> to vector<1x1x1200xf32>
    tpu.vector_store %arg11[%c0_31, %c0_32, %c0_33], %45 {strides = array<i32>} : memref<1x1x1200xf32, #tpu.memory_space<vmem>>, vector<1x1x1200xf32>,
    %cst_34 = arith.constant dense<0.000000e+00> : vector<1x1200xf32>
    %46 = tpu.matmul %41, %18, %cst_34 {dimension_numbers = #tpu.dot_dimension_numbers<[1], [0], [0], [1], [0, 0, 1, 1], [], []>} : vector<1x8xf32>, vector<8x1200xf32>, vector<1x1200xf32> -> vector<1x1200xf32>
    %cst_35 = arith.constant dense<0.000000e+00> : vector<1xf32>
    %47 = vector.multi_reduction <add>, %46, %cst_35 [1] : vector<1x1200xf32> to vector<1xf32>
    %48 = vector.shape_cast %47 : vector<1xf32> to vector<1x1xf32>
    %cst_36 = arith.constant 1.200000e+03 : f32
    %49 = vector.broadcast %cst_36 : f32 to vector<1x1xf32>
    %50 = arith.divf %48, %49 : vector<1x1xf32>
    %c0_37 = arith.constant 0 : index
    %c0_38 = arith.constant 0 : index
    %c0_39 = arith.constant 0 : index
    %51 = vector.load %arg12[%c0_37, %c0_38, %c0_39] : memref<1x1x1xf32, #tpu.memory_space<vmem>>, vector<1x1x1xf32>
    %52 = vector.shape_cast %51 : vector<1x1x1xf32> to vector<1x1xf32>
    %53 = vector.shape_cast %50 : vector<1x1xf32> to vector<1x1x1xf32>
    tpu.vector_store %arg12[%c0_37, %c0_38, %c0_39], %53 {strides = array<i32>} : memref<1x1x1xf32, #tpu.memory_space<vmem>>, vector<1x1x1xf32>,
    return
  }
  func.func @transform_0(%arg0: i32) -> (i32, i32, i32) {
    %c0_i32 = arith.constant 0 : i32
    %c0_i32_0 = arith.constant 0 : i32
    %c0_i32_1 = arith.constant 0 : i32
    return %arg0, %c0_i32, %c0_i32_0 : i32, i32, i32
  }
  func.func @transform_1(%arg0: i32) -> (i32, i32, i32) {
    %c0_i32 = arith.constant 0 : i32
    %c0_i32_0 = arith.constant 0 : i32
    %c0_i32_1 = arith.constant 0 : i32
    return %arg0, %c0_i32, %c0_i32_0 : i32, i32, i32
  }
  func.func @transform_2(%arg0: i32) -> (i32, i32, i32) {
    %c0_i32 = arith.constant 0 : i32
    %c0_i32_0 = arith.constant 0 : i32
    %c0_i32_1 = arith.constant 0 : i32
    return %arg0, %c0_i32, %c0_i32_0 : i32, i32, i32
  }
  func.func @transform_3(%arg0: i32) -> (i32, i32) {
    %c0_i32 = arith.constant 0 : i32
    %c0_i32_0 = arith.constant 0 : i32
    %c0_i32_1 = arith.constant 0 : i32
    return %c0_i32, %c0_i32_0 : i32, i32
  }
  func.func @transform_4(%arg0: i32) -> (i32, i32) {
    %c0_i32 = arith.constant 0 : i32
    %c0_i32_0 = arith.constant 0 : i32
    %c0_i32_1 = arith.constant 0 : i32
    return %c0_i32, %c0_i32_0 : i32, i32
  }
  func.func @transform_5(%arg0: i32) -> (i32, i32) {
    %c0_i32 = arith.constant 0 : i32
    %c0_i32_0 = arith.constant 0 : i32
    %c0_i32_1 = arith.constant 0 : i32
    return %c0_i32, %c0_i32_0 : i32, i32
  }
  func.func @transform_6(%arg0: i32) -> (i32, i32) {
    %c0_i32 = arith.constant 0 : i32
    %c0_i32_0 = arith.constant 0 : i32
    %c0_i32_1 = arith.constant 0 : i32
    return %c0_i32, %c0_i32_0 : i32, i32
  }
  func.func @transform_7(%arg0: i32) -> (i32, i32) {
    %c0_i32 = arith.constant 0 : i32
    %c0_i32_0 = arith.constant 0 : i32
    %c0_i32_1 = arith.constant 0 : i32
    return %c0_i32, %c0_i32_0 : i32, i32
  }
  func.func @transform_8(%arg0: i32) -> (i32, i32) {
    %c0_i32 = arith.constant 0 : i32
    %c0_i32_0 = arith.constant 0 : i32
    %c0_i32_1 = arith.constant 0 : i32
    return %c0_i32, %c0_i32_0 : i32, i32
  }
  func.func @transform_9(%arg0: i32) -> (i32, i32, i32) {
    %c0_i32 = arith.constant 0 : i32
    %c0_i32_0 = arith.constant 0 : i32
    %c0_i32_1 = arith.constant 0 : i32
    return %arg0, %c0_i32, %c0_i32_0 : i32, i32, i32
  }
  func.func @transform_10(%arg0: i32) -> (i32, i32, i32) {
    %c0_i32 = arith.constant 0 : i32
    %c0_i32_0 = arith.constant 0 : i32
    %c0_i32_1 = arith.constant 0 : i32
    return %arg0, %c0_i32, %c0_i32_0 : i32, i32, i32
  }
  func.func @transform_11(%arg0: i32) -> (i32, i32, i32) {
    %c0_i32 = arith.constant 0 : i32
    %c0_i32_0 = arith.constant 0 : i32
    %c0_i32_1 = arith.constant 0 : i32
    return %arg0, %c0_i32, %c0_i32_0 : i32, i32, i32
  }
}

</mosaic_0001>

<llo_original>
// kernel: tpu_custom_call.1
$region0: #{tpu_custom_call.1}
  #allocation0 [shape = 'u32[]', space=smem, size = 0x4, offset = 0x4, fixed_abs, tag = 'smem constant byte address 0x4 - core index']
  #allocation1 [shape = 'u32[144,128]{1,0:T(1,128)}', space=vmem, size = 0x12000, scoped, tag = 'internal scratch']
  %s0 = inlined_call_operand.vmem [shape: f32[2,512,1200], index: 0, kind: input, shape index: {}]
  %s1 = inlined_call_operand.vmem [shape: f32[2,512,1200], index: 1, kind: input, shape index: {}]
  %s2 = inlined_call_operand.vmem [shape: f32[2,32,1], index: 2, kind: input, shape index: {}]
  %s3 = inlined_call_operand.vmem [shape: f32[8,512], index: 3, kind: input, shape index: {}]
  %s4 = inlined_call_operand.vmem [shape: f32[8,1], index: 4, kind: input, shape index: {}]
  %s5 = inlined_call_operand.vmem [shape: f32[8,512], index: 5, kind: input, shape index: {}]
  %s6 = inlined_call_operand.vmem [shape: f32[8,1], index: 6, kind: input, shape index: {}]
  %s7 = inlined_call_operand.vmem [shape: f32[32,512], index: 7, kind: input, shape index: {}]
  %s8 = inlined_call_operand.vmem [shape: f32[32,1], index: 8, kind: input, shape index: {}]
  %s9 = inlined_call_operand.hbm [shape: f32[2,8,1200], index: 9, kind: output, shape index: {0}]
  %s10 = inlined_call_operand.hbm [shape: f32[2,1,1200], index: 10, kind: output, shape index: {1}]
  %s11 = inlined_call_operand.vmem [shape: f32[2,1,1], index: 11, kind: output, shape index: {2}]
  %12 = xla_tuple %s9, %s10, %s11
  %s13 = sld [smem:[#allocation0]]
  $region85: #{tpu_custom_call.1} parent=0
    _
  %s15 = ssub.s32 1, %s13
  %s16 = scalar_select 0, %s15, %s13
  $region1: #{tpu_custom_call.1} parent=0
    #allocation2 [shape = 'u8[81920]{0}', space=vmem, size = 0x14000, scoped, tag = 'output window, operand 0']
    #allocation3 [shape = 's32[2]{0}', space=sflag, size = 0x8, scoped, tag = 'scoped memory for tpu_custom_call.1']
    #allocation4 [shape = 'u8[10240]{0}', space=vmem, size = 0x2800, scoped, tag = 'output window, operand 1']
    #allocation5 [shape = 's32[2]{0}', space=sflag, size = 0x8, scoped, tag = 'scoped memory for tpu_custom_call.1']
    %17 = vsyncpa [#allocation3], 0
    %s18 = scalar_lea.sflag [#allocation3], 1
    %19 = vsyncpa %s18, 0
    %20 = vsyncpa [#allocation5], 0
    %s21 = scalar_lea.sflag [#allocation5], 1
    %22 = vsyncpa %s21, 0
    loop: start=0, step=1, limit=4
    $region2: #{tpu_custom_call.1} parent=1 // loop_pre_header
      _
    $region3: #{tpu_custom_call.1} parent=1 // loop_header
      %s24 = sphi 0, %s28
      %p25 = scmp.ge.s32.totalorder %s24, 4
      %s34 = sphi 0, %s36
      %s37 = sphi 0, %s34
      %s38 = sphi 0, %s37
      %s54 = sphi 0, %s38
      %s60 = sphi 0, %s62
      %s63 = sphi 0, %s60
      %s64 = sphi 0, %s63
      %s80 = sphi 0, %s64
      %s86 = sphi 0, %s88
      %s89 = sphi 0, %s86
      %s90 = sphi 0, %s89
      %s106 = sphi 0, %s90
      %s110 = sphi 0, %s110
      %s112 = sphi 0, %s110
      %s113 = sphi 0, %s112
      %s127 = sphi 0, %s113
      %s131 = sphi 0, %s131
      %s133 = sphi 0, %s131
      %s134 = sphi 0, %s133
      %s148 = sphi 0, %s134
      %s152 = sphi 0, %s152
      %s154 = sphi 0, %s152
      %s155 = sphi 0, %s154
      %s169 = sphi 0, %s155
      %s173 = sphi 0, %s173
      %s175 = sphi 0, %s173
      %s176 = sphi 0, %s175
      %s190 = sphi 0, %s176
      %s194 = sphi 0, %s194
      %s196 = sphi 0, %s194
      %s197 = sphi 0, %s196
      %s211 = sphi 0, %s197
      %s215 = sphi 0, %s215
      %s217 = sphi 0, %s215
      %s218 = sphi 0, %s217
      %s232 = sphi 0, %s218
      %s238 = sphi 0, %s240
      %s241 = sphi 0, %s238
      %s242 = sphi 0, %s241
      %s258 = sphi 0, %s242
      %s264 = sphi 0, %s266
      %s267 = sphi 0, %s264
      %s268 = sphi 0, %s267
      %s284 = sphi 0, %s268
      %s290 = sphi 0, %s292
      %s293 = sphi 0, %s290
      %s294 = sphi 0, %s293
      %s310 = sphi 0, %s294
    $region4: #{tpu_custom_call.1} parent=1 // loop_header_branch
      %27 = sbr.rel (%p25) target = $region8
    $region5: #{tpu_custom_call.1} parent=1 // loop_body
      %s29 = ssub.s32 %s24, 1
      %s30 = ssub.s32 %s24, 2
      %s31 = sadd.s32 %s24, 1
      %s32 = ssub.s32 %s24, %s31
      %p33 = scmp.eq.s32.totalorder %s32, 0
      %s35 = sadd.s32 %s34, 1
      %s36 = scalar_select %p33, %s34, %s35
      %p39 = pneg %p33
      %p40 = scmp.eq.s32.totalorder %s24, 1
      %p41 = por %p39, %p40
      %p42 = scmp.ne.s32.totalorder %s34, %s37
      %p43 = scmp.eq.s32.totalorder %s24, 0
      %p44 = por %p42, %p43
      %p45 = scmp.ne.s32.totalorder %s34, %s37
      %p46 = scmp.eq.s32.totalorder %s29, 1
      %p47 = por %p45, %p46
      %p48 = scmp.ne.s32.totalorder %s37, %s38
      %p49 = scmp.eq.s32.totalorder %s29, 0
      %p50 = por %p48, %p49
      %p51 = scmp.ne.s32.totalorder %s37, %s38
      %p52 = scmp.eq.s32.totalorder %s30, 1
      %p53 = por %p51, %p52
      %p55 = scmp.ne.s32.totalorder %s38, %s54
      %p56 = scmp.eq.s32.totalorder %s30, 0
      %p57 = por %p55, %p56
      %s58 = ssub.s32 %s24, %s31
      %p59 = scmp.eq.s32.totalorder %s58, 0
      %s61 = sadd.s32 %s60, 1
      %s62 = scalar_select %p59, %s60, %s61
      %p65 = pneg %p59
      %p66 = scmp.eq.s32.totalorder %s24, 1
      %p67 = por %p65, %p66
      %p68 = scmp.ne.s32.totalorder %s60, %s63
      %p69 = scmp.eq.s32.totalorder %s24, 0
      %p70 = por %p68, %p69
      %p71 = scmp.ne.s32.totalorder %s60, %s63
      %p72 = scmp.eq.s32.totalorder %s29, 1
      %p73 = por %p71, %p72
      %p74 = scmp.ne.s32.totalorder %s63, %s64
      %p75 = scmp.eq.s32.totalorder %s29, 0
      %p76 = por %p74, %p75
      %p77 = scmp.ne.s32.totalorder %s63, %s64
      %p78 = scmp.eq.s32.totalorder %s30, 1
      %p79 = por %p77, %p78
      %p81 = scmp.ne.s32.totalorder %s64, %s80
      %p82 = scmp.eq.s32.totalorder %s30, 0
      %p83 = por %p81, %p82
      %s84 = ssub.s32 %s24, %s31
      %p85 = scmp.eq.s32.totalorder %s84, 0
      %s87 = sadd.s32 %s86, 1
      %s88 = scalar_select %p85, %s86, %s87
      %p91 = pneg %p85
      %p92 = scmp.eq.s32.totalorder %s24, 1
      %p93 = por %p91, %p92
      %p94 = scmp.ne.s32.totalorder %s86, %s89
      %p95 = scmp.eq.s32.totalorder %s24, 0
      %p96 = por %p94, %p95
      %p97 = scmp.ne.s32.totalorder %s86, %s89
      %p98 = scmp.eq.s32.totalorder %s29, 1
      %p99 = por %p97, %p98
      %p100 = scmp.ne.s32.totalorder %s89, %s90
      %p101 = scmp.eq.s32.totalorder %s29, 0
      %p102 = por %p100, %p101
      %p103 = scmp.ne.s32.totalorder %s89, %s90
      %p104 = scmp.eq.s32.totalorder %s30, 1
      %p105 = por %p103, %p104
      %p107 = scmp.ne.s32.totalorder %s90, %s106
      %p108 = scmp.eq.s32.totalorder %s30, 0
      %p109 = por %p107, %p108
      %s111 = sadd.s32 %s110, 1
      %p114 = scmp.eq.s32.totalorder %s24, 1
      %p115 = scmp.ne.s32.totalorder %s110, %s112
      %p116 = scmp.eq.s32.totalorder %s24, 0
      %p117 = por %p115, %p116
      %p118 = scmp.ne.s32.totalorder %s110, %s112
      %p119 = scmp.eq.s32.totalorder %s29, 1
      %p120 = por %p118, %p119
      %p121 = scmp.ne.s32.totalorder %s112, %s113
      %p122 = scmp.eq.s32.totalorder %s29, 0
      %p123 = por %p121, %p122
      %p124 = scmp.ne.s32.totalorder %s112, %s113
      %p125 = scmp.eq.s32.totalorder %s30, 1
      %p126 = por %p124, %p125
      %p128 = scmp.ne.s32.totalorder %s113, %s127
      %p129 = scmp.eq.s32.totalorder %s30, 0
      %p130 = por %p128, %p129
      %s132 = sadd.s32 %s131, 1
      %p135 = scmp.eq.s32.totalorder %s24, 1
      %p136 = scmp.ne.s32.totalorder %s131, %s133
      %p137 = scmp.eq.s32.totalorder %s24, 0
      %p138 = por %p136, %p137
      %p139 = scmp.ne.s32.totalorder %s131, %s133
      %p140 = scmp.eq.s32.totalorder %s29, 1
      %p141 = por %p139, %p140
      %p142 = scmp.ne.s32.totalorder %s133, %s134
      %p143 = scmp.eq.s32.totalorder %s29, 0
      %p144 = por %p142, %p143
      %p145 = scmp.ne.s32.totalorder %s133, %s134
      %p146 = scmp.eq.s32.totalorder %s30, 1
      %p147 = por %p145, %p146
      %p149 = scmp.ne.s32.totalorder %s134, %s148
      %p150 = scmp.eq.s32.totalorder %s30, 0
      %p151 = por %p149, %p150
      %s153 = sadd.s32 %s152, 1
      %p156 = scmp.eq.s32.totalorder %s24, 1
      %p157 = scmp.ne.s32.totalorder %s152, %s154
      %p158 = scmp.eq.s32.totalorder %s24, 0
      %p159 = por %p157, %p158
      %p160 = scmp.ne.s32.totalorder %s152, %s154
      %p161 = scmp.eq.s32.totalorder %s29, 1
      %p162 = por %p160, %p161
      %p163 = scmp.ne.s32.totalorder %s154, %s155
      %p164 = scmp.eq.s32.totalorder %s29, 0
      %p165 = por %p163, %p164
      %p166 = scmp.ne.s32.totalorder %s154, %s155
      %p167 = scmp.eq.s32.totalorder %s30, 1
      %p168 = por %p166, %p167
      %p170 = scmp.ne.s32.totalorder %s155, %s169
      %p171 = scmp.eq.s32.totalorder %s30, 0
      %p172 = por %p170, %p171
      %s174 = sadd.s32 %s173, 1
      %p177 = scmp.eq.s32.totalorder %s24, 1
      %p178 = scmp.ne.s32.totalorder %s173, %s175
      %p179 = scmp.eq.s32.totalorder %s24, 0
      %p180 = por %p178, %p179
      %p181 = scmp.ne.s32.totalorder %s173, %s175
      %p182 = scmp.eq.s32.totalorder %s29, 1
      %p183 = por %p181, %p182
      %p184 = scmp.ne.s32.totalorder %s175, %s176
      %p185 = scmp.eq.s32.totalorder %s29, 0
      %p186 = por %p184, %p185
      %p187 = scmp.ne.s32.totalorder %s175, %s176
      %p188 = scmp.eq.s32.totalorder %s30, 1
      %p189 = por %p187, %p188
      %p191 = scmp.ne.s32.totalorder %s176, %s190
      %p192 = scmp.eq.s32.totalorder %s30, 0
      %p193 = por %p191, %p192
      %s195 = sadd.s32 %s194, 1
      %p198 = scmp.eq.s32.totalorder %s24, 1
      %p199 = scmp.ne.s32.totalorder %s194, %s196
      %p200 = scmp.eq.s32.totalorder %s24, 0
      %p201 = por %p199, %p200
      %p202 = scmp.ne.s32.totalorder %s194, %s196
      %p203 = scmp.eq.s32.totalorder %s29, 1
      %p204 = por %p202, %p203
      %p205 = scmp.ne.s32.totalorder %s196, %s197
      %p206 = scmp.eq.s32.totalorder %s29, 0
      %p207 = por %p205, %p206
      %p208 = scmp.ne.s32.totalorder %s196, %s197
      %p209 = scmp.eq.s32.totalorder %s30, 1
      %p210 = por %p208, %p209
      %p212 = scmp.ne.s32.totalorder %s197, %s211
      %p213 = scmp.eq.s32.totalorder %s30, 0
      %p214 = por %p212, %p213
      %s216 = sadd.s32 %s215, 1
      %p219 = scmp.eq.s32.totalorder %s24, 1
      %p220 = scmp.ne.s32.totalorder %s215, %s217
      %p221 = scmp.eq.s32.totalorder %s24, 0
      %p222 = por %p220, %p221
      %p223 = scmp.ne.s32.totalorder %s215, %s217
      %p224 = scmp.eq.s32.totalorder %s29, 1
      %p225 = por %p223, %p224
      %p226 = scmp.ne.s32.totalorder %s217, %s218
      %p227 = scmp.eq.s32.totalorder %s29, 0
      %p228 = por %p226, %p227
      %p229 = scmp.ne.s32.totalorder %s217, %s218
      %p230 = scmp.eq.s32.totalorder %s30, 1
      %p231 = por %p229, %p230
      %p233 = scmp.ne.s32.totalorder %s218, %s232
      %p234 = scmp.eq.s32.totalorder %s30, 0
      %p235 = por %p233, %p234
      %s236 = ssub.s32 %s24, %s31
      %p237 = scmp.eq.s32.totalorder %s236, 0
      %s239 = sadd.s32 %s238, 1
      %s240 = scalar_select %p237, %s238, %s239
      %p243 = pneg %p237
      %p244 = scmp.eq.s32.totalorder %s24, 1
      %p245 = por %p243, %p244
      %p246 = scmp.ne.s32.totalorder %s238, %s241
      %p247 = scmp.eq.s32.totalorder %s24, 0
      %p248 = por %p246, %p247
      %p249 = scmp.ne.s32.totalorder %s238, %s241
      %p250 = scmp.eq.s32.totalorder %s29, 1
      %p251 = por %p249, %p250
      %p252 = scmp.ne.s32.totalorder %s241, %s242
      %p253 = scmp.eq.s32.totalorder %s29, 0
      %p254 = por %p252, %p253
      %p255 = scmp.ne.s32.totalorder %s241, %s242
      %p256 = scmp.eq.s32.totalorder %s30, 1
      %p257 = por %p255, %p256
      %p259 = scmp.ne.s32.totalorder %s242, %s258
      %p260 = scmp.eq.s32.totalorder %s30, 0
      %p261 = por %p259, %p260
      %s262 = ssub.s32 %s24, %s31
      %p263 = scmp.eq.s32.totalorder %s262, 0
      %s265 = sadd.s32 %s264, 1
      %s266 = scalar_select %p263, %s264, %s265
      %p269 = pneg %p263
      %p270 = scmp.eq.s32.totalorder %s24, 1
      %p271 = por %p269, %p270
      %p272 = scmp.ne.s32.totalorder %s264, %s267
      %p273 = scmp.eq.s32.totalorder %s24, 0
      %p274 = por %p272, %p273
      %p275 = scmp.ne.s32.totalorder %s264, %s267
      %p276 = scmp.eq.s32.totalorder %s29, 1
      %p277 = por %p275, %p276
      %p278 = scmp.ne.s32.totalorder %s267, %s268
      %p279 = scmp.eq.s32.totalorder %s29, 0
      %p280 = por %p278, %p279
      %p281 = scmp.ne.s32.totalorder %s267, %s268
      %p282 = scmp.eq.s32.totalorder %s30, 1
      %p283 = por %p281, %p282
      %p285 = scmp.ne.s32.totalorder %s268, %s284
      %p286 = scmp.eq.s32.totalorder %s30, 0
      %p287 = por %p285, %p286
      %s288 = ssub.s32 %s24, %s31
      %p289 = scmp.eq.s32.totalorder %s288, 0
      %s291 = sadd.s32 %s290, 1
      %s292 = scalar_select %p289, %s290, %s291
      %p295 = pneg %p289
      %p296 = scmp.eq.s32.totalorder %s24, 1
      %p297 = por %p295, %p296
      %p298 = scmp.ne.s32.totalorder %s290, %s293
      %p299 = scmp.eq.s32.totalorder %s24, 0
      %p300 = por %p298, %p299
      %p301 = scmp.ne.s32.totalorder %s290, %s293
      %p302 = scmp.eq.s32.totalorder %s29, 1
      %p303 = por %p301, %p302
      %p304 = scmp.ne.s32.totalorder %s293, %s294
      %p305 = scmp.eq.s32.totalorder %s29, 0
      %p306 = por %p304, %p305
      %p307 = scmp.ne.s32.totalorder %s293, %s294
      %p308 = scmp.eq.s32.totalorder %s30, 1
      %p309 = por %p307, %p308
      %p311 = scmp.ne.s32.totalorder %s294, %s310
      %p312 = scmp.eq.s32.totalorder %s30, 0
      %p313 = por %p311, %p312
      %p314 = scmp.le.s32.totalorder 1, %s24
      %p315 = scmp.lt.s32.totalorder %s24, 3
      %p316 = pnand %p314, %p315
      %p317 = pneg %p316
      // Predicated region
      $region9: #{tpu_custom_call.1} parent=5 // pred_check
        _
      $region10: #{tpu_custom_call.1} parent=5 // pred_check_branch
        %319 = sbr.rel (%p316) target = $region12
      $region11: #{tpu_custom_call.1} parent=5 // pred_region
        %s320 = ssub.s32 %s24, 1
        // Predicated region
        $region13: #{tpu_custom_call.1} parent=11 // pred_check
          %p321 = pneg %p123
        $region14: #{tpu_custom_call.1} parent=11 // pred_check_branch
          %323 = sbr.rel (%p321) target = $region16
        $region15: #{tpu_custom_call.1} parent=11 // pred_region
          _
        $region16: #{tpu_custom_call.1} parent=11 // pred_fallthru
          _
        // Predicated region
        $region17: #{tpu_custom_call.1} parent=11 // pred_check
          %p324 = pneg %p144
        $region18: #{tpu_custom_call.1} parent=11 // pred_check_branch
          %326 = sbr.rel (%p324) target = $region20
        $region19: #{tpu_custom_call.1} parent=11 // pred_region
          _
        $region20: #{tpu_custom_call.1} parent=11 // pred_fallthru
          _
        // Predicated region
        $region21: #{tpu_custom_call.1} parent=11 // pred_check
          %p327 = pneg %p165
        $region22: #{tpu_custom_call.1} parent=11 // pred_check_branch
          %329 = sbr.rel (%p327) target = $region24
        $region23: #{tpu_custom_call.1} parent=11 // pred_region
          _
        $region24: #{tpu_custom_call.1} parent=11 // pred_fallthru
          _
        // Predicated region
        $region25: #{tpu_custom_call.1} parent=11 // pred_check
          %p330 = pneg %p186
        $region26: #{tpu_custom_call.1} parent=11 // pred_check_branch
          %332 = sbr.rel (%p330) target = $region28
        $region27: #{tpu_custom_call.1} parent=11 // pred_region
          _
        $region28: #{tpu_custom_call.1} parent=11 // pred_fallthru
          _
        // Predicated region
        $region29: #{tpu_custom_call.1} parent=11 // pred_check
          %p333 = pneg %p207
        $region30: #{tpu_custom_call.1} parent=11 // pred_check_branch
          %335 = sbr.rel (%p333) target = $region32
        $region31: #{tpu_custom_call.1} parent=11 // pred_region
          _
        $region32: #{tpu_custom_call.1} parent=11 // pred_fallthru
          _
        // Predicated region
        $region33: #{tpu_custom_call.1} parent=11 // pred_check
          %p336 = pneg %p228
        $region34: #{tpu_custom_call.1} parent=11 // pred_check_branch
          %338 = sbr.rel (%p336) target = $region36
        $region35: #{tpu_custom_call.1} parent=11 // pred_region
          _
        $region36: #{tpu_custom_call.1} parent=11 // pred_fallthru
          _
      $region12: #{tpu_custom_call.1} parent=5 // pred_fallthru
        _
      %p339 = scmp.lt.s32.totalorder %s24, 2
      // Predicated region
      $region37: #{tpu_custom_call.1} parent=5 // pred_check
        %p340 = pneg %p339
      $region38: #{tpu_custom_call.1} parent=5 // pred_check_branch
        %342 = sbr.rel (%p340) target = $region40
      $region39: #{tpu_custom_call.1} parent=5 // pred_region
        // Predicated region
        $region41: #{tpu_custom_call.1} parent=39 // pred_check
          %p343 = pneg %p44
        $region42: #{tpu_custom_call.1} parent=39 // pred_check_branch
          %345 = sbr.rel (%p343) target = $region44
        $region43: #{tpu_custom_call.1} parent=39 // pred_region
          %p346 = scmp.lt.s32.totalorder %s24, 1
          %s347 = scalar_select %p346, %s24, 1
          %s348 = smul.addr %s347, 640
          %s349 = smul.addr %s348, 8
          %s350 = scalar_lea.vmem %s0, %s349
        $region44: #{tpu_custom_call.1} parent=39 // pred_fallthru
          _
        // Predicated region
        $region45: #{tpu_custom_call.1} parent=39 // pred_check
          %p351 = pneg %p70
        $region46: #{tpu_custom_call.1} parent=39 // pred_check_branch
          %353 = sbr.rel (%p351) target = $region48
        $region47: #{tpu_custom_call.1} parent=39 // pred_region
          %p354 = scmp.lt.s32.totalorder %s24, 1
          %s355 = scalar_select %p354, %s24, 1
          %s356 = smul.addr %s355, 640
          %s357 = smul.addr %s356, 8
          %s358 = scalar_lea.vmem %s1, %s357
        $region48: #{tpu_custom_call.1} parent=39 // pred_fallthru
          _
        // Predicated region
        $region49: #{tpu_custom_call.1} parent=39 // pred_check
          %p359 = pneg %p96
        $region50: #{tpu_custom_call.1} parent=39 // pred_check_branch
          %361 = sbr.rel (%p359) target = $region52
        $region51: #{tpu_custom_call.1} parent=39 // pred_region
          %p362 = scmp.lt.s32.totalorder %s24, 1
          %s363 = scalar_select %p362, %s24, 1
          %s364 = smul.addr %s363, 4
          %s365 = smul.addr %s364, 8
          %s366 = scalar_lea.vmem %s2, %s365
        $region52: #{tpu_custom_call.1} parent=39 // pred_fallthru
          _
      $region40: #{tpu_custom_call.1} parent=5 // pred_fallthru
        _
      %p367 = scmp.le.s32.totalorder 1, %s24
      %p368 = scmp.lt.s32.totalorder %s24, 3
      %p369 = pnand %p367, %p368
      %p370 = pneg %p369
      // Predicated region
      $region53: #{tpu_custom_call.1} parent=5 // pred_check
        _
      $region54: #{tpu_custom_call.1} parent=5 // pred_check_branch
        %372 = sbr.rel (%p369) target = $region56
      $region55: #{tpu_custom_call.1} parent=5 // pred_region
        %s373 = ssub.s32 %s24, 1
        %p374 = scmp.lt.s32.totalorder %s29, 1
        %s375 = scalar_select %p374, %s29, 1
        %s376 = smul.addr %s375, 640
        %s377 = smul.addr %s376, 8
        %s378 = scalar_lea.vmem %s0, %s377
        %p379 = pneg %p50
        %p380 = pneg %p47
        %p381 = scmp.lt.s32.totalorder %s29, 1
        %s382 = scalar_select %p381, %s29, 1
        %s383 = smul.addr %s382, 640
        %s384 = smul.addr %s383, 8
        %s385 = scalar_lea.vmem %s1, %s384
        %p386 = pneg %p76
        %p387 = pneg %p73
        %p388 = scmp.lt.s32.totalorder %s29, 1
        %s389 = scalar_select %p388, %s29, 1
        %s390 = smul.addr %s389, 4
        %s391 = smul.addr %s390, 8
        %s392 = scalar_lea.vmem %s2, %s391
        %p393 = pneg %p102
        %p394 = pneg %p99
        %p395 = pneg %p123
        %p396 = pneg %p120
        %p397 = pneg %p144
        %p398 = pneg %p141
        %p399 = pneg %p165
        %p400 = pneg %p162
        %p401 = pneg %p186
        %p402 = pneg %p183
        %p403 = pneg %p207
        %p404 = pneg %p204
        %p405 = pneg %p228
        %p406 = pneg %p225
        %p407 = pneg %p254
        %p408 = pneg %p251
        %s409 = sand.u32 %s241, 1
        %s410 = scalar_lea.sflag [#allocation3], %s409
        %s411 = sand.u32 %s241, 1
        %s412 = smul.addr %s411, 80
        %s413 = scalar_lea.vmem [#allocation2], %s412
        %p414 = pneg %p280
        %p415 = pneg %p277
        %s416 = sand.u32 %s267, 1
        %s417 = scalar_lea.sflag [#allocation5], %s416
        %s418 = sand.u32 %s267, 1
        %s419 = smul.addr %s418, 10
        %s420 = scalar_lea.vmem [#allocation4], %s419
        %p421 = pneg %p306
        %p422 = pneg %p303
        %p423 = scmp.lt.s32.totalorder %s29, 1
        %s424 = scalar_select %p423, %s29, 1
        %s425 = scalar_lea.vmem %s11, %s424
        %p426 = scmp.lt.s32.totalorder %s29, 1
        %s427 = scalar_select %p426, %s29, 1
        %s428 = smul.addr %s427, 640
        %s429 = smul.addr %s428, 8
        %s430 = scalar_lea.vmem %s0, %s429
        %p431 = scmp.lt.s32.totalorder %s29, 1
        %s432 = scalar_select %p431, %s29, 1
        %s433 = smul.addr %s432, 640
        %s434 = smul.addr %s433, 8
        %s435 = scalar_lea.vmem %s1, %s434
        %p436 = scmp.lt.s32.totalorder %s29, 1
        %s437 = scalar_select %p436, %s29, 1
        %s438 = smul.addr %s437, 4
        %s439 = smul.addr %s438, 8
        %s440 = scalar_lea.vmem %s2, %s439
        %p441 = scmp.lt.s32.totalorder %s29, 1
        %s442 = scalar_select %p441, %s29, 1
        %s443 = scalar_lea.vmem %s11, %s442
        %v444 = vld [vmem:[%s430] sm:$0xff]
        %v445 = vld [vmem:[%s430 + $0x8] sm:$0xff]
        %v446 = vld [vmem:[%s430 + $0x10] sm:$0xff]
        %v447 = vld [vmem:[%s430 + $0x18] sm:$0xff]
        %v448 = vld [vmem:[%s430 + $0x20] sm:$0xff]
        %v449 = vld [vmem:[%s430 + $0x28] sm:$0xff]
        %v450 = vld [vmem:[%s430 + $0x30] sm:$0xff]
        %v451 = vld [vmem:[%s430 + $0x38] sm:$0xff]
        %v452 = vld [vmem:[%s430 + $0x40] sm:$0xff]
        %v453 = vld [vmem:[%s430 + $0x48] sm:$0xff]
        %v454 = vld [vmem:[%s430 + $0x50] sm:$0xff]
        %v455 = vld [vmem:[%s430 + $0x58] sm:$0xff]
        %v456 = vld [vmem:[%s430 + $0x60] sm:$0xff]
        %v457 = vld [vmem:[%s430 + $0x68] sm:$0xff]
        %v458 = vld [vmem:[%s430 + $0x70] sm:$0xff]
        %v459 = vld [vmem:[%s430 + $0x78] sm:$0xff]
        %v460 = vld [vmem:[%s430 + $0x80] sm:$0xff]
        %v461 = vld [vmem:[%s430 + $0x88] sm:$0xff]
        %v462 = vld [vmem:[%s430 + $0x90] sm:$0xff]
        %v463 = vld [vmem:[%s430 + $0x98] sm:$0xff]
        %v464 = vld [vmem:[%s430 + $0xa0] sm:$0xff]
        %v465 = vld [vmem:[%s430 + $0xa8] sm:$0xff]
        %v466 = vld [vmem:[%s430 + $0xb0] sm:$0xff]
        %v467 = vld [vmem:[%s430 + $0xb8] sm:$0xff]
        %v468 = vld [vmem:[%s430 + $0xc0] sm:$0xff]
        %v469 = vld [vmem:[%s430 + $0xc8] sm:$0xff]
        %v470 = vld [vmem:[%s430 + $0xd0] sm:$0xff]
        %v471 = vld [vmem:[%s430 + $0xd8] sm:$0xff]
        %v472 = vld [vmem:[%s430 + $0xe0] sm:$0xff]
        %v473 = vld [vmem:[%s430 + $0xe8] sm:$0xff]
        %v474 = vld [vmem:[%s430 + $0xf0] sm:$0xff]
        %v475 = vld [vmem:[%s430 + $0xf8] sm:$0xff]
        %v476 = vld [vmem:[%s430 + $0x100] sm:$0xff]
        %v477 = vld [vmem:[%s430 + $0x108] sm:$0xff]
        %v478 = vld [vmem:[%s430 + $0x110] sm:$0xff]
        %v479 = vld [vmem:[%s430 + $0x118] sm:$0xff]
        %v480 = vld [vmem:[%s430 + $0x120] sm:$0xff]
        %v481 = vld [vmem:[%s430 + $0x128] sm:$0xff]
        %v482 = vld [vmem:[%s430 + $0x130] sm:$0xff]
        %v483 = vld [vmem:[%s430 + $0x138] sm:$0xff]
        %v484 = vld [vmem:[%s430 + $0x140] sm:$0xff]
        %v485 = vld [vmem:[%s430 + $0x148] sm:$0xff]
        %v486 = vld [vmem:[%s430 + $0x150] sm:$0xff]
        %v487 = vld [vmem:[%s430 + $0x158] sm:$0xff]
        %v488 = vld [vmem:[%s430 + $0x160] sm:$0xff]
        %v489 = vld [vmem:[%s430 + $0x168] sm:$0xff]
        %v490 = vld [vmem:[%s430 + $0x170] sm:$0xff]
        %v491 = vld [vmem:[%s430 + $0x178] sm:$0xff]
        %v492 = vld [vmem:[%s430 + $0x180] sm:$0xff]
        %v493 = vld [vmem:[%s430 + $0x188] sm:$0xff]
        %v494 = vld [vmem:[%s430 + $0x190] sm:$0xff]
        %v495 = vld [vmem:[%s430 + $0x198] sm:$0xff]
        %v496 = vld [vmem:[%s430 + $0x1a0] sm:$0xff]
        %v497 = vld [vmem:[%s430 + $0x1a8] sm:$0xff]
        %v498 = vld [vmem:[%s430 + $0x1b0] sm:$0xff]
        %v499 = vld [vmem:[%s430 + $0x1b8] sm:$0xff]
        %v500 = vld [vmem:[%s430 + $0x1c0] sm:$0xff]
        %v501 = vld [vmem:[%s430 + $0x1c8] sm:$0xff]
        %v502 = vld [vmem:[%s430 + $0x1d0] sm:$0xff]
        %v503 = vld [vmem:[%s430 + $0x1d8] sm:$0xff]
        %v504 = vld [vmem:[%s430 + $0x1e0] sm:$0xff]
        %v505 = vld [vmem:[%s430 + $0x1e8] sm:$0xff]
        %v506 = vld [vmem:[%s430 + $0x1f0] sm:$0xff]
        %v507 = vld [vmem:[%s430 + $0x1f8] sm:$0xff]
        %v508 = vld [vmem:[%s430 + $0x200] sm:$0xff]
        %v509 = vld [vmem:[%s430 + $0x208] sm:$0xff]
        %v510 = vld [vmem:[%s430 + $0x210] sm:$0xff]
        %v511 = vld [vmem:[%s430 + $0x218] sm:$0xff]
        %v512 = vld [vmem:[%s430 + $0x220] sm:$0xff]
        %v513 = vld [vmem:[%s430 + $0x228] sm:$0xff]
        %v514 = vld [vmem:[%s430 + $0x230] sm:$0xff]
        %v515 = vld [vmem:[%s430 + $0x238] sm:$0xff]
        %v516 = vld [vmem:[%s430 + $0x240] sm:$0xff]
        %v517 = vld [vmem:[%s430 + $0x248] sm:$0xff]
        %v518 = vld [vmem:[%s430 + $0x250] sm:$0xff]
        %v519 = vld [vmem:[%s430 + $0x258] sm:$0xff]
        %v520 = vld [vmem:[%s430 + $0x260] sm:$0xff]
        %v521 = vld [vmem:[%s430 + $0x268] sm:$0xff]
        %v522 = vld [vmem:[%s430 + $0x270] sm:$0xff]
        %v523 = vld [vmem:[%s430 + $0x278] sm:$0xff]
        %v524 = vld [vmem:[%s430 + $0x280] sm:$0xff]
        %v525 = vld [vmem:[%s430 + $0x288] sm:$0xff]
        %v526 = vld [vmem:[%s430 + $0x290] sm:$0xff]
        %v527 = vld [vmem:[%s430 + $0x298] sm:$0xff]
        %v528 = vld [vmem:[%s430 + $0x2a0] sm:$0xff]
        %v529 = vld [vmem:[%s430 + $0x2a8] sm:$0xff]
        %v530 = vld [vmem:[%s430 + $0x2b0] sm:$0xff]
        %v531 = vld [vmem:[%s430 + $0x2b8] sm:$0xff]
        %v532 = vld [vmem:[%s430 + $0x2c0] sm:$0xff]
        %v533 = vld [vmem:[%s430 + $0x2c8] sm:$0xff]
        %v534 = vld [vmem:[%s430 + $0x2d0] sm:$0xff]
        %v535 = vld [vmem:[%s430 + $0x2d8] sm:$0xff]
        %v536 = vld [vmem:[%s430 + $0x2e0] sm:$0xff]
        %v537 = vld [vmem:[%s430 + $0x2e8] sm:$0xff]
        %v538 = vld [vmem:[%s430 + $0x2f0] sm:$0xff]
        %v539 = vld [vmem:[%s430 + $0x2f8] sm:$0xff]
        %v540 = vld [vmem:[%s430 + $0x300] sm:$0xff]
        %v541 = vld [vmem:[%s430 + $0x308] sm:$0xff]
        %v542 = vld [vmem:[%s430 + $0x310] sm:$0xff]
        %v543 = vld [vmem:[%s430 + $0x318] sm:$0xff]
        %v544 = vld [vmem:[%s430 + $0x320] sm:$0xff]
        %v545 = vld [vmem:[%s430 + $0x328] sm:$0xff]
        %v546 = vld [vmem:[%s430 + $0x330] sm:$0xff]
        %v547 = vld [vmem:[%s430 + $0x338] sm:$0xff]
        %v548 = vld [vmem:[%s430 + $0x340] sm:$0xff]
        %v549 = vld [vmem:[%s430 + $0x348] sm:$0xff]
        %v550 = vld [vmem:[%s430 + $0x350] sm:$0xff]
        %v551 = vld [vmem:[%s430 + $0x358] sm:$0xff]
        %v552 = vld [vmem:[%s430 + $0x360] sm:$0xff]
        %v553 = vld [vmem:[%s430 + $0x368] sm:$0xff]
        %v554 = vld [vmem:[%s430 + $0x370] sm:$0xff]
        %v555 = vld [vmem:[%s430 + $0x378] sm:$0xff]
        %v556 = vld [vmem:[%s430 + $0x380] sm:$0xff]
        %v557 = vld [vmem:[%s430 + $0x388] sm:$0xff]
        %v558 = vld [vmem:[%s430 + $0x390] sm:$0xff]
        %v559 = vld [vmem:[%s430 + $0x398] sm:$0xff]
        %v560 = vld [vmem:[%s430 + $0x3a0] sm:$0xff]
        %v561 = vld [vmem:[%s430 + $0x3a8] sm:$0xff]
        %v562 = vld [vmem:[%s430 + $0x3b0] sm:$0xff]
        %v563 = vld [vmem:[%s430 + $0x3b8] sm:$0xff]
        %v564 = vld [vmem:[%s430 + $0x3c0] sm:$0xff]
        %v565 = vld [vmem:[%s430 + $0x3c8] sm:$0xff]
        %v566 = vld [vmem:[%s430 + $0x3d0] sm:$0xff]
        %v567 = vld [vmem:[%s430 + $0x3d8] sm:$0xff]
        %v568 = vld [vmem:[%s430 + $0x3e0] sm:$0xff]
        %v569 = vld [vmem:[%s430 + $0x3e8] sm:$0xff]
        %v570 = vld [vmem:[%s430 + $0x3f0] sm:$0xff]
        %v571 = vld [vmem:[%s430 + $0x3f8] sm:$0xff]
        %v572 = vld [vmem:[%s430 + $0x400] sm:$0xff]
        %v573 = vld [vmem:[%s430 + $0x408] sm:$0xff]
        %v574 = vld [vmem:[%s430 + $0x410] sm:$0xff]
        %v575 = vld [vmem:[%s430 + $0x418] sm:$0xff]
        %v576 = vld [vmem:[%s430 + $0x420] sm:$0xff]
        %v577 = vld [vmem:[%s430 + $0x428] sm:$0xff]
        %v578 = vld [vmem:[%s430 + $0x430] sm:$0xff]
        %v579 = vld [vmem:[%s430 + $0x438] sm:$0xff]
        %v580 = vld [vmem:[%s430 + $0x440] sm:$0xff]
        %v581 = vld [vmem:[%s430 + $0x448] sm:$0xff]
        %v582 = vld [vmem:[%s430 + $0x450] sm:$0xff]
        %v583 = vld [vmem:[%s430 + $0x458] sm:$0xff]
        %v584 = vld [vmem:[%s430 + $0x460] sm:$0xff]
        %v585 = vld [vmem:[%s430 + $0x468] sm:$0xff]
        %v586 = vld [vmem:[%s430 + $0x470] sm:$0xff]
        %v587 = vld [vmem:[%s430 + $0x478] sm:$0xff]
        %v588 = vld [vmem:[%s430 + $0x480] sm:$0xff]
        %v589 = vld [vmem:[%s430 + $0x488] sm:$0xff]
        %v590 = vld [vmem:[%s430 + $0x490] sm:$0xff]
        %v591 = vld [vmem:[%s430 + $0x498] sm:$0xff]
        %v592 = vld [vmem:[%s430 + $0x4a0] sm:$0xff]
        %v593 = vld [vmem:[%s430 + $0x4a8] sm:$0xff]
        %v594 = vld [vmem:[%s430 + $0x4b0] sm:$0xff]
        %v595 = vld [vmem:[%s430 + $0x4b8] sm:$0xff]
        %v596 = vld [vmem:[%s430 + $0x4c0] sm:$0xff]
        %v597 = vld [vmem:[%s430 + $0x4c8] sm:$0xff]
        %v598 = vld [vmem:[%s430 + $0x4d0] sm:$0xff]
        %v599 = vld [vmem:[%s430 + $0x4d8] sm:$0xff]
        %v600 = vld [vmem:[%s430 + $0x4e0] sm:$0xff]
        %v601 = vld [vmem:[%s430 + $0x4e8] sm:$0xff]
        %v602 = vld [vmem:[%s430 + $0x4f0] sm:$0xff]
        %v603 = vld [vmem:[%s430 + $0x4f8] sm:$0xff]
        %v604 = vld [vmem:[%s430 + $0x500] sm:$0xff]
        %v605 = vld [vmem:[%s430 + $0x508] sm:$0xff]
        %v606 = vld [vmem:[%s430 + $0x510] sm:$0xff]
        %v607 = vld [vmem:[%s430 + $0x518] sm:$0xff]
        %v608 = vld [vmem:[%s430 + $0x520] sm:$0xff]
        %v609 = vld [vmem:[%s430 + $0x528] sm:$0xff]
        %v610 = vld [vmem:[%s430 + $0x530] sm:$0xff]
        %v611 = vld [vmem:[%s430 + $0x538] sm:$0xff]
        %v612 = vld [vmem:[%s430 + $0x540] sm:$0xff]
        %v613 = vld [vmem:[%s430 + $0x548] sm:$0xff]
        %v614 = vld [vmem:[%s430 + $0x550] sm:$0xff]
        %v615 = vld [vmem:[%s430 + $0x558] sm:$0xff]
        %v616 = vld [vmem:[%s430 + $0x560] sm:$0xff]
        %v617 = vld [vmem:[%s430 + $0x568] sm:$0xff]
        %v618 = vld [vmem:[%s430 + $0x570] sm:$0xff]
        %v619 = vld [vmem:[%s430 + $0x578] sm:$0xff]
        %v620 = vld [vmem:[%s430 + $0x580] sm:$0xff]
        %v621 = vld [vmem:[%s430 + $0x588] sm:$0xff]
        %v622 = vld [vmem:[%s430 + $0x590] sm:$0xff]
        %v623 = vld [vmem:[%s430 + $0x598] sm:$0xff]
        %v624 = vld [vmem:[%s430 + $0x5a0] sm:$0xff]
        %v625 = vld [vmem:[%s430 + $0x5a8] sm:$0xff]
        %v626 = vld [vmem:[%s430 + $0x5b0] sm:$0xff]
        %v627 = vld [vmem:[%s430 + $0x5b8] sm:$0xff]
        %v628 = vld [vmem:[%s430 + $0x5c0] sm:$0xff]
        %v629 = vld [vmem:[%s430 + $0x5c8] sm:$0xff]
        %v630 = vld [vmem:[%s430 + $0x5d0] sm:$0xff]
        %v631 = vld [vmem:[%s430 + $0x5d8] sm:$0xff]
        %v632 = vld [vmem:[%s430 + $0x5e0] sm:$0xff]
        %v633 = vld [vmem:[%s430 + $0x5e8] sm:$0xff]
        %v634 = vld [vmem:[%s430 + $0x5f0] sm:$0xff]
        %v635 = vld [vmem:[%s430 + $0x5f8] sm:$0xff]
        %v636 = vld [vmem:[%s430 + $0x600] sm:$0xff]
        %v637 = vld [vmem:[%s430 + $0x608] sm:$0xff]
        %v638 = vld [vmem:[%s430 + $0x610] sm:$0xff]
        %v639 = vld [vmem:[%s430 + $0x618] sm:$0xff]
        %v640 = vld [vmem:[%s430 + $0x620] sm:$0xff]
        %v641 = vld [vmem:[%s430 + $0x628] sm:$0xff]
        %v642 = vld [vmem:[%s430 + $0x630] sm:$0xff]
        %v643 = vld [vmem:[%s430 + $0x638] sm:$0xff]
        %v644 = vld [vmem:[%s430 + $0x640] sm:$0xff]
        %v645 = vld [vmem:[%s430 + $0x648] sm:$0xff]
        %v646 = vld [vmem:[%s430 + $0x650] sm:$0xff]
        %v647 = vld [vmem:[%s430 + $0x658] sm:$0xff]
        %v648 = vld [vmem:[%s430 + $0x660] sm:$0xff]
        %v649 = vld [vmem:[%s430 + $0x668] sm:$0xff]
        %v650 = vld [vmem:[%s430 + $0x670] sm:$0xff]
        %v651 = vld [vmem:[%s430 + $0x678] sm:$0xff]
        %v652 = vld [vmem:[%s430 + $0x680] sm:$0xff]
        %v653 = vld [vmem:[%s430 + $0x688] sm:$0xff]
        %v654 = vld [vmem:[%s430 + $0x690] sm:$0xff]
        %v655 = vld [vmem:[%s430 + $0x698] sm:$0xff]
        %v656 = vld [vmem:[%s430 + $0x6a0] sm:$0xff]
        %v657 = vld [vmem:[%s430 + $0x6a8] sm:$0xff]
        %v658 = vld [vmem:[%s430 + $0x6b0] sm:$0xff]
        %v659 = vld [vmem:[%s430 + $0x6b8] sm:$0xff]
        %v660 = vld [vmem:[%s430 + $0x6c0] sm:$0xff]
        %v661 = vld [vmem:[%s430 + $0x6c8] sm:$0xff]
        %v662 = vld [vmem:[%s430 + $0x6d0] sm:$0xff]
        %v663 = vld [vmem:[%s430 + $0x6d8] sm:$0xff]
        %v664 = vld [vmem:[%s430 + $0x6e0] sm:$0xff]
        %v665 = vld [vmem:[%s430 + $0x6e8] sm:$0xff]
        %v666 = vld [vmem:[%s430 + $0x6f0] sm:$0xff]
        %v667 = vld [vmem:[%s430 + $0x6f8] sm:$0xff]
        %v668 = vld [vmem:[%s430 + $0x700] sm:$0xff]
        %v669 = vld [vmem:[%s430 + $0x708] sm:$0xff]
        %v670 = vld [vmem:[%s430 + $0x710] sm:$0xff]
        %v671 = vld [vmem:[%s430 + $0x718] sm:$0xff]
        %v672 = vld [vmem:[%s430 + $0x720] sm:$0xff]
        %v673 = vld [vmem:[%s430 + $0x728] sm:$0xff]
        %v674 = vld [vmem:[%s430 + $0x730] sm:$0xff]
        %v675 = vld [vmem:[%s430 + $0x738] sm:$0xff]
        %v676 = vld [vmem:[%s430 + $0x740] sm:$0xff]
        %v677 = vld [vmem:[%s430 + $0x748] sm:$0xff]
        %v678 = vld [vmem:[%s430 + $0x750] sm:$0xff]
        %v679 = vld [vmem:[%s430 + $0x758] sm:$0xff]
        %v680 = vld [vmem:[%s430 + $0x760] sm:$0xff]
        %v681 = vld [vmem:[%s430 + $0x768] sm:$0xff]
        %v682 = vld [vmem:[%s430 + $0x770] sm:$0xff]
        %v683 = vld [vmem:[%s430 + $0x778] sm:$0xff]
        %v684 = vld [vmem:[%s430 + $0x780] sm:$0xff]
        %v685 = vld [vmem:[%s430 + $0x788] sm:$0xff]
        %v686 = vld [vmem:[%s430 + $0x790] sm:$0xff]
        %v687 = vld [vmem:[%s430 + $0x798] sm:$0xff]
        %v688 = vld [vmem:[%s430 + $0x7a0] sm:$0xff]
        %v689 = vld [vmem:[%s430 + $0x7a8] sm:$0xff]
        %v690 = vld [vmem:[%s430 + $0x7b0] sm:$0xff]
        %v691 = vld [vmem:[%s430 + $0x7b8] sm:$0xff]
        %v692 = vld [vmem:[%s430 + $0x7c0] sm:$0xff]
        %v693 = vld [vmem:[%s430 + $0x7c8] sm:$0xff]
        %v694 = vld [vmem:[%s430 + $0x7d0] sm:$0xff]
        %v695 = vld [vmem:[%s430 + $0x7d8] sm:$0xff]
        %v696 = vld [vmem:[%s430 + $0x7e0] sm:$0xff]
        %v697 = vld [vmem:[%s430 + $0x7e8] sm:$0xff]
        %v698 = vld [vmem:[%s430 + $0x7f0] sm:$0xff]
        %v699 = vld [vmem:[%s430 + $0x7f8] sm:$0xff]
        %v700 = vld [vmem:[%s430 + $0x800] sm:$0xff]
        %v701 = vld [vmem:[%s430 + $0x808] sm:$0xff]
        %v702 = vld [vmem:[%s430 + $0x810] sm:$0xff]
        %v703 = vld [vmem:[%s430 + $0x818] sm:$0xff]
        %v704 = vld [vmem:[%s430 + $0x820] sm:$0xff]
        %v705 = vld [vmem:[%s430 + $0x828] sm:$0xff]
        %v706 = vld [vmem:[%s430 + $0x830] sm:$0xff]
        %v707 = vld [vmem:[%s430 + $0x838] sm:$0xff]
        %v708 = vld [vmem:[%s430 + $0x840] sm:$0xff]
        %v709 = vld [vmem:[%s430 + $0x848] sm:$0xff]
        %v710 = vld [vmem:[%s430 + $0x850] sm:$0xff]
        %v711 = vld [vmem:[%s430 + $0x858] sm:$0xff]
        %v712 = vld [vmem:[%s430 + $0x860] sm:$0xff]
        %v713 = vld [vmem:[%s430 + $0x868] sm:$0xff]
        %v714 = vld [vmem:[%s430 + $0x870] sm:$0xff]
        %v715 = vld [vmem:[%s430 + $0x878] sm:$0xff]
        %v716 = vld [vmem:[%s430 + $0x880] sm:$0xff]
        %v717 = vld [vmem:[%s430 + $0x888] sm:$0xff]
        %v718 = vld [vmem:[%s430 + $0x890] sm:$0xff]
        %v719 = vld [vmem:[%s430 + $0x898] sm:$0xff]
        %v720 = vld [vmem:[%s430 + $0x8a0] sm:$0xff]
        %v721 = vld [vmem:[%s430 + $0x8a8] sm:$0xff]
        %v722 = vld [vmem:[%s430 + $0x8b0] sm:$0xff]
        %v723 = vld [vmem:[%s430 + $0x8b8] sm:$0xff]
        %v724 = vld [vmem:[%s430 + $0x8c0] sm:$0xff]
        %v725 = vld [vmem:[%s430 + $0x8c8] sm:$0xff]
        %v726 = vld [vmem:[%s430 + $0x8d0] sm:$0xff]
        %v727 = vld [vmem:[%s430 + $0x8d8] sm:$0xff]
        %v728 = vld [vmem:[%s430 + $0x8e0] sm:$0xff]
        %v729 = vld [vmem:[%s430 + $0x8e8] sm:$0xff]
        %v730 = vld [vmem:[%s430 + $0x8f0] sm:$0xff]
        %v731 = vld [vmem:[%s430 + $0x8f8] sm:$0xff]
        %v732 = vld [vmem:[%s430 + $0x900] sm:$0xff]
        %v733 = vld [vmem:[%s430 + $0x908] sm:$0xff]
        %v734 = vld [vmem:[%s430 + $0x910] sm:$0xff]
        %v735 = vld [vmem:[%s430 + $0x918] sm:$0xff]
        %v736 = vld [vmem:[%s430 + $0x920] sm:$0xff]
        %v737 = vld [vmem:[%s430 + $0x928] sm:$0xff]
        %v738 = vld [vmem:[%s430 + $0x930] sm:$0xff]
        %v739 = vld [vmem:[%s430 + $0x938] sm:$0xff]
        %v740 = vld [vmem:[%s430 + $0x940] sm:$0xff]
        %v741 = vld [vmem:[%s430 + $0x948] sm:$0xff]
        %v742 = vld [vmem:[%s430 + $0x950] sm:$0xff]
        %v743 = vld [vmem:[%s430 + $0x958] sm:$0xff]
        %v744 = vld [vmem:[%s430 + $0x960] sm:$0xff]
        %v745 = vld [vmem:[%s430 + $0x968] sm:$0xff]
        %v746 = vld [vmem:[%s430 + $0x970] sm:$0xff]
        %v747 = vld [vmem:[%s430 + $0x978] sm:$0xff]
        %v748 = vld [vmem:[%s430 + $0x980] sm:$0xff]
        %v749 = vld [vmem:[%s430 + $0x988] sm:$0xff]
        %v750 = vld [vmem:[%s430 + $0x990] sm:$0xff]
        %v751 = vld [vmem:[%s430 + $0x998] sm:$0xff]
        %v752 = vld [vmem:[%s430 + $0x9a0] sm:$0xff]
        %v753 = vld [vmem:[%s430 + $0x9a8] sm:$0xff]
        %v754 = vld [vmem:[%s430 + $0x9b0] sm:$0xff]
        %v755 = vld [vmem:[%s430 + $0x9b8] sm:$0xff]
        %v756 = vld [vmem:[%s430 + $0x9c0] sm:$0xff]
        %v757 = vld [vmem:[%s430 + $0x9c8] sm:$0xff]
        %v758 = vld [vmem:[%s430 + $0x9d0] sm:$0xff]
        %v759 = vld [vmem:[%s430 + $0x9d8] sm:$0xff]
        %v760 = vld [vmem:[%s430 + $0x9e0] sm:$0xff]
        %v761 = vld [vmem:[%s430 + $0x9e8] sm:$0xff]
        %v762 = vld [vmem:[%s430 + $0x9f0] sm:$0xff]
        %v763 = vld [vmem:[%s430 + $0x9f8] sm:$0xff]
        %v764 = vld [vmem:[%s430 + $0xa00] sm:$0xff]
        %v765 = vld [vmem:[%s430 + $0xa08] sm:$0xff]
        %v766 = vld [vmem:[%s430 + $0xa10] sm:$0xff]
        %v767 = vld [vmem:[%s430 + $0xa18] sm:$0xff]
        %v768 = vld [vmem:[%s430 + $0xa20] sm:$0xff]
        %v769 = vld [vmem:[%s430 + $0xa28] sm:$0xff]
        %v770 = vld [vmem:[%s430 + $0xa30] sm:$0xff]
        %v771 = vld [vmem:[%s430 + $0xa38] sm:$0xff]
        %v772 = vld [vmem:[%s430 + $0xa40] sm:$0xff]
        %v773 = vld [vmem:[%s430 + $0xa48] sm:$0xff]
        %v774 = vld [vmem:[%s430 + $0xa50] sm:$0xff]
        %v775 = vld [vmem:[%s430 + $0xa58] sm:$0xff]
        %v776 = vld [vmem:[%s430 + $0xa60] sm:$0xff]
        %v777 = vld [vmem:[%s430 + $0xa68] sm:$0xff]
        %v778 = vld [vmem:[%s430 + $0xa70] sm:$0xff]
        %v779 = vld [vmem:[%s430 + $0xa78] sm:$0xff]
        %v780 = vld [vmem:[%s430 + $0xa80] sm:$0xff]
        %v781 = vld [vmem:[%s430 + $0xa88] sm:$0xff]
        %v782 = vld [vmem:[%s430 + $0xa90] sm:$0xff]
        %v783 = vld [vmem:[%s430 + $0xa98] sm:$0xff]
        %v784 = vld [vmem:[%s430 + $0xaa0] sm:$0xff]
        %v785 = vld [vmem:[%s430 + $0xaa8] sm:$0xff]
        %v786 = vld [vmem:[%s430 + $0xab0] sm:$0xff]
        %v787 = vld [vmem:[%s430 + $0xab8] sm:$0xff]
        %v788 = vld [vmem:[%s430 + $0xac0] sm:$0xff]
        %v789 = vld [vmem:[%s430 + $0xac8] sm:$0xff]
        %v790 = vld [vmem:[%s430 + $0xad0] sm:$0xff]
        %v791 = vld [vmem:[%s430 + $0xad8] sm:$0xff]
        %v792 = vld [vmem:[%s430 + $0xae0] sm:$0xff]
        %v793 = vld [vmem:[%s430 + $0xae8] sm:$0xff]
        %v794 = vld [vmem:[%s430 + $0xaf0] sm:$0xff]
        %v795 = vld [vmem:[%s430 + $0xaf8] sm:$0xff]
        %v796 = vld [vmem:[%s430 + $0xb00] sm:$0xff]
        %v797 = vld [vmem:[%s430 + $0xb08] sm:$0xff]
        %v798 = vld [vmem:[%s430 + $0xb10] sm:$0xff]
        %v799 = vld [vmem:[%s430 + $0xb18] sm:$0xff]
        %v800 = vld [vmem:[%s430 + $0xb20] sm:$0xff]
        %v801 = vld [vmem:[%s430 + $0xb28] sm:$0xff]
        %v802 = vld [vmem:[%s430 + $0xb30] sm:$0xff]
        %v803 = vld [vmem:[%s430 + $0xb38] sm:$0xff]
        %v804 = vld [vmem:[%s430 + $0xb40] sm:$0xff]
        %v805 = vld [vmem:[%s430 + $0xb48] sm:$0xff]
        %v806 = vld [vmem:[%s430 + $0xb50] sm:$0xff]
        %v807 = vld [vmem:[%s430 + $0xb58] sm:$0xff]
        %v808 = vld [vmem:[%s430 + $0xb60] sm:$0xff]
        %v809 = vld [vmem:[%s430 + $0xb68] sm:$0xff]
        %v810 = vld [vmem:[%s430 + $0xb70] sm:$0xff]
        %v811 = vld [vmem:[%s430 + $0xb78] sm:$0xff]
        %v812 = vld [vmem:[%s430 + $0xb80] sm:$0xff]
        %v813 = vld [vmem:[%s430 + $0xb88] sm:$0xff]
        %v814 = vld [vmem:[%s430 + $0xb90] sm:$0xff]
        %v815 = vld [vmem:[%s430 + $0xb98] sm:$0xff]
        %v816 = vld [vmem:[%s430 + $0xba0] sm:$0xff]
        %v817 = vld [vmem:[%s430 + $0xba8] sm:$0xff]
        %v818 = vld [vmem:[%s430 + $0xbb0] sm:$0xff]
        %v819 = vld [vmem:[%s430 + $0xbb8] sm:$0xff]
        %v820 = vld [vmem:[%s430 + $0xbc0] sm:$0xff]
        %v821 = vld [vmem:[%s430 + $0xbc8] sm:$0xff]
        %v822 = vld [vmem:[%s430 + $0xbd0] sm:$0xff]
        %v823 = vld [vmem:[%s430 + $0xbd8] sm:$0xff]
        %v824 = vld [vmem:[%s430 + $0xbe0] sm:$0xff]
        %v825 = vld [vmem:[%s430 + $0xbe8] sm:$0xff]
        %v826 = vld [vmem:[%s430 + $0xbf0] sm:$0xff]
        %v827 = vld [vmem:[%s430 + $0xbf8] sm:$0xff]
        %v828 = vld [vmem:[%s430 + $0xc00] sm:$0xff]
        %v829 = vld [vmem:[%s430 + $0xc08] sm:$0xff]
        %v830 = vld [vmem:[%s430 + $0xc10] sm:$0xff]
        %v831 = vld [vmem:[%s430 + $0xc18] sm:$0xff]
        %v832 = vld [vmem:[%s430 + $0xc20] sm:$0xff]
        %v833 = vld [vmem:[%s430 + $0xc28] sm:$0xff]
        %v834 = vld [vmem:[%s430 + $0xc30] sm:$0xff]
        %v835 = vld [vmem:[%s430 + $0xc38] sm:$0xff]
        %v836 = vld [vmem:[%s430 + $0xc40] sm:$0xff]
        %v837 = vld [vmem:[%s430 + $0xc48] sm:$0xff]
        %v838 = vld [vmem:[%s430 + $0xc50] sm:$0xff]
        %v839 = vld [vmem:[%s430 + $0xc58] sm:$0xff]
        %v840 = vld [vmem:[%s430 + $0xc60] sm:$0xff]
        %v841 = vld [vmem:[%s430 + $0xc68] sm:$0xff]
        %v842 = vld [vmem:[%s430 + $0xc70] sm:$0xff]
        %v843 = vld [vmem:[%s430 + $0xc78] sm:$0xff]
        %v844 = vld [vmem:[%s430 + $0xc80] sm:$0xff]
        %v845 = vld [vmem:[%s430 + $0xc88] sm:$0xff]
        %v846 = vld [vmem:[%s430 + $0xc90] sm:$0xff]
        %v847 = vld [vmem:[%s430 + $0xc98] sm:$0xff]
        %v848 = vld [vmem:[%s430 + $0xca0] sm:$0xff]
        %v849 = vld [vmem:[%s430 + $0xca8] sm:$0xff]
        %v850 = vld [vmem:[%s430 + $0xcb0] sm:$0xff]
        %v851 = vld [vmem:[%s430 + $0xcb8] sm:$0xff]
        %v852 = vld [vmem:[%s430 + $0xcc0] sm:$0xff]
        %v853 = vld [vmem:[%s430 + $0xcc8] sm:$0xff]
        %v854 = vld [vmem:[%s430 + $0xcd0] sm:$0xff]
        %v855 = vld [vmem:[%s430 + $0xcd8] sm:$0xff]
        %v856 = vld [vmem:[%s430 + $0xce0] sm:$0xff]
        %v857 = vld [vmem:[%s430 + $0xce8] sm:$0xff]
        %v858 = vld [vmem:[%s430 + $0xcf0] sm:$0xff]
        %v859 = vld [vmem:[%s430 + $0xcf8] sm:$0xff]
        %v860 = vld [vmem:[%s430 + $0xd00] sm:$0xff]
        %v861 = vld [vmem:[%s430 + $0xd08] sm:$0xff]
        %v862 = vld [vmem:[%s430 + $0xd10] sm:$0xff]
        %v863 = vld [vmem:[%s430 + $0xd18] sm:$0xff]
        %v864 = vld [vmem:[%s430 + $0xd20] sm:$0xff]
        %v865 = vld [vmem:[%s430 + $0xd28] sm:$0xff]
        %v866 = vld [vmem:[%s430 + $0xd30] sm:$0xff]
        %v867 = vld [vmem:[%s430 + $0xd38] sm:$0xff]
        %v868 = vld [vmem:[%s430 + $0xd40] sm:$0xff]
        %v869 = vld [vmem:[%s430 + $0xd48] sm:$0xff]
        %v870 = vld [vmem:[%s430 + $0xd50] sm:$0xff]
        %v871 = vld [vmem:[%s430 + $0xd58] sm:$0xff]
        %v872 = vld [vmem:[%s430 + $0xd60] sm:$0xff]
        %v873 = vld [vmem:[%s430 + $0xd68] sm:$0xff]
        %v874 = vld [vmem:[%s430 + $0xd70] sm:$0xff]
        %v875 = vld [vmem:[%s430 + $0xd78] sm:$0xff]
        %v876 = vld [vmem:[%s430 + $0xd80] sm:$0xff]
        %v877 = vld [vmem:[%s430 + $0xd88] sm:$0xff]
        %v878 = vld [vmem:[%s430 + $0xd90] sm:$0xff]
        %v879 = vld [vmem:[%s430 + $0xd98] sm:$0xff]
        %v880 = vld [vmem:[%s430 + $0xda0] sm:$0xff]
        %v881 = vld [vmem:[%s430 + $0xda8] sm:$0xff]
        %v882 = vld [vmem:[%s430 + $0xdb0] sm:$0xff]
        %v883 = vld [vmem:[%s430 + $0xdb8] sm:$0xff]
        %v884 = vld [vmem:[%s430 + $0xdc0] sm:$0xff]
        %v885 = vld [vmem:[%s430 + $0xdc8] sm:$0xff]
        %v886 = vld [vmem:[%s430 + $0xdd0] sm:$0xff]
        %v887 = vld [vmem:[%s430 + $0xdd8] sm:$0xff]
        %v888 = vld [vmem:[%s430 + $0xde0] sm:$0xff]
        %v889 = vld [vmem:[%s430 + $0xde8] sm:$0xff]
        %v890 = vld [vmem:[%s430 + $0xdf0] sm:$0xff]
        %v891 = vld [vmem:[%s430 + $0xdf8] sm:$0xff]
        %v892 = vld [vmem:[%s430 + $0xe00] sm:$0xff]
        %v893 = vld [vmem:[%s430 + $0xe08] sm:$0xff]
        %v894 = vld [vmem:[%s430 + $0xe10] sm:$0xff]
        %v895 = vld [vmem:[%s430 + $0xe18] sm:$0xff]
        %v896 = vld [vmem:[%s430 + $0xe20] sm:$0xff]
        %v897 = vld [vmem:[%s430 + $0xe28] sm:$0xff]
        %v898 = vld [vmem:[%s430 + $0xe30] sm:$0xff]
        %v899 = vld [vmem:[%s430 + $0xe38] sm:$0xff]
        %v900 = vld [vmem:[%s430 + $0xe40] sm:$0xff]
        %v901 = vld [vmem:[%s430 + $0xe48] sm:$0xff]
        %v902 = vld [vmem:[%s430 + $0xe50] sm:$0xff]
        %v903 = vld [vmem:[%s430 + $0xe58] sm:$0xff]
        %v904 = vld [vmem:[%s430 + $0xe60] sm:$0xff]
        %v905 = vld [vmem:[%s430 + $0xe68] sm:$0xff]
        %v906 = vld [vmem:[%s430 + $0xe70] sm:$0xff]
        %v907 = vld [vmem:[%s430 + $0xe78] sm:$0xff]
        %v908 = vld [vmem:[%s430 + $0xe80] sm:$0xff]
        %v909 = vld [vmem:[%s430 + $0xe88] sm:$0xff]
        %v910 = vld [vmem:[%s430 + $0xe90] sm:$0xff]
        %v911 = vld [vmem:[%s430 + $0xe98] sm:$0xff]
        %v912 = vld [vmem:[%s430 + $0xea0] sm:$0xff]
        %v913 = vld [vmem:[%s430 + $0xea8] sm:$0xff]
        %v914 = vld [vmem:[%s430 + $0xeb0] sm:$0xff]
        %v915 = vld [vmem:[%s430 + $0xeb8] sm:$0xff]
        %v916 = vld [vmem:[%s430 + $0xec0] sm:$0xff]
        %v917 = vld [vmem:[%s430 + $0xec8] sm:$0xff]
        %v918 = vld [vmem:[%s430 + $0xed0] sm:$0xff]
        %v919 = vld [vmem:[%s430 + $0xed8] sm:$0xff]
        %v920 = vld [vmem:[%s430 + $0xee0] sm:$0xff]
        %v921 = vld [vmem:[%s430 + $0xee8] sm:$0xff]
        %v922 = vld [vmem:[%s430 + $0xef0] sm:$0xff]
        %v923 = vld [vmem:[%s430 + $0xef8] sm:$0xff]
        %v924 = vld [vmem:[%s430 + $0xf00] sm:$0xff]
        %v925 = vld [vmem:[%s430 + $0xf08] sm:$0xff]
        %v926 = vld [vmem:[%s430 + $0xf10] sm:$0xff]
        %v927 = vld [vmem:[%s430 + $0xf18] sm:$0xff]
        %v928 = vld [vmem:[%s430 + $0xf20] sm:$0xff]
        %v929 = vld [vmem:[%s430 + $0xf28] sm:$0xff]
        %v930 = vld [vmem:[%s430 + $0xf30] sm:$0xff]
        %v931 = vld [vmem:[%s430 + $0xf38] sm:$0xff]
        %v932 = vld [vmem:[%s430 + $0xf40] sm:$0xff]
        %v933 = vld [vmem:[%s430 + $0xf48] sm:$0xff]
        %v934 = vld [vmem:[%s430 + $0xf50] sm:$0xff]
        %v935 = vld [vmem:[%s430 + $0xf58] sm:$0xff]
        %v936 = vld [vmem:[%s430 + $0xf60] sm:$0xff]
        %v937 = vld [vmem:[%s430 + $0xf68] sm:$0xff]
        %v938 = vld [vmem:[%s430 + $0xf70] sm:$0xff]
        %v939 = vld [vmem:[%s430 + $0xf78] sm:$0xff]
        %v940 = vld [vmem:[%s430 + $0xf80] sm:$0xff]
        %v941 = vld [vmem:[%s430 + $0xf88] sm:$0xff]
        %v942 = vld [vmem:[%s430 + $0xf90] sm:$0xff]
        %v943 = vld [vmem:[%s430 + $0xf98] sm:$0xff]
        %v944 = vld [vmem:[%s430 + $0xfa0] sm:$0xff]
        %v945 = vld [vmem:[%s430 + $0xfa8] sm:$0xff]
        %v946 = vld [vmem:[%s430 + $0xfb0] sm:$0xff]
        %v947 = vld [vmem:[%s430 + $0xfb8] sm:$0xff]
        %v948 = vld [vmem:[%s430 + $0xfc0] sm:$0xff]
        %v949 = vld [vmem:[%s430 + $0xfc8] sm:$0xff]
        %v950 = vld [vmem:[%s430 + $0xfd0] sm:$0xff]
        %v951 = vld [vmem:[%s430 + $0xfd8] sm:$0xff]
        %v952 = vld [vmem:[%s430 + $0xfe0] sm:$0xff]
        %v953 = vld [vmem:[%s430 + $0xfe8] sm:$0xff]
        %v954 = vld [vmem:[%s430 + $0xff0] sm:$0xff]
        %v955 = vld [vmem:[%s430 + $0xff8] sm:$0xff]
        %v956 = vld [vmem:[%s430 + $0x1000] sm:$0xff]
        %v957 = vld [vmem:[%s430 + $0x1008] sm:$0xff]
        %v958 = vld [vmem:[%s430 + $0x1010] sm:$0xff]
        %v959 = vld [vmem:[%s430 + $0x1018] sm:$0xff]
        %v960 = vld [vmem:[%s430 + $0x1020] sm:$0xff]
        %v961 = vld [vmem:[%s430 + $0x1028] sm:$0xff]
        %v962 = vld [vmem:[%s430 + $0x1030] sm:$0xff]
        %v963 = vld [vmem:[%s430 + $0x1038] sm:$0xff]
        %v964 = vld [vmem:[%s430 + $0x1040] sm:$0xff]
        %v965 = vld [vmem:[%s430 + $0x1048] sm:$0xff]
        %v966 = vld [vmem:[%s430 + $0x1050] sm:$0xff]
        %v967 = vld [vmem:[%s430 + $0x1058] sm:$0xff]
        %v968 = vld [vmem:[%s430 + $0x1060] sm:$0xff]
        %v969 = vld [vmem:[%s430 + $0x1068] sm:$0xff]
        %v970 = vld [vmem:[%s430 + $0x1070] sm:$0xff]
        %v971 = vld [vmem:[%s430 + $0x1078] sm:$0xff]
        %v972 = vld [vmem:[%s430 + $0x1080] sm:$0xff]
        %v973 = vld [vmem:[%s430 + $0x1088] sm:$0xff]
        %v974 = vld [vmem:[%s430 + $0x1090] sm:$0xff]
        %v975 = vld [vmem:[%s430 + $0x1098] sm:$0xff]
        %v976 = vld [vmem:[%s430 + $0x10a0] sm:$0xff]
        %v977 = vld [vmem:[%s430 + $0x10a8] sm:$0xff]
        %v978 = vld [vmem:[%s430 + $0x10b0] sm:$0xff]
        %v979 = vld [vmem:[%s430 + $0x10b8] sm:$0xff]
        %v980 = vld [vmem:[%s430 + $0x10c0] sm:$0xff]
        %v981 = vld [vmem:[%s430 + $0x10c8] sm:$0xff]
        %v982 = vld [vmem:[%s430 + $0x10d0] sm:$0xff]
        %v983 = vld [vmem:[%s430 + $0x10d8] sm:$0xff]
        %v984 = vld [vmem:[%s430 + $0x10e0] sm:$0xff]
        %v985 = vld [vmem:[%s430 + $0x10e8] sm:$0xff]
        %v986 = vld [vmem:[%s430 + $0x10f0] sm:$0xff]
        %v987 = vld [vmem:[%s430 + $0x10f8] sm:$0xff]
        %v988 = vld [vmem:[%s430 + $0x1100] sm:$0xff]
        %v989 = vld [vmem:[%s430 + $0x1108] sm:$0xff]
        %v990 = vld [vmem:[%s430 + $0x1110] sm:$0xff]
        %v991 = vld [vmem:[%s430 + $0x1118] sm:$0xff]
        %v992 = vld [vmem:[%s430 + $0x1120] sm:$0xff]
        %v993 = vld [vmem:[%s430 + $0x1128] sm:$0xff]
        %v994 = vld [vmem:[%s430 + $0x1130] sm:$0xff]
        %v995 = vld [vmem:[%s430 + $0x1138] sm:$0xff]
        %v996 = vld [vmem:[%s430 + $0x1140] sm:$0xff]
        %v997 = vld [vmem:[%s430 + $0x1148] sm:$0xff]
        %v998 = vld [vmem:[%s430 + $0x1150] sm:$0xff]
        %v999 = vld [vmem:[%s430 + $0x1158] sm:$0xff]
        %v1000 = vld [vmem:[%s430 + $0x1160] sm:$0xff]
        %v1001 = vld [vmem:[%s430 + $0x1168] sm:$0xff]
        %v1002 = vld [vmem:[%s430 + $0x1170] sm:$0xff]
        %v1003 = vld [vmem:[%s430 + $0x1178] sm:$0xff]
        %v1004 = vld [vmem:[%s430 + $0x1180] sm:$0xff]
        %v1005 = vld [vmem:[%s430 + $0x1188] sm:$0xff]
        %v1006 = vld [vmem:[%s430 + $0x1190] sm:$0xff]
        %v1007 = vld [vmem:[%s430 + $0x1198] sm:$0xff]
        %v1008 = vld [vmem:[%s430 + $0x11a0] sm:$0xff]
        %v1009 = vld [vmem:[%s430 + $0x11a8] sm:$0xff]
        %v1010 = vld [vmem:[%s430 + $0x11b0] sm:$0xff]
        %v1011 = vld [vmem:[%s430 + $0x11b8] sm:$0xff]
        %v1012 = vld [vmem:[%s430 + $0x11c0] sm:$0xff]
        %v1013 = vld [vmem:[%s430 + $0x11c8] sm:$0xff]
        %v1014 = vld [vmem:[%s430 + $0x11d0] sm:$0xff]
        %v1015 = vld [vmem:[%s430 + $0x11d8] sm:$0xff]
        %v1016 = vld [vmem:[%s430 + $0x11e0] sm:$0xff]
        %v1017 = vld [vmem:[%s430 + $0x11e8] sm:$0xff]
        %v1018 = vld [vmem:[%s430 + $0x11f0] sm:$0xff]
        %v1019 = vld [vmem:[%s430 + $0x11f8] sm:$0xff]
        %v1020 = vld [vmem:[%s430 + $0x1200] sm:$0xff]
        %v1021 = vld [vmem:[%s430 + $0x1208] sm:$0xff]
        %v1022 = vld [vmem:[%s430 + $0x1210] sm:$0xff]
        %v1023 = vld [vmem:[%s430 + $0x1218] sm:$0xff]
        %v1024 = vld [vmem:[%s430 + $0x1220] sm:$0xff]
        %v1025 = vld [vmem:[%s430 + $0x1228] sm:$0xff]
        %v1026 = vld [vmem:[%s430 + $0x1230] sm:$0xff]
        %v1027 = vld [vmem:[%s430 + $0x1238] sm:$0xff]
        %v1028 = vld [vmem:[%s430 + $0x1240] sm:$0xff]
        %v1029 = vld [vmem:[%s430 + $0x1248] sm:$0xff]
        %v1030 = vld [vmem:[%s430 + $0x1250] sm:$0xff]
        %v1031 = vld [vmem:[%s430 + $0x1258] sm:$0xff]
        %v1032 = vld [vmem:[%s430 + $0x1260] sm:$0xff]
        %v1033 = vld [vmem:[%s430 + $0x1268] sm:$0xff]
        %v1034 = vld [vmem:[%s430 + $0x1270] sm:$0xff]
        %v1035 = vld [vmem:[%s430 + $0x1278] sm:$0xff]
        %v1036 = vld [vmem:[%s430 + $0x1280] sm:$0xff]
        %v1037 = vld [vmem:[%s430 + $0x1288] sm:$0xff]
        %v1038 = vld [vmem:[%s430 + $0x1290] sm:$0xff]
        %v1039 = vld [vmem:[%s430 + $0x1298] sm:$0xff]
        %v1040 = vld [vmem:[%s430 + $0x12a0] sm:$0xff]
        %v1041 = vld [vmem:[%s430 + $0x12a8] sm:$0xff]
        %v1042 = vld [vmem:[%s430 + $0x12b0] sm:$0xff]
        %v1043 = vld [vmem:[%s430 + $0x12b8] sm:$0xff]
        %v1044 = vld [vmem:[%s430 + $0x12c0] sm:$0xff]
        %v1045 = vld [vmem:[%s430 + $0x12c8] sm:$0xff]
        %v1046 = vld [vmem:[%s430 + $0x12d0] sm:$0xff]
        %v1047 = vld [vmem:[%s430 + $0x12d8] sm:$0xff]
        %v1048 = vld [vmem:[%s430 + $0x12e0] sm:$0xff]
        %v1049 = vld [vmem:[%s430 + $0x12e8] sm:$0xff]
        %v1050 = vld [vmem:[%s430 + $0x12f0] sm:$0xff]
        %v1051 = vld [vmem:[%s430 + $0x12f8] sm:$0xff]
        %v1052 = vld [vmem:[%s430 + $0x1300] sm:$0xff]
        %v1053 = vld [vmem:[%s430 + $0x1308] sm:$0xff]
        %v1054 = vld [vmem:[%s430 + $0x1310] sm:$0xff]
        %v1055 = vld [vmem:[%s430 + $0x1318] sm:$0xff]
        %v1056 = vld [vmem:[%s430 + $0x1320] sm:$0xff]
        %v1057 = vld [vmem:[%s430 + $0x1328] sm:$0xff]
        %v1058 = vld [vmem:[%s430 + $0x1330] sm:$0xff]
        %v1059 = vld [vmem:[%s430 + $0x1338] sm:$0xff]
        %v1060 = vld [vmem:[%s430 + $0x1340] sm:$0xff]
        %v1061 = vld [vmem:[%s430 + $0x1348] sm:$0xff]
        %v1062 = vld [vmem:[%s430 + $0x1350] sm:$0xff]
        %v1063 = vld [vmem:[%s430 + $0x1358] sm:$0xff]
        %v1064 = vld [vmem:[%s430 + $0x1360] sm:$0xff]
        %v1065 = vld [vmem:[%s430 + $0x1368] sm:$0xff]
        %v1066 = vld [vmem:[%s430 + $0x1370] sm:$0xff]
        %v1067 = vld [vmem:[%s430 + $0x1378] sm:$0xff]
        %v1068 = vld [vmem:[%s430 + $0x1380] sm:$0xff]
        %v1069 = vld [vmem:[%s430 + $0x1388] sm:$0xff]
        %v1070 = vld [vmem:[%s430 + $0x1390] sm:$0xff]
        %v1071 = vld [vmem:[%s430 + $0x1398] sm:$0xff]
        %v1072 = vld [vmem:[%s430 + $0x13a0] sm:$0xff]
        %v1073 = vld [vmem:[%s430 + $0x13a8] sm:$0xff]
        %v1074 = vld [vmem:[%s430 + $0x13b0] sm:$0xff]
        %v1075 = vld [vmem:[%s430 + $0x13b8] sm:$0xff]
        %v1076 = vld [vmem:[%s430 + $0x13c0] sm:$0xff]
        %v1077 = vld [vmem:[%s430 + $0x13c8] sm:$0xff]
        %v1078 = vld [vmem:[%s430 + $0x13d0] sm:$0xff]
        %v1079 = vld [vmem:[%s430 + $0x13d8] sm:$0xff]
        %v1080 = vld [vmem:[%s430 + $0x13e0] sm:$0xff]
        %v1081 = vld [vmem:[%s430 + $0x13e8] sm:$0xff]
        %v1082 = vld [vmem:[%s430 + $0x13f0] sm:$0xff]
        %v1083 = vld [vmem:[%s430 + $0x13f8] sm:$0xff]
        %v1084 = vld [vmem:[%s435] sm:$0xff]
        %v1085 = vld [vmem:[%s435 + $0x8] sm:$0xff]
        %v1086 = vld [vmem:[%s435 + $0x10] sm:$0xff]
        %v1087 = vld [vmem:[%s435 + $0x18] sm:$0xff]
        %v1088 = vld [vmem:[%s435 + $0x20] sm:$0xff]
        %v1089 = vld [vmem:[%s435 + $0x28] sm:$0xff]
        %v1090 = vld [vmem:[%s435 + $0x30] sm:$0xff]
        %v1091 = vld [vmem:[%s435 + $0x38] sm:$0xff]
        %v1092 = vld [vmem:[%s435 + $0x40] sm:$0xff]
        %v1093 = vld [vmem:[%s435 + $0x48] sm:$0xff]
        %v1094 = vld [vmem:[%s435 + $0x50] sm:$0xff]
        %v1095 = vld [vmem:[%s435 + $0x58] sm:$0xff]
        %v1096 = vld [vmem:[%s435 + $0x60] sm:$0xff]
        %v1097 = vld [vmem:[%s435 + $0x68] sm:$0xff]
        %v1098 = vld [vmem:[%s435 + $0x70] sm:$0xff]
        %v1099 = vld [vmem:[%s435 + $0x78] sm:$0xff]
        %v1100 = vld [vmem:[%s435 + $0x80] sm:$0xff]
        %v1101 = vld [vmem:[%s435 + $0x88] sm:$0xff]
        %v1102 = vld [vmem:[%s435 + $0x90] sm:$0xff]
        %v1103 = vld [vmem:[%s435 + $0x98] sm:$0xff]
        %v1104 = vld [vmem:[%s435 + $0xa0] sm:$0xff]
        %v1105 = vld [vmem:[%s435 + $0xa8] sm:$0xff]
        %v1106 = vld [vmem:[%s435 + $0xb0] sm:$0xff]
        %v1107 = vld [vmem:[%s435 + $0xb8] sm:$0xff]
        %v1108 = vld [vmem:[%s435 + $0xc0] sm:$0xff]
        %v1109 = vld [vmem:[%s435 + $0xc8] sm:$0xff]
        %v1110 = vld [vmem:[%s435 + $0xd0] sm:$0xff]
        %v1111 = vld [vmem:[%s435 + $0xd8] sm:$0xff]
        %v1112 = vld [vmem:[%s435 + $0xe0] sm:$0xff]
        %v1113 = vld [vmem:[%s435 + $0xe8] sm:$0xff]
        %v1114 = vld [vmem:[%s435 + $0xf0] sm:$0xff]
        %v1115 = vld [vmem:[%s435 + $0xf8] sm:$0xff]
        %v1116 = vld [vmem:[%s435 + $0x100] sm:$0xff]
        %v1117 = vld [vmem:[%s435 + $0x108] sm:$0xff]
        %v1118 = vld [vmem:[%s435 + $0x110] sm:$0xff]
        %v1119 = vld [vmem:[%s435 + $0x118] sm:$0xff]
        %v1120 = vld [vmem:[%s435 + $0x120] sm:$0xff]
        %v1121 = vld [vmem:[%s435 + $0x128] sm:$0xff]
        %v1122 = vld [vmem:[%s435 + $0x130] sm:$0xff]
        %v1123 = vld [vmem:[%s435 + $0x138] sm:$0xff]
        %v1124 = vld [vmem:[%s435 + $0x140] sm:$0xff]
        %v1125 = vld [vmem:[%s435 + $0x148] sm:$0xff]
        %v1126 = vld [vmem:[%s435 + $0x150] sm:$0xff]
        %v1127 = vld [vmem:[%s435 + $0x158] sm:$0xff]
        %v1128 = vld [vmem:[%s435 + $0x160] sm:$0xff]
        %v1129 = vld [vmem:[%s435 + $0x168] sm:$0xff]
        %v1130 = vld [vmem:[%s435 + $0x170] sm:$0xff]
        %v1131 = vld [vmem:[%s435 + $0x178] sm:$0xff]
        %v1132 = vld [vmem:[%s435 + $0x180] sm:$0xff]
        %v1133 = vld [vmem:[%s435 + $0x188] sm:$0xff]
        %v1134 = vld [vmem:[%s435 + $0x190] sm:$0xff]
        %v1135 = vld [vmem:[%s435 + $0x198] sm:$0xff]
        %v1136 = vld [vmem:[%s435 + $0x1a0] sm:$0xff]
        %v1137 = vld [vmem:[%s435 + $0x1a8] sm:$0xff]
        %v1138 = vld [vmem:[%s435 + $0x1b0] sm:$0xff]
        %v1139 = vld [vmem:[%s435 + $0x1b8] sm:$0xff]
        %v1140 = vld [vmem:[%s435 + $0x1c0] sm:$0xff]
        %v1141 = vld [vmem:[%s435 + $0x1c8] sm:$0xff]
        %v1142 = vld [vmem:[%s435 + $0x1d0] sm:$0xff]
        %v1143 = vld [vmem:[%s435 + $0x1d8] sm:$0xff]
        %v1144 = vld [vmem:[%s435 + $0x1e0] sm:$0xff]
        %v1145 = vld [vmem:[%s435 + $0x1e8] sm:$0xff]
        %v1146 = vld [vmem:[%s435 + $0x1f0] sm:$0xff]
        %v1147 = vld [vmem:[%s435 + $0x1f8] sm:$0xff]
        %v1148 = vld [vmem:[%s435 + $0x200] sm:$0xff]
        %v1149 = vld [vmem:[%s435 + $0x208] sm:$0xff]
        %v1150 = vld [vmem:[%s435 + $0x210] sm:$0xff]
        %v1151 = vld [vmem:[%s435 + $0x218] sm:$0xff]
        %v1152 = vld [vmem:[%s435 + $0x220] sm:$0xff]
        %v1153 = vld [vmem:[%s435 + $0x228] sm:$0xff]
        %v1154 = vld [vmem:[%s435 + $0x230] sm:$0xff]
        %v1155 = vld [vmem:[%s435 + $0x238] sm:$0xff]
        %v1156 = vld [vmem:[%s435 + $0x240] sm:$0xff]
        %v1157 = vld [vmem:[%s435 + $0x248] sm:$0xff]
        %v1158 = vld [vmem:[%s435 + $0x250] sm:$0xff]
        %v1159 = vld [vmem:[%s435 + $0x258] sm:$0xff]
        %v1160 = vld [vmem:[%s435 + $0x260] sm:$0xff]
        %v1161 = vld [vmem:[%s435 + $0x268] sm:$0xff]
        %v1162 = vld [vmem:[%s435 + $0x270] sm:$0xff]
        %v1163 = vld [vmem:[%s435 + $0x278] sm:$0xff]
        %v1164 = vld [vmem:[%s435 + $0x280] sm:$0xff]
        %v1165 = vld [vmem:[%s435 + $0x288] sm:$0xff]
        %v1166 = vld [vmem:[%s435 + $0x290] sm:$0xff]
        %v1167 = vld [vmem:[%s435 + $0x298] sm:$0xff]
        %v1168 = vld [vmem:[%s435 + $0x2a0] sm:$0xff]
        %v1169 = vld [vmem:[%s435 + $0x2a8] sm:$0xff]
        %v1170 = vld [vmem:[%s435 + $0x2b0] sm:$0xff]
        %v1171 = vld [vmem:[%s435 + $0x2b8] sm:$0xff]
        %v1172 = vld [vmem:[%s435 + $0x2c0] sm:$0xff]
        %v1173 = vld [vmem:[%s435 + $0x2c8] sm:$0xff]
        %v1174 = vld [vmem:[%s435 + $0x2d0] sm:$0xff]
        %v1175 = vld [vmem:[%s435 + $0x2d8] sm:$0xff]
        %v1176 = vld [vmem:[%s435 + $0x2e0] sm:$0xff]
        %v1177 = vld [vmem:[%s435 + $0x2e8] sm:$0xff]
        %v1178 = vld [vmem:[%s435 + $0x2f0] sm:$0xff]
        %v1179 = vld [vmem:[%s435 + $0x2f8] sm:$0xff]
        %v1180 = vld [vmem:[%s435 + $0x300] sm:$0xff]
        %v1181 = vld [vmem:[%s435 + $0x308] sm:$0xff]
        %v1182 = vld [vmem:[%s435 + $0x310] sm:$0xff]
        %v1183 = vld [vmem:[%s435 + $0x318] sm:$0xff]
        %v1184 = vld [vmem:[%s435 + $0x320] sm:$0xff]
        %v1185 = vld [vmem:[%s435 + $0x328] sm:$0xff]
        %v1186 = vld [vmem:[%s435 + $0x330] sm:$0xff]
        %v1187 = vld [vmem:[%s435 + $0x338] sm:$0xff]
        %v1188 = vld [vmem:[%s435 + $0x340] sm:$0xff]
        %v1189 = vld [vmem:[%s435 + $0x348] sm:$0xff]
        %v1190 = vld [vmem:[%s435 + $0x350] sm:$0xff]
        %v1191 = vld [vmem:[%s435 + $0x358] sm:$0xff]
        %v1192 = vld [vmem:[%s435 + $0x360] sm:$0xff]
        %v1193 = vld [vmem:[%s435 + $0x368] sm:$0xff]
        %v1194 = vld [vmem:[%s435 + $0x370] sm:$0xff]
        %v1195 = vld [vmem:[%s435 + $0x378] sm:$0xff]
        %v1196 = vld [vmem:[%s435 + $0x380] sm:$0xff]
        %v1197 = vld [vmem:[%s435 + $0x388] sm:$0xff]
        %v1198 = vld [vmem:[%s435 + $0x390] sm:$0xff]
        %v1199 = vld [vmem:[%s435 + $0x398] sm:$0xff]
        %v1200 = vld [vmem:[%s435 + $0x3a0] sm:$0xff]
        %v1201 = vld [vmem:[%s435 + $0x3a8] sm:$0xff]
        %v1202 = vld [vmem:[%s435 + $0x3b0] sm:$0xff]
        %v1203 = vld [vmem:[%s435 + $0x3b8] sm:$0xff]
        %v1204 = vld [vmem:[%s435 + $0x3c0] sm:$0xff]
        %v1205 = vld [vmem:[%s435 + $0x3c8] sm:$0xff]
        %v1206 = vld [vmem:[%s435 + $0x3d0] sm:$0xff]
        %v1207 = vld [vmem:[%s435 + $0x3d8] sm:$0xff]
        %v1208 = vld [vmem:[%s435 + $0x3e0] sm:$0xff]
        %v1209 = vld [vmem:[%s435 + $0x3e8] sm:$0xff]
        %v1210 = vld [vmem:[%s435 + $0x3f0] sm:$0xff]
        %v1211 = vld [vmem:[%s435 + $0x3f8] sm:$0xff]
        %v1212 = vld [vmem:[%s435 + $0x400] sm:$0xff]
        %v1213 = vld [vmem:[%s435 + $0x408] sm:$0xff]
        %v1214 = vld [vmem:[%s435 + $0x410] sm:$0xff]
        %v1215 = vld [vmem:[%s435 + $0x418] sm:$0xff]
        %v1216 = vld [vmem:[%s435 + $0x420] sm:$0xff]
        %v1217 = vld [vmem:[%s435 + $0x428] sm:$0xff]
        %v1218 = vld [vmem:[%s435 + $0x430] sm:$0xff]
        %v1219 = vld [vmem:[%s435 + $0x438] sm:$0xff]
        %v1220 = vld [vmem:[%s435 + $0x440] sm:$0xff]
        %v1221 = vld [vmem:[%s435 + $0x448] sm:$0xff]
        %v1222 = vld [vmem:[%s435 + $0x450] sm:$0xff]
        %v1223 = vld [vmem:[%s435 + $0x458] sm:$0xff]
        %v1224 = vld [vmem:[%s435 + $0x460] sm:$0xff]
        %v1225 = vld [vmem:[%s435 + $0x468] sm:$0xff]
        %v1226 = vld [vmem:[%s435 + $0x470] sm:$0xff]
        %v1227 = vld [vmem:[%s435 + $0x478] sm:$0xff]
        %v1228 = vld [vmem:[%s435 + $0x480] sm:$0xff]
        %v1229 = vld [vmem:[%s435 + $0x488] sm:$0xff]
        %v1230 = vld [vmem:[%s435 + $0x490] sm:$0xff]
        %v1231 = vld [vmem:[%s435 + $0x498] sm:$0xff]
        %v1232 = vld [vmem:[%s435 + $0x4a0] sm:$0xff]
        %v1233 = vld [vmem:[%s435 + $0x4a8] sm:$0xff]
        %v1234 = vld [vmem:[%s435 + $0x4b0] sm:$0xff]
        %v1235 = vld [vmem:[%s435 + $0x4b8] sm:$0xff]
        %v1236 = vld [vmem:[%s435 + $0x4c0] sm:$0xff]
        %v1237 = vld [vmem:[%s435 + $0x4c8] sm:$0xff]
        %v1238 = vld [vmem:[%s435 + $0x4d0] sm:$0xff]
        %v1239 = vld [vmem:[%s435 + $0x4d8] sm:$0xff]
        %v1240 = vld [vmem:[%s435 + $0x4e0] sm:$0xff]
        %v1241 = vld [vmem:[%s435 + $0x4e8] sm:$0xff]
        %v1242 = vld [vmem:[%s435 + $0x4f0] sm:$0xff]
        %v1243 = vld [vmem:[%s435 + $0x4f8] sm:$0xff]
        %v1244 = vld [vmem:[%s435 + $0x500] sm:$0xff]
        %v1245 = vld [vmem:[%s435 + $0x508] sm:$0xff]
        %v1246 = vld [vmem:[%s435 + $0x510] sm:$0xff]
        %v1247 = vld [vmem:[%s435 + $0x518] sm:$0xff]
        %v1248 = vld [vmem:[%s435 + $0x520] sm:$0xff]
        %v1249 = vld [vmem:[%s435 + $0x528] sm:$0xff]
        %v1250 = vld [vmem:[%s435 + $0x530] sm:$0xff]
        %v1251 = vld [vmem:[%s435 + $0x538] sm:$0xff]
        %v1252 = vld [vmem:[%s435 + $0x540] sm:$0xff]
        %v1253 = vld [vmem:[%s435 + $0x548] sm:$0xff]
        %v1254 = vld [vmem:[%s435 + $0x550] sm:$0xff]
        %v1255 = vld [vmem:[%s435 + $0x558] sm:$0xff]
        %v1256 = vld [vmem:[%s435 + $0x560] sm:$0xff]
        %v1257 = vld [vmem:[%s435 + $0x568] sm:$0xff]
        %v1258 = vld [vmem:[%s435 + $0x570] sm:$0xff]
        %v1259 = vld [vmem:[%s435 + $0x578] sm:$0xff]
        %v1260 = vld [vmem:[%s435 + $0x580] sm:$0xff]
        %v1261 = vld [vmem:[%s435 + $0x588] sm:$0xff]
        %v1262 = vld [vmem:[%s435 + $0x590] sm:$0xff]
        %v1263 = vld [vmem:[%s435 + $0x598] sm:$0xff]
        %v1264 = vld [vmem:[%s435 + $0x5a0] sm:$0xff]
        %v1265 = vld [vmem:[%s435 + $0x5a8] sm:$0xff]
        %v1266 = vld [vmem:[%s435 + $0x5b0] sm:$0xff]
        %v1267 = vld [vmem:[%s435 + $0x5b8] sm:$0xff]
        %v1268 = vld [vmem:[%s435 + $0x5c0] sm:$0xff]
        %v1269 = vld [vmem:[%s435 + $0x5c8] sm:$0xff]
        %v1270 = vld [vmem:[%s435 + $0x5d0] sm:$0xff]
        %v1271 = vld [vmem:[%s435 + $0x5d8] sm:$0xff]
        %v1272 = vld [vmem:[%s435 + $0x5e0] sm:$0xff]
        %v1273 = vld [vmem:[%s435 + $0x5e8] sm:$0xff]
        %v1274 = vld [vmem:[%s435 + $0x5f0] sm:$0xff]
        %v1275 = vld [vmem:[%s435 + $0x5f8] sm:$0xff]
        %v1276 = vld [vmem:[%s435 + $0x600] sm:$0xff]
        %v1277 = vld [vmem:[%s435 + $0x608] sm:$0xff]
        %v1278 = vld [vmem:[%s435 + $0x610] sm:$0xff]
        %v1279 = vld [vmem:[%s435 + $0x618] sm:$0xff]
        %v1280 = vld [vmem:[%s435 + $0x620] sm:$0xff]
        %v1281 = vld [vmem:[%s435 + $0x628] sm:$0xff]
        %v1282 = vld [vmem:[%s435 + $0x630] sm:$0xff]
        %v1283 = vld [vmem:[%s435 + $0x638] sm:$0xff]
        %v1284 = vld [vmem:[%s435 + $0x640] sm:$0xff]
        %v1285 = vld [vmem:[%s435 + $0x648] sm:$0xff]
        %v1286 = vld [vmem:[%s435 + $0x650] sm:$0xff]
        %v1287 = vld [vmem:[%s435 + $0x658] sm:$0xff]
        %v1288 = vld [vmem:[%s435 + $0x660] sm:$0xff]
        %v1289 = vld [vmem:[%s435 + $0x668] sm:$0xff]
        %v1290 = vld [vmem:[%s435 + $0x670] sm:$0xff]
        %v1291 = vld [vmem:[%s435 + $0x678] sm:$0xff]
        %v1292 = vld [vmem:[%s435 + $0x680] sm:$0xff]
        %v1293 = vld [vmem:[%s435 + $0x688] sm:$0xff]
        %v1294 = vld [vmem:[%s435 + $0x690] sm:$0xff]
        %v1295 = vld [vmem:[%s435 + $0x698] sm:$0xff]
        %v1296 = vld [vmem:[%s435 + $0x6a0] sm:$0xff]
        %v1297 = vld [vmem:[%s435 + $0x6a8] sm:$0xff]
        %v1298 = vld [vmem:[%s435 + $0x6b0] sm:$0xff]
        %v1299 = vld [vmem:[%s435 + $0x6b8] sm:$0xff]
        %v1300 = vld [vmem:[%s435 + $0x6c0] sm:$0xff]
        %v1301 = vld [vmem:[%s435 + $0x6c8] sm:$0xff]
        %v1302 = vld [vmem:[%s435 + $0x6d0] sm:$0xff]
        %v1303 = vld [vmem:[%s435 + $0x6d8] sm:$0xff]
        %v1304 = vld [vmem:[%s435 + $0x6e0] sm:$0xff]
        %v1305 = vld [vmem:[%s435 + $0x6e8] sm:$0xff]
        %v1306 = vld [vmem:[%s435 + $0x6f0] sm:$0xff]
        %v1307 = vld [vmem:[%s435 + $0x6f8] sm:$0xff]
        %v1308 = vld [vmem:[%s435 + $0x700] sm:$0xff]
        %v1309 = vld [vmem:[%s435 + $0x708] sm:$0xff]
        %v1310 = vld [vmem:[%s435 + $0x710] sm:$0xff]
        %v1311 = vld [vmem:[%s435 + $0x718] sm:$0xff]
        %v1312 = vld [vmem:[%s435 + $0x720] sm:$0xff]
        %v1313 = vld [vmem:[%s435 + $0x728] sm:$0xff]
        %v1314 = vld [vmem:[%s435 + $0x730] sm:$0xff]
        %v1315 = vld [vmem:[%s435 + $0x738] sm:$0xff]
        %v1316 = vld [vmem:[%s435 + $0x740] sm:$0xff]
        %v1317 = vld [vmem:[%s435 + $0x748] sm:$0xff]
        %v1318 = vld [vmem:[%s435 + $0x750] sm:$0xff]
        %v1319 = vld [vmem:[%s435 + $0x758] sm:$0xff]
        %v1320 = vld [vmem:[%s435 + $0x760] sm:$0xff]
        %v1321 = vld [vmem:[%s435 + $0x768] sm:$0xff]
        %v1322 = vld [vmem:[%s435 + $0x770] sm:$0xff]
        %v1323 = vld [vmem:[%s435 + $0x778] sm:$0xff]
        %v1324 = vld [vmem:[%s435 + $0x780] sm:$0xff]
        %v1325 = vld [vmem:[%s435 + $0x788] sm:$0xff]
        %v1326 = vld [vmem:[%s435 + $0x790] sm:$0xff]
        %v1327 = vld [vmem:[%s435 + $0x798] sm:$0xff]
        %v1328 = vld [vmem:[%s435 + $0x7a0] sm:$0xff]
        %v1329 = vld [vmem:[%s435 + $0x7a8] sm:$0xff]
        %v1330 = vld [vmem:[%s435 + $0x7b0] sm:$0xff]
        %v1331 = vld [vmem:[%s435 + $0x7b8] sm:$0xff]
        %v1332 = vld [vmem:[%s435 + $0x7c0] sm:$0xff]
        %v1333 = vld [vmem:[%s435 + $0x7c8] sm:$0xff]
        %v1334 = vld [vmem:[%s435 + $0x7d0] sm:$0xff]
        %v1335 = vld [vmem:[%s435 + $0x7d8] sm:$0xff]
        %v1336 = vld [vmem:[%s435 + $0x7e0] sm:$0xff]
        %v1337 = vld [vmem:[%s435 + $0x7e8] sm:$0xff]
        %v1338 = vld [vmem:[%s435 + $0x7f0] sm:$0xff]
        %v1339 = vld [vmem:[%s435 + $0x7f8] sm:$0xff]
        %v1340 = vld [vmem:[%s435 + $0x800] sm:$0xff]
        %v1341 = vld [vmem:[%s435 + $0x808] sm:$0xff]
        %v1342 = vld [vmem:[%s435 + $0x810] sm:$0xff]
        %v1343 = vld [vmem:[%s435 + $0x818] sm:$0xff]
        %v1344 = vld [vmem:[%s435 + $0x820] sm:$0xff]
        %v1345 = vld [vmem:[%s435 + $0x828] sm:$0xff]
        %v1346 = vld [vmem:[%s435 + $0x830] sm:$0xff]
        %v1347 = vld [vmem:[%s435 + $0x838] sm:$0xff]
        %v1348 = vld [vmem:[%s435 + $0x840] sm:$0xff]
        %v1349 = vld [vmem:[%s435 + $0x848] sm:$0xff]
        %v1350 = vld [vmem:[%s435 + $0x850] sm:$0xff]
        %v1351 = vld [vmem:[%s435 + $0x858] sm:$0xff]
        %v1352 = vld [vmem:[%s435 + $0x860] sm:$0xff]
        %v1353 = vld [vmem:[%s435 + $0x868] sm:$0xff]
        %v1354 = vld [vmem:[%s435 + $0x870] sm:$0xff]
        %v1355 = vld [vmem:[%s435 + $0x878] sm:$0xff]
        %v1356 = vld [vmem:[%s435 + $0x880] sm:$0xff]
        %v1357 = vld [vmem:[%s435 + $0x888] sm:$0xff]
        %v1358 = vld [vmem:[%s435 + $0x890] sm:$0xff]
        %v1359 = vld [vmem:[%s435 + $0x898] sm:$0xff]
        %v1360 = vld [vmem:[%s435 + $0x8a0] sm:$0xff]
        %v1361 = vld [vmem:[%s435 + $0x8a8] sm:$0xff]
        %v1362 = vld [vmem:[%s435 + $0x8b0] sm:$0xff]
        %v1363 = vld [vmem:[%s435 + $0x8b8] sm:$0xff]
        %v1364 = vld [vmem:[%s435 + $0x8c0] sm:$0xff]
        %v1365 = vld [vmem:[%s435 + $0x8c8] sm:$0xff]
        %v1366 = vld [vmem:[%s435 + $0x8d0] sm:$0xff]
        %v1367 = vld [vmem:[%s435 + $0x8d8] sm:$0xff]
        %v1368 = vld [vmem:[%s435 + $0x8e0] sm:$0xff]
        %v1369 = vld [vmem:[%s435 + $0x8e8] sm:$0xff]
        %v1370 = vld [vmem:[%s435 + $0x8f0] sm:$0xff]
        %v1371 = vld [vmem:[%s435 + $0x8f8] sm:$0xff]
        %v1372 = vld [vmem:[%s435 + $0x900] sm:$0xff]
        %v1373 = vld [vmem:[%s435 + $0x908] sm:$0xff]
        %v1374 = vld [vmem:[%s435 + $0x910] sm:$0xff]
        %v1375 = vld [vmem:[%s435 + $0x918] sm:$0xff]
        %v1376 = vld [vmem:[%s435 + $0x920] sm:$0xff]
        %v1377 = vld [vmem:[%s435 + $0x928] sm:$0xff]
        %v1378 = vld [vmem:[%s435 + $0x930] sm:$0xff]
        %v1379 = vld [vmem:[%s435 + $0x938] sm:$0xff]
        %v1380 = vld [vmem:[%s435 + $0x940] sm:$0xff]
        %v1381 = vld [vmem:[%s435 + $0x948] sm:$0xff]
        %v1382 = vld [vmem:[%s435 + $0x950] sm:$0xff]
        %v1383 = vld [vmem:[%s435 + $0x958] sm:$0xff]
        %v1384 = vld [vmem:[%s435 + $0x960] sm:$0xff]
        %v1385 = vld [vmem:[%s435 + $0x968] sm:$0xff]
        %v1386 = vld [vmem:[%s435 + $0x970] sm:$0xff]
        %v1387 = vld [vmem:[%s435 + $0x978] sm:$0xff]
        %v1388 = vld [vmem:[%s435 + $0x980] sm:$0xff]
        %v1389 = vld [vmem:[%s435 + $0x988] sm:$0xff]
        %v1390 = vld [vmem:[%s435 + $0x990] sm:$0xff]
        %v1391 = vld [vmem:[%s435 + $0x998] sm:$0xff]
        %v1392 = vld [vmem:[%s435 + $0x9a0] sm:$0xff]
        %v1393 = vld [vmem:[%s435 + $0x9a8] sm:$0xff]
        %v1394 = vld [vmem:[%s435 + $0x9b0] sm:$0xff]
        %v1395 = vld [vmem:[%s435 + $0x9b8] sm:$0xff]
        %v1396 = vld [vmem:[%s435 + $0x9c0] sm:$0xff]
        %v1397 = vld [vmem:[%s435 + $0x9c8] sm:$0xff]
        %v1398 = vld [vmem:[%s435 + $0x9d0] sm:$0xff]
        %v1399 = vld [vmem:[%s435 + $0x9d8] sm:$0xff]
        %v1400 = vld [vmem:[%s435 + $0x9e0] sm:$0xff]
        %v1401 = vld [vmem:[%s435 + $0x9e8] sm:$0xff]
        %v1402 = vld [vmem:[%s435 + $0x9f0] sm:$0xff]
        %v1403 = vld [vmem:[%s435 + $0x9f8] sm:$0xff]
        %v1404 = vld [vmem:[%s435 + $0xa00] sm:$0xff]
        %v1405 = vld [vmem:[%s435 + $0xa08] sm:$0xff]
        %v1406 = vld [vmem:[%s435 + $0xa10] sm:$0xff]
        %v1407 = vld [vmem:[%s435 + $0xa18] sm:$0xff]
        %v1408 = vld [vmem:[%s435 + $0xa20] sm:$0xff]
        %v1409 = vld [vmem:[%s435 + $0xa28] sm:$0xff]
        %v1410 = vld [vmem:[%s435 + $0xa30] sm:$0xff]
        %v1411 = vld [vmem:[%s435 + $0xa38] sm:$0xff]
        %v1412 = vld [vmem:[%s435 + $0xa40] sm:$0xff]
        %v1413 = vld [vmem:[%s435 + $0xa48] sm:$0xff]
        %v1414 = vld [vmem:[%s435 + $0xa50] sm:$0xff]
        %v1415 = vld [vmem:[%s435 + $0xa58] sm:$0xff]
        %v1416 = vld [vmem:[%s435 + $0xa60] sm:$0xff]
        %v1417 = vld [vmem:[%s435 + $0xa68] sm:$0xff]
        %v1418 = vld [vmem:[%s435 + $0xa70] sm:$0xff]
        %v1419 = vld [vmem:[%s435 + $0xa78] sm:$0xff]
        %v1420 = vld [vmem:[%s435 + $0xa80] sm:$0xff]
        %v1421 = vld [vmem:[%s435 + $0xa88] sm:$0xff]
        %v1422 = vld [vmem:[%s435 + $0xa90] sm:$0xff]
        %v1423 = vld [vmem:[%s435 + $0xa98] sm:$0xff]
        %v1424 = vld [vmem:[%s435 + $0xaa0] sm:$0xff]
        %v1425 = vld [vmem:[%s435 + $0xaa8] sm:$0xff]
        %v1426 = vld [vmem:[%s435 + $0xab0] sm:$0xff]
        %v1427 = vld [vmem:[%s435 + $0xab8] sm:$0xff]
        %v1428 = vld [vmem:[%s435 + $0xac0] sm:$0xff]
        %v1429 = vld [vmem:[%s435 + $0xac8] sm:$0xff]
        %v1430 = vld [vmem:[%s435 + $0xad0] sm:$0xff]
        %v1431 = vld [vmem:[%s435 + $0xad8] sm:$0xff]
        %v1432 = vld [vmem:[%s435 + $0xae0] sm:$0xff]
        %v1433 = vld [vmem:[%s435 + $0xae8] sm:$0xff]
        %v1434 = vld [vmem:[%s435 + $0xaf0] sm:$0xff]
        %v1435 = vld [vmem:[%s435 + $0xaf8] sm:$0xff]
        %v1436 = vld [vmem:[%s435 + $0xb00] sm:$0xff]
        %v1437 = vld [vmem:[%s435 + $0xb08] sm:$0xff]
        %v1438 = vld [vmem:[%s435 + $0xb10] sm:$0xff]
        %v1439 = vld [vmem:[%s435 + $0xb18] sm:$0xff]
        %v1440 = vld [vmem:[%s435 + $0xb20] sm:$0xff]
        %v1441 = vld [vmem:[%s435 + $0xb28] sm:$0xff]
        %v1442 = vld [vmem:[%s435 + $0xb30] sm:$0xff]
        %v1443 = vld [vmem:[%s435 + $0xb38] sm:$0xff]
        %v1444 = vld [vmem:[%s435 + $0xb40] sm:$0xff]
        %v1445 = vld [vmem:[%s435 + $0xb48] sm:$0xff]
        %v1446 = vld [vmem:[%s435 + $0xb50] sm:$0xff]
        %v1447 = vld [vmem:[%s435 + $0xb58] sm:$0xff]
        %v1448 = vld [vmem:[%s435 + $0xb60] sm:$0xff]
        %v1449 = vld [vmem:[%s435 + $0xb68] sm:$0xff]
        %v1450 = vld [vmem:[%s435 + $0xb70] sm:$0xff]
        %v1451 = vld [vmem:[%s435 + $0xb78] sm:$0xff]
        %v1452 = vld [vmem:[%s435 + $0xb80] sm:$0xff]
        %v1453 = vld [vmem:[%s435 + $0xb88] sm:$0xff]
        %v1454 = vld [vmem:[%s435 + $0xb90] sm:$0xff]
        %v1455 = vld [vmem:[%s435 + $0xb98] sm:$0xff]
        %v1456 = vld [vmem:[%s435 + $0xba0] sm:$0xff]
        %v1457 = vld [vmem:[%s435 + $0xba8] sm:$0xff]
        %v1458 = vld [vmem:[%s435 + $0xbb0] sm:$0xff]
        %v1459 = vld [vmem:[%s435 + $0xbb8] sm:$0xff]
        %v1460 = vld [vmem:[%s435 + $0xbc0] sm:$0xff]
        %v1461 = vld [vmem:[%s435 + $0xbc8] sm:$0xff]
        %v1462 = vld [vmem:[%s435 + $0xbd0] sm:$0xff]
        %v1463 = vld [vmem:[%s435 + $0xbd8] sm:$0xff]
        %v1464 = vld [vmem:[%s435 + $0xbe0] sm:$0xff]
        %v1465 = vld [vmem:[%s435 + $0xbe8] sm:$0xff]
        %v1466 = vld [vmem:[%s435 + $0xbf0] sm:$0xff]
        %v1467 = vld [vmem:[%s435 + $0xbf8] sm:$0xff]
        %v1468 = vld [vmem:[%s435 + $0xc00] sm:$0xff]
        %v1469 = vld [vmem:[%s435 + $0xc08] sm:$0xff]
        %v1470 = vld [vmem:[%s435 + $0xc10] sm:$0xff]
        %v1471 = vld [vmem:[%s435 + $0xc18] sm:$0xff]
        %v1472 = vld [vmem:[%s435 + $0xc20] sm:$0xff]
        %v1473 = vld [vmem:[%s435 + $0xc28] sm:$0xff]
        %v1474 = vld [vmem:[%s435 + $0xc30] sm:$0xff]
        %v1475 = vld [vmem:[%s435 + $0xc38] sm:$0xff]
        %v1476 = vld [vmem:[%s435 + $0xc40] sm:$0xff]
        %v1477 = vld [vmem:[%s435 + $0xc48] sm:$0xff]
        %v1478 = vld [vmem:[%s435 + $0xc50] sm:$0xff]
        %v1479 = vld [vmem:[%s435 + $0xc58] sm:$0xff]
        %v1480 = vld [vmem:[%s435 + $0xc60] sm:$0xff]
        %v1481 = vld [vmem:[%s435 + $0xc68] sm:$0xff]
        %v1482 = vld [vmem:[%s435 + $0xc70] sm:$0xff]
        %v1483 = vld [vmem:[%s435 + $0xc78] sm:$0xff]
        %v1484 = vld [vmem:[%s435 + $0xc80] sm:$0xff]
        %v1485 = vld [vmem:[%s435 + $0xc88] sm:$0xff]
        %v1486 = vld [vmem:[%s435 + $0xc90] sm:$0xff]
        %v1487 = vld [vmem:[%s435 + $0xc98] sm:$0xff]
        %v1488 = vld [vmem:[%s435 + $0xca0] sm:$0xff]
        %v1489 = vld [vmem:[%s435 + $0xca8] sm:$0xff]
        %v1490 = vld [vmem:[%s435 + $0xcb0] sm:$0xff]
        %v1491 = vld [vmem:[%s435 + $0xcb8] sm:$0xff]
        %v1492 = vld [vmem:[%s435 + $0xcc0] sm:$0xff]
        %v1493 = vld [vmem:[%s435 + $0xcc8] sm:$0xff]
        %v1494 = vld [vmem:[%s435 + $0xcd0] sm:$0xff]
        %v1495 = vld [vmem:[%s435 + $0xcd8] sm:$0xff]
        %v1496 = vld [vmem:[%s435 + $0xce0] sm:$0xff]
        %v1497 = vld [vmem:[%s435 + $0xce8] sm:$0xff]
        %v1498 = vld [vmem:[%s435 + $0xcf0] sm:$0xff]
        %v1499 = vld [vmem:[%s435 + $0xcf8] sm:$0xff]
        %v1500 = vld [vmem:[%s435 + $0xd00] sm:$0xff]
        %v1501 = vld [vmem:[%s435 + $0xd08] sm:$0xff]
        %v1502 = vld [vmem:[%s435 + $0xd10] sm:$0xff]
        %v1503 = vld [vmem:[%s435 + $0xd18] sm:$0xff]
        %v1504 = vld [vmem:[%s435 + $0xd20] sm:$0xff]
        %v1505 = vld [vmem:[%s435 + $0xd28] sm:$0xff]
        %v1506 = vld [vmem:[%s435 + $0xd30] sm:$0xff]
        %v1507 = vld [vmem:[%s435 + $0xd38] sm:$0xff]
        %v1508 = vld [vmem:[%s435 + $0xd40] sm:$0xff]
        %v1509 = vld [vmem:[%s435 + $0xd48] sm:$0xff]
        %v1510 = vld [vmem:[%s435 + $0xd50] sm:$0xff]
        %v1511 = vld [vmem:[%s435 + $0xd58] sm:$0xff]
        %v1512 = vld [vmem:[%s435 + $0xd60] sm:$0xff]
        %v1513 = vld [vmem:[%s435 + $0xd68] sm:$0xff]
        %v1514 = vld [vmem:[%s435 + $0xd70] sm:$0xff]
        %v1515 = vld [vmem:[%s435 + $0xd78] sm:$0xff]
        %v1516 = vld [vmem:[%s435 + $0xd80] sm:$0xff]
        %v1517 = vld [vmem:[%s435 + $0xd88] sm:$0xff]
        %v1518 = vld [vmem:[%s435 + $0xd90] sm:$0xff]
        %v1519 = vld [vmem:[%s435 + $0xd98] sm:$0xff]
        %v1520 = vld [vmem:[%s435 + $0xda0] sm:$0xff]
        %v1521 = vld [vmem:[%s435 + $0xda8] sm:$0xff]
        %v1522 = vld [vmem:[%s435 + $0xdb0] sm:$0xff]
        %v1523 = vld [vmem:[%s435 + $0xdb8] sm:$0xff]
        %v1524 = vld [vmem:[%s435 + $0xdc0] sm:$0xff]
        %v1525 = vld [vmem:[%s435 + $0xdc8] sm:$0xff]
        %v1526 = vld [vmem:[%s435 + $0xdd0] sm:$0xff]
        %v1527 = vld [vmem:[%s435 + $0xdd8] sm:$0xff]
        %v1528 = vld [vmem:[%s435 + $0xde0] sm:$0xff]
        %v1529 = vld [vmem:[%s435 + $0xde8] sm:$0xff]
        %v1530 = vld [vmem:[%s435 + $0xdf0] sm:$0xff]
        %v1531 = vld [vmem:[%s435 + $0xdf8] sm:$0xff]
        %v1532 = vld [vmem:[%s435 + $0xe00] sm:$0xff]
        %v1533 = vld [vmem:[%s435 + $0xe08] sm:$0xff]
        %v1534 = vld [vmem:[%s435 + $0xe10] sm:$0xff]
        %v1535 = vld [vmem:[%s435 + $0xe18] sm:$0xff]
        %v1536 = vld [vmem:[%s435 + $0xe20] sm:$0xff]
        %v1537 = vld [vmem:[%s435 + $0xe28] sm:$0xff]
        %v1538 = vld [vmem:[%s435 + $0xe30] sm:$0xff]
        %v1539 = vld [vmem:[%s435 + $0xe38] sm:$0xff]
        %v1540 = vld [vmem:[%s435 + $0xe40] sm:$0xff]
        %v1541 = vld [vmem:[%s435 + $0xe48] sm:$0xff]
        %v1542 = vld [vmem:[%s435 + $0xe50] sm:$0xff]
        %v1543 = vld [vmem:[%s435 + $0xe58] sm:$0xff]
        %v1544 = vld [vmem:[%s435 + $0xe60] sm:$0xff]
        %v1545 = vld [vmem:[%s435 + $0xe68] sm:$0xff]
        %v1546 = vld [vmem:[%s435 + $0xe70] sm:$0xff]
        %v1547 = vld [vmem:[%s435 + $0xe78] sm:$0xff]
        %v1548 = vld [vmem:[%s435 + $0xe80] sm:$0xff]
        %v1549 = vld [vmem:[%s435 + $0xe88] sm:$0xff]
        %v1550 = vld [vmem:[%s435 + $0xe90] sm:$0xff]
        %v1551 = vld [vmem:[%s435 + $0xe98] sm:$0xff]
        %v1552 = vld [vmem:[%s435 + $0xea0] sm:$0xff]
        %v1553 = vld [vmem:[%s435 + $0xea8] sm:$0xff]
        %v1554 = vld [vmem:[%s435 + $0xeb0] sm:$0xff]
        %v1555 = vld [vmem:[%s435 + $0xeb8] sm:$0xff]
        %v1556 = vld [vmem:[%s435 + $0xec0] sm:$0xff]
        %v1557 = vld [vmem:[%s435 + $0xec8] sm:$0xff]
        %v1558 = vld [vmem:[%s435 + $0xed0] sm:$0xff]
        %v1559 = vld [vmem:[%s435 + $0xed8] sm:$0xff]
        %v1560 = vld [vmem:[%s435 + $0xee0] sm:$0xff]
        %v1561 = vld [vmem:[%s435 + $0xee8] sm:$0xff]
        %v1562 = vld [vmem:[%s435 + $0xef0] sm:$0xff]
        %v1563 = vld [vmem:[%s435 + $0xef8] sm:$0xff]
        %v1564 = vld [vmem:[%s435 + $0xf00] sm:$0xff]
        %v1565 = vld [vmem:[%s435 + $0xf08] sm:$0xff]
        %v1566 = vld [vmem:[%s435 + $0xf10] sm:$0xff]
        %v1567 = vld [vmem:[%s435 + $0xf18] sm:$0xff]
        %v1568 = vld [vmem:[%s435 + $0xf20] sm:$0xff]
        %v1569 = vld [vmem:[%s435 + $0xf28] sm:$0xff]
        %v1570 = vld [vmem:[%s435 + $0xf30] sm:$0xff]
        %v1571 = vld [vmem:[%s435 + $0xf38] sm:$0xff]
        %v1572 = vld [vmem:[%s435 + $0xf40] sm:$0xff]
        %v1573 = vld [vmem:[%s435 + $0xf48] sm:$0xff]
        %v1574 = vld [vmem:[%s435 + $0xf50] sm:$0xff]
        %v1575 = vld [vmem:[%s435 + $0xf58] sm:$0xff]
        %v1576 = vld [vmem:[%s435 + $0xf60] sm:$0xff]
        %v1577 = vld [vmem:[%s435 + $0xf68] sm:$0xff]
        %v1578 = vld [vmem:[%s435 + $0xf70] sm:$0xff]
        %v1579 = vld [vmem:[%s435 + $0xf78] sm:$0xff]
        %v1580 = vld [vmem:[%s435 + $0xf80] sm:$0xff]
        %v1581 = vld [vmem:[%s435 + $0xf88] sm:$0xff]
        %v1582 = vld [vmem:[%s435 + $0xf90] sm:$0xff]
        %v1583 = vld [vmem:[%s435 + $0xf98] sm:$0xff]
        %v1584 = vld [vmem:[%s435 + $0xfa0] sm:$0xff]
        %v1585 = vld [vmem:[%s435 + $0xfa8] sm:$0xff]
        %v1586 = vld [vmem:[%s435 + $0xfb0] sm:$0xff]
        %v1587 = vld [vmem:[%s435 + $0xfb8] sm:$0xff]
        %v1588 = vld [vmem:[%s435 + $0xfc0] sm:$0xff]
        %v1589 = vld [vmem:[%s435 + $0xfc8] sm:$0xff]
        %v1590 = vld [vmem:[%s435 + $0xfd0] sm:$0xff]
        %v1591 = vld [vmem:[%s435 + $0xfd8] sm:$0xff]
        %v1592 = vld [vmem:[%s435 + $0xfe0] sm:$0xff]
        %v1593 = vld [vmem:[%s435 + $0xfe8] sm:$0xff]
        %v1594 = vld [vmem:[%s435 + $0xff0] sm:$0xff]
        %v1595 = vld [vmem:[%s435 + $0xff8] sm:$0xff]
        %v1596 = vld [vmem:[%s435 + $0x1000] sm:$0xff]
        %v1597 = vld [vmem:[%s435 + $0x1008] sm:$0xff]
        %v1598 = vld [vmem:[%s435 + $0x1010] sm:$0xff]
        %v1599 = vld [vmem:[%s435 + $0x1018] sm:$0xff]
        %v1600 = vld [vmem:[%s435 + $0x1020] sm:$0xff]
        %v1601 = vld [vmem:[%s435 + $0x1028] sm:$0xff]
        %v1602 = vld [vmem:[%s435 + $0x1030] sm:$0xff]
        %v1603 = vld [vmem:[%s435 + $0x1038] sm:$0xff]
        %v1604 = vld [vmem:[%s435 + $0x1040] sm:$0xff]
        %v1605 = vld [vmem:[%s435 + $0x1048] sm:$0xff]
        %v1606 = vld [vmem:[%s435 + $0x1050] sm:$0xff]
        %v1607 = vld [vmem:[%s435 + $0x1058] sm:$0xff]
        %v1608 = vld [vmem:[%s435 + $0x1060] sm:$0xff]
        %v1609 = vld [vmem:[%s435 + $0x1068] sm:$0xff]
        %v1610 = vld [vmem:[%s435 + $0x1070] sm:$0xff]
        %v1611 = vld [vmem:[%s435 + $0x1078] sm:$0xff]
        %v1612 = vld [vmem:[%s435 + $0x1080] sm:$0xff]
        %v1613 = vld [vmem:[%s435 + $0x1088] sm:$0xff]
        %v1614 = vld [vmem:[%s435 + $0x1090] sm:$0xff]
        %v1615 = vld [vmem:[%s435 + $0x1098] sm:$0xff]
        %v1616 = vld [vmem:[%s435 + $0x10a0] sm:$0xff]
        %v1617 = vld [vmem:[%s435 + $0x10a8] sm:$0xff]
        %v1618 = vld [vmem:[%s435 + $0x10b0] sm:$0xff]
        %v1619 = vld [vmem:[%s435 + $0x10b8] sm:$0xff]
        %v1620 = vld [vmem:[%s435 + $0x10c0] sm:$0xff]
        %v1621 = vld [vmem:[%s435 + $0x10c8] sm:$0xff]
        %v1622 = vld [vmem:[%s435 + $0x10d0] sm:$0xff]
        %v1623 = vld [vmem:[%s435 + $0x10d8] sm:$0xff]
        %v1624 = vld [vmem:[%s435 + $0x10e0] sm:$0xff]
        %v1625 = vld [vmem:[%s435 + $0x10e8] sm:$0xff]
        %v1626 = vld [vmem:[%s435 + $0x10f0] sm:$0xff]
        %v1627 = vld [vmem:[%s435 + $0x10f8] sm:$0xff]
        %v1628 = vld [vmem:[%s435 + $0x1100] sm:$0xff]
        %v1629 = vld [vmem:[%s435 + $0x1108] sm:$0xff]
        %v1630 = vld [vmem:[%s435 + $0x1110] sm:$0xff]
        %v1631 = vld [vmem:[%s435 + $0x1118] sm:$0xff]
        %v1632 = vld [vmem:[%s435 + $0x1120] sm:$0xff]
        %v1633 = vld [vmem:[%s435 + $0x1128] sm:$0xff]
        %v1634 = vld [vmem:[%s435 + $0x1130] sm:$0xff]
        %v1635 = vld [vmem:[%s435 + $0x1138] sm:$0xff]
        %v1636 = vld [vmem:[%s435 + $0x1140] sm:$0xff]
        %v1637 = vld [vmem:[%s435 + $0x1148] sm:$0xff]
        %v1638 = vld [vmem:[%s435 + $0x1150] sm:$0xff]
        %v1639 = vld [vmem:[%s435 + $0x1158] sm:$0xff]
        %v1640 = vld [vmem:[%s435 + $0x1160] sm:$0xff]
        %v1641 = vld [vmem:[%s435 + $0x1168] sm:$0xff]
        %v1642 = vld [vmem:[%s435 + $0x1170] sm:$0xff]
        %v1643 = vld [vmem:[%s435 + $0x1178] sm:$0xff]
        %v1644 = vld [vmem:[%s435 + $0x1180] sm:$0xff]
        %v1645 = vld [vmem:[%s435 + $0x1188] sm:$0xff]
        %v1646 = vld [vmem:[%s435 + $0x1190] sm:$0xff]
        %v1647 = vld [vmem:[%s435 + $0x1198] sm:$0xff]
        %v1648 = vld [vmem:[%s435 + $0x11a0] sm:$0xff]
        %v1649 = vld [vmem:[%s435 + $0x11a8] sm:$0xff]
        %v1650 = vld [vmem:[%s435 + $0x11b0] sm:$0xff]
        %v1651 = vld [vmem:[%s435 + $0x11b8] sm:$0xff]
        %v1652 = vld [vmem:[%s435 + $0x11c0] sm:$0xff]
        %v1653 = vld [vmem:[%s435 + $0x11c8] sm:$0xff]
        %v1654 = vld [vmem:[%s435 + $0x11d0] sm:$0xff]
        %v1655 = vld [vmem:[%s435 + $0x11d8] sm:$0xff]
        %v1656 = vld [vmem:[%s435 + $0x11e0] sm:$0xff]
        %v1657 = vld [vmem:[%s435 + $0x11e8] sm:$0xff]
        %v1658 = vld [vmem:[%s435 + $0x11f0] sm:$0xff]
        %v1659 = vld [vmem:[%s435 + $0x11f8] sm:$0xff]
        %v1660 = vld [vmem:[%s435 + $0x1200] sm:$0xff]
        %v1661 = vld [vmem:[%s435 + $0x1208] sm:$0xff]
        %v1662 = vld [vmem:[%s435 + $0x1210] sm:$0xff]
        %v1663 = vld [vmem:[%s435 + $0x1218] sm:$0xff]
        %v1664 = vld [vmem:[%s435 + $0x1220] sm:$0xff]
        %v1665 = vld [vmem:[%s435 + $0x1228] sm:$0xff]
        %v1666 = vld [vmem:[%s435 + $0x1230] sm:$0xff]
        %v1667 = vld [vmem:[%s435 + $0x1238] sm:$0xff]
        %v1668 = vld [vmem:[%s435 + $0x1240] sm:$0xff]
        %v1669 = vld [vmem:[%s435 + $0x1248] sm:$0xff]
        %v1670 = vld [vmem:[%s435 + $0x1250] sm:$0xff]
        %v1671 = vld [vmem:[%s435 + $0x1258] sm:$0xff]
        %v1672 = vld [vmem:[%s435 + $0x1260] sm:$0xff]
        %v1673 = vld [vmem:[%s435 + $0x1268] sm:$0xff]
        %v1674 = vld [vmem:[%s435 + $0x1270] sm:$0xff]
        %v1675 = vld [vmem:[%s435 + $0x1278] sm:$0xff]
        %v1676 = vld [vmem:[%s435 + $0x1280] sm:$0xff]
        %v1677 = vld [vmem:[%s435 + $0x1288] sm:$0xff]
        %v1678 = vld [vmem:[%s435 + $0x1290] sm:$0xff]
        %v1679 = vld [vmem:[%s435 + $0x1298] sm:$0xff]
        %v1680 = vld [vmem:[%s435 + $0x12a0] sm:$0xff]
        %v1681 = vld [vmem:[%s435 + $0x12a8] sm:$0xff]
        %v1682 = vld [vmem:[%s435 + $0x12b0] sm:$0xff]
        %v1683 = vld [vmem:[%s435 + $0x12b8] sm:$0xff]
        %v1684 = vld [vmem:[%s435 + $0x12c0] sm:$0xff]
        %v1685 = vld [vmem:[%s435 + $0x12c8] sm:$0xff]
        %v1686 = vld [vmem:[%s435 + $0x12d0] sm:$0xff]
        %v1687 = vld [vmem:[%s435 + $0x12d8] sm:$0xff]
        %v1688 = vld [vmem:[%s435 + $0x12e0] sm:$0xff]
        %v1689 = vld [vmem:[%s435 + $0x12e8] sm:$0xff]
        %v1690 = vld [vmem:[%s435 + $0x12f0] sm:$0xff]
        %v1691 = vld [vmem:[%s435 + $0x12f8] sm:$0xff]
        %v1692 = vld [vmem:[%s435 + $0x1300] sm:$0xff]
        %v1693 = vld [vmem:[%s435 + $0x1308] sm:$0xff]
        %v1694 = vld [vmem:[%s435 + $0x1310] sm:$0xff]
        %v1695 = vld [vmem:[%s435 + $0x1318] sm:$0xff]
        %v1696 = vld [vmem:[%s435 + $0x1320] sm:$0xff]
        %v1697 = vld [vmem:[%s435 + $0x1328] sm:$0xff]
        %v1698 = vld [vmem:[%s435 + $0x1330] sm:$0xff]
        %v1699 = vld [vmem:[%s435 + $0x1338] sm:$0xff]
        %v1700 = vld [vmem:[%s435 + $0x1340] sm:$0xff]
        %v1701 = vld [vmem:[%s435 + $0x1348] sm:$0xff]
        %v1702 = vld [vmem:[%s435 + $0x1350] sm:$0xff]
        %v1703 = vld [vmem:[%s435 + $0x1358] sm:$0xff]
        %v1704 = vld [vmem:[%s435 + $0x1360] sm:$0xff]
        %v1705 = vld [vmem:[%s435 + $0x1368] sm:$0xff]
        %v1706 = vld [vmem:[%s435 + $0x1370] sm:$0xff]
        %v1707 = vld [vmem:[%s435 + $0x1378] sm:$0xff]
        %v1708 = vld [vmem:[%s435 + $0x1380] sm:$0xff]
        %v1709 = vld [vmem:[%s435 + $0x1388] sm:$0xff]
        %v1710 = vld [vmem:[%s435 + $0x1390] sm:$0xff]
        %v1711 = vld [vmem:[%s435 + $0x1398] sm:$0xff]
        %v1712 = vld [vmem:[%s435 + $0x13a0] sm:$0xff]
        %v1713 = vld [vmem:[%s435 + $0x13a8] sm:$0xff]
        %v1714 = vld [vmem:[%s435 + $0x13b0] sm:$0xff]
        %v1715 = vld [vmem:[%s435 + $0x13b8] sm:$0xff]
        %v1716 = vld [vmem:[%s435 + $0x13c0] sm:$0xff]
        %v1717 = vld [vmem:[%s435 + $0x13c8] sm:$0xff]
        %v1718 = vld [vmem:[%s435 + $0x13d0] sm:$0xff]
        %v1719 = vld [vmem:[%s435 + $0x13d8] sm:$0xff]
        %v1720 = vld [vmem:[%s435 + $0x13e0] sm:$0xff]
        %v1721 = vld [vmem:[%s435 + $0x13e8] sm:$0xff]
        %v1722 = vld [vmem:[%s435 + $0x13f0] sm:$0xff]
        %v1723 = vld [vmem:[%s435 + $0x13f8] sm:$0xff]
        %v1724 = vld [vmem:[%s5] sm:$0xff]
        %v1725 = vld [vmem:[%s5 + $0x8] sm:$0xff]
        %v1726 = vld [vmem:[%s5 + $0x10] sm:$0xff]
        %v1727 = vld [vmem:[%s5 + $0x18] sm:$0xff]
        %v1728 = vld [vmem:[%s6] sm:$0xff]
        %1730 = vset.pattern.permute.xlu0 0
        %1731 = vperm.xlu0 %1730, %v1728
        %v1732 = vpop.permute.xlu0 %1731
        %1734 = vmatprep.subr.mxu0 %v445
        %1735 = vmatpush1.msra.mxu0 %v444
        %1736 = vmatprep.subr.mxu0 %v455
        %1737 = vmatpush1.msra.mxu0 %v454
        %1738 = vmatprep.subr.mxu0 %v465
        %1739 = vmatpush1.msra.mxu0 %v464
        %1740 = vmatprep.subr.mxu0 %v475
        %1741 = vmatpush1.msra.mxu0 %v474
        %1742 = vmatprep.subr.mxu0 %v485
        %1743 = vmatpush1.msra.mxu0 %v484
        %1744 = vmatprep.subr.mxu0 %v495
        %1745 = vmatpush1.msra.mxu0 %v494
        %1746 = vmatprep.subr.mxu0 %v505
        %1747 = vmatpush1.msra.mxu0 %v504
        %1748 = vmatprep.subr.mxu0 %v515
        %1749 = vmatpush1.msra.mxu0 %v514
        %1750 = vmatprep.subr.mxu0 %v525
        %1751 = vmatpush1.msra.mxu0 %v524
        %1752 = vmatprep.subr.mxu0 %v535
        %1753 = vmatpush1.msra.mxu0 %v534
        %1754 = vmatprep.subr.mxu0 %v545
        %1755 = vmatpush1.msra.mxu0 %v544
        %1756 = vmatprep.subr.mxu0 %v555
        %1757 = vmatpush1.msra.mxu0 %v554
        %1758 = vmatprep.subr.mxu0 %v565
        %1759 = vmatpush1.msra.mxu0 %v564
        %1760 = vmatprep.subr.mxu0 %v575
        %1761 = vmatpush1.msra.mxu0 %v574
        %1762 = vmatprep.subr.mxu0 %v585
        %1763 = vmatpush1.msra.mxu0 %v584
        %1764 = vmatprep.subr.mxu0 %v595
        %1765 = vmatpush1.msra.mxu0 %v594
        %1766 = vmatprep.subr.mxu0 %v605
        %1767 = vmatpush1.msra.mxu0 %v604
        %1768 = vmatprep.subr.mxu0 %v615
        %1769 = vmatpush1.msra.mxu0 %v614
        %1770 = vmatprep.subr.mxu0 %v625
        %1771 = vmatpush1.msra.mxu0 %v624
        %1772 = vmatprep.subr.mxu0 %v635
        %1773 = vmatpush1.msra.mxu0 %v634
        %1774 = vmatprep.subr.mxu0 %v645
        %1775 = vmatpush1.msra.mxu0 %v644
        %1776 = vmatprep.subr.mxu0 %v655
        %1777 = vmatpush1.msra.mxu0 %v654
        %1778 = vmatprep.subr.mxu0 %v665
        %1779 = vmatpush1.msra.mxu0 %v664
        %1780 = vmatprep.subr.mxu0 %v675
        %1781 = vmatpush1.msra.mxu0 %v674
        %1782 = vmatprep.subr.mxu0 %v685
        %1783 = vmatpush1.msra.mxu0 %v684
        %1784 = vmatprep.subr.mxu0 %v695
        %1785 = vmatpush1.msra.mxu0 %v694
        %1786 = vmatprep.subr.mxu0 %v705
        %1787 = vmatpush1.msra.mxu0 %v704
        %1788 = vmatprep.subr.mxu0 %v715
        %1789 = vmatpush1.msra.mxu0 %v714
        %1790 = vmatprep.subr.mxu0 %v725
        %1791 = vmatpush1.msra.mxu0 %v724
        %1792 = vmatprep.subr.mxu0 %v735
        %1793 = vmatpush1.msra.mxu0 %v734
        %1794 = vmatprep.subr.mxu0 %v745
        %1795 = vmatpush1.msra.mxu0 %v744
        %1796 = vmatprep.subr.mxu0 %v755
        %1797 = vmatpush1.msra.mxu0 %v754
        %1798 = vmatprep.mubr.f32.mxu0 %v1725
        %1799 = vmatmul.mubr.f32.gmra.mrb[0].mxu0 %v1724
        %v1800 = vpop.f32.mrb[0].mxu0
        %v1801 = vadd.f32 %v1732, %v1800
        %v1802 = vpop.f32.mrb[0].mxu0
        %v1803 = vadd.f32 %v1732, %v1802
        %1804 = vdwg.mxu0
        %1805 = vmatprep.subr.mxu0 %v765
        %1806 = vmatpush1.msra.mxu0 %v764
        %1807 = vmatprep.subr.mxu0 %v775
        %1808 = vmatpush1.msra.mxu0 %v774
        %1809 = vmatprep.subr.mxu0 %v785
        %1810 = vmatpush1.msra.mxu0 %v784
        %1811 = vmatprep.subr.mxu0 %v795
        %1812 = vmatpush1.msra.mxu0 %v794
        %1813 = vmatprep.subr.mxu0 %v805
        %1814 = vmatpush1.msra.mxu0 %v804
        %1815 = vmatprep.subr.mxu0 %v815
        %1816 = vmatpush1.msra.mxu0 %v814
        %1817 = vmatprep.subr.mxu0 %v825
        %1818 = vmatpush1.msra.mxu0 %v824
        %1819 = vmatprep.subr.mxu0 %v835
        %1820 = vmatpush1.msra.mxu0 %v834
        %1821 = vmatprep.subr.mxu0 %v845
        %1822 = vmatpush1.msra.mxu0 %v844
        %1823 = vmatprep.subr.mxu0 %v855
        %1824 = vmatpush1.msra.mxu0 %v854
        %1825 = vmatprep.subr.mxu0 %v865
        %1826 = vmatpush1.msra.mxu0 %v864
        %1827 = vmatprep.subr.mxu0 %v875
        %1828 = vmatpush1.msra.mxu0 %v874
        %1829 = vmatprep.subr.mxu0 %v885
        %1830 = vmatpush1.msra.mxu0 %v884
        %1831 = vmatprep.subr.mxu0 %v895
        %1832 = vmatpush1.msra.mxu0 %v894
        %1833 = vmatprep.subr.mxu0 %v905
        %1834 = vmatpush1.msra.mxu0 %v904
        %1835 = vmatprep.subr.mxu0 %v915
        %1836 = vmatpush1.msra.mxu0 %v914
        %1837 = vmatprep.subr.mxu0 %v925
        %1838 = vmatpush1.msra.mxu0 %v924
        %1839 = vmatprep.subr.mxu0 %v935
        %1840 = vmatpush1.msra.mxu0 %v934
        %1841 = vmatprep.subr.mxu0 %v945
        %1842 = vmatpush1.msra.mxu0 %v944
        %1843 = vmatprep.subr.mxu0 %v955
        %1844 = vmatpush1.msra.mxu0 %v954
        %1845 = vmatprep.subr.mxu0 %v965
        %1846 = vmatpush1.msra.mxu0 %v964
        %1847 = vmatprep.subr.mxu0 %v975
        %1848 = vmatpush1.msra.mxu0 %v974
        %1849 = vmatprep.subr.mxu0 %v985
        %1850 = vmatpush1.msra.mxu0 %v984
        %1851 = vmatprep.subr.mxu0 %v995
        %1852 = vmatpush1.msra.mxu0 %v994
        %1853 = vmatprep.subr.mxu0 %v1005
        %1854 = vmatpush1.msra.mxu0 %v1004
        %1855 = vmatprep.subr.mxu0 %v1015
        %1856 = vmatpush1.msra.mxu0 %v1014
        %1857 = vmatprep.subr.mxu0 %v1025
        %1858 = vmatpush1.msra.mxu0 %v1024
        %1859 = vmatprep.subr.mxu0 %v1035
        %1860 = vmatpush1.msra.mxu0 %v1034
        %1861 = vmatprep.subr.mxu0 %v1045
        %1862 = vmatpush1.msra.mxu0 %v1044
        %1863 = vmatprep.subr.mxu0 %v1055
        %1864 = vmatpush1.msra.mxu0 %v1054
        %1865 = vmatprep.subr.mxu0 %v1065
        %1866 = vmatpush1.msra.mxu0 %v1064
        %1867 = vmatprep.subr.mxu0 %v1075
        %1868 = vmatpush1.msra.mxu0 %v1074
        %1869 = vmatprep.mubr.f32.mxu0 %v1727
        %1870 = vmatmul.mubr.f32.gmra.mrb[0].mxu0 %v1726
        %v1871 = vpop.f32.mrb[0].mxu0
        %v1872 = vadd.f32 %v1801, %v1871
        %v1873 = vpop.f32.mrb[0].mxu0
        %v1874 = vadd.f32 %v1803, %v1873
        %1875 = vdwg.mxu0
        %1876 = vmatprep.subr.mxu0 %v447
        %1877 = vmatpush1.msra.mxu0 %v446
        %1878 = vmatprep.subr.mxu0 %v457
        %1879 = vmatpush1.msra.mxu0 %v456
        %1880 = vmatprep.subr.mxu0 %v467
        %1881 = vmatpush1.msra.mxu0 %v466
        %1882 = vmatprep.subr.mxu0 %v477
        %1883 = vmatpush1.msra.mxu0 %v476
        %1884 = vmatprep.subr.mxu0 %v487
        %1885 = vmatpush1.msra.mxu0 %v486
        %1886 = vmatprep.subr.mxu0 %v497
        %1887 = vmatpush1.msra.mxu0 %v496
        %1888 = vmatprep.subr.mxu0 %v507
        %1889 = vmatpush1.msra.mxu0 %v506
        %1890 = vmatprep.subr.mxu0 %v517
        %1891 = vmatpush1.msra.mxu0 %v516
        %1892 = vmatprep.subr.mxu0 %v527
        %1893 = vmatpush1.msra.mxu0 %v526
        %1894 = vmatprep.subr.mxu0 %v537
        %1895 = vmatpush1.msra.mxu0 %v536
        %1896 = vmatprep.subr.mxu0 %v547
        %1897 = vmatpush1.msra.mxu0 %v546
        %1898 = vmatprep.subr.mxu0 %v557
        %1899 = vmatpush1.msra.mxu0 %v556
        %1900 = vmatprep.subr.mxu0 %v567
        %1901 = vmatpush1.msra.mxu0 %v566
        %1902 = vmatprep.subr.mxu0 %v577
        %1903 = vmatpush1.msra.mxu0 %v576
        %1904 = vmatprep.subr.mxu0 %v587
        %1905 = vmatpush1.msra.mxu0 %v586
        %1906 = vmatprep.subr.mxu0 %v597
        %1907 = vmatpush1.msra.mxu0 %v596
        %1908 = vmatprep.subr.mxu0 %v607
        %1909 = vmatpush1.msra.mxu0 %v606
        %1910 = vmatprep.subr.mxu0 %v617
        %1911 = vmatpush1.msra.mxu0 %v616
        %1912 = vmatprep.subr.mxu0 %v627
        %1913 = vmatpush1.msra.mxu0 %v626
        %1914 = vmatprep.subr.mxu0 %v637
        %1915 = vmatpush1.msra.mxu0 %v636
        %1916 = vmatprep.subr.mxu0 %v647
        %1917 = vmatpush1.msra.mxu0 %v646
        %1918 = vmatprep.subr.mxu0 %v657
        %1919 = vmatpush1.msra.mxu0 %v656
        %1920 = vmatprep.subr.mxu0 %v667
        %1921 = vmatpush1.msra.mxu0 %v666
        %1922 = vmatprep.subr.mxu0 %v677
        %1923 = vmatpush1.msra.mxu0 %v676
        %1924 = vmatprep.subr.mxu0 %v687
        %1925 = vmatpush1.msra.mxu0 %v686
        %1926 = vmatprep.subr.mxu0 %v697
        %1927 = vmatpush1.msra.mxu0 %v696
        %1928 = vmatprep.subr.mxu0 %v707
        %1929 = vmatpush1.msra.mxu0 %v706
        %1930 = vmatprep.subr.mxu0 %v717
        %1931 = vmatpush1.msra.mxu0 %v716
        %1932 = vmatprep.subr.mxu0 %v727
        %1933 = vmatpush1.msra.mxu0 %v726
        %1934 = vmatprep.subr.mxu0 %v737
        %1935 = vmatpush1.msra.mxu0 %v736
        %1936 = vmatprep.subr.mxu0 %v747
        %1937 = vmatpush1.msra.mxu0 %v746
        %1938 = vmatprep.subr.mxu0 %v757
        %1939 = vmatpush1.msra.mxu0 %v756
        %1940 = vmatprep.mubr.f32.mxu0 %v1725
        %1941 = vmatmul.mubr.f32.gmra.mrb[0].mxu0 %v1724
        %v1942 = vpop.f32.mrb[0].mxu0
        %v1943 = vadd.f32 %v1732, %v1942
        %v1944 = vpop.f32.mrb[0].mxu0
        %v1945 = vadd.f32 %v1732, %v1944
        %1946 = vdwg.mxu0
        %1947 = vmatprep.subr.mxu0 %v767
        %1948 = vmatpush1.msra.mxu0 %v766
        %1949 = vmatprep.subr.mxu0 %v777
        %1950 = vmatpush1.msra.mxu0 %v776
        %1951 = vmatprep.subr.mxu0 %v787
        %1952 = vmatpush1.msra.mxu0 %v786
        %1953 = vmatprep.subr.mxu0 %v797
        %1954 = vmatpush1.msra.mxu0 %v796
        %1955 = vmatprep.subr.mxu0 %v807
        %1956 = vmatpush1.msra.mxu0 %v806
        %1957 = vmatprep.subr.mxu0 %v817
        %1958 = vmatpush1.msra.mxu0 %v816
        %1959 = vmatprep.subr.mxu0 %v827
        %1960 = vmatpush1.msra.mxu0 %v826
        %1961 = vmatprep.subr.mxu0 %v837
        %1962 = vmatpush1.msra.mxu0 %v836
        %1963 = vmatprep.subr.mxu0 %v847
        %1964 = vmatpush1.msra.mxu0 %v846
        %1965 = vmatprep.subr.mxu0 %v857
        %1966 = vmatpush1.msra.mxu0 %v856
        %1967 = vmatprep.subr.mxu0 %v867
        %1968 = vmatpush1.msra.mxu0 %v866
        %1969 = vmatprep.subr.mxu0 %v877
        %1970 = vmatpush1.msra.mxu0 %v876
        %1971 = vmatprep.subr.mxu0 %v887
        %1972 = vmatpush1.msra.mxu0 %v886
        %1973 = vmatprep.subr.mxu0 %v897
        %1974 = vmatpush1.msra.mxu0 %v896
        %1975 = vmatprep.subr.mxu0 %v907
        %1976 = vmatpush1.msra.mxu0 %v906
        %1977 = vmatprep.subr.mxu0 %v917
        %1978 = vmatpush1.msra.mxu0 %v916
        %1979 = vmatprep.subr.mxu0 %v927
        %1980 = vmatpush1.msra.mxu0 %v926
        %1981 = vmatprep.subr.mxu0 %v937
        %1982 = vmatpush1.msra.mxu0 %v936
        %1983 = vmatprep.subr.mxu0 %v947
        %1984 = vmatpush1.msra.mxu0 %v946
        %1985 = vmatprep.subr.mxu0 %v957
        %1986 = vmatpush1.msra.mxu0 %v956
        %1987 = vmatprep.subr.mxu0 %v967
        %1988 = vmatpush1.msra.mxu0 %v966
        %1989 = vmatprep.subr.mxu0 %v977
        %1990 = vmatpush1.msra.mxu0 %v976
        %1991 = vmatprep.subr.mxu0 %v987
        %1992 = vmatpush1.msra.mxu0 %v986
        %1993 = vmatprep.subr.mxu0 %v997
        %1994 = vmatpush1.msra.mxu0 %v996
        %1995 = vmatprep.subr.mxu0 %v1007
        %1996 = vmatpush1.msra.mxu0 %v1006
        %1997 = vmatprep.subr.mxu0 %v1017
        %1998 = vmatpush1.msra.mxu0 %v1016
        %1999 = vmatprep.subr.mxu0 %v1027
        %2000 = vmatpush1.msra.mxu0 %v1026
        %2001 = vmatprep.subr.mxu0 %v1037
        %2002 = vmatpush1.msra.mxu0 %v1036
        %2003 = vmatprep.subr.mxu0 %v1047
        %2004 = vmatpush1.msra.mxu0 %v1046
        %2005 = vmatprep.subr.mxu0 %v1057
        %2006 = vmatpush1.msra.mxu0 %v1056
        %2007 = vmatprep.subr.mxu0 %v1067
        %2008 = vmatpush1.msra.mxu0 %v1066
        %2009 = vmatprep.subr.mxu0 %v1077
        %2010 = vmatpush1.msra.mxu0 %v1076
        %2011 = vmatprep.mubr.f32.mxu0 %v1727
        %2012 = vmatmul.mubr.f32.gmra.mrb[0].mxu0 %v1726
        %v2013 = vpop.f32.mrb[0].mxu0
        %v2014 = vadd.f32 %v1943, %v2013
        %v2015 = vpop.f32.mrb[0].mxu0
        %v2016 = vadd.f32 %v1945, %v2015
        %2017 = vdwg.mxu0
        %2018 = vmatprep.subr.mxu0 %v449
        %2019 = vmatpush1.msra.mxu0 %v448
        %2020 = vmatprep.subr.mxu0 %v459
        %2021 = vmatpush1.msra.mxu0 %v458
        %2022 = vmatprep.subr.mxu0 %v469
        %2023 = vmatpush1.msra.mxu0 %v468
        %2024 = vmatprep.subr.mxu0 %v479
        %2025 = vmatpush1.msra.mxu0 %v478
        %2026 = vmatprep.subr.mxu0 %v489
        %2027 = vmatpush1.msra.mxu0 %v488
        %2028 = vmatprep.subr.mxu0 %v499
        %2029 = vmatpush1.msra.mxu0 %v498
        %2030 = vmatprep.subr.mxu0 %v509
        %2031 = vmatpush1.msra.mxu0 %v508
        %2032 = vmatprep.subr.mxu0 %v519
        %2033 = vmatpush1.msra.mxu0 %v518
        %2034 = vmatprep.subr.mxu0 %v529
        %2035 = vmatpush1.msra.mxu0 %v528
        %2036 = vmatprep.subr.mxu0 %v539
        %2037 = vmatpush1.msra.mxu0 %v538
        %2038 = vmatprep.subr.mxu0 %v549
        %2039 = vmatpush1.msra.mxu0 %v548
        %2040 = vmatprep.subr.mxu0 %v559
        %2041 = vmatpush1.msra.mxu0 %v558
        %2042 = vmatprep.subr.mxu0 %v569
        %2043 = vmatpush1.msra.mxu0 %v568
        %2044 = vmatprep.subr.mxu0 %v579
        %2045 = vmatpush1.msra.mxu0 %v578
        %2046 = vmatprep.subr.mxu0 %v589
        %2047 = vmatpush1.msra.mxu0 %v588
        %2048 = vmatprep.subr.mxu0 %v599
        %2049 = vmatpush1.msra.mxu0 %v598
        %2050 = vmatprep.subr.mxu0 %v609
        %2051 = vmatpush1.msra.mxu0 %v608
        %2052 = vmatprep.subr.mxu0 %v619
        %2053 = vmatpush1.msra.mxu0 %v618
        %2054 = vmatprep.subr.mxu0 %v629
        %2055 = vmatpush1.msra.mxu0 %v628
        %2056 = vmatprep.subr.mxu0 %v639
        %2057 = vmatpush1.msra.mxu0 %v638
        %2058 = vmatprep.subr.mxu0 %v649
        %2059 = vmatpush1.msra.mxu0 %v648
        %2060 = vmatprep.subr.mxu0 %v659
        %2061 = vmatpush1.msra.mxu0 %v658
        %2062 = vmatprep.subr.mxu0 %v669
        %2063 = vmatpush1.msra.mxu0 %v668
        %2064 = vmatprep.subr.mxu0 %v679
        %2065 = vmatpush1.msra.mxu0 %v678
        %2066 = vmatprep.subr.mxu0 %v689
        %2067 = vmatpush1.msra.mxu0 %v688
        %2068 = vmatprep.subr.mxu0 %v699
        %2069 = vmatpush1.msra.mxu0 %v698
        %2070 = vmatprep.subr.mxu0 %v709
        %2071 = vmatpush1.msra.mxu0 %v708
        %2072 = vmatprep.subr.mxu0 %v719
        %2073 = vmatpush1.msra.mxu0 %v718
        %2074 = vmatprep.subr.mxu0 %v729
        %2075 = vmatpush1.msra.mxu0 %v728
        %2076 = vmatprep.subr.mxu0 %v739
        %2077 = vmatpush1.msra.mxu0 %v738
        %2078 = vmatprep.subr.mxu0 %v749
        %2079 = vmatpush1.msra.mxu0 %v748
        %2080 = vmatprep.subr.mxu0 %v759
        %2081 = vmatpush1.msra.mxu0 %v758
        %2082 = vmatprep.mubr.f32.mxu0 %v1725
        %2083 = vmatmul.mubr.f32.gmra.mrb[0].mxu0 %v1724
        %v2084 = vpop.f32.mrb[0].mxu0
        %v2085 = vadd.f32 %v1732, %v2084
        %v2086 = vpop.f32.mrb[0].mxu0
        %v2087 = vadd.f32 %v1732, %v2086
        %2088 = vdwg.mxu0
        %2089 = vmatprep.subr.mxu0 %v769
        %2090 = vmatpush1.msra.mxu0 %v768
        %2091 = vmatprep.subr.mxu0 %v779
        %2092 = vmatpush1.msra.mxu0 %v778
        %2093 = vmatprep.subr.mxu0 %v789
        %2094 = vmatpush1.msra.mxu0 %v788
        %2095 = vmatprep.subr.mxu0 %v799
        %2096 = vmatpush1.msra.mxu0 %v798
        %2097 = vmatprep.subr.mxu0 %v809
        %2098 = vmatpush1.msra.mxu0 %v808
        %2099 = vmatprep.subr.mxu0 %v819
        %2100 = vmatpush1.msra.mxu0 %v818
        %2101 = vmatprep.subr.mxu0 %v829
        %2102 = vmatpush1.msra.mxu0 %v828
        %2103 = vmatprep.subr.mxu0 %v839
        %2104 = vmatpush1.msra.mxu0 %v838
        %2105 = vmatprep.subr.mxu0 %v849
        %2106 = vmatpush1.msra.mxu0 %v848
        %2107 = vmatprep.subr.mxu0 %v859
        %2108 = vmatpush1.msra.mxu0 %v858
        %2109 = vmatprep.subr.mxu0 %v869
        %2110 = vmatpush1.msra.mxu0 %v868
        %2111 = vmatprep.subr.mxu0 %v879
        %2112 = vmatpush1.msra.mxu0 %v878
        %2113 = vmatprep.subr.mxu0 %v889
        %2114 = vmatpush1.msra.mxu0 %v888
        %2115 = vmatprep.subr.mxu0 %v899
        %2116 = vmatpush1.msra.mxu0 %v898
        %2117 = vmatprep.subr.mxu0 %v909
        %2118 = vmatpush1.msra.mxu0 %v908
        %2119 = vmatprep.subr.mxu0 %v919
        %2120 = vmatpush1.msra.mxu0 %v918
        %2121 = vmatprep.subr.mxu0 %v929
        %2122 = vmatpush1.msra.mxu0 %v928
        %2123 = vmatprep.subr.mxu0 %v939
        %2124 = vmatpush1.msra.mxu0 %v938
        %2125 = vmatprep.subr.mxu0 %v949
        %2126 = vmatpush1.msra.mxu0 %v948
        %2127 = vmatprep.subr.mxu0 %v959
        %2128 = vmatpush1.msra.mxu0 %v958
        %2129 = vmatprep.subr.mxu0 %v969
        %2130 = vmatpush1.msra.mxu0 %v968
        %2131 = vmatprep.subr.mxu0 %v979
        %2132 = vmatpush1.msra.mxu0 %v978
        %2133 = vmatprep.subr.mxu0 %v989
        %2134 = vmatpush1.msra.mxu0 %v988
        %2135 = vmatprep.subr.mxu0 %v999
        %2136 = vmatpush1.msra.mxu0 %v998
        %2137 = vmatprep.subr.mxu0 %v1009
        %2138 = vmatpush1.msra.mxu0 %v1008
        %2139 = vmatprep.subr.mxu0 %v1019
        %2140 = vmatpush1.msra.mxu0 %v1018
        %2141 = vmatprep.subr.mxu0 %v1029
        %2142 = vmatpush1.msra.mxu0 %v1028
        %2143 = vmatprep.subr.mxu0 %v1039
        %2144 = vmatpush1.msra.mxu0 %v1038
        %2145 = vmatprep.subr.mxu0 %v1049
        %2146 = vmatpush1.msra.mxu0 %v1048
        %2147 = vmatprep.subr.mxu0 %v1059
        %2148 = vmatpush1.msra.mxu0 %v1058
        %2149 = vmatprep.subr.mxu0 %v1069
        %2150 = vmatpush1.msra.mxu0 %v1068
        %2151 = vmatprep.subr.mxu0 %v1079
        %2152 = vmatpush1.msra.mxu0 %v1078
        %2153 = vmatprep.mubr.f32.mxu0 %v1727
        %2154 = vmatmul.mubr.f32.gmra.mrb[0].mxu0 %v1726
        %v2155 = vpop.f32.mrb[0].mxu0
        %v2156 = vadd.f32 %v2085, %v2155
        %v2157 = vpop.f32.mrb[0].mxu0
        %v2158 = vadd.f32 %v2087, %v2157
        %2159 = vdwg.mxu0
        %2160 = vmatprep.subr.mxu0 %v451
        %2161 = vmatpush1.msra.mxu0 %v450
        %2162 = vmatprep.subr.mxu0 %v461
        %2163 = vmatpush1.msra.mxu0 %v460
        %2164 = vmatprep.subr.mxu0 %v471
        %2165 = vmatpush1.msra.mxu0 %v470
        %2166 = vmatprep.subr.mxu0 %v481
        %2167 = vmatpush1.msra.mxu0 %v480
        %2168 = vmatprep.subr.mxu0 %v491
        %2169 = vmatpush1.msra.mxu0 %v490
        %2170 = vmatprep.subr.mxu0 %v501
        %2171 = vmatpush1.msra.mxu0 %v500
        %2172 = vmatprep.subr.mxu0 %v511
        %2173 = vmatpush1.msra.mxu0 %v510
        %2174 = vmatprep.subr.mxu0 %v521
        %2175 = vmatpush1.msra.mxu0 %v520
        %2176 = vmatprep.subr.mxu0 %v531
        %2177 = vmatpush1.msra.mxu0 %v530
        %2178 = vmatprep.subr.mxu0 %v541
        %2179 = vmatpush1.msra.mxu0 %v540
        %2180 = vmatprep.subr.mxu0 %v551
        %2181 = vmatpush1.msra.mxu0 %v550
        %2182 = vmatprep.subr.mxu0 %v561
        %2183 = vmatpush1.msra.mxu0 %v560
        %2184 = vmatprep.subr.mxu0 %v571
        %2185 = vmatpush1.msra.mxu0 %v570
        %2186 = vmatprep.subr.mxu0 %v581
        %2187 = vmatpush1.msra.mxu0 %v580
        %2188 = vmatprep.subr.mxu0 %v591
        %2189 = vmatpush1.msra.mxu0 %v590
        %2190 = vmatprep.subr.mxu0 %v601
        %2191 = vmatpush1.msra.mxu0 %v600
        %2192 = vmatprep.subr.mxu0 %v611
        %2193 = vmatpush1.msra.mxu0 %v610
        %2194 = vmatprep.subr.mxu0 %v621
        %2195 = vmatpush1.msra.mxu0 %v620
        %2196 = vmatprep.subr.mxu0 %v631
        %2197 = vmatpush1.msra.mxu0 %v630
        %2198 = vmatprep.subr.mxu0 %v641
        %2199 = vmatpush1.msra.mxu0 %v640
        %2200 = vmatprep.subr.mxu0 %v651
        %2201 = vmatpush1.msra.mxu0 %v650
        %2202 = vmatprep.subr.mxu0 %v661
        %2203 = vmatpush1.msra.mxu0 %v660
        %2204 = vmatprep.subr.mxu0 %v671
        %2205 = vmatpush1.msra.mxu0 %v670
        %2206 = vmatprep.subr.mxu0 %v681
        %2207 = vmatpush1.msra.mxu0 %v680
        %2208 = vmatprep.subr.mxu0 %v691
        %2209 = vmatpush1.msra.mxu0 %v690
        %2210 = vmatprep.subr.mxu0 %v701
        %2211 = vmatpush1.msra.mxu0 %v700
        %2212 = vmatprep.subr.mxu0 %v711
        %2213 = vmatpush1.msra.mxu0 %v710
        %2214 = vmatprep.subr.mxu0 %v721
        %2215 = vmatpush1.msra.mxu0 %v720
        %2216 = vmatprep.subr.mxu0 %v731
        %2217 = vmatpush1.msra.mxu0 %v730
        %2218 = vmatprep.subr.mxu0 %v741
        %2219 = vmatpush1.msra.mxu0 %v740
        %2220 = vmatprep.subr.mxu0 %v751
        %2221 = vmatpush1.msra.mxu0 %v750
        %2222 = vmatprep.subr.mxu0 %v761
        %2223 = vmatpush1.msra.mxu0 %v760
        %2224 = vmatprep.mubr.f32.mxu0 %v1725
        %2225 = vmatmul.mubr.f32.gmra.mrb[0].mxu0 %v1724
        %v2226 = vpop.f32.mrb[0].mxu0
        %v2227 = vadd.f32 %v1732, %v2226
        %v2228 = vpop.f32.mrb[0].mxu0
        %v2229 = vadd.f32 %v1732, %v2228
        %2230 = vdwg.mxu0
        %2231 = vmatprep.subr.mxu0 %v771
        %2232 = vmatpush1.msra.mxu0 %v770
        %2233 = vmatprep.subr.mxu0 %v781
        %2234 = vmatpush1.msra.mxu0 %v780
        %2235 = vmatprep.subr.mxu0 %v791
        %2236 = vmatpush1.msra.mxu0 %v790
        %2237 = vmatprep.subr.mxu0 %v801
        %2238 = vmatpush1.msra.mxu0 %v800
        %2239 = vmatprep.subr.mxu0 %v811
        %2240 = vmatpush1.msra.mxu0 %v810
        %2241 = vmatprep.subr.mxu0 %v821
        %2242 = vmatpush1.msra.mxu0 %v820
        %2243 = vmatprep.subr.mxu0 %v831
        %2244 = vmatpush1.msra.mxu0 %v830
        %2245 = vmatprep.subr.mxu0 %v841
        %2246 = vmatpush1.msra.mxu0 %v840
        %2247 = vmatprep.subr.mxu0 %v851
        %2248 = vmatpush1.msra.mxu0 %v850
        %2249 = vmatprep.subr.mxu0 %v861
        %2250 = vmatpush1.msra.mxu0 %v860
        %2251 = vmatprep.subr.mxu0 %v871
        %2252 = vmatpush1.msra.mxu0 %v870
        %2253 = vmatprep.subr.mxu0 %v881
        %2254 = vmatpush1.msra.mxu0 %v880
        %2255 = vmatprep.subr.mxu0 %v891
        %2256 = vmatpush1.msra.mxu0 %v890
        %2257 = vmatprep.subr.mxu0 %v901
        %2258 = vmatpush1.msra.mxu0 %v900
        %2259 = vmatprep.subr.mxu0 %v911
        %2260 = vmatpush1.msra.mxu0 %v910
        %2261 = vmatprep.subr.mxu0 %v921
        %2262 = vmatpush1.msra.mxu0 %v920
        %2263 = vmatprep.subr.mxu0 %v931
        %2264 = vmatpush1.msra.mxu0 %v930
        %2265 = vmatprep.subr.mxu0 %v941
        %2266 = vmatpush1.msra.mxu0 %v940
        %2267 = vmatprep.subr.mxu0 %v951
        %2268 = vmatpush1.msra.mxu0 %v950
        %2269 = vmatprep.subr.mxu0 %v961
        %2270 = vmatpush1.msra.mxu0 %v960
        %2271 = vmatprep.subr.mxu0 %v971
        %2272 = vmatpush1.msra.mxu0 %v970
        %2273 = vmatprep.subr.mxu0 %v981
        %2274 = vmatpush1.msra.mxu0 %v980
        %2275 = vmatprep.subr.mxu0 %v991
        %2276 = vmatpush1.msra.mxu0 %v990
        %2277 = vmatprep.subr.mxu0 %v1001
        %2278 = vmatpush1.msra.mxu0 %v1000
        %2279 = vmatprep.subr.mxu0 %v1011
        %2280 = vmatpush1.msra.mxu0 %v1010
        %2281 = vmatprep.subr.mxu0 %v1021
        %2282 = vmatpush1.msra.mxu0 %v1020
        %2283 = vmatprep.subr.mxu0 %v1031
        %2284 = vmatpush1.msra.mxu0 %v1030
        %2285 = vmatprep.subr.mxu0 %v1041
        %2286 = vmatpush1.msra.mxu0 %v1040
        %2287 = vmatprep.subr.mxu0 %v1051
        %2288 = vmatpush1.msra.mxu0 %v1050
        %2289 = vmatprep.subr.mxu0 %v1061
        %2290 = vmatpush1.msra.mxu0 %v1060
        %2291 = vmatprep.subr.mxu0 %v1071
        %2292 = vmatpush1.msra.mxu0 %v1070
        %2293 = vmatprep.subr.mxu0 %v1081
        %2294 = vmatpush1.msra.mxu0 %v1080
        %2295 = vmatprep.mubr.f32.mxu0 %v1727
        %2296 = vmatmul.mubr.f32.gmra.mrb[0].mxu0 %v1726
        %v2297 = vpop.f32.mrb[0].mxu0
        %v2298 = vadd.f32 %v2227, %v2297
        %v2299 = vpop.f32.mrb[0].mxu0
        %v2300 = vadd.f32 %v2229, %v2299
        %2301 = vdwg.mxu0
        %2302 = vmatprep.subr.mxu0 %v453
        %2303 = vmatpush1.msra.mxu0 %v452
        %2304 = vmatprep.subr.mxu0 %v463
        %2305 = vmatpush1.msra.mxu0 %v462
        %2306 = vmatprep.subr.mxu0 %v473
        %2307 = vmatpush1.msra.mxu0 %v472
        %2308 = vmatprep.subr.mxu0 %v483
        %2309 = vmatpush1.msra.mxu0 %v482
        %2310 = vmatprep.subr.mxu0 %v493
        %2311 = vmatpush1.msra.mxu0 %v492
        %2312 = vmatprep.subr.mxu0 %v503
        %2313 = vmatpush1.msra.mxu0 %v502
        %2314 = vmatprep.subr.mxu0 %v513
        %2315 = vmatpush1.msra.mxu0 %v512
        %2316 = vmatprep.subr.mxu0 %v523
        %2317 = vmatpush1.msra.mxu0 %v522
        %2318 = vmatprep.subr.mxu0 %v533
        %2319 = vmatpush1.msra.mxu0 %v532
        %2320 = vmatprep.subr.mxu0 %v543
        %2321 = vmatpush1.msra.mxu0 %v542
        %2322 = vmatprep.subr.mxu0 %v553
        %2323 = vmatpush1.msra.mxu0 %v552
        %2324 = vmatprep.subr.mxu0 %v563
        %2325 = vmatpush1.msra.mxu0 %v562
        %2326 = vmatprep.subr.mxu0 %v573
        %2327 = vmatpush1.msra.mxu0 %v572
        %2328 = vmatprep.subr.mxu0 %v583
        %2329 = vmatpush1.msra.mxu0 %v582
        %2330 = vmatprep.subr.mxu0 %v593
        %2331 = vmatpush1.msra.mxu0 %v592
        %2332 = vmatprep.subr.mxu0 %v603
        %2333 = vmatpush1.msra.mxu0 %v602
        %2334 = vmatprep.subr.mxu0 %v613
        %2335 = vmatpush1.msra.mxu0 %v612
        %2336 = vmatprep.subr.mxu0 %v623
        %2337 = vmatpush1.msra.mxu0 %v622
        %2338 = vmatprep.subr.mxu0 %v633
        %2339 = vmatpush1.msra.mxu0 %v632
        %2340 = vmatprep.subr.mxu0 %v643
        %2341 = vmatpush1.msra.mxu0 %v642
        %2342 = vmatprep.subr.mxu0 %v653
        %2343 = vmatpush1.msra.mxu0 %v652
        %2344 = vmatprep.subr.mxu0 %v663
        %2345 = vmatpush1.msra.mxu0 %v662
        %2346 = vmatprep.subr.mxu0 %v673
        %2347 = vmatpush1.msra.mxu0 %v672
        %2348 = vmatprep.subr.mxu0 %v683
        %2349 = vmatpush1.msra.mxu0 %v682
        %2350 = vmatprep.subr.mxu0 %v693
        %2351 = vmatpush1.msra.mxu0 %v692
        %2352 = vmatprep.subr.mxu0 %v703
        %2353 = vmatpush1.msra.mxu0 %v702
        %2354 = vmatprep.subr.mxu0 %v713
        %2355 = vmatpush1.msra.mxu0 %v712
        %2356 = vmatprep.subr.mxu0 %v723
        %2357 = vmatpush1.msra.mxu0 %v722
        %2358 = vmatprep.subr.mxu0 %v733
        %2359 = vmatpush1.msra.mxu0 %v732
        %2360 = vmatprep.subr.mxu0 %v743
        %2361 = vmatpush1.msra.mxu0 %v742
        %2362 = vmatprep.subr.mxu0 %v753
        %2363 = vmatpush1.msra.mxu0 %v752
        %2364 = vmatprep.subr.mxu0 %v763
        %2365 = vmatpush1.msra.mxu0 %v762
        %2366 = vmatprep.mubr.f32.mxu0 %v1725
        %2367 = vmatmul.mubr.f32.gmra.mrb[0].mxu0 %v1724
        %v2368 = vpop.f32.mrb[0].mxu0
        %v2369 = vadd.f32 %v1732, %v2368
        %v2370 = vpop.f32.mrb[0].mxu0
        %v2371 = vadd.f32 %v1732, %v2370
        %2372 = vdwg.mxu0
        %2373 = vmatprep.subr.mxu0 %v773
        %2374 = vmatpush1.msra.mxu0 %v772
        %2375 = vmatprep.subr.mxu0 %v783
        %2376 = vmatpush1.msra.mxu0 %v782
        %2377 = vmatprep.subr.mxu0 %v793
        %2378 = vmatpush1.msra.mxu0 %v792
        %2379 = vmatprep.subr.mxu0 %v803
        %2380 = vmatpush1.msra.mxu0 %v802
        %2381 = vmatprep.subr.mxu0 %v813
        %2382 = vmatpush1.msra.mxu0 %v812
        %2383 = vmatprep.subr.mxu0 %v823
        %2384 = vmatpush1.msra.mxu0 %v822
        %2385 = vmatprep.subr.mxu0 %v833
        %2386 = vmatpush1.msra.mxu0 %v832
        %2387 = vmatprep.subr.mxu0 %v843
        %2388 = vmatpush1.msra.mxu0 %v842
        %2389 = vmatprep.subr.mxu0 %v853
        %2390 = vmatpush1.msra.mxu0 %v852
        %2391 = vmatprep.subr.mxu0 %v863
        %2392 = vmatpush1.msra.mxu0 %v862
        %2393 = vmatprep.subr.mxu0 %v873
        %2394 = vmatpush1.msra.mxu0 %v872
        %2395 = vmatprep.subr.mxu0 %v883
        %2396 = vmatpush1.msra.mxu0 %v882
        %2397 = vmatprep.subr.mxu0 %v893
        %2398 = vmatpush1.msra.mxu0 %v892
        %2399 = vmatprep.subr.mxu0 %v903
        %2400 = vmatpush1.msra.mxu0 %v902
        %2401 = vmatprep.subr.mxu0 %v913
        %2402 = vmatpush1.msra.mxu0 %v912
        %2403 = vmatprep.subr.mxu0 %v923
        %2404 = vmatpush1.msra.mxu0 %v922
        %2405 = vmatprep.subr.mxu0 %v933
        %2406 = vmatpush1.msra.mxu0 %v932
        %2407 = vmatprep.subr.mxu0 %v943
        %2408 = vmatpush1.msra.mxu0 %v942
        %2409 = vmatprep.subr.mxu0 %v953
        %2410 = vmatpush1.msra.mxu0 %v952
        %2411 = vmatprep.subr.mxu0 %v963
        %2412 = vmatpush1.msra.mxu0 %v962
        %2413 = vmatprep.subr.mxu0 %v973
        %2414 = vmatpush1.msra.mxu0 %v972
        %2415 = vmatprep.subr.mxu0 %v983
        %2416 = vmatpush1.msra.mxu0 %v982
        %2417 = vmatprep.subr.mxu0 %v993
        %2418 = vmatpush1.msra.mxu0 %v992
        %2419 = vmatprep.subr.mxu0 %v1003
        %2420 = vmatpush1.msra.mxu0 %v1002
        %2421 = vmatprep.subr.mxu0 %v1013
        %2422 = vmatpush1.msra.mxu0 %v1012
        %2423 = vmatprep.subr.mxu0 %v1023
        %2424 = vmatpush1.msra.mxu0 %v1022
        %2425 = vmatprep.subr.mxu0 %v1033
        %2426 = vmatpush1.msra.mxu0 %v1032
        %2427 = vmatprep.subr.mxu0 %v1043
        %2428 = vmatpush1.msra.mxu0 %v1042
        %2429 = vmatprep.subr.mxu0 %v1053
        %2430 = vmatpush1.msra.mxu0 %v1052
        %2431 = vmatprep.subr.mxu0 %v1063
        %2432 = vmatpush1.msra.mxu0 %v1062
        %2433 = vmatprep.subr.mxu0 %v1073
        %2434 = vmatpush1.msra.mxu0 %v1072
        %2435 = vmatprep.subr.mxu0 %v1083
        %2436 = vmatpush1.msra.mxu0 %v1082
        %2437 = vmatprep.mubr.f32.mxu0 %v1727
        %2438 = vmatmul.mubr.f32.gmra.mrb[0].mxu0 %v1726
        %v2439 = vpop.f32.mrb[0].mxu0
        %v2440 = vadd.f32 %v2369, %v2439
        %v2441 = vpop.f32.mrb[0].mxu0
        %v2442 = vadd.f32 %v2371, %v2441
        %2443 = vdwg.mxu0
        %v2444 = vmax.f32 %v1872, 0.0
        %v2445 = vmax.f32 %v1874, 0.0
        %v2446 = vmax.f32 %v2014, 0.0
        %v2447 = vmax.f32 %v2016, 0.0
        %v2448 = vmax.f32 %v2156, 0.0
        %v2449 = vmax.f32 %v2158, 0.0
        %v2450 = vmax.f32 %v2298, 0.0
        %v2451 = vmax.f32 %v2300, 0.0
        %v2452 = vmax.f32 %v2440, 0.0
        %v2453 = vmax.f32 %v2442, 0.0
        %2454 = vst [vmem:[%s413] sm:$0xff] %v2444
        %2455 = vst [vmem:[%s413 + $0x8] sm:$0xff] %v2445
        %2456 = vst [vmem:[%s413 + $0x10] sm:$0xff] %v2446
        %2457 = vst [vmem:[%s413 + $0x18] sm:$0xff] %v2447
        %2458 = vst [vmem:[%s413 + $0x20] sm:$0xff] %v2448
        %2459 = vst [vmem:[%s413 + $0x28] sm:$0xff] %v2449
        %2460 = vst [vmem:[%s413 + $0x30] sm:$0xff] %v2450
        %2461 = vst [vmem:[%s413 + $0x38] sm:$0xff] %v2451
        %2462 = vst [vmem:[%s413 + $0x40] sm:$0xff] %v2452
        %vm2463 = vcmask 392192
        %2464 = vst.msk [vmem:[%s413 + $0x48] sm:$0xff] %vm2463, %v2453
        %v2465 = vld [vmem:[%s3] sm:$0xff]
        %v2466 = vld [vmem:[%s3 + $0x8] sm:$0xff]
        %v2467 = vld [vmem:[%s3 + $0x10] sm:$0xff]
        %v2468 = vld [vmem:[%s3 + $0x18] sm:$0xff]
        %v2469 = vld [vmem:[%s4] sm:$0xff]
        %2471 = vset.pattern.permute.xlu0 0
        %2472 = vperm.xlu0 %2471, %v2469
        %v2473 = vpop.permute.xlu0 %2472
        %2475 = vmatprep.subr.mxu0 %v445
        %2476 = vmatpush1.msra.mxu0 %v444
        %2477 = vmatprep.subr.mxu0 %v455
        %2478 = vmatpush1.msra.mxu0 %v454
        %2479 = vmatprep.subr.mxu0 %v465
        %2480 = vmatpush1.msra.mxu0 %v464
        %2481 = vmatprep.subr.mxu0 %v475
        %2482 = vmatpush1.msra.mxu0 %v474
        %2483 = vmatprep.subr.mxu0 %v485
        %2484 = vmatpush1.msra.mxu0 %v484
        %2485 = vmatprep.subr.mxu0 %v495
        %2486 = vmatpush1.msra.mxu0 %v494
        %2487 = vmatprep.subr.mxu0 %v505
        %2488 = vmatpush1.msra.mxu0 %v504
        %2489 = vmatprep.subr.mxu0 %v515
        %2490 = vmatpush1.msra.mxu0 %v514
        %2491 = vmatprep.subr.mxu0 %v525
        %2492 = vmatpush1.msra.mxu0 %v524
        %2493 = vmatprep.subr.mxu0 %v535
        %2494 = vmatpush1.msra.mxu0 %v534
        %2495 = vmatprep.subr.mxu0 %v545
        %2496 = vmatpush1.msra.mxu0 %v544
        %2497 = vmatprep.subr.mxu0 %v555
        %2498 = vmatpush1.msra.mxu0 %v554
        %2499 = vmatprep.subr.mxu0 %v565
        %2500 = vmatpush1.msra.mxu0 %v564
        %2501 = vmatprep.subr.mxu0 %v575
        %2502 = vmatpush1.msra.mxu0 %v574
        %2503 = vmatprep.subr.mxu0 %v585
        %2504 = vmatpush1.msra.mxu0 %v584
        %2505 = vmatprep.subr.mxu0 %v595
        %2506 = vmatpush1.msra.mxu0 %v594
        %2507 = vmatprep.subr.mxu0 %v605
        %2508 = vmatpush1.msra.mxu0 %v604
        %2509 = vmatprep.subr.mxu0 %v615
        %2510 = vmatpush1.msra.mxu0 %v614
        %2511 = vmatprep.subr.mxu0 %v625
        %2512 = vmatpush1.msra.mxu0 %v624
        %2513 = vmatprep.subr.mxu0 %v635
        %2514 = vmatpush1.msra.mxu0 %v634
        %2515 = vmatprep.subr.mxu0 %v645
        %2516 = vmatpush1.msra.mxu0 %v644
        %2517 = vmatprep.subr.mxu0 %v655
        %2518 = vmatpush1.msra.mxu0 %v654
        %2519 = vmatprep.subr.mxu0 %v665
        %2520 = vmatpush1.msra.mxu0 %v664
        %2521 = vmatprep.subr.mxu0 %v675
        %2522 = vmatpush1.msra.mxu0 %v674
        %2523 = vmatprep.subr.mxu0 %v685
        %2524 = vmatpush1.msra.mxu0 %v684
        %2525 = vmatprep.subr.mxu0 %v695
        %2526 = vmatpush1.msra.mxu0 %v694
        %2527 = vmatprep.subr.mxu0 %v705
        %2528 = vmatpush1.msra.mxu0 %v704
        %2529 = vmatprep.subr.mxu0 %v715
        %2530 = vmatpush1.msra.mxu0 %v714
        %2531 = vmatprep.subr.mxu0 %v725
        %2532 = vmatpush1.msra.mxu0 %v724
        %2533 = vmatprep.subr.mxu0 %v735
        %2534 = vmatpush1.msra.mxu0 %v734
        %2535 = vmatprep.subr.mxu0 %v745
        %2536 = vmatpush1.msra.mxu0 %v744
        %2537 = vmatprep.subr.mxu0 %v755
        %2538 = vmatpush1.msra.mxu0 %v754
        %2539 = vmatprep.mubr.f32.mxu0 %v2466
        %2540 = vmatmul.mubr.f32.gmra.mrb[0].mxu0 %v2465
        %v2541 = vpop.f32.mrb[0].mxu0
        %v2542 = vadd.f32 %v2473, %v2541
        %v2543 = vpop.f32.mrb[0].mxu0
        %v2544 = vadd.f32 %v2473, %v2543
        %2545 = vdwg.mxu0
        %2546 = vmatprep.subr.mxu0 %v765
        %2547 = vmatpush1.msra.mxu0 %v764
        %2548 = vmatprep.subr.mxu0 %v775
        %2549 = vmatpush1.msra.mxu0 %v774
        %2550 = vmatprep.subr.mxu0 %v785
        %2551 = vmatpush1.msra.mxu0 %v784
        %2552 = vmatprep.subr.mxu0 %v795
        %2553 = vmatpush1.msra.mxu0 %v794
        %2554 = vmatprep.subr.mxu0 %v805
        %2555 = vmatpush1.msra.mxu0 %v804
        %2556 = vmatprep.subr.mxu0 %v815
        %2557 = vmatpush1.msra.mxu0 %v814
        %2558 = vmatprep.subr.mxu0 %v825
        %2559 = vmatpush1.msra.mxu0 %v824
        %2560 = vmatprep.subr.mxu0 %v835
        %2561 = vmatpush1.msra.mxu0 %v834
        %2562 = vmatprep.subr.mxu0 %v845
        %2563 = vmatpush1.msra.mxu0 %v844
        %2564 = vmatprep.subr.mxu0 %v855
        %2565 = vmatpush1.msra.mxu0 %v854
        %2566 = vmatprep.subr.mxu0 %v865
        %2567 = vmatpush1.msra.mxu0 %v864
        %2568 = vmatprep.subr.mxu0 %v875
        %2569 = vmatpush1.msra.mxu0 %v874
        %2570 = vmatprep.subr.mxu0 %v885
        %2571 = vmatpush1.msra.mxu0 %v884
        %2572 = vmatprep.subr.mxu0 %v895
        %2573 = vmatpush1.msra.mxu0 %v894
        %2574 = vmatprep.subr.mxu0 %v905
        %2575 = vmatpush1.msra.mxu0 %v904
        %2576 = vmatprep.subr.mxu0 %v915
        %2577 = vmatpush1.msra.mxu0 %v914
        %2578 = vmatprep.subr.mxu0 %v925
        %2579 = vmatpush1.msra.mxu0 %v924
        %2580 = vmatprep.subr.mxu0 %v935
        %2581 = vmatpush1.msra.mxu0 %v934
        %2582 = vmatprep.subr.mxu0 %v945
        %2583 = vmatpush1.msra.mxu0 %v944
        %2584 = vmatprep.subr.mxu0 %v955
        %2585 = vmatpush1.msra.mxu0 %v954
        %2586 = vmatprep.subr.mxu0 %v965
        %2587 = vmatpush1.msra.mxu0 %v964
        %2588 = vmatprep.subr.mxu0 %v975
        %2589 = vmatpush1.msra.mxu0 %v974
        %2590 = vmatprep.subr.mxu0 %v985
        %2591 = vmatpush1.msra.mxu0 %v984
        %2592 = vmatprep.subr.mxu0 %v995
        %2593 = vmatpush1.msra.mxu0 %v994
        %2594 = vmatprep.subr.mxu0 %v1005
        %2595 = vmatpush1.msra.mxu0 %v1004
        %2596 = vmatprep.subr.mxu0 %v1015
        %2597 = vmatpush1.msra.mxu0 %v1014
        %2598 = vmatprep.subr.mxu0 %v1025
        %2599 = vmatpush1.msra.mxu0 %v1024
        %2600 = vmatprep.subr.mxu0 %v1035
        %2601 = vmatpush1.msra.mxu0 %v1034
        %2602 = vmatprep.subr.mxu0 %v1045
        %2603 = vmatpush1.msra.mxu0 %v1044
        %2604 = vmatprep.subr.mxu0 %v1055
        %2605 = vmatpush1.msra.mxu0 %v1054
        %2606 = vmatprep.subr.mxu0 %v1065
        %2607 = vmatpush1.msra.mxu0 %v1064
        %2608 = vmatprep.subr.mxu0 %v1075
        %2609 = vmatpush1.msra.mxu0 %v1074
        %2610 = vmatprep.mubr.f32.mxu0 %v2468
        %2611 = vmatmul.mubr.f32.gmra.mrb[0].mxu0 %v2467
        %v2612 = vpop.f32.mrb[0].mxu0
        %v2613 = vadd.f32 %v2542, %v2612
        %v2614 = vpop.f32.mrb[0].mxu0
        %v2615 = vadd.f32 %v2544, %v2614
        %2616 = vdwg.mxu0
        %2617 = vmatprep.subr.mxu0 %v447
        %2618 = vmatpush1.msra.mxu0 %v446
        %2619 = vmatprep.subr.mxu0 %v457
        %2620 = vmatpush1.msra.mxu0 %v456
        %2621 = vmatprep.subr.mxu0 %v467
        %2622 = vmatpush1.msra.mxu0 %v466
        %2623 = vmatprep.subr.mxu0 %v477
        %2624 = vmatpush1.msra.mxu0 %v476
        %2625 = vmatprep.subr.mxu0 %v487
        %2626 = vmatpush1.msra.mxu0 %v486
        %2627 = vmatprep.subr.mxu0 %v497
        %2628 = vmatpush1.msra.mxu0 %v496
        %2629 = vmatprep.subr.mxu0 %v507
        %2630 = vmatpush1.msra.mxu0 %v506
        %2631 = vmatprep.subr.mxu0 %v517
        %2632 = vmatpush1.msra.mxu0 %v516
        %2633 = vmatprep.subr.mxu0 %v527
        %2634 = vmatpush1.msra.mxu0 %v526
        %2635 = vmatprep.subr.mxu0 %v537
        %2636 = vmatpush1.msra.mxu0 %v536
        %2637 = vmatprep.subr.mxu0 %v547
        %2638 = vmatpush1.msra.mxu0 %v546
        %2639 = vmatprep.subr.mxu0 %v557
        %2640 = vmatpush1.msra.mxu0 %v556
        %2641 = vmatprep.subr.mxu0 %v567
        %2642 = vmatpush1.msra.mxu0 %v566
        %2643 = vmatprep.subr.mxu0 %v577
        %2644 = vmatpush1.msra.mxu0 %v576
        %2645 = vmatprep.subr.mxu0 %v587
        %2646 = vmatpush1.msra.mxu0 %v586
        %2647 = vmatprep.subr.mxu0 %v597
        %2648 = vmatpush1.msra.mxu0 %v596
        %2649 = vmatprep.subr.mxu0 %v607
        %2650 = vmatpush1.msra.mxu0 %v606
        %2651 = vmatprep.subr.mxu0 %v617
        %2652 = vmatpush1.msra.mxu0 %v616
        %2653 = vmatprep.subr.mxu0 %v627
        %2654 = vmatpush1.msra.mxu0 %v626
        %2655 = vmatprep.subr.mxu0 %v637
        %2656 = vmatpush1.msra.mxu0 %v636
        %2657 = vmatprep.subr.mxu0 %v647
        %2658 = vmatpush1.msra.mxu0 %v646
        %2659 = vmatprep.subr.mxu0 %v657
        %2660 = vmatpush1.msra.mxu0 %v656
        %2661 = vmatprep.subr.mxu0 %v667
        %2662 = vmatpush1.msra.mxu0 %v666
        %2663 = vmatprep.subr.mxu0 %v677
        %2664 = vmatpush1.msra.mxu0 %v676
        %2665 = vmatprep.subr.mxu0 %v687
        %2666 = vmatpush1.msra.mxu0 %v686
        %2667 = vmatprep.subr.mxu0 %v697
        %2668 = vmatpush1.msra.mxu0 %v696
        %2669 = vmatprep.subr.mxu0 %v707
        %2670 = vmatpush1.msra.mxu0 %v706
        %2671 = vmatprep.subr.mxu0 %v717
        %2672 = vmatpush1.msra.mxu0 %v716
        %2673 = vmatprep.subr.mxu0 %v727
        %2674 = vmatpush1.msra.mxu0 %v726
        %2675 = vmatprep.subr.mxu0 %v737
        %2676 = vmatpush1.msra.mxu0 %v736
        %2677 = vmatprep.subr.mxu0 %v747
        %2678 = vmatpush1.msra.mxu0 %v746
        %2679 = vmatprep.subr.mxu0 %v757
        %2680 = vmatpush1.msra.mxu0 %v756
        %2681 = vmatprep.mubr.f32.mxu0 %v2466
        %2682 = vmatmul.mubr.f32.gmra.mrb[0].mxu0 %v2465
        %v2683 = vpop.f32.mrb[0].mxu0
        %v2684 = vadd.f32 %v2473, %v2683
        %v2685 = vpop.f32.mrb[0].mxu0
        %v2686 = vadd.f32 %v2473, %v2685
        %2687 = vdwg.mxu0
        %2688 = vmatprep.subr.mxu0 %v767
        %2689 = vmatpush1.msra.mxu0 %v766
        %2690 = vmatprep.subr.mxu0 %v777
        %2691 = vmatpush1.msra.mxu0 %v776
        %2692 = vmatprep.subr.mxu0 %v787
        %2693 = vmatpush1.msra.mxu0 %v786
        %2694 = vmatprep.subr.mxu0 %v797
        %2695 = vmatpush1.msra.mxu0 %v796
        %2696 = vmatprep.subr.mxu0 %v807
        %2697 = vmatpush1.msra.mxu0 %v806
        %2698 = vmatprep.subr.mxu0 %v817
        %2699 = vmatpush1.msra.mxu0 %v816
        %2700 = vmatprep.subr.mxu0 %v827
        %2701 = vmatpush1.msra.mxu0 %v826
        %2702 = vmatprep.subr.mxu0 %v837
        %2703 = vmatpush1.msra.mxu0 %v836
        %2704 = vmatprep.subr.mxu0 %v847
        %2705 = vmatpush1.msra.mxu0 %v846
        %2706 = vmatprep.subr.mxu0 %v857
        %2707 = vmatpush1.msra.mxu0 %v856
        %2708 = vmatprep.subr.mxu0 %v867
        %2709 = vmatpush1.msra.mxu0 %v866
        %2710 = vmatprep.subr.mxu0 %v877
        %2711 = vmatpush1.msra.mxu0 %v876
        %2712 = vmatprep.subr.mxu0 %v887
        %2713 = vmatpush1.msra.mxu0 %v886
        %2714 = vmatprep.subr.mxu0 %v897
        %2715 = vmatpush1.msra.mxu0 %v896
        %2716 = vmatprep.subr.mxu0 %v907
        %2717 = vmatpush1.msra.mxu0 %v906
        %2718 = vmatprep.subr.mxu0 %v917
        %2719 = vmatpush1.msra.mxu0 %v916
        %2720 = vmatprep.subr.mxu0 %v927
        %2721 = vmatpush1.msra.mxu0 %v926
        %2722 = vmatprep.subr.mxu0 %v937
        %2723 = vmatpush1.msra.mxu0 %v936
        %2724 = vmatprep.subr.mxu0 %v947
        %2725 = vmatpush1.msra.mxu0 %v946
        %2726 = vmatprep.subr.mxu0 %v957
        %2727 = vmatpush1.msra.mxu0 %v956
        %2728 = vmatprep.subr.mxu0 %v967
        %2729 = vmatpush1.msra.mxu0 %v966
        %2730 = vmatprep.subr.mxu0 %v977
        %2731 = vmatpush1.msra.mxu0 %v976
        %2732 = vmatprep.subr.mxu0 %v987
        %2733 = vmatpush1.msra.mxu0 %v986
        %2734 = vmatprep.subr.mxu0 %v997
        %2735 = vmatpush1.msra.mxu0 %v996
        %2736 = vmatprep.subr.mxu0 %v1007
        %2737 = vmatpush1.msra.mxu0 %v1006
        %2738 = vmatprep.subr.mxu0 %v1017
        %2739 = vmatpush1.msra.mxu0 %v1016
        %2740 = vmatprep.subr.mxu0 %v1027
        %2741 = vmatpush1.msra.mxu0 %v1026
        %2742 = vmatprep.subr.mxu0 %v1037
        %2743 = vmatpush1.msra.mxu0 %v1036
        %2744 = vmatprep.subr.mxu0 %v1047
        %2745 = vmatpush1.msra.mxu0 %v1046
        %2746 = vmatprep.subr.mxu0 %v1057
        %2747 = vmatpush1.msra.mxu0 %v1056
        %2748 = vmatprep.subr.mxu0 %v1067
        %2749 = vmatpush1.msra.mxu0 %v1066
        %2750 = vmatprep.subr.mxu0 %v1077
        %2751 = vmatpush1.msra.mxu0 %v1076
        %2752 = vmatprep.mubr.f32.mxu0 %v2468
        %2753 = vmatmul.mubr.f32.gmra.mrb[0].mxu0 %v2467
        %v2754 = vpop.f32.mrb[0].mxu0
        %v2755 = vadd.f32 %v2684, %v2754
        %v2756 = vpop.f32.mrb[0].mxu0
        %v2757 = vadd.f32 %v2686, %v2756
        %2758 = vdwg.mxu0
        %2759 = vmatprep.subr.mxu0 %v449
        %2760 = vmatpush1.msra.mxu0 %v448
        %2761 = vmatprep.subr.mxu0 %v459
        %2762 = vmatpush1.msra.mxu0 %v458
        %2763 = vmatprep.subr.mxu0 %v469
        %2764 = vmatpush1.msra.mxu0 %v468
        %2765 = vmatprep.subr.mxu0 %v479
        %2766 = vmatpush1.msra.mxu0 %v478
        %2767 = vmatprep.subr.mxu0 %v489
        %2768 = vmatpush1.msra.mxu0 %v488
        %2769 = vmatprep.subr.mxu0 %v499
        %2770 = vmatpush1.msra.mxu0 %v498
        %2771 = vmatprep.subr.mxu0 %v509
        %2772 = vmatpush1.msra.mxu0 %v508
        %2773 = vmatprep.subr.mxu0 %v519
        %2774 = vmatpush1.msra.mxu0 %v518
        %2775 = vmatprep.subr.mxu0 %v529
        %2776 = vmatpush1.msra.mxu0 %v528
        %2777 = vmatprep.subr.mxu0 %v539
        %2778 = vmatpush1.msra.mxu0 %v538
        %2779 = vmatprep.subr.mxu0 %v549
        %2780 = vmatpush1.msra.mxu0 %v548
        %2781 = vmatprep.subr.mxu0 %v559
        %2782 = vmatpush1.msra.mxu0 %v558
        %2783 = vmatprep.subr.mxu0 %v569
        %2784 = vmatpush1.msra.mxu0 %v568
        %2785 = vmatprep.subr.mxu0 %v579
        %2786 = vmatpush1.msra.mxu0 %v578
        %2787 = vmatprep.subr.mxu0 %v589
        %2788 = vmatpush1.msra.mxu0 %v588
        %2789 = vmatprep.subr.mxu0 %v599
        %2790 = vmatpush1.msra.mxu0 %v598
        %2791 = vmatprep.subr.mxu0 %v609
        %2792 = vmatpush1.msra.mxu0 %v608
        %2793 = vmatprep.subr.mxu0 %v619
        %2794 = vmatpush1.msra.mxu0 %v618
        %2795 = vmatprep.subr.mxu0 %v629
        %2796 = vmatpush1.msra.mxu0 %v628
        %2797 = vmatprep.subr.mxu0 %v639
        %2798 = vmatpush1.msra.mxu0 %v638
        %2799 = vmatprep.subr.mxu0 %v649
        %2800 = vmatpush1.msra.mxu0 %v648
        %2801 = vmatprep.subr.mxu0 %v659
        %2802 = vmatpush1.msra.mxu0 %v658
        %2803 = vmatprep.subr.mxu0 %v669
        %2804 = vmatpush1.msra.mxu0 %v668
        %2805 = vmatprep.subr.mxu0 %v679
        %2806 = vmatpush1.msra.mxu0 %v678
        %2807 = vmatprep.subr.mxu0 %v689
        %2808 = vmatpush1.msra.mxu0 %v688
        %2809 = vmatprep.subr.mxu0 %v699
        %2810 = vmatpush1.msra.mxu0 %v698
        %2811 = vmatprep.subr.mxu0 %v709
        %2812 = vmatpush1.msra.mxu0 %v708
        %2813 = vmatprep.subr.mxu0 %v719
        %2814 = vmatpush1.msra.mxu0 %v718
        %2815 = vmatprep.subr.mxu0 %v729
        %2816 = vmatpush1.msra.mxu0 %v728
        %2817 = vmatprep.subr.mxu0 %v739
        %2818 = vmatpush1.msra.mxu0 %v738
        %2819 = vmatprep.subr.mxu0 %v749
        %2820 = vmatpush1.msra.mxu0 %v748
        %2821 = vmatprep.subr.mxu0 %v759
        %2822 = vmatpush1.msra.mxu0 %v758
        %2823 = vmatprep.mubr.f32.mxu0 %v2466
        %2824 = vmatmul.mubr.f32.gmra.mrb[0].mxu0 %v2465
        %v2825 = vpop.f32.mrb[0].mxu0
        %v2826 = vadd.f32 %v2473, %v2825
        %v2827 = vpop.f32.mrb[0].mxu0
        %v2828 = vadd.f32 %v2473, %v2827
        %2829 = vdwg.mxu0
        %2830 = vmatprep.subr.mxu0 %v769
        %2831 = vmatpush1.msra.mxu0 %v768
        %2832 = vmatprep.subr.mxu0 %v779
        %2833 = vmatpush1.msra.mxu0 %v778
        %2834 = vmatprep.subr.mxu0 %v789
        %2835 = vmatpush1.msra.mxu0 %v788
        %2836 = vmatprep.subr.mxu0 %v799
        %2837 = vmatpush1.msra.mxu0 %v798
        %2838 = vmatprep.subr.mxu0 %v809
        %2839 = vmatpush1.msra.mxu0 %v808
        %2840 = vmatprep.subr.mxu0 %v819
        %2841 = vmatpush1.msra.mxu0 %v818
        %2842 = vmatprep.subr.mxu0 %v829
        %2843 = vmatpush1.msra.mxu0 %v828
        %2844 = vmatprep.subr.mxu0 %v839
        %2845 = vmatpush1.msra.mxu0 %v838
        %2846 = vmatprep.subr.mxu0 %v849
        %2847 = vmatpush1.msra.mxu0 %v848
        %2848 = vmatprep.subr.mxu0 %v859
        %2849 = vmatpush1.msra.mxu0 %v858
        %2850 = vmatprep.subr.mxu0 %v869
        %2851 = vmatpush1.msra.mxu0 %v868
        %2852 = vmatprep.subr.mxu0 %v879
        %2853 = vmatpush1.msra.mxu0 %v878
        %2854 = vmatprep.subr.mxu0 %v889
        %2855 = vmatpush1.msra.mxu0 %v888
        %2856 = vmatprep.subr.mxu0 %v899
        %2857 = vmatpush1.msra.mxu0 %v898
        %2858 = vmatprep.subr.mxu0 %v909
        %2859 = vmatpush1.msra.mxu0 %v908
        %2860 = vmatprep.subr.mxu0 %v919
        %2861 = vmatpush1.msra.mxu0 %v918
        %2862 = vmatprep.subr.mxu0 %v929
        %2863 = vmatpush1.msra.mxu0 %v928
        %2864 = vmatprep.subr.mxu0 %v939
        %2865 = vmatpush1.msra.mxu0 %v938
        %2866 = vmatprep.subr.mxu0 %v949
        %2867 = vmatpush1.msra.mxu0 %v948
        %2868 = vmatprep.subr.mxu0 %v959
        %2869 = vmatpush1.msra.mxu0 %v958
        %2870 = vmatprep.subr.mxu0 %v969
        %2871 = vmatpush1.msra.mxu0 %v968
        %2872 = vmatprep.subr.mxu0 %v979
        %2873 = vmatpush1.msra.mxu0 %v978
        %2874 = vmatprep.subr.mxu0 %v989
        %2875 = vmatpush1.msra.mxu0 %v988
        %2876 = vmatprep.subr.mxu0 %v999
        %2877 = vmatpush1.msra.mxu0 %v998
        %2878 = vmatprep.subr.mxu0 %v1009
        %2879 = vmatpush1.msra.mxu0 %v1008
        %2880 = vmatprep.subr.mxu0 %v1019
        %2881 = vmatpush1.msra.mxu0 %v1018
        %2882 = vmatprep.subr.mxu0 %v1029
        %2883 = vmatpush1.msra.mxu0 %v1028
        %2884 = vmatprep.subr.mxu0 %v1039
        %2885 = vmatpush1.msra.mxu0 %v1038
        %2886 = vmatprep.subr.mxu0 %v1049
        %2887 = vmatpush1.msra.mxu0 %v1048
        %2888 = vmatprep.subr.mxu0 %v1059
        %2889 = vmatpush1.msra.mxu0 %v1058
        %2890 = vmatprep.subr.mxu0 %v1069
        %2891 = vmatpush1.msra.mxu0 %v1068
        %2892 = vmatprep.subr.mxu0 %v1079
        %2893 = vmatpush1.msra.mxu0 %v1078
        %2894 = vmatprep.mubr.f32.mxu0 %v2468
        %2895 = vmatmul.mubr.f32.gmra.mrb[0].mxu0 %v2467
        %v2896 = vpop.f32.mrb[0].mxu0
        %v2897 = vadd.f32 %v2826, %v2896
        %v2898 = vpop.f32.mrb[0].mxu0
        %v2899 = vadd.f32 %v2828, %v2898
        %2900 = vdwg.mxu0
        %2901 = vmatprep.subr.mxu0 %v451
        %2902 = vmatpush1.msra.mxu0 %v450
        %2903 = vmatprep.subr.mxu0 %v461
        %2904 = vmatpush1.msra.mxu0 %v460
        %2905 = vmatprep.subr.mxu0 %v471
        %2906 = vmatpush1.msra.mxu0 %v470
        %2907 = vmatprep.subr.mxu0 %v481
        %2908 = vmatpush1.msra.mxu0 %v480
        %2909 = vmatprep.subr.mxu0 %v491
        %2910 = vmatpush1.msra.mxu0 %v490
        %2911 = vmatprep.subr.mxu0 %v501
        %2912 = vmatpush1.msra.mxu0 %v500
        %2913 = vmatprep.subr.mxu0 %v511
        %2914 = vmatpush1.msra.mxu0 %v510
        %2915 = vmatprep.subr.mxu0 %v521
        %2916 = vmatpush1.msra.mxu0 %v520
        %2917 = vmatprep.subr.mxu0 %v531
        %2918 = vmatpush1.msra.mxu0 %v530
        %2919 = vmatprep.subr.mxu0 %v541
        %2920 = vmatpush1.msra.mxu0 %v540
        %2921 = vmatprep.subr.mxu0 %v551
        %2922 = vmatpush1.msra.mxu0 %v550
        %2923 = vmatprep.subr.mxu0 %v561
        %2924 = vmatpush1.msra.mxu0 %v560
        %2925 = vmatprep.subr.mxu0 %v571
        %2926 = vmatpush1.msra.mxu0 %v570
        %2927 = vmatprep.subr.mxu0 %v581
        %2928 = vmatpush1.msra.mxu0 %v580
        %2929 = vmatprep.subr.mxu0 %v591
        %2930 = vmatpush1.msra.mxu0 %v590
        %2931 = vmatprep.subr.mxu0 %v601
        %2932 = vmatpush1.msra.mxu0 %v600
        %2933 = vmatprep.subr.mxu0 %v611
        %2934 = vmatpush1.msra.mxu0 %v610
        %2935 = vmatprep.subr.mxu0 %v621
        %2936 = vmatpush1.msra.mxu0 %v620
        %2937 = vmatprep.subr.mxu0 %v631
        %2938 = vmatpush1.msra.mxu0 %v630
        %2939 = vmatprep.subr.mxu0 %v641
        %2940 = vmatpush1.msra.mxu0 %v640
        %2941 = vmatprep.subr.mxu0 %v651
        %2942 = vmatpush1.msra.mxu0 %v650
        %2943 = vmatprep.subr.mxu0 %v661
        %2944 = vmatpush1.msra.mxu0 %v660
        %2945 = vmatprep.subr.mxu0 %v671
        %2946 = vmatpush1.msra.mxu0 %v670
        %2947 = vmatprep.subr.mxu0 %v681
        %2948 = vmatpush1.msra.mxu0 %v680
        %2949 = vmatprep.subr.mxu0 %v691
        %2950 = vmatpush1.msra.mxu0 %v690
        %2951 = vmatprep.subr.mxu0 %v701
        %2952 = vmatpush1.msra.mxu0 %v700
        %2953 = vmatprep.subr.mxu0 %v711
        %2954 = vmatpush1.msra.mxu0 %v710
        %2955 = vmatprep.subr.mxu0 %v721
        %2956 = vmatpush1.msra.mxu0 %v720
        %2957 = vmatprep.subr.mxu0 %v731
        %2958 = vmatpush1.msra.mxu0 %v730
        %2959 = vmatprep.subr.mxu0 %v741
        %2960 = vmatpush1.msra.mxu0 %v740
        %2961 = vmatprep.subr.mxu0 %v751
        %2962 = vmatpush1.msra.mxu0 %v750
        %2963 = vmatprep.subr.mxu0 %v761
        %2964 = vmatpush1.msra.mxu0 %v760
        %2965 = vmatprep.mubr.f32.mxu0 %v2466
        %2966 = vmatmul.mubr.f32.gmra.mrb[0].mxu0 %v2465
        %v2967 = vpop.f32.mrb[0].mxu0
        %v2968 = vadd.f32 %v2473, %v2967
        %v2969 = vpop.f32.mrb[0].mxu0
        %v2970 = vadd.f32 %v2473, %v2969
        %2971 = vdwg.mxu0
        %2972 = vmatprep.subr.mxu0 %v771
        %2973 = vmatpush1.msra.mxu0 %v770
        %2974 = vmatprep.subr.mxu0 %v781
        %2975 = vmatpush1.msra.mxu0 %v780
        %2976 = vmatprep.subr.mxu0 %v791
        %2977 = vmatpush1.msra.mxu0 %v790
        %2978 = vmatprep.subr.mxu0 %v801
        %2979 = vmatpush1.msra.mxu0 %v800
        %2980 = vmatprep.subr.mxu0 %v811
        %2981 = vmatpush1.msra.mxu0 %v810
        %2982 = vmatprep.subr.mxu0 %v821
        %2983 = vmatpush1.msra.mxu0 %v820
        %2984 = vmatprep.subr.mxu0 %v831
        %2985 = vmatpush1.msra.mxu0 %v830
        %2986 = vmatprep.subr.mxu0 %v841
        %2987 = vmatpush1.msra.mxu0 %v840
        %2988 = vmatprep.subr.mxu0 %v851
        %2989 = vmatpush1.msra.mxu0 %v850
        %2990 = vmatprep.subr.mxu0 %v861
        %2991 = vmatpush1.msra.mxu0 %v860
        %2992 = vmatprep.subr.mxu0 %v871
        %2993 = vmatpush1.msra.mxu0 %v870
        %2994 = vmatprep.subr.mxu0 %v881
        %2995 = vmatpush1.msra.mxu0 %v880
        %2996 = vmatprep.subr.mxu0 %v891
        %2997 = vmatpush1.msra.mxu0 %v890
        %2998 = vmatprep.subr.mxu0 %v901
        %2999 = vmatpush1.msra.mxu0 %v900
        %3000 = vmatprep.subr.mxu0 %v911
        %3001 = vmatpush1.msra.mxu0 %v910
        %3002 = vmatprep.subr.mxu0 %v921
        %3003 = vmatpush1.msra.mxu0 %v920
        %3004 = vmatprep.subr.mxu0 %v931
        %3005 = vmatpush1.msra.mxu0 %v930
        %3006 = vmatprep.subr.mxu0 %v941
        %3007 = vmatpush1.msra.mxu0 %v940
        %3008 = vmatprep.subr.mxu0 %v951
        %3009 = vmatpush1.msra.mxu0 %v950
        %3010 = vmatprep.subr.mxu0 %v961
        %3011 = vmatpush1.msra.mxu0 %v960
        %3012 = vmatprep.subr.mxu0 %v971
        %3013 = vmatpush1.msra.mxu0 %v970
        %3014 = vmatprep.subr.mxu0 %v981
        %3015 = vmatpush1.msra.mxu0 %v980
        %3016 = vmatprep.subr.mxu0 %v991
        %3017 = vmatpush1.msra.mxu0 %v990
        %3018 = vmatprep.subr.mxu0 %v1001
        %3019 = vmatpush1.msra.mxu0 %v1000
        %3020 = vmatprep.subr.mxu0 %v1011
        %3021 = vmatpush1.msra.mxu0 %v1010
        %3022 = vmatprep.subr.mxu0 %v1021
        %3023 = vmatpush1.msra.mxu0 %v1020
        %3024 = vmatprep.subr.mxu0 %v1031
        %3025 = vmatpush1.msra.mxu0 %v1030
        %3026 = vmatprep.subr.mxu0 %v1041
        %3027 = vmatpush1.msra.mxu0 %v1040
        %3028 = vmatprep.subr.mxu0 %v1051
        %3029 = vmatpush1.msra.mxu0 %v1050
        %3030 = vmatprep.subr.mxu0 %v1061
        %3031 = vmatpush1.msra.mxu0 %v1060
        %3032 = vmatprep.subr.mxu0 %v1071
        %3033 = vmatpush1.msra.mxu0 %v1070
        %3034 = vmatprep.subr.mxu0 %v1081
        %3035 = vmatpush1.msra.mxu0 %v1080
        %3036 = vmatprep.mubr.f32.mxu0 %v2468
        %3037 = vmatmul.mubr.f32.gmra.mrb[0].mxu0 %v2467
        %v3038 = vpop.f32.mrb[0].mxu0
        %v3039 = vadd.f32 %v2968, %v3038
        %v3040 = vpop.f32.mrb[0].mxu0
        %v3041 = vadd.f32 %v2970, %v3040
        %3042 = vdwg.mxu0
        %3043 = vmatprep.subr.mxu0 %v453
        %3044 = vmatpush1.msra.mxu0 %v452
        %3045 = vmatprep.subr.mxu0 %v463
        %3046 = vmatpush1.msra.mxu0 %v462
        %3047 = vmatprep.subr.mxu0 %v473
        %3048 = vmatpush1.msra.mxu0 %v472
        %3049 = vmatprep.subr.mxu0 %v483
        %3050 = vmatpush1.msra.mxu0 %v482
        %3051 = vmatprep.subr.mxu0 %v493
        %3052 = vmatpush1.msra.mxu0 %v492
        %3053 = vmatprep.subr.mxu0 %v503
        %3054 = vmatpush1.msra.mxu0 %v502
        %3055 = vmatprep.subr.mxu0 %v513
        %3056 = vmatpush1.msra.mxu0 %v512
        %3057 = vmatprep.subr.mxu0 %v523
        %3058 = vmatpush1.msra.mxu0 %v522
        %3059 = vmatprep.subr.mxu0 %v533
        %3060 = vmatpush1.msra.mxu0 %v532
        %3061 = vmatprep.subr.mxu0 %v543
        %3062 = vmatpush1.msra.mxu0 %v542
        %3063 = vmatprep.subr.mxu0 %v553
        %3064 = vmatpush1.msra.mxu0 %v552
        %3065 = vmatprep.subr.mxu0 %v563
        %3066 = vmatpush1.msra.mxu0 %v562
        %3067 = vmatprep.subr.mxu0 %v573
        %3068 = vmatpush1.msra.mxu0 %v572
        %3069 = vmatprep.subr.mxu0 %v583
        %3070 = vmatpush1.msra.mxu0 %v582
        %3071 = vmatprep.subr.mxu0 %v593
        %3072 = vmatpush1.msra.mxu0 %v592
        %3073 = vmatprep.subr.mxu0 %v603
        %3074 = vmatpush1.msra.mxu0 %v602
        %3075 = vmatprep.subr.mxu0 %v613
        %3076 = vmatpush1.msra.mxu0 %v612
        %3077 = vmatprep.subr.mxu0 %v623
        %3078 = vmatpush1.msra.mxu0 %v622
        %3079 = vmatprep.subr.mxu0 %v633
        %3080 = vmatpush1.msra.mxu0 %v632
        %3081 = vmatprep.subr.mxu0 %v643
        %3082 = vmatpush1.msra.mxu0 %v642
        %3083 = vmatprep.subr.mxu0 %v653
        %3084 = vmatpush1.msra.mxu0 %v652
        %3085 = vmatprep.subr.mxu0 %v663
        %3086 = vmatpush1.msra.mxu0 %v662
        %3087 = vmatprep.subr.mxu0 %v673
        %3088 = vmatpush1.msra.mxu0 %v672
        %3089 = vmatprep.subr.mxu0 %v683
        %3090 = vmatpush1.msra.mxu0 %v682
        %3091 = vmatprep.subr.mxu0 %v693
        %3092 = vmatpush1.msra.mxu0 %v692
        %3093 = vmatprep.subr.mxu0 %v703
        %3094 = vmatpush1.msra.mxu0 %v702
        %3095 = vmatprep.subr.mxu0 %v713
        %3096 = vmatpush1.msra.mxu0 %v712
        %3097 = vmatprep.subr.mxu0 %v723
        %3098 = vmatpush1.msra.mxu0 %v722
        %3099 = vmatprep.subr.mxu0 %v733
        %3100 = vmatpush1.msra.mxu0 %v732
        %3101 = vmatprep.subr.mxu0 %v743
        %3102 = vmatpush1.msra.mxu0 %v742
        %3103 = vmatprep.subr.mxu0 %v753
        %3104 = vmatpush1.msra.mxu0 %v752
        %3105 = vmatprep.subr.mxu0 %v763
        %3106 = vmatpush1.msra.mxu0 %v762
        %3107 = vmatprep.mubr.f32.mxu0 %v2466
        %3108 = vmatmul.mubr.f32.gmra.mrb[0].mxu0 %v2465
        %v3109 = vpop.f32.mrb[0].mxu0
        %v3110 = vadd.f32 %v2473, %v3109
        %v3111 = vpop.f32.mrb[0].mxu0
        %v3112 = vadd.f32 %v2473, %v3111
        %3113 = vdwg.mxu0
        %3114 = vmatprep.subr.mxu0 %v773
        %3115 = vmatpush1.msra.mxu0 %v772
        %3116 = vmatprep.subr.mxu0 %v783
        %3117 = vmatpush1.msra.mxu0 %v782
        %3118 = vmatprep.subr.mxu0 %v793
        %3119 = vmatpush1.msra.mxu0 %v792
        %3120 = vmatprep.subr.mxu0 %v803
        %3121 = vmatpush1.msra.mxu0 %v802
        %3122 = vmatprep.subr.mxu0 %v813
        %3123 = vmatpush1.msra.mxu0 %v812
        %3124 = vmatprep.subr.mxu0 %v823
        %3125 = vmatpush1.msra.mxu0 %v822
        %3126 = vmatprep.subr.mxu0 %v833
        %3127 = vmatpush1.msra.mxu0 %v832
        %3128 = vmatprep.subr.mxu0 %v843
        %3129 = vmatpush1.msra.mxu0 %v842
        %3130 = vmatprep.subr.mxu0 %v853
        %3131 = vmatpush1.msra.mxu0 %v852
        %3132 = vmatprep.subr.mxu0 %v863
        %3133 = vmatpush1.msra.mxu0 %v862
        %3134 = vmatprep.subr.mxu0 %v873
        %3135 = vmatpush1.msra.mxu0 %v872
        %3136 = vmatprep.subr.mxu0 %v883
        %3137 = vmatpush1.msra.mxu0 %v882
        %3138 = vmatprep.subr.mxu0 %v893
        %3139 = vmatpush1.msra.mxu0 %v892
        %3140 = vmatprep.subr.mxu0 %v903
        %3141 = vmatpush1.msra.mxu0 %v902
        %3142 = vmatprep.subr.mxu0 %v913
        %3143 = vmatpush1.msra.mxu0 %v912
        %3144 = vmatprep.subr.mxu0 %v923
        %3145 = vmatpush1.msra.mxu0 %v922
        %3146 = vmatprep.subr.mxu0 %v933
        %3147 = vmatpush1.msra.mxu0 %v932
        %3148 = vmatprep.subr.mxu0 %v943
        %3149 = vmatpush1.msra.mxu0 %v942
        %3150 = vmatprep.subr.mxu0 %v953
        %3151 = vmatpush1.msra.mxu0 %v952
        %3152 = vmatprep.subr.mxu0 %v963
        %3153 = vmatpush1.msra.mxu0 %v962
        %3154 = vmatprep.subr.mxu0 %v973
        %3155 = vmatpush1.msra.mxu0 %v972
        %3156 = vmatprep.subr.mxu0 %v983
        %3157 = vmatpush1.msra.mxu0 %v982
        %3158 = vmatprep.subr.mxu0 %v993
        %3159 = vmatpush1.msra.mxu0 %v992
        %3160 = vmatprep.subr.mxu0 %v1003
        %3161 = vmatpush1.msra.mxu0 %v1002
        %3162 = vmatprep.subr.mxu0 %v1013
        %3163 = vmatpush1.msra.mxu0 %v1012
        %3164 = vmatprep.subr.mxu0 %v1023
        %3165 = vmatpush1.msra.mxu0 %v1022
        %3166 = vmatprep.subr.mxu0 %v1033
        %3167 = vmatpush1.msra.mxu0 %v1032
        %3168 = vmatprep.subr.mxu0 %v1043
        %3169 = vmatpush1.msra.mxu0 %v1042
        %3170 = vmatprep.subr.mxu0 %v1053
        %3171 = vmatpush1.msra.mxu0 %v1052
        %3172 = vmatprep.subr.mxu0 %v1063
        %3173 = vmatpush1.msra.mxu0 %v1062
        %3174 = vmatprep.subr.mxu0 %v1073
        %3175 = vmatpush1.msra.mxu0 %v1072
        %3176 = vmatprep.subr.mxu0 %v1083
        %3177 = vmatpush1.msra.mxu0 %v1082
        %3178 = vmatprep.mubr.f32.mxu0 %v2468
        %3179 = vmatmul.mubr.f32.gmra.mrb[0].mxu0 %v2467
        %v3180 = vpop.f32.mrb[0].mxu0
        %v3181 = vadd.f32 %v3110, %v3180
        %v3182 = vpop.f32.mrb[0].mxu0
        %v3183 = vadd.f32 %v3112, %v3182
        %3184 = vdwg.mxu0
        %v3186 = vsel %vm2463, %v1093, 0
        %v3189 = vsel %vm2463, %v1103, 0
        %v3192 = vsel %vm2463, %v1113, 0
        %v3195 = vsel %vm2463, %v1123, 0
        %v3198 = vsel %vm2463, %v1133, 0
        %v3201 = vsel %vm2463, %v1143, 0
        %v3204 = vsel %vm2463, %v1153, 0
        %v3207 = vsel %vm2463, %v1163, 0
        %v3210 = vsel %vm2463, %v1173, 0
        %v3213 = vsel %vm2463, %v1183, 0
        %v3216 = vsel %vm2463, %v1193, 0
        %v3219 = vsel %vm2463, %v1203, 0
        %v3222 = vsel %vm2463, %v1213, 0
        %v3225 = vsel %vm2463, %v1223, 0
        %v3228 = vsel %vm2463, %v1233, 0
        %v3231 = vsel %vm2463, %v1243, 0
        %v3234 = vsel %vm2463, %v1253, 0
        %v3237 = vsel %vm2463, %v1263, 0
        %v3240 = vsel %vm2463, %v1273, 0
        %v3243 = vsel %vm2463, %v1283, 0
        %v3246 = vsel %vm2463, %v1293, 0
        %v3249 = vsel %vm2463, %v1303, 0
        %v3252 = vsel %vm2463, %v1313, 0
        %v3255 = vsel %vm2463, %v1323, 0
        %v3258 = vsel %vm2463, %v1333, 0
        %v3261 = vsel %vm2463, %v1343, 0
        %v3264 = vsel %vm2463, %v1353, 0
        %v3267 = vsel %vm2463, %v1363, 0
        %v3270 = vsel %vm2463, %v1373, 0
        %v3273 = vsel %vm2463, %v1383, 0
        %v3276 = vsel %vm2463, %v1393, 0
        %v3279 = vsel %vm2463, %v1403, 0
        %v3282 = vsel %vm2463, %v1413, 0
        %v3285 = vsel %vm2463, %v1423, 0
        %v3288 = vsel %vm2463, %v1433, 0
        %v3291 = vsel %vm2463, %v1443, 0
        %v3294 = vsel %vm2463, %v1453, 0
        %v3297 = vsel %vm2463, %v1463, 0
        %v3300 = vsel %vm2463, %v1473, 0
        %v3303 = vsel %vm2463, %v1483, 0
        %v3306 = vsel %vm2463, %v1493, 0
        %v3309 = vsel %vm2463, %v1503, 0
        %v3312 = vsel %vm2463, %v1513, 0
        %v3315 = vsel %vm2463, %v1523, 0
        %v3318 = vsel %vm2463, %v1533, 0
        %v3321 = vsel %vm2463, %v1543, 0
        %v3324 = vsel %vm2463, %v1553, 0
        %v3327 = vsel %vm2463, %v1563, 0
        %v3330 = vsel %vm2463, %v1573, 0
        %v3333 = vsel %vm2463, %v1583, 0
        %v3336 = vsel %vm2463, %v1593, 0
        %v3339 = vsel %vm2463, %v1603, 0
        %v3342 = vsel %vm2463, %v1613, 0
        %v3345 = vsel %vm2463, %v1623, 0
        %v3348 = vsel %vm2463, %v1633, 0
        %v3351 = vsel %vm2463, %v1643, 0
        %v3354 = vsel %vm2463, %v1653, 0
        %v3357 = vsel %vm2463, %v1663, 0
        %v3360 = vsel %vm2463, %v1673, 0
        %v3363 = vsel %vm2463, %v1683, 0
        %v3366 = vsel %vm2463, %v1693, 0
        %v3369 = vsel %vm2463, %v1703, 0
        %v3372 = vsel %vm2463, %v1713, 0
        %v3375 = vsel %vm2463, %v1723, 0
        %v3378 = vsel %vm2463, %v2453, 0
        %3380 = vmatprep.subr.mxu0 %v2445
        %3381 = vmatpush1.xpose.msra.mxu0 %v2444
        %3382 = vmatprep.subr.mxu0 0.0
        %3383 = vmatpush1.xpose.msra.mxu0 0.0
        %3384 = vmatprep.subr.mxu0 0.0
        %3385 = vmatpush1.xpose.msra.mxu0 0.0
        %3386 = vmatprep.subr.mxu0 0.0
        %3387 = vmatpush1.xpose.msra.mxu0 0.0
        %3388 = vmatprep.subr.mxu0 0.0
        %3389 = vmatpush1.xpose.msra.mxu0 0.0
        %3390 = vmatprep.subr.mxu0 0.0
        %3391 = vmatpush1.xpose.msra.mxu0 0.0
        %3392 = vmatprep.subr.mxu0 0.0
        %3393 = vmatpush1.xpose.msra.mxu0 0.0
        %3394 = vmatprep.subr.mxu0 0.0
        %3395 = vmatpush1.xpose.msra.mxu0 0.0
        %3396 = vmatprep.subr.mxu0 0.0
        %3397 = vmatpush1.xpose.msra.mxu0 0.0
        %3398 = vmatprep.subr.mxu0 0.0
        %3399 = vmatpush1.xpose.msra.mxu0 0.0
        %3400 = vmatprep.subr.mxu0 0.0
        %3401 = vmatpush1.xpose.msra.mxu0 0.0
        %3402 = vmatprep.subr.mxu0 0.0
        %3403 = vmatpush1.xpose.msra.mxu0 0.0
        %3404 = vmatprep.subr.mxu0 0.0
        %3405 = vmatpush1.xpose.msra.mxu0 0.0
        %3406 = vmatprep.subr.mxu0 0.0
        %3407 = vmatpush1.xpose.msra.mxu0 0.0
        %3408 = vmatprep.subr.mxu0 0.0
        %3409 = vmatpush1.xpose.msra.mxu0 0.0
        %3410 = vmatprep.subr.mxu0 0.0
        %3411 = vmatpush1.xpose.msra.mxu0 0.0
        %3412 = vmatprep.subr.mxu0 0.0
        %3413 = vmatpush1.xpose.msra.mxu0 0.0
        %3414 = vmatprep.subr.mxu0 0.0
        %3415 = vmatpush1.xpose.msra.mxu0 0.0
        %3416 = vmatprep.subr.mxu0 0.0
        %3417 = vmatpush1.xpose.msra.mxu0 0.0
        %3418 = vmatprep.subr.mxu0 0.0
        %3419 = vmatpush1.xpose.msra.mxu0 0.0
        %3420 = vmatprep.subr.mxu0 0.0
        %3421 = vmatpush1.xpose.msra.mxu0 0.0
        %3422 = vmatprep.subr.mxu0 0.0
        %3423 = vmatpush1.xpose.msra.mxu0 0.0
        %3424 = vmatprep.subr.mxu0 0.0
        %3425 = vmatpush1.xpose.msra.mxu0 0.0
        %3426 = vmatprep.subr.mxu0 0.0
        %3427 = vmatpush1.xpose.msra.mxu0 0.0
        %3428 = vmatprep.subr.mxu0 0.0
        %3429 = vmatpush1.xpose.msra.mxu0 0.0
        %3430 = vmatprep.subr.mxu0 0.0
        %3431 = vmatpush1.xpose.msra.mxu0 0.0
        %3432 = vmatprep.subr.mxu0 0.0
        %3433 = vmatpush1.xpose.msra.mxu0 0.0
        %3434 = vmatprep.subr.mxu0 0.0
        %3435 = vmatpush1.xpose.msra.mxu0 0.0
        %3436 = vmatprep.subr.mxu0 0.0
        %3437 = vmatpush1.xpose.msra.mxu0 0.0
        %3438 = vmatprep.subr.mxu0 0.0
        %3439 = vmatpush1.xpose.msra.mxu0 0.0
        %3440 = vmatprep.subr.mxu0 0.0
        %3441 = vmatpush1.xpose.msra.mxu0 0.0
        %3442 = vmatprep.subr.mxu0 0.0
        %3443 = vmatpush1.xpose.msra.mxu0 0.0
        %3444 = vmatprep.mubr.f32.mxu0 %v1085
        %3445 = vmatmul.mubr.f32.gmra.mrb[0].mxu0 %v1084
        %v3446 = vpop.f32.mrb[0].mxu0
        %v3447 = vadd.f32 0.0, %v3446
        %v3448 = vpop.f32.mrb[0].mxu0
        %3449 = vmatprep.mubr.f32.mxu0 %v1095
        %3450 = vmatmul.mubr.f32.gmra.mrb[0].mxu0 %v1094
        %v3451 = vpop.f32.mrb[0].mxu0
        %v3452 = vadd.f32 0.0, %v3451
        %v3453 = vpop.f32.mrb[0].mxu0
        %3454 = vmatprep.mubr.f32.mxu0 %v1105
        %3455 = vmatmul.mubr.f32.gmra.mrb[0].mxu0 %v1104
        %v3456 = vpop.f32.mrb[0].mxu0
        %v3457 = vadd.f32 0.0, %v3456
        %v3458 = vpop.f32.mrb[0].mxu0
        %3459 = vmatprep.mubr.f32.mxu0 %v1115
        %3460 = vmatmul.mubr.f32.gmra.mrb[0].mxu0 %v1114
        %v3461 = vpop.f32.mrb[0].mxu0
        %v3462 = vadd.f32 0.0, %v3461
        %v3463 = vpop.f32.mrb[0].mxu0
        %3464 = vmatprep.mubr.f32.mxu0 %v1125
        %3465 = vmatmul.mubr.f32.gmra.mrb[0].mxu0 %v1124
        %v3466 = vpop.f32.mrb[0].mxu0
        %v3467 = vadd.f32 0.0, %v3466
        %v3468 = vpop.f32.mrb[0].mxu0
        %3469 = vmatprep.mubr.f32.mxu0 %v1135
        %3470 = vmatmul.mubr.f32.gmra.mrb[0].mxu0 %v1134
        %v3471 = vpop.f32.mrb[0].mxu0
        %v3472 = vadd.f32 0.0, %v3471
        %v3473 = vpop.f32.mrb[0].mxu0
        %3474 = vmatprep.mubr.f32.mxu0 %v1145
        %3475 = vmatmul.mubr.f32.gmra.mrb[0].mxu0 %v1144
        %v3476 = vpop.f32.mrb[0].mxu0
        %v3477 = vadd.f32 0.0, %v3476
        %v3478 = vpop.f32.mrb[0].mxu0
        %3479 = vmatprep.mubr.f32.mxu0 %v1155
        %3480 = vmatmul.mubr.f32.gmra.mrb[0].mxu0 %v1154
        %v3481 = vpop.f32.mrb[0].mxu0
        %v3482 = vadd.f32 0.0, %v3481
        %v3483 = vpop.f32.mrb[0].mxu0
        %3484 = vmatprep.mubr.f32.mxu0 %v1165
        %3485 = vmatmul.mubr.f32.gmra.mrb[0].mxu0 %v1164
        %v3486 = vpop.f32.mrb[0].mxu0
        %v3487 = vadd.f32 0.0, %v3486
        %v3488 = vpop.f32.mrb[0].mxu0
        %3489 = vmatprep.mubr.f32.mxu0 %v1175
        %3490 = vmatmul.mubr.f32.gmra.mrb[0].mxu0 %v1174
        %v3491 = vpop.f32.mrb[0].mxu0
        %v3492 = vadd.f32 0.0, %v3491
        %v3493 = vpop.f32.mrb[0].mxu0
        %3494 = vmatprep.mubr.f32.mxu0 %v1185
        %3495 = vmatmul.mubr.f32.gmra.mrb[0].mxu0 %v1184
        %v3496 = vpop.f32.mrb[0].mxu0
        %v3497 = vadd.f32 0.0, %v3496
        %v3498 = vpop.f32.mrb[0].mxu0
        %3499 = vmatprep.mubr.f32.mxu0 %v1195
        %3500 = vmatmul.mubr.f32.gmra.mrb[0].mxu0 %v1194
        %v3501 = vpop.f32.mrb[0].mxu0
        %v3502 = vadd.f32 0.0, %v3501
        %v3503 = vpop.f32.mrb[0].mxu0
        %3504 = vmatprep.mubr.f32.mxu0 %v1205
        %3505 = vmatmul.mubr.f32.gmra.mrb[0].mxu0 %v1204
        %v3506 = vpop.f32.mrb[0].mxu0
        %v3507 = vadd.f32 0.0, %v3506
        %v3508 = vpop.f32.mrb[0].mxu0
        %3509 = vmatprep.mubr.f32.mxu0 %v1215
        %3510 = vmatmul.mubr.f32.gmra.mrb[0].mxu0 %v1214
        %v3511 = vpop.f32.mrb[0].mxu0
        %v3512 = vadd.f32 0.0, %v3511
        %v3513 = vpop.f32.mrb[0].mxu0
        %3514 = vmatprep.mubr.f32.mxu0 %v1225
        %3515 = vmatmul.mubr.f32.gmra.mrb[0].mxu0 %v1224
        %v3516 = vpop.f32.mrb[0].mxu0
        %v3517 = vadd.f32 0.0, %v3516
        %v3518 = vpop.f32.mrb[0].mxu0
        %3519 = vmatprep.mubr.f32.mxu0 %v1235
        %3520 = vmatmul.mubr.f32.gmra.mrb[0].mxu0 %v1234
        %v3521 = vpop.f32.mrb[0].mxu0
        %v3522 = vadd.f32 0.0, %v3521
        %v3523 = vpop.f32.mrb[0].mxu0
        %3524 = vmatprep.mubr.f32.mxu0 %v1245
        %3525 = vmatmul.mubr.f32.gmra.mrb[0].mxu0 %v1244
        %v3526 = vpop.f32.mrb[0].mxu0
        %v3527 = vadd.f32 0.0, %v3526
        %v3528 = vpop.f32.mrb[0].mxu0
        %3529 = vmatprep.mubr.f32.mxu0 %v1255
        %3530 = vmatmul.mubr.f32.gmra.mrb[0].mxu0 %v1254
        %v3531 = vpop.f32.mrb[0].mxu0
        %v3532 = vadd.f32 0.0, %v3531
        %v3533 = vpop.f32.mrb[0].mxu0
        %3534 = vmatprep.mubr.f32.mxu0 %v1265
        %3535 = vmatmul.mubr.f32.gmra.mrb[0].mxu0 %v1264
        %v3536 = vpop.f32.mrb[0].mxu0
        %v3537 = vadd.f32 0.0, %v3536
        %v3538 = vpop.f32.mrb[0].mxu0
        %3539 = vmatprep.mubr.f32.mxu0 %v1275
        %3540 = vmatmul.mubr.f32.gmra.mrb[0].mxu0 %v1274
        %v3541 = vpop.f32.mrb[0].mxu0
        %v3542 = vadd.f32 0.0, %v3541
        %v3543 = vpop.f32.mrb[0].mxu0
        %3544 = vmatprep.mubr.f32.mxu0 %v1285
        %3545 = vmatmul.mubr.f32.gmra.mrb[0].mxu0 %v1284
        %v3546 = vpop.f32.mrb[0].mxu0
        %v3547 = vadd.f32 0.0, %v3546
        %v3548 = vpop.f32.mrb[0].mxu0
        %3549 = vmatprep.mubr.f32.mxu0 %v1295
        %3550 = vmatmul.mubr.f32.gmra.mrb[0].mxu0 %v1294
        %v3551 = vpop.f32.mrb[0].mxu0
        %v3552 = vadd.f32 0.0, %v3551
        %v3553 = vpop.f32.mrb[0].mxu0
        %3554 = vmatprep.mubr.f32.mxu0 %v1305
        %3555 = vmatmul.mubr.f32.gmra.mrb[0].mxu0 %v1304
        %v3556 = vpop.f32.mrb[0].mxu0
        %v3557 = vadd.f32 0.0, %v3556
        %v3558 = vpop.f32.mrb[0].mxu0
        %3559 = vmatprep.mubr.f32.mxu0 %v1315
        %3560 = vmatmul.mubr.f32.gmra.mrb[0].mxu0 %v1314
        %v3561 = vpop.f32.mrb[0].mxu0
        %v3562 = vadd.f32 0.0, %v3561
        %v3563 = vpop.f32.mrb[0].mxu0
        %3564 = vmatprep.mubr.f32.mxu0 %v1325
        %3565 = vmatmul.mubr.f32.gmra.mrb[0].mxu0 %v1324
        %v3566 = vpop.f32.mrb[0].mxu0
        %v3567 = vadd.f32 0.0, %v3566
        %v3568 = vpop.f32.mrb[0].mxu0
        %3569 = vmatprep.mubr.f32.mxu0 %v1335
        %3570 = vmatmul.mubr.f32.gmra.mrb[0].mxu0 %v1334
        %v3571 = vpop.f32.mrb[0].mxu0
        %v3572 = vadd.f32 0.0, %v3571
        %v3573 = vpop.f32.mrb[0].mxu0
        %3574 = vmatprep.mubr.f32.mxu0 %v1345
        %3575 = vmatmul.mubr.f32.gmra.mrb[0].mxu0 %v1344
        %v3576 = vpop.f32.mrb[0].mxu0
        %v3577 = vadd.f32 0.0, %v3576
        %v3578 = vpop.f32.mrb[0].mxu0
        %3579 = vmatprep.mubr.f32.mxu0 %v1355
        %3580 = vmatmul.mubr.f32.gmra.mrb[0].mxu0 %v1354
        %v3581 = vpop.f32.mrb[0].mxu0
        %v3582 = vadd.f32 0.0, %v3581
        %v3583 = vpop.f32.mrb[0].mxu0
        %3584 = vmatprep.mubr.f32.mxu0 %v1365
        %3585 = vmatmul.mubr.f32.gmra.mrb[0].mxu0 %v1364
        %v3586 = vpop.f32.mrb[0].mxu0
        %v3587 = vadd.f32 0.0, %v3586
        %v3588 = vpop.f32.mrb[0].mxu0
        %3589 = vmatprep.mubr.f32.mxu0 %v1375
        %3590 = vmatmul.mubr.f32.gmra.mrb[0].mxu0 %v1374
        %v3591 = vpop.f32.mrb[0].mxu0
        %v3592 = vadd.f32 0.0, %v3591
        %v3593 = vpop.f32.mrb[0].mxu0
        %3594 = vmatprep.mubr.f32.mxu0 %v1385
        %3595 = vmatmul.mubr.f32.gmra.mrb[0].mxu0 %v1384
        %v3596 = vpop.f32.mrb[0].mxu0
        %v3597 = vadd.f32 0.0, %v3596
        %v3598 = vpop.f32.mrb[0].mxu0
        %3599 = vmatprep.mubr.f32.mxu0 %v1395
        %3600 = vmatmul.mubr.f32.gmra.mrb[0].mxu0 %v1394
        %v3601 = vpop.f32.mrb[0].mxu0
        %v3602 = vadd.f32 0.0, %v3601
        %v3603 = vpop.f32.mrb[0].mxu0
        %3604 = vmatprep.mubr.f32.mxu0 %v1405
        %3605 = vmatmul.mubr.f32.gmra.mrb[0].mxu0 %v1404
        %v3606 = vpop.f32.mrb[0].mxu0
        %v3607 = vadd.f32 0.0, %v3606
        %v3608 = vpop.f32.mrb[0].mxu0
        %3609 = vmatprep.mubr.f32.mxu0 %v1415
        %3610 = vmatmul.mubr.f32.gmra.mrb[0].mxu0 %v1414
        %v3611 = vpop.f32.mrb[0].mxu0
        %v3612 = vadd.f32 0.0, %v3611
        %v3613 = vpop.f32.mrb[0].mxu0
        %3614 = vmatprep.mubr.f32.mxu0 %v1425
        %3615 = vmatmul.mubr.f32.gmra.mrb[0].mxu0 %v1424
        %v3616 = vpop.f32.mrb[0].mxu0
        %v3617 = vadd.f32 0.0, %v3616
        %v3618 = vpop.f32.mrb[0].mxu0
        %3619 = vmatprep.mubr.f32.mxu0 %v1435
        %3620 = vmatmul.mubr.f32.gmra.mrb[0].mxu0 %v1434
        %v3621 = vpop.f32.mrb[0].mxu0
        %v3622 = vadd.f32 0.0, %v3621
        %v3623 = vpop.f32.mrb[0].mxu0
        %3624 = vmatprep.mubr.f32.mxu0 %v1445
        %3625 = vmatmul.mubr.f32.gmra.mrb[0].mxu0 %v1444
        %v3626 = vpop.f32.mrb[0].mxu0
        %v3627 = vadd.f32 0.0, %v3626
        %v3628 = vpop.f32.mrb[0].mxu0
        %3629 = vmatprep.mubr.f32.mxu0 %v1455
        %3630 = vmatmul.mubr.f32.gmra.mrb[0].mxu0 %v1454
        %v3631 = vpop.f32.mrb[0].mxu0
        %v3632 = vadd.f32 0.0, %v3631
        %v3633 = vpop.f32.mrb[0].mxu0
        %3634 = vmatprep.mubr.f32.mxu0 %v1465
        %3635 = vmatmul.mubr.f32.gmra.mrb[0].mxu0 %v1464
        %v3636 = vpop.f32.mrb[0].mxu0
        %v3637 = vadd.f32 0.0, %v3636
        %v3638 = vpop.f32.mrb[0].mxu0
        %3639 = vmatprep.mubr.f32.mxu0 %v1475
        %3640 = vmatmul.mubr.f32.gmra.mrb[0].mxu0 %v1474
        %v3641 = vpop.f32.mrb[0].mxu0
        %v3642 = vadd.f32 0.0, %v3641
        %v3643 = vpop.f32.mrb[0].mxu0
        %3644 = vmatprep.mubr.f32.mxu0 %v1485
        %3645 = vmatmul.mubr.f32.gmra.mrb[0].mxu0 %v1484
        %v3646 = vpop.f32.mrb[0].mxu0
        %v3647 = vadd.f32 0.0, %v3646
        %v3648 = vpop.f32.mrb[0].mxu0
        %3649 = vmatprep.mubr.f32.mxu0 %v1495
        %3650 = vmatmul.mubr.f32.gmra.mrb[0].mxu0 %v1494
        %v3651 = vpop.f32.mrb[0].mxu0
        %v3652 = vadd.f32 0.0, %v3651
        %v3653 = vpop.f32.mrb[0].mxu0
        %3654 = vmatprep.mubr.f32.mxu0 %v1505
        %3655 = vmatmul.mubr.f32.gmra.mrb[0].mxu0 %v1504
        %v3656 = vpop.f32.mrb[0].mxu0
        %v3657 = vadd.f32 0.0, %v3656
        %v3658 = vpop.f32.mrb[0].mxu0
        %3659 = vmatprep.mubr.f32.mxu0 %v1515
        %3660 = vmatmul.mubr.f32.gmra.mrb[0].mxu0 %v1514
        %v3661 = vpop.f32.mrb[0].mxu0
        %v3662 = vadd.f32 0.0, %v3661
        %v3663 = vpop.f32.mrb[0].mxu0
        %3664 = vmatprep.mubr.f32.mxu0 %v1525
        %3665 = vmatmul.mubr.f32.gmra.mrb[0].mxu0 %v1524
        %v3666 = vpop.f32.mrb[0].mxu0
        %v3667 = vadd.f32 0.0, %v3666
        %v3668 = vpop.f32.mrb[0].mxu0
        %3669 = vmatprep.mubr.f32.mxu0 %v1535
        %3670 = vmatmul.mubr.f32.gmra.mrb[0].mxu0 %v1534
        %v3671 = vpop.f32.mrb[0].mxu0
        %v3672 = vadd.f32 0.0, %v3671
        %v3673 = vpop.f32.mrb[0].mxu0
        %3674 = vmatprep.mubr.f32.mxu0 %v1545
        %3675 = vmatmul.mubr.f32.gmra.mrb[0].mxu0 %v1544
        %v3676 = vpop.f32.mrb[0].mxu0
        %v3677 = vadd.f32 0.0, %v3676
        %v3678 = vpop.f32.mrb[0].mxu0
        %3679 = vmatprep.mubr.f32.mxu0 %v1555
        %3680 = vmatmul.mubr.f32.gmra.mrb[0].mxu0 %v1554
        %v3681 = vpop.f32.mrb[0].mxu0
        %v3682 = vadd.f32 0.0, %v3681
        %v3683 = vpop.f32.mrb[0].mxu0
        %3684 = vmatprep.mubr.f32.mxu0 %v1565
        %3685 = vmatmul.mubr.f32.gmra.mrb[0].mxu0 %v1564
        %v3686 = vpop.f32.mrb[0].mxu0
        %v3687 = vadd.f32 0.0, %v3686
        %v3688 = vpop.f32.mrb[0].mxu0
        %3689 = vmatprep.mubr.f32.mxu0 %v1575
        %3690 = vmatmul.mubr.f32.gmra.mrb[0].mxu0 %v1574
        %v3691 = vpop.f32.mrb[0].mxu0
        %v3692 = vadd.f32 0.0, %v3691
        %v3693 = vpop.f32.mrb[0].mxu0
        %3694 = vmatprep.mubr.f32.mxu0 %v1585
        %3695 = vmatmul.mubr.f32.gmra.mrb[0].mxu0 %v1584
        %v3696 = vpop.f32.mrb[0].mxu0
        %v3697 = vadd.f32 0.0, %v3696
        %v3698 = vpop.f32.mrb[0].mxu0
        %3699 = vmatprep.mubr.f32.mxu0 %v1595
        %3700 = vmatmul.mubr.f32.gmra.mrb[0].mxu0 %v1594
        %v3701 = vpop.f32.mrb[0].mxu0
        %v3702 = vadd.f32 0.0, %v3701
        %v3703 = vpop.f32.mrb[0].mxu0
        %3704 = vmatprep.mubr.f32.mxu0 %v1605
        %3705 = vmatmul.mubr.f32.gmra.mrb[0].mxu0 %v1604
        %v3706 = vpop.f32.mrb[0].mxu0
        %v3707 = vadd.f32 0.0, %v3706
        %v3708 = vpop.f32.mrb[0].mxu0
        %3709 = vmatprep.mubr.f32.mxu0 %v1615
        %3710 = vmatmul.mubr.f32.gmra.mrb[0].mxu0 %v1614
        %v3711 = vpop.f32.mrb[0].mxu0
        %v3712 = vadd.f32 0.0, %v3711
        %v3713 = vpop.f32.mrb[0].mxu0
        %3714 = vmatprep.mubr.f32.mxu0 %v1625
        %3715 = vmatmul.mubr.f32.gmra.mrb[0].mxu0 %v1624
        %v3716 = vpop.f32.mrb[0].mxu0
        %v3717 = vadd.f32 0.0, %v3716
        %v3718 = vpop.f32.mrb[0].mxu0
        %3719 = vmatprep.mubr.f32.mxu0 %v1635
        %3720 = vmatmul.mubr.f32.gmra.mrb[0].mxu0 %v1634
        %v3721 = vpop.f32.mrb[0].mxu0
        %v3722 = vadd.f32 0.0, %v3721
        %v3723 = vpop.f32.mrb[0].mxu0
        %3724 = vmatprep.mubr.f32.mxu0 %v1645
        %3725 = vmatmul.mubr.f32.gmra.mrb[0].mxu0 %v1644
        %v3726 = vpop.f32.mrb[0].mxu0
        %v3727 = vadd.f32 0.0, %v3726
        %v3728 = vpop.f32.mrb[0].mxu0
        %3729 = vmatprep.mubr.f32.mxu0 %v1655
        %3730 = vmatmul.mubr.f32.gmra.mrb[0].mxu0 %v1654
        %v3731 = vpop.f32.mrb[0].mxu0
        %v3732 = vadd.f32 0.0, %v3731
        %v3733 = vpop.f32.mrb[0].mxu0
        %3734 = vmatprep.mubr.f32.mxu0 %v1665
        %3735 = vmatmul.mubr.f32.gmra.mrb[0].mxu0 %v1664
        %v3736 = vpop.f32.mrb[0].mxu0
        %v3737 = vadd.f32 0.0, %v3736
        %v3738 = vpop.f32.mrb[0].mxu0
        %3739 = vmatprep.mubr.f32.mxu0 %v1675
        %3740 = vmatmul.mubr.f32.gmra.mrb[0].mxu0 %v1674
        %v3741 = vpop.f32.mrb[0].mxu0
        %v3742 = vadd.f32 0.0, %v3741
        %v3743 = vpop.f32.mrb[0].mxu0
        %3744 = vmatprep.mubr.f32.mxu0 %v1685
        %3745 = vmatmul.mubr.f32.gmra.mrb[0].mxu0 %v1684
        %v3746 = vpop.f32.mrb[0].mxu0
        %v3747 = vadd.f32 0.0, %v3746
        %v3748 = vpop.f32.mrb[0].mxu0
        %3749 = vmatprep.mubr.f32.mxu0 %v1695
        %3750 = vmatmul.mubr.f32.gmra.mrb[0].mxu0 %v1694
        %v3751 = vpop.f32.mrb[0].mxu0
        %v3752 = vadd.f32 0.0, %v3751
        %v3753 = vpop.f32.mrb[0].mxu0
        %3754 = vmatprep.mubr.f32.mxu0 %v1705
        %3755 = vmatmul.mubr.f32.gmra.mrb[0].mxu0 %v1704
        %v3756 = vpop.f32.mrb[0].mxu0
        %v3757 = vadd.f32 0.0, %v3756
        %v3758 = vpop.f32.mrb[0].mxu0
        %3759 = vmatprep.mubr.f32.mxu0 %v1715
        %3760 = vmatmul.mubr.f32.gmra.mrb[0].mxu0 %v1714
        %v3761 = vpop.f32.mrb[0].mxu0
        %v3762 = vadd.f32 0.0, %v3761
        %v3763 = vpop.f32.mrb[0].mxu0
        %3764 = vdwg.mxu0
        %3765 = vmatprep.subr.mxu0 %v2447
        %3766 = vmatpush1.xpose.msra.mxu0 %v2446
        %3767 = vmatprep.subr.mxu0 0.0
        %3768 = vmatpush1.xpose.msra.mxu0 0.0
        %3769 = vmatprep.subr.mxu0 0.0
        %3770 = vmatpush1.xpose.msra.mxu0 0.0
        %3771 = vmatprep.subr.mxu0 0.0
        %3772 = vmatpush1.xpose.msra.mxu0 0.0
        %3773 = vmatprep.subr.mxu0 0.0
        %3774 = vmatpush1.xpose.msra.mxu0 0.0
        %3775 = vmatprep.subr.mxu0 0.0
        %3776 = vmatpush1.xpose.msra.mxu0 0.0
        %3777 = vmatprep.subr.mxu0 0.0
        %3778 = vmatpush1.xpose.msra.mxu0 0.0
        %3779 = vmatprep.subr.mxu0 0.0
        %3780 = vmatpush1.xpose.msra.mxu0 0.0
        %3781 = vmatprep.subr.mxu0 0.0
        %3782 = vmatpush1.xpose.msra.mxu0 0.0
        %3783 = vmatprep.subr.mxu0 0.0
        %3784 = vmatpush1.xpose.msra.mxu0 0.0
        %3785 = vmatprep.subr.mxu0 0.0
        %3786 = vmatpush1.xpose.msra.mxu0 0.0
        %3787 = vmatprep.subr.mxu0 0.0
        %3788 = vmatpush1.xpose.msra.mxu0 0.0
        %3789 = vmatprep.subr.mxu0 0.0
        %3790 = vmatpush1.xpose.msra.mxu0 0.0
        %3791 = vmatprep.subr.mxu0 0.0
        %3792 = vmatpush1.xpose.msra.mxu0 0.0
        %3793 = vmatprep.subr.mxu0 0.0
        %3794 = vmatpush1.xpose.msra.mxu0 0.0
        %3795 = vmatprep.subr.mxu0 0.0
        %3796 = vmatpush1.xpose.msra.mxu0 0.0
        %3797 = vmatprep.subr.mxu0 0.0
        %3798 = vmatpush1.xpose.msra.mxu0 0.0
        %3799 = vmatprep.subr.mxu0 0.0
        %3800 = vmatpush1.xpose.msra.mxu0 0.0
        %3801 = vmatprep.subr.mxu0 0.0
        %3802 = vmatpush1.xpose.msra.mxu0 0.0
        %3803 = vmatprep.subr.mxu0 0.0
        %3804 = vmatpush1.xpose.msra.mxu0 0.0
        %3805 = vmatprep.subr.mxu0 0.0
        %3806 = vmatpush1.xpose.msra.mxu0 0.0
        %3807 = vmatprep.subr.mxu0 0.0
        %3808 = vmatpush1.xpose.msra.mxu0 0.0
        %3809 = vmatprep.subr.mxu0 0.0
        %3810 = vmatpush1.xpose.msra.mxu0 0.0
        %3811 = vmatprep.subr.mxu0 0.0
        %3812 = vmatpush1.xpose.msra.mxu0 0.0
        %3813 = vmatprep.subr.mxu0 0.0
        %3814 = vmatpush1.xpose.msra.mxu0 0.0
        %3815 = vmatprep.subr.mxu0 0.0
        %3816 = vmatpush1.xpose.msra.mxu0 0.0
        %3817 = vmatprep.subr.mxu0 0.0
        %3818 = vmatpush1.xpose.msra.mxu0 0.0
        %3819 = vmatprep.subr.mxu0 0.0
        %3820 = vmatpush1.xpose.msra.mxu0 0.0
        %3821 = vmatprep.subr.mxu0 0.0
        %3822 = vmatpush1.xpose.msra.mxu0 0.0
        %3823 = vmatprep.subr.mxu0 0.0
        %3824 = vmatpush1.xpose.msra.mxu0 0.0
        %3825 = vmatprep.subr.mxu0 0.0
        %3826 = vmatpush1.xpose.msra.mxu0 0.0
        %3827 = vmatprep.subr.mxu0 0.0
        %3828 = vmatpush1.xpose.msra.mxu0 0.0
        %3829 = vmatprep.mubr.f32.mxu0 %v1087
        %3830 = vmatmul.mubr.f32.gmra.mrb[0].mxu0 %v1086
        %v3831 = vpop.f32.mrb[0].mxu0
        %v3832 = vadd.f32 %v3447, %v3831
        %v3833 = vpop.f32.mrb[0].mxu0
        %3834 = vmatprep.mubr.f32.mxu0 %v1097
        %3835 = vmatmul.mubr.f32.gmra.mrb[0].mxu0 %v1096
        %v3836 = vpop.f32.mrb[0].mxu0
        %v3837 = vadd.f32 %v3452, %v3836
        %v3838 = vpop.f32.mrb[0].mxu0
        %3839 = vmatprep.mubr.f32.mxu0 %v1107
        %3840 = vmatmul.mubr.f32.gmra.mrb[0].mxu0 %v1106
        %v3841 = vpop.f32.mrb[0].mxu0
        %v3842 = vadd.f32 %v3457, %v3841
        %v3843 = vpop.f32.mrb[0].mxu0
        %3844 = vmatprep.mubr.f32.mxu0 %v1117
        %3845 = vmatmul.mubr.f32.gmra.mrb[0].mxu0 %v1116
        %v3846 = vpop.f32.mrb[0].mxu0
        %v3847 = vadd.f32 %v3462, %v3846
        %v3848 = vpop.f32.mrb[0].mxu0
        %3849 = vmatprep.mubr.f32.mxu0 %v1127
        %3850 = vmatmul.mubr.f32.gmra.mrb[0].mxu0 %v1126
        %v3851 = vpop.f32.mrb[0].mxu0
        %v3852 = vadd.f32 %v3467, %v3851
        %v3853 = vpop.f32.mrb[0].mxu0
        %3854 = vmatprep.mubr.f32.mxu0 %v1137
        %3855 = vmatmul.mubr.f32.gmra.mrb[0].mxu0 %v1136
        %v3856 = vpop.f32.mrb[0].mxu0
        %v3857 = vadd.f32 %v3472, %v3856
        %v3858 = vpop.f32.mrb[0].mxu0
        %3859 = vmatprep.mubr.f32.mxu0 %v1147
        %3860 = vmatmul.mubr.f32.gmra.mrb[0].mxu0 %v1146
        %v3861 = vpop.f32.mrb[0].mxu0
        %v3862 = vadd.f32 %v3477, %v3861
        %v3863 = vpop.f32.mrb[0].mxu0
        %3864 = vmatprep.mubr.f32.mxu0 %v1157
        %3865 = vmatmul.mubr.f32.gmra.mrb[0].mxu0 %v1156
        %v3866 = vpop.f32.mrb[0].mxu0
        %v3867 = vadd.f32 %v3482, %v3866
        %v3868 = vpop.f32.mrb[0].mxu0
        %3869 = vmatprep.mubr.f32.mxu0 %v1167
        %3870 = vmatmul.mubr.f32.gmra.mrb[0].mxu0 %v1166
        %v3871 = vpop.f32.mrb[0].mxu0
        %v3872 = vadd.f32 %v3487, %v3871
        %v3873 = vpop.f32.mrb[0].mxu0
        %3874 = vmatprep.mubr.f32.mxu0 %v1177
        %3875 = vmatmul.mubr.f32.gmra.mrb[0].mxu0 %v1176
        %v3876 = vpop.f32.mrb[0].mxu0
        %v3877 = vadd.f32 %v3492, %v3876
        %v3878 = vpop.f32.mrb[0].mxu0
        %3879 = vmatprep.mubr.f32.mxu0 %v1187
        %3880 = vmatmul.mubr.f32.gmra.mrb[0].mxu0 %v1186
        %v3881 = vpop.f32.mrb[0].mxu0
        %v3882 = vadd.f32 %v3497, %v3881
        %v3883 = vpop.f32.mrb[0].mxu0
        %3884 = vmatprep.mubr.f32.mxu0 %v1197
        %3885 = vmatmul.mubr.f32.gmra.mrb[0].mxu0 %v1196
        %v3886 = vpop.f32.mrb[0].mxu0
        %v3887 = vadd.f32 %v3502, %v3886
        %v3888 = vpop.f32.mrb[0].mxu0
        %3889 = vmatprep.mubr.f32.mxu0 %v1207
        %3890 = vmatmul.mubr.f32.gmra.mrb[0].mxu0 %v1206
        %v3891 = vpop.f32.mrb[0].mxu0
        %v3892 = vadd.f32 %v3507, %v3891
        %v3893 = vpop.f32.mrb[0].mxu0
        %3894 = vmatprep.mubr.f32.mxu0 %v1217
        %3895 = vmatmul.mubr.f32.gmra.mrb[0].mxu0 %v1216
        %v3896 = vpop.f32.mrb[0].mxu0
        %v3897 = vadd.f32 %v3512, %v3896
        %v3898 = vpop.f32.mrb[0].mxu0
        %3899 = vmatprep.mubr.f32.mxu0 %v1227
        %3900 = vmatmul.mubr.f32.gmra.mrb[0].mxu0 %v1226
        %v3901 = vpop.f32.mrb[0].mxu0
        %v3902 = vadd.f32 %v3517, %v3901
        %v3903 = vpop.f32.mrb[0].mxu0
        %3904 = vmatprep.mubr.f32.mxu0 %v1237
        %3905 = vmatmul.mubr.f32.gmra.mrb[0].mxu0 %v1236
        %v3906 = vpop.f32.mrb[0].mxu0
        %v3907 = vadd.f32 %v3522, %v3906
        %v3908 = vpop.f32.mrb[0].mxu0
        %3909 = vmatprep.mubr.f32.mxu0 %v1247
        %3910 = vmatmul.mubr.f32.gmra.mrb[0].mxu0 %v1246
        %v3911 = vpop.f32.mrb[0].mxu0
        %v3912 = vadd.f32 %v3527, %v3911
        %v3913 = vpop.f32.mrb[0].mxu0
        %3914 = vmatprep.mubr.f32.mxu0 %v1257
        %3915 = vmatmul.mubr.f32.gmra.mrb[0].mxu0 %v1256
        %v3916 = vpop.f32.mrb[0].mxu0
        %v3917 = vadd.f32 %v3532, %v3916
        %v3918 = vpop.f32.mrb[0].mxu0
        %3919 = vmatprep.mubr.f32.mxu0 %v1267
        %3920 = vmatmul.mubr.f32.gmra.mrb[0].mxu0 %v1266
        %v3921 = vpop.f32.mrb[0].mxu0
        %v3922 = vadd.f32 %v3537, %v3921
        %v3923 = vpop.f32.mrb[0].mxu0
        %3924 = vmatprep.mubr.f32.mxu0 %v1277
        %3925 = vmatmul.mubr.f32.gmra.mrb[0].mxu0 %v1276
        %v3926 = vpop.f32.mrb[0].mxu0
        %v3927 = vadd.f32 %v3542, %v3926
        %v3928 = vpop.f32.mrb[0].mxu0
        %3929 = vmatprep.mubr.f32.mxu0 %v1287
        %3930 = vmatmul.mubr.f32.gmra.mrb[0].mxu0 %v1286
        %v3931 = vpop.f32.mrb[0].mxu0
        %v3932 = vadd.f32 %v3547, %v3931
        %v3933 = vpop.f32.mrb[0].mxu0
        %3934 = vmatprep.mubr.f32.mxu0 %v1297
        %3935 = vmatmul.mubr.f32.gmra.mrb[0].mxu0 %v1296
        %v3936 = vpop.f32.mrb[0].mxu0
        %v3937 = vadd.f32 %v3552, %v3936
        %v3938 = vpop.f32.mrb[0].mxu0
        %3939 = vmatprep.mubr.f32.mxu0 %v1307
        %3940 = vmatmul.mubr.f32.gmra.mrb[0].mxu0 %v1306
        %v3941 = vpop.f32.mrb[0].mxu0
        %v3942 = vadd.f32 %v3557, %v3941
        %v3943 = vpop.f32.mrb[0].mxu0
        %3944 = vmatprep.mubr.f32.mxu0 %v1317
        %3945 = vmatmul.mubr.f32.gmra.mrb[0].mxu0 %v1316
        %v3946 = vpop.f32.mrb[0].mxu0
        %v3947 = vadd.f32 %v3562, %v3946
        %v3948 = vpop.f32.mrb[0].mxu0
        %3949 = vmatprep.mubr.f32.mxu0 %v1327
        %3950 = vmatmul.mubr.f32.gmra.mrb[0].mxu0 %v1326
        %v3951 = vpop.f32.mrb[0].mxu0
        %v3952 = vadd.f32 %v3567, %v3951
        %v3953 = vpop.f32.mrb[0].mxu0
        %3954 = vmatprep.mubr.f32.mxu0 %v1337
        %3955 = vmatmul.mubr.f32.gmra.mrb[0].mxu0 %v1336
        %v3956 = vpop.f32.mrb[0].mxu0
        %v3957 = vadd.f32 %v3572, %v3956
        %v3958 = vpop.f32.mrb[0].mxu0
        %3959 = vmatprep.mubr.f32.mxu0 %v1347
        %3960 = vmatmul.mubr.f32.gmra.mrb[0].mxu0 %v1346
        %v3961 = vpop.f32.mrb[0].mxu0
        %v3962 = vadd.f32 %v3577, %v3961
        %v3963 = vpop.f32.mrb[0].mxu0
        %3964 = vmatprep.mubr.f32.mxu0 %v1357
        %3965 = vmatmul.mubr.f32.gmra.mrb[0].mxu0 %v1356
        %v3966 = vpop.f32.mrb[0].mxu0
        %v3967 = vadd.f32 %v3582, %v3966
        %v3968 = vpop.f32.mrb[0].mxu0
        %3969 = vmatprep.mubr.f32.mxu0 %v1367
        %3970 = vmatmul.mubr.f32.gmra.mrb[0].mxu0 %v1366
        %v3971 = vpop.f32.mrb[0].mxu0
        %v3972 = vadd.f32 %v3587, %v3971
        %v3973 = vpop.f32.mrb[0].mxu0
        %3974 = vmatprep.mubr.f32.mxu0 %v1377
        %3975 = vmatmul.mubr.f32.gmra.mrb[0].mxu0 %v1376
        %v3976 = vpop.f32.mrb[0].mxu0
        %v3977 = vadd.f32 %v3592, %v3976
        %v3978 = vpop.f32.mrb[0].mxu0
        %3979 = vmatprep.mubr.f32.mxu0 %v1387
        %3980 = vmatmul.mubr.f32.gmra.mrb[0].mxu0 %v1386
        %v3981 = vpop.f32.mrb[0].mxu0
        %v3982 = vadd.f32 %v3597, %v3981
        %v3983 = vpop.f32.mrb[0].mxu0
        %3984 = vmatprep.mubr.f32.mxu0 %v1397
        %3985 = vmatmul.mubr.f32.gmra.mrb[0].mxu0 %v1396
        %v3986 = vpop.f32.mrb[0].mxu0
        %v3987 = vadd.f32 %v3602, %v3986
        %v3988 = vpop.f32.mrb[0].mxu0
        %3989 = vmatprep.mubr.f32.mxu0 %v1407
        %3990 = vmatmul.mubr.f32.gmra.mrb[0].mxu0 %v1406
        %v3991 = vpop.f32.mrb[0].mxu0
        %v3992 = vadd.f32 %v3607, %v3991
        %v3993 = vpop.f32.mrb[0].mxu0
        %3994 = vmatprep.mubr.f32.mxu0 %v1417
        %3995 = vmatmul.mubr.f32.gmra.mrb[0].mxu0 %v1416
        %v3996 = vpop.f32.mrb[0].mxu0
        %v3997 = vadd.f32 %v3612, %v3996
        %v3998 = vpop.f32.mrb[0].mxu0
        %3999 = vmatprep.mubr.f32.mxu0 %v1427
        %4000 = vmatmul.mubr.f32.gmra.mrb[0].mxu0 %v1426
        %v4001 = vpop.f32.mrb[0].mxu0
        %v4002 = vadd.f32 %v3617, %v4001
        %v4003 = vpop.f32.mrb[0].mxu0
        %4004 = vmatprep.mubr.f32.mxu0 %v1437
        %4005 = vmatmul.mubr.f32.gmra.mrb[0].mxu0 %v1436
        %v4006 = vpop.f32.mrb[0].mxu0
        %v4007 = vadd.f32 %v3622, %v4006
        %v4008 = vpop.f32.mrb[0].mxu0
        %4009 = vmatprep.mubr.f32.mxu0 %v1447
        %4010 = vmatmul.mubr.f32.gmra.mrb[0].mxu0 %v1446
        %v4011 = vpop.f32.mrb[0].mxu0
        %v4012 = vadd.f32 %v3627, %v4011
        %v4013 = vpop.f32.mrb[0].mxu0
        %4014 = vmatprep.mubr.f32.mxu0 %v1457
        %4015 = vmatmul.mubr.f32.gmra.mrb[0].mxu0 %v1456
        %v4016 = vpop.f32.mrb[0].mxu0
        %v4017 = vadd.f32 %v3632, %v4016
        %v4018 = vpop.f32.mrb[0].mxu0
        %4019 = vmatprep.mubr.f32.mxu0 %v1467
        %4020 = vmatmul.mubr.f32.gmra.mrb[0].mxu0 %v1466
        %v4021 = vpop.f32.mrb[0].mxu0
        %v4022 = vadd.f32 %v3637, %v4021
        %v4023 = vpop.f32.mrb[0].mxu0
        %4024 = vmatprep.mubr.f32.mxu0 %v1477
        %4025 = vmatmul.mubr.f32.gmra.mrb[0].mxu0 %v1476
        %v4026 = vpop.f32.mrb[0].mxu0
        %v4027 = vadd.f32 %v3642, %v4026
        %v4028 = vpop.f32.mrb[0].mxu0
        %4029 = vmatprep.mubr.f32.mxu0 %v1487
        %4030 = vmatmul.mubr.f32.gmra.mrb[0].mxu0 %v1486
        %v4031 = vpop.f32.mrb[0].mxu0
        %v4032 = vadd.f32 %v3647, %v4031
        %v4033 = vpop.f32.mrb[0].mxu0
        %4034 = vmatprep.mubr.f32.mxu0 %v1497
        %4035 = vmatmul.mubr.f32.gmra.mrb[0].mxu0 %v1496
        %v4036 = vpop.f32.mrb[0].mxu0
        %v4037 = vadd.f32 %v3652, %v4036
        %v4038 = vpop.f32.mrb[0].mxu0
        %4039 = vmatprep.mubr.f32.mxu0 %v1507
        %4040 = vmatmul.mubr.f32.gmra.mrb[0].mxu0 %v1506
        %v4041 = vpop.f32.mrb[0].mxu0
        %v4042 = vadd.f32 %v3657, %v4041
        %v4043 = vpop.f32.mrb[0].mxu0
        %4044 = vmatprep.mubr.f32.mxu0 %v1517
        %4045 = vmatmul.mubr.f32.gmra.mrb[0].mxu0 %v1516
        %v4046 = vpop.f32.mrb[0].mxu0
        %v4047 = vadd.f32 %v3662, %v4046
        %v4048 = vpop.f32.mrb[0].mxu0
        %4049 = vmatprep.mubr.f32.mxu0 %v1527
        %4050 = vmatmul.mubr.f32.gmra.mrb[0].mxu0 %v1526
        %v4051 = vpop.f32.mrb[0].mxu0
        %v4052 = vadd.f32 %v3667, %v4051
        %v4053 = vpop.f32.mrb[0].mxu0
        %4054 = vmatprep.mubr.f32.mxu0 %v1537
        %4055 = vmatmul.mubr.f32.gmra.mrb[0].mxu0 %v1536
        %v4056 = vpop.f32.mrb[0].mxu0
        %v4057 = vadd.f32 %v3672, %v4056
        %v4058 = vpop.f32.mrb[0].mxu0
        %4059 = vmatprep.mubr.f32.mxu0 %v1547
        %4060 = vmatmul.mubr.f32.gmra.mrb[0].mxu0 %v1546
        %v4061 = vpop.f32.mrb[0].mxu0
        %v4062 = vadd.f32 %v3677, %v4061
        %v4063 = vpop.f32.mrb[0].mxu0
        %4064 = vmatprep.mubr.f32.mxu0 %v1557
        %4065 = vmatmul.mubr.f32.gmra.mrb[0].mxu0 %v1556
        %v4066 = vpop.f32.mrb[0].mxu0
        %v4067 = vadd.f32 %v3682, %v4066
        %v4068 = vpop.f32.mrb[0].mxu0
        %4069 = vmatprep.mubr.f32.mxu0 %v1567
        %4070 = vmatmul.mubr.f32.gmra.mrb[0].mxu0 %v1566
        %v4071 = vpop.f32.mrb[0].mxu0
        %v4072 = vadd.f32 %v3687, %v4071
        %v4073 = vpop.f32.mrb[0].mxu0
        %4074 = vmatprep.mubr.f32.mxu0 %v1577
        %4075 = vmatmul.mubr.f32.gmra.mrb[0].mxu0 %v1576
        %v4076 = vpop.f32.mrb[0].mxu0
        %v4077 = vadd.f32 %v3692, %v4076
        %v4078 = vpop.f32.mrb[0].mxu0
        %4079 = vmatprep.mubr.f32.mxu0 %v1587
        %4080 = vmatmul.mubr.f32.gmra.mrb[0].mxu0 %v1586
        %v4081 = vpop.f32.mrb[0].mxu0
        %v4082 = vadd.f32 %v3697, %v4081
        %v4083 = vpop.f32.mrb[0].mxu0
        %4084 = vmatprep.mubr.f32.mxu0 %v1597
        %4085 = vmatmul.mubr.f32.gmra.mrb[0].mxu0 %v1596
        %v4086 = vpop.f32.mrb[0].mxu0
        %v4087 = vadd.f32 %v3702, %v4086
        %v4088 = vpop.f32.mrb[0].mxu0
        %4089 = vmatprep.mubr.f32.mxu0 %v1607
        %4090 = vmatmul.mubr.f32.gmra.mrb[0].mxu0 %v1606
        %v4091 = vpop.f32.mrb[0].mxu0
        %v4092 = vadd.f32 %v3707, %v4091
        %v4093 = vpop.f32.mrb[0].mxu0
        %4094 = vmatprep.mubr.f32.mxu0 %v1617
        %4095 = vmatmul.mubr.f32.gmra.mrb[0].mxu0 %v1616
        %v4096 = vpop.f32.mrb[0].mxu0
        %v4097 = vadd.f32 %v3712, %v4096
        %v4098 = vpop.f32.mrb[0].mxu0
        %4099 = vmatprep.mubr.f32.mxu0 %v1627
        %4100 = vmatmul.mubr.f32.gmra.mrb[0].mxu0 %v1626
        %v4101 = vpop.f32.mrb[0].mxu0
        %v4102 = vadd.f32 %v3717, %v4101
        %v4103 = vpop.f32.mrb[0].mxu0
        %4104 = vmatprep.mubr.f32.mxu0 %v1637
        %4105 = vmatmul.mubr.f32.gmra.mrb[0].mxu0 %v1636
        %v4106 = vpop.f32.mrb[0].mxu0
        %v4107 = vadd.f32 %v3722, %v4106
        %v4108 = vpop.f32.mrb[0].mxu0
        %4109 = vmatprep.mubr.f32.mxu0 %v1647
        %4110 = vmatmul.mubr.f32.gmra.mrb[0].mxu0 %v1646
        %v4111 = vpop.f32.mrb[0].mxu0
        %v4112 = vadd.f32 %v3727, %v4111
        %v4113 = vpop.f32.mrb[0].mxu0
        %4114 = vmatprep.mubr.f32.mxu0 %v1657
        %4115 = vmatmul.mubr.f32.gmra.mrb[0].mxu0 %v1656
        %v4116 = vpop.f32.mrb[0].mxu0
        %v4117 = vadd.f32 %v3732, %v4116
        %v4118 = vpop.f32.mrb[0].mxu0
        %4119 = vmatprep.mubr.f32.mxu0 %v1667
        %4120 = vmatmul.mubr.f32.gmra.mrb[0].mxu0 %v1666
        %v4121 = vpop.f32.mrb[0].mxu0
        %v4122 = vadd.f32 %v3737, %v4121
        %v4123 = vpop.f32.mrb[0].mxu0
        %4124 = vmatprep.mubr.f32.mxu0 %v1677
        %4125 = vmatmul.mubr.f32.gmra.mrb[0].mxu0 %v1676
        %v4126 = vpop.f32.mrb[0].mxu0
        %v4127 = vadd.f32 %v3742, %v4126
        %v4128 = vpop.f32.mrb[0].mxu0
        %4129 = vmatprep.mubr.f32.mxu0 %v1687
        %4130 = vmatmul.mubr.f32.gmra.mrb[0].mxu0 %v1686
        %v4131 = vpop.f32.mrb[0].mxu0
        %v4132 = vadd.f32 %v3747, %v4131
        %v4133 = vpop.f32.mrb[0].mxu0
        %4134 = vmatprep.mubr.f32.mxu0 %v1697
        %4135 = vmatmul.mubr.f32.gmra.mrb[0].mxu0 %v1696
        %v4136 = vpop.f32.mrb[0].mxu0
        %v4137 = vadd.f32 %v3752, %v4136
        %v4138 = vpop.f32.mrb[0].mxu0
        %4139 = vmatprep.mubr.f32.mxu0 %v1707
        %4140 = vmatmul.mubr.f32.gmra.mrb[0].mxu0 %v1706
        %v4141 = vpop.f32.mrb[0].mxu0
        %v4142 = vadd.f32 %v3757, %v4141
        %v4143 = vpop.f32.mrb[0].mxu0
        %4144 = vmatprep.mubr.f32.mxu0 %v1717
        %4145 = vmatmul.mubr.f32.gmra.mrb[0].mxu0 %v1716
        %v4146 = vpop.f32.mrb[0].mxu0
        %v4147 = vadd.f32 %v3762, %v4146
        %v4148 = vpop.f32.mrb[0].mxu0
        %4149 = vdwg.mxu0
        %4150 = vmatprep.subr.mxu0 %v2449
        %4151 = vmatpush1.xpose.msra.mxu0 %v2448
        %4152 = vmatprep.subr.mxu0 0.0
        %4153 = vmatpush1.xpose.msra.mxu0 0.0
        %4154 = vmatprep.subr.mxu0 0.0
        %4155 = vmatpush1.xpose.msra.mxu0 0.0
        %4156 = vmatprep.subr.mxu0 0.0
        %4157 = vmatpush1.xpose.msra.mxu0 0.0
        %4158 = vmatprep.subr.mxu0 0.0
        %4159 = vmatpush1.xpose.msra.mxu0 0.0
        %4160 = vmatprep.subr.mxu0 0.0
        %4161 = vmatpush1.xpose.msra.mxu0 0.0
        %4162 = vmatprep.subr.mxu0 0.0
        %4163 = vmatpush1.xpose.msra.mxu0 0.0
        %4164 = vmatprep.subr.mxu0 0.0
        %4165 = vmatpush1.xpose.msra.mxu0 0.0
        %4166 = vmatprep.subr.mxu0 0.0
        %4167 = vmatpush1.xpose.msra.mxu0 0.0
        %4168 = vmatprep.subr.mxu0 0.0
        %4169 = vmatpush1.xpose.msra.mxu0 0.0
        %4170 = vmatprep.subr.mxu0 0.0
        %4171 = vmatpush1.xpose.msra.mxu0 0.0
        %4172 = vmatprep.subr.mxu0 0.0
        %4173 = vmatpush1.xpose.msra.mxu0 0.0
        %4174 = vmatprep.subr.mxu0 0.0
        %4175 = vmatpush1.xpose.msra.mxu0 0.0
        %4176 = vmatprep.subr.mxu0 0.0
        %4177 = vmatpush1.xpose.msra.mxu0 0.0
        %4178 = vmatprep.subr.mxu0 0.0
        %4179 = vmatpush1.xpose.msra.mxu0 0.0
        %4180 = vmatprep.subr.mxu0 0.0
        %4181 = vmatpush1.xpose.msra.mxu0 0.0
        %4182 = vmatprep.subr.mxu0 0.0
        %4183 = vmatpush1.xpose.msra.mxu0 0.0
        %4184 = vmatprep.subr.mxu0 0.0
        %4185 = vmatpush1.xpose.msra.mxu0 0.0
        %4186 = vmatprep.subr.mxu0 0.0
        %4187 = vmatpush1.xpose.msra.mxu0 0.0
        %4188 = vmatprep.subr.mxu0 0.0
        %4189 = vmatpush1.xpose.msra.mxu0 0.0
        %4190 = vmatprep.subr.mxu0 0.0
        %4191 = vmatpush1.xpose.msra.mxu0 0.0
        %4192 = vmatprep.subr.mxu0 0.0
        %4193 = vmatpush1.xpose.msra.mxu0 0.0
        %4194 = vmatprep.subr.mxu0 0.0
        %4195 = vmatpush1.xpose.msra.mxu0 0.0
        %4196 = vmatprep.subr.mxu0 0.0
        %4197 = vmatpush1.xpose.msra.mxu0 0.0
        %4198 = vmatprep.subr.mxu0 0.0
        %4199 = vmatpush1.xpose.msra.mxu0 0.0
        %4200 = vmatprep.subr.mxu0 0.0
        %4201 = vmatpush1.xpose.msra.mxu0 0.0
        %4202 = vmatprep.subr.mxu0 0.0
        %4203 = vmatpush1.xpose.msra.mxu0 0.0
        %4204 = vmatprep.subr.mxu0 0.0
        %4205 = vmatpush1.xpose.msra.mxu0 0.0
        %4206 = vmatprep.subr.mxu0 0.0
        %4207 = vmatpush1.xpose.msra.mxu0 0.0
        %4208 = vmatprep.subr.mxu0 0.0
        %4209 = vmatpush1.xpose.msra.mxu0 0.0
        %4210 = vmatprep.subr.mxu0 0.0
        %4211 = vmatpush1.xpose.msra.mxu0 0.0
        %4212 = vmatprep.subr.mxu0 0.0
        %4213 = vmatpush1.xpose.msra.mxu0 0.0
        %4214 = vmatprep.mubr.f32.mxu0 %v1089
        %4215 = vmatmul.mubr.f32.gmra.mrb[0].mxu0 %v1088
        %v4216 = vpop.f32.mrb[0].mxu0
        %v4217 = vadd.f32 %v3832, %v4216
        %v4218 = vpop.f32.mrb[0].mxu0
        %4219 = vmatprep.mubr.f32.mxu0 %v1099
        %4220 = vmatmul.mubr.f32.gmra.mrb[0].mxu0 %v1098
        %v4221 = vpop.f32.mrb[0].mxu0
        %v4222 = vadd.f32 %v3837, %v4221
        %v4223 = vpop.f32.mrb[0].mxu0
        %4224 = vmatprep.mubr.f32.mxu0 %v1109
        %4225 = vmatmul.mubr.f32.gmra.mrb[0].mxu0 %v1108
        %v4226 = vpop.f32.mrb[0].mxu0
        %v4227 = vadd.f32 %v3842, %v4226
        %v4228 = vpop.f32.mrb[0].mxu0
        %4229 = vmatprep.mubr.f32.mxu0 %v1119
        %4230 = vmatmul.mubr.f32.gmra.mrb[0].mxu0 %v1118
        %v4231 = vpop.f32.mrb[0].mxu0
        %v4232 = vadd.f32 %v3847, %v4231
        %v4233 = vpop.f32.mrb[0].mxu0
        %4234 = vmatprep.mubr.f32.mxu0 %v1129
        %4235 = vmatmul.mubr.f32.gmra.mrb[0].mxu0 %v1128
        %v4236 = vpop.f32.mrb[0].mxu0
        %v4237 = vadd.f32 %v3852, %v4236
        %v4238 = vpop.f32.mrb[0].mxu0
        %4239 = vmatprep.mubr.f32.mxu0 %v1139
        %4240 = vmatmul.mubr.f32.gmra.mrb[0].mxu0 %v1138
        %v4241 = vpop.f32.mrb[0].mxu0
        %v4242 = vadd.f32 %v3857, %v4241
        %v4243 = vpop.f32.mrb[0].mxu0
        %4244 = vmatprep.mubr.f32.mxu0 %v1149
        %4245 = vmatmul.mubr.f32.gmra.mrb[0].mxu0 %v1148
        %v4246 = vpop.f32.mrb[0].mxu0
        %v4247 = vadd.f32 %v3862, %v4246
        %v4248 = vpop.f32.mrb[0].mxu0
        %4249 = vmatprep.mubr.f32.mxu0 %v1159
        %4250 = vmatmul.mubr.f32.gmra.mrb[0].mxu0 %v1158
        %v4251 = vpop.f32.mrb[0].mxu0
        %v4252 = vadd.f32 %v3867, %v4251
        %v4253 = vpop.f32.mrb[0].mxu0
        %4254 = vmatprep.mubr.f32.mxu0 %v1169
        %4255 = vmatmul.mubr.f32.gmra.mrb[0].mxu0 %v1168
        %v4256 = vpop.f32.mrb[0].mxu0
        %v4257 = vadd.f32 %v3872, %v4256
        %v4258 = vpop.f32.mrb[0].mxu0
        %4259 = vmatprep.mubr.f32.mxu0 %v1179
        %4260 = vmatmul.mubr.f32.gmra.mrb[0].mxu0 %v1178
        %v4261 = vpop.f32.mrb[0].mxu0
        %v4262 = vadd.f32 %v3877, %v4261
        %v4263 = vpop.f32.mrb[0].mxu0
        %4264 = vmatprep.mubr.f32.mxu0 %v1189
        %4265 = vmatmul.mubr.f32.gmra.mrb[0].mxu0 %v1188
        %v4266 = vpop.f32.mrb[0].mxu0
        %v4267 = vadd.f32 %v3882, %v4266
        %v4268 = vpop.f32.mrb[0].mxu0
        %4269 = vmatprep.mubr.f32.mxu0 %v1199
        %4270 = vmatmul.mubr.f32.gmra.mrb[0].mxu0 %v1198
        %v4271 = vpop.f32.mrb[0].mxu0
        %v4272 = vadd.f32 %v3887, %v4271
        %v4273 = vpop.f32.mrb[0].mxu0
        %4274 = vmatprep.mubr.f32.mxu0 %v1209
        %4275 = vmatmul.mubr.f32.gmra.mrb[0].mxu0 %v1208
        %v4276 = vpop.f32.mrb[0].mxu0
        %v4277 = vadd.f32 %v3892, %v4276
        %v4278 = vpop.f32.mrb[0].mxu0
        %4279 = vmatprep.mubr.f32.mxu0 %v1219
        %4280 = vmatmul.mubr.f32.gmra.mrb[0].mxu0 %v1218
        %v4281 = vpop.f32.mrb[0].mxu0
        %v4282 = vadd.f32 %v3897, %v4281
        %v4283 = vpop.f32.mrb[0].mxu0
        %4284 = vmatprep.mubr.f32.mxu0 %v1229
        %4285 = vmatmul.mubr.f32.gmra.mrb[0].mxu0 %v1228
        %v4286 = vpop.f32.mrb[0].mxu0
        %v4287 = vadd.f32 %v3902, %v4286
        %v4288 = vpop.f32.mrb[0].mxu0
        %4289 = vmatprep.mubr.f32.mxu0 %v1239
        %4290 = vmatmul.mubr.f32.gmra.mrb[0].mxu0 %v1238
        %v4291 = vpop.f32.mrb[0].mxu0
        %v4292 = vadd.f32 %v3907, %v4291
        %v4293 = vpop.f32.mrb[0].mxu0
        %4294 = vmatprep.mubr.f32.mxu0 %v1249
        %4295 = vmatmul.mubr.f32.gmra.mrb[0].mxu0 %v1248
        %v4296 = vpop.f32.mrb[0].mxu0
        %v4297 = vadd.f32 %v3912, %v4296
        %v4298 = vpop.f32.mrb[0].mxu0
        %4299 = vmatprep.mubr.f32.mxu0 %v1259
        %4300 = vmatmul.mubr.f32.gmra.mrb[0].mxu0 %v1258
        %v4301 = vpop.f32.mrb[0].mxu0
        %v4302 = vadd.f32 %v3917, %v4301
        %v4303 = vpop.f32.mrb[0].mxu0
        %4304 = vmatprep.mubr.f32.mxu0 %v1269
        %4305 = vmatmul.mubr.f32.gmra.mrb[0].mxu0 %v1268
        %v4306 = vpop.f32.mrb[0].mxu0
        %v4307 = vadd.f32 %v3922, %v4306
        %v4308 = vpop.f32.mrb[0].mxu0
        %4309 = vmatprep.mubr.f32.mxu0 %v1279
        %4310 = vmatmul.mubr.f32.gmra.mrb[0].mxu0 %v1278
        %v4311 = vpop.f32.mrb[0].mxu0
        %v4312 = vadd.f32 %v3927, %v4311
        %v4313 = vpop.f32.mrb[0].mxu0
        %4314 = vmatprep.mubr.f32.mxu0 %v1289
        %4315 = vmatmul.mubr.f32.gmra.mrb[0].mxu0 %v1288
        %v4316 = vpop.f32.mrb[0].mxu0
        %v4317 = vadd.f32 %v3932, %v4316
        %v4318 = vpop.f32.mrb[0].mxu0
        %4319 = vmatprep.mubr.f32.mxu0 %v1299
        %4320 = vmatmul.mubr.f32.gmra.mrb[0].mxu0 %v1298
        %v4321 = vpop.f32.mrb[0].mxu0
        %v4322 = vadd.f32 %v3937, %v4321
        %v4323 = vpop.f32.mrb[0].mxu0
        %4324 = vmatprep.mubr.f32.mxu0 %v1309
        %4325 = vmatmul.mubr.f32.gmra.mrb[0].mxu0 %v1308
        %v4326 = vpop.f32.mrb[0].mxu0
        %v4327 = vadd.f32 %v3942, %v4326
        %v4328 = vpop.f32.mrb[0].mxu0
        %4329 = vmatprep.mubr.f32.mxu0 %v1319
        %4330 = vmatmul.mubr.f32.gmra.mrb[0].mxu0 %v1318
        %v4331 = vpop.f32.mrb[0].mxu0
        %v4332 = vadd.f32 %v3947, %v4331
        %v4333 = vpop.f32.mrb[0].mxu0
        %4334 = vmatprep.mubr.f32.mxu0 %v1329
        %4335 = vmatmul.mubr.f32.gmra.mrb[0].mxu0 %v1328
        %v4336 = vpop.f32.mrb[0].mxu0
        %v4337 = vadd.f32 %v3952, %v4336
        %v4338 = vpop.f32.mrb[0].mxu0
        %4339 = vmatprep.mubr.f32.mxu0 %v1339
        %4340 = vmatmul.mubr.f32.gmra.mrb[0].mxu0 %v1338
        %v4341 = vpop.f32.mrb[0].mxu0
        %v4342 = vadd.f32 %v3957, %v4341
        %v4343 = vpop.f32.mrb[0].mxu0
        %4344 = vmatprep.mubr.f32.mxu0 %v1349
        %4345 = vmatmul.mubr.f32.gmra.mrb[0].mxu0 %v1348
        %v4346 = vpop.f32.mrb[0].mxu0
        %v4347 = vadd.f32 %v3962, %v4346
        %v4348 = vpop.f32.mrb[0].mxu0
        %4349 = vmatprep.mubr.f32.mxu0 %v1359
        %4350 = vmatmul.mubr.f32.gmra.mrb[0].mxu0 %v1358
        %v4351 = vpop.f32.mrb[0].mxu0
        %v4352 = vadd.f32 %v3967, %v4351
        %v4353 = vpop.f32.mrb[0].mxu0
        %4354 = vmatprep.mubr.f32.mxu0 %v1369
        %4355 = vmatmul.mubr.f32.gmra.mrb[0].mxu0 %v1368
        %v4356 = vpop.f32.mrb[0].mxu0
        %v4357 = vadd.f32 %v3972, %v4356
        %v4358 = vpop.f32.mrb[0].mxu0
        %4359 = vmatprep.mubr.f32.mxu0 %v1379
        %4360 = vmatmul.mubr.f32.gmra.mrb[0].mxu0 %v1378
        %v4361 = vpop.f32.mrb[0].mxu0
        %v4362 = vadd.f32 %v3977, %v4361
        %v4363 = vpop.f32.mrb[0].mxu0
        %4364 = vmatprep.mubr.f32.mxu0 %v1389
        %4365 = vmatmul.mubr.f32.gmra.mrb[0].mxu0 %v1388
        %v4366 = vpop.f32.mrb[0].mxu0
        %v4367 = vadd.f32 %v3982, %v4366
        %v4368 = vpop.f32.mrb[0].mxu0
        %4369 = vmatprep.mubr.f32.mxu0 %v1399
        %4370 = vmatmul.mubr.f32.gmra.mrb[0].mxu0 %v1398
        %v4371 = vpop.f32.mrb[0].mxu0
        %v4372 = vadd.f32 %v3987, %v4371
        %v4373 = vpop.f32.mrb[0].mxu0
        %4374 = vmatprep.mubr.f32.mxu0 %v1409
        %4375 = vmatmul.mubr.f32.gmra.mrb[0].mxu0 %v1408
        %v4376 = vpop.f32.mrb[0].mxu0
        %v4377 = vadd.f32 %v3992, %v4376
        %v4378 = vpop.f32.mrb[0].mxu0
        %4379 = vmatprep.mubr.f32.mxu0 %v1419
        %4380 = vmatmul.mubr.f32.gmra.mrb[0].mxu0 %v1418
        %v4381 = vpop.f32.mrb[0].mxu0
        %v4382 = vadd.f32 %v3997, %v4381
        %v4383 = vpop.f32.mrb[0].mxu0
        %4384 = vmatprep.mubr.f32.mxu0 %v1429
        %4385 = vmatmul.mubr.f32.gmra.mrb[0].mxu0 %v1428
        %v4386 = vpop.f32.mrb[0].mxu0
        %v4387 = vadd.f32 %v4002, %v4386
        %v4388 = vpop.f32.mrb[0].mxu0
        %4389 = vmatprep.mubr.f32.mxu0 %v1439
        %4390 = vmatmul.mubr.f32.gmra.mrb[0].mxu0 %v1438
        %v4391 = vpop.f32.mrb[0].mxu0
        %v4392 = vadd.f32 %v4007, %v4391
        %v4393 = vpop.f32.mrb[0].mxu0
        %4394 = vmatprep.mubr.f32.mxu0 %v1449
        %4395 = vmatmul.mubr.f32.gmra.mrb[0].mxu0 %v1448
        %v4396 = vpop.f32.mrb[0].mxu0
        %v4397 = vadd.f32 %v4012, %v4396
        %v4398 = vpop.f32.mrb[0].mxu0
        %4399 = vmatprep.mubr.f32.mxu0 %v1459
        %4400 = vmatmul.mubr.f32.gmra.mrb[0].mxu0 %v1458
        %v4401 = vpop.f32.mrb[0].mxu0
        %v4402 = vadd.f32 %v4017, %v4401
        %v4403 = vpop.f32.mrb[0].mxu0
        %4404 = vmatprep.mubr.f32.mxu0 %v1469
        %4405 = vmatmul.mubr.f32.gmra.mrb[0].mxu0 %v1468
        %v4406 = vpop.f32.mrb[0].mxu0
        %v4407 = vadd.f32 %v4022, %v4406
        %v4408 = vpop.f32.mrb[0].mxu0
        %4409 = vmatprep.mubr.f32.mxu0 %v1479
        %4410 = vmatmul.mubr.f32.gmra.mrb[0].mxu0 %v1478
        %v4411 = vpop.f32.mrb[0].mxu0
        %v4412 = vadd.f32 %v4027, %v4411
        %v4413 = vpop.f32.mrb[0].mxu0
        %4414 = vmatprep.mubr.f32.mxu0 %v1489
        %4415 = vmatmul.mubr.f32.gmra.mrb[0].mxu0 %v1488
        %v4416 = vpop.f32.mrb[0].mxu0
        %v4417 = vadd.f32 %v4032, %v4416
        %v4418 = vpop.f32.mrb[0].mxu0
        %4419 = vmatprep.mubr.f32.mxu0 %v1499
        %4420 = vmatmul.mubr.f32.gmra.mrb[0].mxu0 %v1498
        %v4421 = vpop.f32.mrb[0].mxu0
        %v4422 = vadd.f32 %v4037, %v4421
        %v4423 = vpop.f32.mrb[0].mxu0
        %4424 = vmatprep.mubr.f32.mxu0 %v1509
        %4425 = vmatmul.mubr.f32.gmra.mrb[0].mxu0 %v1508
        %v4426 = vpop.f32.mrb[0].mxu0
        %v4427 = vadd.f32 %v4042, %v4426
        %v4428 = vpop.f32.mrb[0].mxu0
        %4429 = vmatprep.mubr.f32.mxu0 %v1519
        %4430 = vmatmul.mubr.f32.gmra.mrb[0].mxu0 %v1518
        %v4431 = vpop.f32.mrb[0].mxu0
        %v4432 = vadd.f32 %v4047, %v4431
        %v4433 = vpop.f32.mrb[0].mxu0
        %4434 = vmatprep.mubr.f32.mxu0 %v1529
        %4435 = vmatmul.mubr.f32.gmra.mrb[0].mxu0 %v1528
        %v4436 = vpop.f32.mrb[0].mxu0
        %v4437 = vadd.f32 %v4052, %v4436
        %v4438 = vpop.f32.mrb[0].mxu0
        %4439 = vmatprep.mubr.f32.mxu0 %v1539
        %4440 = vmatmul.mubr.f32.gmra.mrb[0].mxu0 %v1538
        %v4441 = vpop.f32.mrb[0].mxu0
        %v4442 = vadd.f32 %v4057, %v4441
        %v4443 = vpop.f32.mrb[0].mxu0
        %4444 = vmatprep.mubr.f32.mxu0 %v1549
        %4445 = vmatmul.mubr.f32.gmra.mrb[0].mxu0 %v1548
        %v4446 = vpop.f32.mrb[0].mxu0
        %v4447 = vadd.f32 %v4062, %v4446
        %v4448 = vpop.f32.mrb[0].mxu0
        %4449 = vmatprep.mubr.f32.mxu0 %v1559
        %4450 = vmatmul.mubr.f32.gmra.mrb[0].mxu0 %v1558
        %v4451 = vpop.f32.mrb[0].mxu0
        %v4452 = vadd.f32 %v4067, %v4451
        %v4453 = vpop.f32.mrb[0].mxu0
        %4454 = vmatprep.mubr.f32.mxu0 %v1569
        %4455 = vmatmul.mubr.f32.gmra.mrb[0].mxu0 %v1568
        %v4456 = vpop.f32.mrb[0].mxu0
        %v4457 = vadd.f32 %v4072, %v4456
        %v4458 = vpop.f32.mrb[0].mxu0
        %4459 = vmatprep.mubr.f32.mxu0 %v1579
        %4460 = vmatmul.mubr.f32.gmra.mrb[0].mxu0 %v1578
        %v4461 = vpop.f32.mrb[0].mxu0
        %v4462 = vadd.f32 %v4077, %v4461
        %v4463 = vpop.f32.mrb[0].mxu0
        %4464 = vmatprep.mubr.f32.mxu0 %v1589
        %4465 = vmatmul.mubr.f32.gmra.mrb[0].mxu0 %v1588
        %v4466 = vpop.f32.mrb[0].mxu0
        %v4467 = vadd.f32 %v4082, %v4466
        %v4468 = vpop.f32.mrb[0].mxu0
        %4469 = vmatprep.mubr.f32.mxu0 %v1599
        %4470 = vmatmul.mubr.f32.gmra.mrb[0].mxu0 %v1598
        %v4471 = vpop.f32.mrb[0].mxu0
        %v4472 = vadd.f32 %v4087, %v4471
        %v4473 = vpop.f32.mrb[0].mxu0
        %4474 = vmatprep.mubr.f32.mxu0 %v1609
        %4475 = vmatmul.mubr.f32.gmra.mrb[0].mxu0 %v1608
        %v4476 = vpop.f32.mrb[0].mxu0
        %v4477 = vadd.f32 %v4092, %v4476
        %v4478 = vpop.f32.mrb[0].mxu0
        %4479 = vmatprep.mubr.f32.mxu0 %v1619
        %4480 = vmatmul.mubr.f32.gmra.mrb[0].mxu0 %v1618
        %v4481 = vpop.f32.mrb[0].mxu0
        %v4482 = vadd.f32 %v4097, %v4481
        %v4483 = vpop.f32.mrb[0].mxu0
        %4484 = vmatprep.mubr.f32.mxu0 %v1629
        %4485 = vmatmul.mubr.f32.gmra.mrb[0].mxu0 %v1628
        %v4486 = vpop.f32.mrb[0].mxu0
        %v4487 = vadd.f32 %v4102, %v4486
        %v4488 = vpop.f32.mrb[0].mxu0
        %4489 = vmatprep.mubr.f32.mxu0 %v1639
        %4490 = vmatmul.mubr.f32.gmra.mrb[0].mxu0 %v1638
        %v4491 = vpop.f32.mrb[0].mxu0
        %v4492 = vadd.f32 %v4107, %v4491
        %v4493 = vpop.f32.mrb[0].mxu0
        %4494 = vmatprep.mubr.f32.mxu0 %v1649
        %4495 = vmatmul.mubr.f32.gmra.mrb[0].mxu0 %v1648
        %v4496 = vpop.f32.mrb[0].mxu0
        %v4497 = vadd.f32 %v4112, %v4496
        %v4498 = vpop.f32.mrb[0].mxu0
        %4499 = vmatprep.mubr.f32.mxu0 %v1659
        %4500 = vmatmul.mubr.f32.gmra.mrb[0].mxu0 %v1658
        %v4501 = vpop.f32.mrb[0].mxu0
        %v4502 = vadd.f32 %v4117, %v4501
        %v4503 = vpop.f32.mrb[0].mxu0
        %4504 = vmatprep.mubr.f32.mxu0 %v1669
        %4505 = vmatmul.mubr.f32.gmra.mrb[0].mxu0 %v1668
        %v4506 = vpop.f32.mrb[0].mxu0
        %v4507 = vadd.f32 %v4122, %v4506
        %v4508 = vpop.f32.mrb[0].mxu0
        %4509 = vmatprep.mubr.f32.mxu0 %v1679
        %4510 = vmatmul.mubr.f32.gmra.mrb[0].mxu0 %v1678
        %v4511 = vpop.f32.mrb[0].mxu0
        %v4512 = vadd.f32 %v4127, %v4511
        %v4513 = vpop.f32.mrb[0].mxu0
        %4514 = vmatprep.mubr.f32.mxu0 %v1689
        %4515 = vmatmul.mubr.f32.gmra.mrb[0].mxu0 %v1688
        %v4516 = vpop.f32.mrb[0].mxu0
        %v4517 = vadd.f32 %v4132, %v4516
        %v4518 = vpop.f32.mrb[0].mxu0
        %4519 = vmatprep.mubr.f32.mxu0 %v1699
        %4520 = vmatmul.mubr.f32.gmra.mrb[0].mxu0 %v1698
        %v4521 = vpop.f32.mrb[0].mxu0
        %v4522 = vadd.f32 %v4137, %v4521
        %v4523 = vpop.f32.mrb[0].mxu0
        %4524 = vmatprep.mubr.f32.mxu0 %v1709
        %4525 = vmatmul.mubr.f32.gmra.mrb[0].mxu0 %v1708
        %v4526 = vpop.f32.mrb[0].mxu0
        %v4527 = vadd.f32 %v4142, %v4526
        %v4528 = vpop.f32.mrb[0].mxu0
        %4529 = vmatprep.mubr.f32.mxu0 %v1719
        %4530 = vmatmul.mubr.f32.gmra.mrb[0].mxu0 %v1718
        %v4531 = vpop.f32.mrb[0].mxu0
        %v4532 = vadd.f32 %v4147, %v4531
        %v4533 = vpop.f32.mrb[0].mxu0
        %4534 = vdwg.mxu0
        %4535 = vmatprep.subr.mxu0 %v2451
        %4536 = vmatpush1.xpose.msra.mxu0 %v2450
        %4537 = vmatprep.subr.mxu0 0.0
        %4538 = vmatpush1.xpose.msra.mxu0 0.0
        %4539 = vmatprep.subr.mxu0 0.0
        %4540 = vmatpush1.xpose.msra.mxu0 0.0
        %4541 = vmatprep.subr.mxu0 0.0
        %4542 = vmatpush1.xpose.msra.mxu0 0.0
        %4543 = vmatprep.subr.mxu0 0.0
        %4544 = vmatpush1.xpose.msra.mxu0 0.0
        %4545 = vmatprep.subr.mxu0 0.0
        %4546 = vmatpush1.xpose.msra.mxu0 0.0
        %4547 = vmatprep.subr.mxu0 0.0
        %4548 = vmatpush1.xpose.msra.mxu0 0.0
        %4549 = vmatprep.subr.mxu0 0.0
        %4550 = vmatpush1.xpose.msra.mxu0 0.0
        %4551 = vmatprep.subr.mxu0 0.0
        %4552 = vmatpush1.xpose.msra.mxu0 0.0
        %4553 = vmatprep.subr.mxu0 0.0
        %4554 = vmatpush1.xpose.msra.mxu0 0.0
        %4555 = vmatprep.subr.mxu0 0.0
        %4556 = vmatpush1.xpose.msra.mxu0 0.0
        %4557 = vmatprep.subr.mxu0 0.0
        %4558 = vmatpush1.xpose.msra.mxu0 0.0
        %4559 = vmatprep.subr.mxu0 0.0
        %4560 = vmatpush1.xpose.msra.mxu0 0.0
        %4561 = vmatprep.subr.mxu0 0.0
        %4562 = vmatpush1.xpose.msra.mxu0 0.0
        %4563 = vmatprep.subr.mxu0 0.0
        %4564 = vmatpush1.xpose.msra.mxu0 0.0
        %4565 = vmatprep.subr.mxu0 0.0
        %4566 = vmatpush1.xpose.msra.mxu0 0.0
        %4567 = vmatprep.subr.mxu0 0.0
        %4568 = vmatpush1.xpose.msra.mxu0 0.0
        %4569 = vmatprep.subr.mxu0 0.0
        %4570 = vmatpush1.xpose.msra.mxu0 0.0
        %4571 = vmatprep.subr.mxu0 0.0
        %4572 = vmatpush1.xpose.msra.mxu0 0.0
        %4573 = vmatprep.subr.mxu0 0.0
        %4574 = vmatpush1.xpose.msra.mxu0 0.0
        %4575 = vmatprep.subr.mxu0 0.0
        %4576 = vmatpush1.xpose.msra.mxu0 0.0
        %4577 = vmatprep.subr.mxu0 0.0
        %4578 = vmatpush1.xpose.msra.mxu0 0.0
        %4579 = vmatprep.subr.mxu0 0.0
        %4580 = vmatpush1.xpose.msra.mxu0 0.0
        %4581 = vmatprep.subr.mxu0 0.0
        %4582 = vmatpush1.xpose.msra.mxu0 0.0
        %4583 = vmatprep.subr.mxu0 0.0
        %4584 = vmatpush1.xpose.msra.mxu0 0.0
        %4585 = vmatprep.subr.mxu0 0.0
        %4586 = vmatpush1.xpose.msra.mxu0 0.0
        %4587 = vmatprep.subr.mxu0 0.0
        %4588 = vmatpush1.xpose.msra.mxu0 0.0
        %4589 = vmatprep.subr.mxu0 0.0
        %4590 = vmatpush1.xpose.msra.mxu0 0.0
        %4591 = vmatprep.subr.mxu0 0.0
        %4592 = vmatpush1.xpose.msra.mxu0 0.0
        %4593 = vmatprep.subr.mxu0 0.0
        %4594 = vmatpush1.xpose.msra.mxu0 0.0
        %4595 = vmatprep.subr.mxu0 0.0
        %4596 = vmatpush1.xpose.msra.mxu0 0.0
        %4597 = vmatprep.subr.mxu0 0.0
        %4598 = vmatpush1.xpose.msra.mxu0 0.0
        %4599 = vmatprep.mubr.f32.mxu0 %v1091
        %4600 = vmatmul.mubr.f32.gmra.mrb[0].mxu0 %v1090
        %v4601 = vpop.f32.mrb[0].mxu0
        %v4602 = vadd.f32 %v4217, %v4601
        %v4603 = vpop.f32.mrb[0].mxu0
        %4604 = vmatprep.mubr.f32.mxu0 %v1101
        %4605 = vmatmul.mubr.f32.gmra.mrb[0].mxu0 %v1100
        %v4606 = vpop.f32.mrb[0].mxu0
        %v4607 = vadd.f32 %v4222, %v4606
        %v4608 = vpop.f32.mrb[0].mxu0
        %4609 = vmatprep.mubr.f32.mxu0 %v1111
        %4610 = vmatmul.mubr.f32.gmra.mrb[0].mxu0 %v1110
        %v4611 = vpop.f32.mrb[0].mxu0
        %v4612 = vadd.f32 %v4227, %v4611
        %v4613 = vpop.f32.mrb[0].mxu0
        %4614 = vmatprep.mubr.f32.mxu0 %v1121
        %4615 = vmatmul.mubr.f32.gmra.mrb[0].mxu0 %v1120
        %v4616 = vpop.f32.mrb[0].mxu0
        %v4617 = vadd.f32 %v4232, %v4616
        %v4618 = vpop.f32.mrb[0].mxu0
        %4619 = vmatprep.mubr.f32.mxu0 %v1131
        %4620 = vmatmul.mubr.f32.gmra.mrb[0].mxu0 %v1130
        %v4621 = vpop.f32.mrb[0].mxu0
        %v4622 = vadd.f32 %v4237, %v4621
        %v4623 = vpop.f32.mrb[0].mxu0
        %4624 = vmatprep.mubr.f32.mxu0 %v1141
        %4625 = vmatmul.mubr.f32.gmra.mrb[0].mxu0 %v1140
        %v4626 = vpop.f32.mrb[0].mxu0
        %v4627 = vadd.f32 %v4242, %v4626
        %v4628 = vpop.f32.mrb[0].mxu0
        %4629 = vmatprep.mubr.f32.mxu0 %v1151
        %4630 = vmatmul.mubr.f32.gmra.mrb[0].mxu0 %v1150
        %v4631 = vpop.f32.mrb[0].mxu0
        %v4632 = vadd.f32 %v4247, %v4631
        %v4633 = vpop.f32.mrb[0].mxu0
        %4634 = vmatprep.mubr.f32.mxu0 %v1161
        %4635 = vmatmul.mubr.f32.gmra.mrb[0].mxu0 %v1160
        %v4636 = vpop.f32.mrb[0].mxu0
        %v4637 = vadd.f32 %v4252, %v4636
        %v4638 = vpop.f32.mrb[0].mxu0
        %4639 = vmatprep.mubr.f32.mxu0 %v1171
        %4640 = vmatmul.mubr.f32.gmra.mrb[0].mxu0 %v1170
        %v4641 = vpop.f32.mrb[0].mxu0
        %v4642 = vadd.f32 %v4257, %v4641
        %v4643 = vpop.f32.mrb[0].mxu0
        %4644 = vmatprep.mubr.f32.mxu0 %v1181
        %4645 = vmatmul.mubr.f32.gmra.mrb[0].mxu0 %v1180
        %v4646 = vpop.f32.mrb[0].mxu0
        %v4647 = vadd.f32 %v4262, %v4646
        %v4648 = vpop.f32.mrb[0].mxu0
        %4649 = vmatprep.mubr.f32.mxu0 %v1191
        %4650 = vmatmul.mubr.f32.gmra.mrb[0].mxu0 %v1190
        %v4651 = vpop.f32.mrb[0].mxu0
        %v4652 = vadd.f32 %v4267, %v4651
        %v4653 = vpop.f32.mrb[0].mxu0
        %4654 = vmatprep.mubr.f32.mxu0 %v1201
        %4655 = vmatmul.mubr.f32.gmra.mrb[0].mxu0 %v1200
        %v4656 = vpop.f32.mrb[0].mxu0
        %v4657 = vadd.f32 %v4272, %v4656
        %v4658 = vpop.f32.mrb[0].mxu0
        %4659 = vmatprep.mubr.f32.mxu0 %v1211
        %4660 = vmatmul.mubr.f32.gmra.mrb[0].mxu0 %v1210
        %v4661 = vpop.f32.mrb[0].mxu0
        %v4662 = vadd.f32 %v4277, %v4661
        %v4663 = vpop.f32.mrb[0].mxu0
        %4664 = vmatprep.mubr.f32.mxu0 %v1221
        %4665 = vmatmul.mubr.f32.gmra.mrb[0].mxu0 %v1220
        %v4666 = vpop.f32.mrb[0].mxu0
        %v4667 = vadd.f32 %v4282, %v4666
        %v4668 = vpop.f32.mrb[0].mxu0
        %4669 = vmatprep.mubr.f32.mxu0 %v1231
        %4670 = vmatmul.mubr.f32.gmra.mrb[0].mxu0 %v1230
        %v4671 = vpop.f32.mrb[0].mxu0
        %v4672 = vadd.f32 %v4287, %v4671
        %v4673 = vpop.f32.mrb[0].mxu0
        %4674 = vmatprep.mubr.f32.mxu0 %v1241
        %4675 = vmatmul.mubr.f32.gmra.mrb[0].mxu0 %v1240
        %v4676 = vpop.f32.mrb[0].mxu0
        %v4677 = vadd.f32 %v4292, %v4676
        %v4678 = vpop.f32.mrb[0].mxu0
        %4679 = vmatprep.mubr.f32.mxu0 %v1251
        %4680 = vmatmul.mubr.f32.gmra.mrb[0].mxu0 %v1250
        %v4681 = vpop.f32.mrb[0].mxu0
        %v4682 = vadd.f32 %v4297, %v4681
        %v4683 = vpop.f32.mrb[0].mxu0
        %4684 = vmatprep.mubr.f32.mxu0 %v1261
        %4685 = vmatmul.mubr.f32.gmra.mrb[0].mxu0 %v1260
        %v4686 = vpop.f32.mrb[0].mxu0
        %v4687 = vadd.f32 %v4302, %v4686
        %v4688 = vpop.f32.mrb[0].mxu0
        %4689 = vmatprep.mubr.f32.mxu0 %v1271
        %4690 = vmatmul.mubr.f32.gmra.mrb[0].mxu0 %v1270
        %v4691 = vpop.f32.mrb[0].mxu0
        %v4692 = vadd.f32 %v4307, %v4691
        %v4693 = vpop.f32.mrb[0].mxu0
        %4694 = vmatprep.mubr.f32.mxu0 %v1281
        %4695 = vmatmul.mubr.f32.gmra.mrb[0].mxu0 %v1280
        %v4696 = vpop.f32.mrb[0].mxu0
        %v4697 = vadd.f32 %v4312, %v4696
        %v4698 = vpop.f32.mrb[0].mxu0
        %4699 = vmatprep.mubr.f32.mxu0 %v1291
        %4700 = vmatmul.mubr.f32.gmra.mrb[0].mxu0 %v1290
        %v4701 = vpop.f32.mrb[0].mxu0
        %v4702 = vadd.f32 %v4317, %v4701
        %v4703 = vpop.f32.mrb[0].mxu0
        %4704 = vmatprep.mubr.f32.mxu0 %v1301
        %4705 = vmatmul.mubr.f32.gmra.mrb[0].mxu0 %v1300
        %v4706 = vpop.f32.mrb[0].mxu0
        %v4707 = vadd.f32 %v4322, %v4706
        %v4708 = vpop.f32.mrb[0].mxu0
        %4709 = vmatprep.mubr.f32.mxu0 %v1311
        %4710 = vmatmul.mubr.f32.gmra.mrb[0].mxu0 %v1310
        %v4711 = vpop.f32.mrb[0].mxu0
        %v4712 = vadd.f32 %v4327, %v4711
        %v4713 = vpop.f32.mrb[0].mxu0
        %4714 = vmatprep.mubr.f32.mxu0 %v1321
        %4715 = vmatmul.mubr.f32.gmra.mrb[0].mxu0 %v1320
        %v4716 = vpop.f32.mrb[0].mxu0
        %v4717 = vadd.f32 %v4332, %v4716
        %v4718 = vpop.f32.mrb[0].mxu0
        %4719 = vmatprep.mubr.f32.mxu0 %v1331
        %4720 = vmatmul.mubr.f32.gmra.mrb[0].mxu0 %v1330
        %v4721 = vpop.f32.mrb[0].mxu0
        %v4722 = vadd.f32 %v4337, %v4721
        %v4723 = vpop.f32.mrb[0].mxu0
        %4724 = vmatprep.mubr.f32.mxu0 %v1341
        %4725 = vmatmul.mubr.f32.gmra.mrb[0].mxu0 %v1340
        %v4726 = vpop.f32.mrb[0].mxu0
        %v4727 = vadd.f32 %v4342, %v4726
        %v4728 = vpop.f32.mrb[0].mxu0
        %4729 = vmatprep.mubr.f32.mxu0 %v1351
        %4730 = vmatmul.mubr.f32.gmra.mrb[0].mxu0 %v1350
        %v4731 = vpop.f32.mrb[0].mxu0
        %v4732 = vadd.f32 %v4347, %v4731
        %v4733 = vpop.f32.mrb[0].mxu0
        %4734 = vmatprep.mubr.f32.mxu0 %v1361
        %4735 = vmatmul.mubr.f32.gmra.mrb[0].mxu0 %v1360
        %v4736 = vpop.f32.mrb[0].mxu0
        %v4737 = vadd.f32 %v4352, %v4736
        %v4738 = vpop.f32.mrb[0].mxu0
        %4739 = vmatprep.mubr.f32.mxu0 %v1371
        %4740 = vmatmul.mubr.f32.gmra.mrb[0].mxu0 %v1370
        %v4741 = vpop.f32.mrb[0].mxu0
        %v4742 = vadd.f32 %v4357, %v4741
        %v4743 = vpop.f32.mrb[0].mxu0
        %4744 = vmatprep.mubr.f32.mxu0 %v1381
        %4745 = vmatmul.mubr.f32.gmra.mrb[0].mxu0 %v1380
        %v4746 = vpop.f32.mrb[0].mxu0
        %v4747 = vadd.f32 %v4362, %v4746
        %v4748 = vpop.f32.mrb[0].mxu0
        %4749 = vmatprep.mubr.f32.mxu0 %v1391
        %4750 = vmatmul.mubr.f32.gmra.mrb[0].mxu0 %v1390
        %v4751 = vpop.f32.mrb[0].mxu0
        %v4752 = vadd.f32 %v4367, %v4751
        %v4753 = vpop.f32.mrb[0].mxu0
        %4754 = vmatprep.mubr.f32.mxu0 %v1401
        %4755 = vmatmul.mubr.f32.gmra.mrb[0].mxu0 %v1400
        %v4756 = vpop.f32.mrb[0].mxu0
        %v4757 = vadd.f32 %v4372, %v4756
        %v4758 = vpop.f32.mrb[0].mxu0
        %4759 = vmatprep.mubr.f32.mxu0 %v1411
        %4760 = vmatmul.mubr.f32.gmra.mrb[0].mxu0 %v1410
        %v4761 = vpop.f32.mrb[0].mxu0
        %v4762 = vadd.f32 %v4377, %v4761
        %v4763 = vpop.f32.mrb[0].mxu0
        %4764 = vmatprep.mubr.f32.mxu0 %v1421
        %4765 = vmatmul.mubr.f32.gmra.mrb[0].mxu0 %v1420
        %v4766 = vpop.f32.mrb[0].mxu0
        %v4767 = vadd.f32 %v4382, %v4766
        %v4768 = vpop.f32.mrb[0].mxu0
        %4769 = vmatprep.mubr.f32.mxu0 %v1431
        %4770 = vmatmul.mubr.f32.gmra.mrb[0].mxu0 %v1430
        %v4771 = vpop.f32.mrb[0].mxu0
        %v4772 = vadd.f32 %v4387, %v4771
        %v4773 = vpop.f32.mrb[0].mxu0
        %4774 = vmatprep.mubr.f32.mxu0 %v1441
        %4775 = vmatmul.mubr.f32.gmra.mrb[0].mxu0 %v1440
        %v4776 = vpop.f32.mrb[0].mxu0
        %v4777 = vadd.f32 %v4392, %v4776
        %v4778 = vpop.f32.mrb[0].mxu0
        %4779 = vmatprep.mubr.f32.mxu0 %v1451
        %4780 = vmatmul.mubr.f32.gmra.mrb[0].mxu0 %v1450
        %v4781 = vpop.f32.mrb[0].mxu0
        %v4782 = vadd.f32 %v4397, %v4781
        %v4783 = vpop.f32.mrb[0].mxu0
        %4784 = vmatprep.mubr.f32.mxu0 %v1461
        %4785 = vmatmul.mubr.f32.gmra.mrb[0].mxu0 %v1460
        %v4786 = vpop.f32.mrb[0].mxu0
        %v4787 = vadd.f32 %v4402, %v4786
        %v4788 = vpop.f32.mrb[0].mxu0
        %4789 = vmatprep.mubr.f32.mxu0 %v1471
        %4790 = vmatmul.mubr.f32.gmra.mrb[0].mxu0 %v1470
        %v4791 = vpop.f32.mrb[0].mxu0
        %v4792 = vadd.f32 %v4407, %v4791
        %v4793 = vpop.f32.mrb[0].mxu0
        %4794 = vmatprep.mubr.f32.mxu0 %v1481
        %4795 = vmatmul.mubr.f32.gmra.mrb[0].mxu0 %v1480
        %v4796 = vpop.f32.mrb[0].mxu0
        %v4797 = vadd.f32 %v4412, %v4796
        %v4798 = vpop.f32.mrb[0].mxu0
        %4799 = vmatprep.mubr.f32.mxu0 %v1491
        %4800 = vmatmul.mubr.f32.gmra.mrb[0].mxu0 %v1490
        %v4801 = vpop.f32.mrb[0].mxu0
        %v4802 = vadd.f32 %v4417, %v4801
        %v4803 = vpop.f32.mrb[0].mxu0
        %4804 = vmatprep.mubr.f32.mxu0 %v1501
        %4805 = vmatmul.mubr.f32.gmra.mrb[0].mxu0 %v1500
        %v4806 = vpop.f32.mrb[0].mxu0
        %v4807 = vadd.f32 %v4422, %v4806
        %v4808 = vpop.f32.mrb[0].mxu0
        %4809 = vmatprep.mubr.f32.mxu0 %v1511
        %4810 = vmatmul.mubr.f32.gmra.mrb[0].mxu0 %v1510
        %v4811 = vpop.f32.mrb[0].mxu0
        %v4812 = vadd.f32 %v4427, %v4811
        %v4813 = vpop.f32.mrb[0].mxu0
        %4814 = vmatprep.mubr.f32.mxu0 %v1521
        %4815 = vmatmul.mubr.f32.gmra.mrb[0].mxu0 %v1520
        %v4816 = vpop.f32.mrb[0].mxu0
        %v4817 = vadd.f32 %v4432, %v4816
        %v4818 = vpop.f32.mrb[0].mxu0
        %4819 = vmatprep.mubr.f32.mxu0 %v1531
        %4820 = vmatmul.mubr.f32.gmra.mrb[0].mxu0 %v1530
        %v4821 = vpop.f32.mrb[0].mxu0
        %v4822 = vadd.f32 %v4437, %v4821
        %v4823 = vpop.f32.mrb[0].mxu0
        %4824 = vmatprep.mubr.f32.mxu0 %v1541
        %4825 = vmatmul.mubr.f32.gmra.mrb[0].mxu0 %v1540
        %v4826 = vpop.f32.mrb[0].mxu0
        %v4827 = vadd.f32 %v4442, %v4826
        %v4828 = vpop.f32.mrb[0].mxu0
        %4829 = vmatprep.mubr.f32.mxu0 %v1551
        %4830 = vmatmul.mubr.f32.gmra.mrb[0].mxu0 %v1550
        %v4831 = vpop.f32.mrb[0].mxu0
        %v4832 = vadd.f32 %v4447, %v4831
        %v4833 = vpop.f32.mrb[0].mxu0
        %4834 = vmatprep.mubr.f32.mxu0 %v1561
        %4835 = vmatmul.mubr.f32.gmra.mrb[0].mxu0 %v1560
        %v4836 = vpop.f32.mrb[0].mxu0
        %v4837 = vadd.f32 %v4452, %v4836
        %v4838 = vpop.f32.mrb[0].mxu0
        %4839 = vmatprep.mubr.f32.mxu0 %v1571
        %4840 = vmatmul.mubr.f32.gmra.mrb[0].mxu0 %v1570
        %v4841 = vpop.f32.mrb[0].mxu0
        %v4842 = vadd.f32 %v4457, %v4841
        %v4843 = vpop.f32.mrb[0].mxu0
        %4844 = vmatprep.mubr.f32.mxu0 %v1581
        %4845 = vmatmul.mubr.f32.gmra.mrb[0].mxu0 %v1580
        %v4846 = vpop.f32.mrb[0].mxu0
        %v4847 = vadd.f32 %v4462, %v4846
        %v4848 = vpop.f32.mrb[0].mxu0
        %4849 = vmatprep.mubr.f32.mxu0 %v1591
        %4850 = vmatmul.mubr.f32.gmra.mrb[0].mxu0 %v1590
        %v4851 = vpop.f32.mrb[0].mxu0
        %v4852 = vadd.f32 %v4467, %v4851
        %v4853 = vpop.f32.mrb[0].mxu0
        %4854 = vmatprep.mubr.f32.mxu0 %v1601
        %4855 = vmatmul.mubr.f32.gmra.mrb[0].mxu0 %v1600
        %v4856 = vpop.f32.mrb[0].mxu0
        %v4857 = vadd.f32 %v4472, %v4856
        %v4858 = vpop.f32.mrb[0].mxu0
        %4859 = vmatprep.mubr.f32.mxu0 %v1611
        %4860 = vmatmul.mubr.f32.gmra.mrb[0].mxu0 %v1610
        %v4861 = vpop.f32.mrb[0].mxu0
        %v4862 = vadd.f32 %v4477, %v4861
        %v4863 = vpop.f32.mrb[0].mxu0
        %4864 = vmatprep.mubr.f32.mxu0 %v1621
        %4865 = vmatmul.mubr.f32.gmra.mrb[0].mxu0 %v1620
        %v4866 = vpop.f32.mrb[0].mxu0
        %v4867 = vadd.f32 %v4482, %v4866
        %v4868 = vpop.f32.mrb[0].mxu0
        %4869 = vmatprep.mubr.f32.mxu0 %v1631
        %4870 = vmatmul.mubr.f32.gmra.mrb[0].mxu0 %v1630
        %v4871 = vpop.f32.mrb[0].mxu0
        %v4872 = vadd.f32 %v4487, %v4871
        %v4873 = vpop.f32.mrb[0].mxu0
        %4874 = vmatprep.mubr.f32.mxu0 %v1641
        %4875 = vmatmul.mubr.f32.gmra.mrb[0].mxu0 %v1640
        %v4876 = vpop.f32.mrb[0].mxu0
        %v4877 = vadd.f32 %v4492, %v4876
        %v4878 = vpop.f32.mrb[0].mxu0
        %4879 = vmatprep.mubr.f32.mxu0 %v1651
        %4880 = vmatmul.mubr.f32.gmra.mrb[0].mxu0 %v1650
        %v4881 = vpop.f32.mrb[0].mxu0
        %v4882 = vadd.f32 %v4497, %v4881
        %v4883 = vpop.f32.mrb[0].mxu0
        %4884 = vmatprep.mubr.f32.mxu0 %v1661
        %4885 = vmatmul.mubr.f32.gmra.mrb[0].mxu0 %v1660
        %v4886 = vpop.f32.mrb[0].mxu0
        %v4887 = vadd.f32 %v4502, %v4886
        %v4888 = vpop.f32.mrb[0].mxu0
        %4889 = vmatprep.mubr.f32.mxu0 %v1671
        %4890 = vmatmul.mubr.f32.gmra.mrb[0].mxu0 %v1670
        %v4891 = vpop.f32.mrb[0].mxu0
        %v4892 = vadd.f32 %v4507, %v4891
        %v4893 = vpop.f32.mrb[0].mxu0
        %4894 = vmatprep.mubr.f32.mxu0 %v1681
        %4895 = vmatmul.mubr.f32.gmra.mrb[0].mxu0 %v1680
        %v4896 = vpop.f32.mrb[0].mxu0
        %v4897 = vadd.f32 %v4512, %v4896
        %v4898 = vpop.f32.mrb[0].mxu0
        %4899 = vmatprep.mubr.f32.mxu0 %v1691
        %4900 = vmatmul.mubr.f32.gmra.mrb[0].mxu0 %v1690
        %v4901 = vpop.f32.mrb[0].mxu0
        %v4902 = vadd.f32 %v4517, %v4901
        %v4903 = vpop.f32.mrb[0].mxu0
        %4904 = vmatprep.mubr.f32.mxu0 %v1701
        %4905 = vmatmul.mubr.f32.gmra.mrb[0].mxu0 %v1700
        %v4906 = vpop.f32.mrb[0].mxu0
        %v4907 = vadd.f32 %v4522, %v4906
        %v4908 = vpop.f32.mrb[0].mxu0
        %4909 = vmatprep.mubr.f32.mxu0 %v1711
        %4910 = vmatmul.mubr.f32.gmra.mrb[0].mxu0 %v1710
        %v4911 = vpop.f32.mrb[0].mxu0
        %v4912 = vadd.f32 %v4527, %v4911
        %v4913 = vpop.f32.mrb[0].mxu0
        %4914 = vmatprep.mubr.f32.mxu0 %v1721
        %4915 = vmatmul.mubr.f32.gmra.mrb[0].mxu0 %v1720
        %v4916 = vpop.f32.mrb[0].mxu0
        %v4917 = vadd.f32 %v4532, %v4916
        %v4918 = vpop.f32.mrb[0].mxu0
        %4919 = vdwg.mxu0
        %4920 = vmatprep.subr.mxu0 %v3378
        %4921 = vmatpush1.xpose.msra.mxu0 %v2452
        %4922 = vmatprep.subr.mxu0 0.0
        %4923 = vmatpush1.xpose.msra.mxu0 0.0
        %4924 = vmatprep.subr.mxu0 0.0
        %4925 = vmatpush1.xpose.msra.mxu0 0.0
        %4926 = vmatprep.subr.mxu0 0.0
        %4927 = vmatpush1.xpose.msra.mxu0 0.0
        %4928 = vmatprep.subr.mxu0 0.0
        %4929 = vmatpush1.xpose.msra.mxu0 0.0
        %4930 = vmatprep.subr.mxu0 0.0
        %4931 = vmatpush1.xpose.msra.mxu0 0.0
        %4932 = vmatprep.subr.mxu0 0.0
        %4933 = vmatpush1.xpose.msra.mxu0 0.0
        %4934 = vmatprep.subr.mxu0 0.0
        %4935 = vmatpush1.xpose.msra.mxu0 0.0
        %4936 = vmatprep.subr.mxu0 0.0
        %4937 = vmatpush1.xpose.msra.mxu0 0.0
        %4938 = vmatprep.subr.mxu0 0.0
        %4939 = vmatpush1.xpose.msra.mxu0 0.0
        %4940 = vmatprep.subr.mxu0 0.0
        %4941 = vmatpush1.xpose.msra.mxu0 0.0
        %4942 = vmatprep.subr.mxu0 0.0
        %4943 = vmatpush1.xpose.msra.mxu0 0.0
        %4944 = vmatprep.subr.mxu0 0.0
        %4945 = vmatpush1.xpose.msra.mxu0 0.0
        %4946 = vmatprep.subr.mxu0 0.0
        %4947 = vmatpush1.xpose.msra.mxu0 0.0
        %4948 = vmatprep.subr.mxu0 0.0
        %4949 = vmatpush1.xpose.msra.mxu0 0.0
        %4950 = vmatprep.subr.mxu0 0.0
        %4951 = vmatpush1.xpose.msra.mxu0 0.0
        %4952 = vmatprep.subr.mxu0 0.0
        %4953 = vmatpush1.xpose.msra.mxu0 0.0
        %4954 = vmatprep.subr.mxu0 0.0
        %4955 = vmatpush1.xpose.msra.mxu0 0.0
        %4956 = vmatprep.subr.mxu0 0.0
        %4957 = vmatpush1.xpose.msra.mxu0 0.0
        %4958 = vmatprep.subr.mxu0 0.0
        %4959 = vmatpush1.xpose.msra.mxu0 0.0
        %4960 = vmatprep.subr.mxu0 0.0
        %4961 = vmatpush1.xpose.msra.mxu0 0.0
        %4962 = vmatprep.subr.mxu0 0.0
        %4963 = vmatpush1.xpose.msra.mxu0 0.0
        %4964 = vmatprep.subr.mxu0 0.0
        %4965 = vmatpush1.xpose.msra.mxu0 0.0
        %4966 = vmatprep.subr.mxu0 0.0
        %4967 = vmatpush1.xpose.msra.mxu0 0.0
        %4968 = vmatprep.subr.mxu0 0.0
        %4969 = vmatpush1.xpose.msra.mxu0 0.0
        %4970 = vmatprep.subr.mxu0 0.0
        %4971 = vmatpush1.xpose.msra.mxu0 0.0
        %4972 = vmatprep.subr.mxu0 0.0
        %4973 = vmatpush1.xpose.msra.mxu0 0.0
        %4974 = vmatprep.subr.mxu0 0.0
        %4975 = vmatpush1.xpose.msra.mxu0 0.0
        %4976 = vmatprep.subr.mxu0 0.0
        %4977 = vmatpush1.xpose.msra.mxu0 0.0
        %4978 = vmatprep.subr.mxu0 0.0
        %4979 = vmatpush1.xpose.msra.mxu0 0.0
        %4980 = vmatprep.subr.mxu0 0.0
        %4981 = vmatpush1.xpose.msra.mxu0 0.0
        %4982 = vmatprep.subr.mxu0 0.0
        %4983 = vmatpush1.xpose.msra.mxu0 0.0
        %4984 = vmatprep.mubr.f32.mxu0 %v3186
        %4985 = vmatmul.mubr.f32.gmra.mrb[0].mxu0 %v1092
        %v4986 = vpop.f32.mrb[0].mxu0
        %v4987 = vadd.f32 %v4602, %v4986
        %v4988 = vpop.f32.mrb[0].mxu0
        %4989 = vmatprep.mubr.f32.mxu0 %v3189
        %4990 = vmatmul.mubr.f32.gmra.mrb[0].mxu0 %v1102
        %v4991 = vpop.f32.mrb[0].mxu0
        %v4992 = vadd.f32 %v4607, %v4991
        %v4993 = vpop.f32.mrb[0].mxu0
        %4994 = vmatprep.mubr.f32.mxu0 %v3192
        %4995 = vmatmul.mubr.f32.gmra.mrb[0].mxu0 %v1112
        %v4996 = vpop.f32.mrb[0].mxu0
        %v4997 = vadd.f32 %v4612, %v4996
        %v4998 = vpop.f32.mrb[0].mxu0
        %4999 = vmatprep.mubr.f32.mxu0 %v3195
        %5000 = vmatmul.mubr.f32.gmra.mrb[0].mxu0 %v1122
        %v5001 = vpop.f32.mrb[0].mxu0
        %v5002 = vadd.f32 %v4617, %v5001
        %v5003 = vpop.f32.mrb[0].mxu0
        %5004 = vmatprep.mubr.f32.mxu0 %v3198
        %5005 = vmatmul.mubr.f32.gmra.mrb[0].mxu0 %v1132
        %v5006 = vpop.f32.mrb[0].mxu0
        %v5007 = vadd.f32 %v4622, %v5006
        %v5008 = vpop.f32.mrb[0].mxu0
        %5009 = vmatprep.mubr.f32.mxu0 %v3201
        %5010 = vmatmul.mubr.f32.gmra.mrb[0].mxu0 %v1142
        %v5011 = vpop.f32.mrb[0].mxu0
        %v5012 = vadd.f32 %v4627, %v5011
        %v5013 = vpop.f32.mrb[0].mxu0
        %5014 = vmatprep.mubr.f32.mxu0 %v3204
        %5015 = vmatmul.mubr.f32.gmra.mrb[0].mxu0 %v1152
        %v5016 = vpop.f32.mrb[0].mxu0
        %v5017 = vadd.f32 %v4632, %v5016
        %v5018 = vpop.f32.mrb[0].mxu0
        %5019 = vmatprep.mubr.f32.mxu0 %v3207
        %5020 = vmatmul.mubr.f32.gmra.mrb[0].mxu0 %v1162
        %v5021 = vpop.f32.mrb[0].mxu0
        %v5022 = vadd.f32 %v4637, %v5021
        %v5023 = vpop.f32.mrb[0].mxu0
        %5024 = vmatprep.mubr.f32.mxu0 %v3210
        %5025 = vmatmul.mubr.f32.gmra.mrb[0].mxu0 %v1172
        %v5026 = vpop.f32.mrb[0].mxu0
        %v5027 = vadd.f32 %v4642, %v5026
        %v5028 = vpop.f32.mrb[0].mxu0
        %5029 = vmatprep.mubr.f32.mxu0 %v3213
        %5030 = vmatmul.mubr.f32.gmra.mrb[0].mxu0 %v1182
        %v5031 = vpop.f32.mrb[0].mxu0
        %v5032 = vadd.f32 %v4647, %v5031
        %v5033 = vpop.f32.mrb[0].mxu0
        %5034 = vmatprep.mubr.f32.mxu0 %v3216
        %5035 = vmatmul.mubr.f32.gmra.mrb[0].mxu0 %v1192
        %v5036 = vpop.f32.mrb[0].mxu0
        %v5037 = vadd.f32 %v4652, %v5036
        %v5038 = vpop.f32.mrb[0].mxu0
        %5039 = vmatprep.mubr.f32.mxu0 %v3219
        %5040 = vmatmul.mubr.f32.gmra.mrb[0].mxu0 %v1202
        %v5041 = vpop.f32.mrb[0].mxu0
        %v5042 = vadd.f32 %v4657, %v5041
        %v5043 = vpop.f32.mrb[0].mxu0
        %5044 = vmatprep.mubr.f32.mxu0 %v3222
        %5045 = vmatmul.mubr.f32.gmra.mrb[0].mxu0 %v1212
        %v5046 = vpop.f32.mrb[0].mxu0
        %v5047 = vadd.f32 %v4662, %v5046
        %v5048 = vpop.f32.mrb[0].mxu0
        %5049 = vmatprep.mubr.f32.mxu0 %v3225
        %5050 = vmatmul.mubr.f32.gmra.mrb[0].mxu0 %v1222
        %v5051 = vpop.f32.mrb[0].mxu0
        %v5052 = vadd.f32 %v4667, %v5051
        %v5053 = vpop.f32.mrb[0].mxu0
        %5054 = vmatprep.mubr.f32.mxu0 %v3228
        %5055 = vmatmul.mubr.f32.gmra.mrb[0].mxu0 %v1232
        %v5056 = vpop.f32.mrb[0].mxu0
        %v5057 = vadd.f32 %v4672, %v5056
        %v5058 = vpop.f32.mrb[0].mxu0
        %5059 = vmatprep.mubr.f32.mxu0 %v3231
        %5060 = vmatmul.mubr.f32.gmra.mrb[0].mxu0 %v1242
        %v5061 = vpop.f32.mrb[0].mxu0
        %v5062 = vadd.f32 %v4677, %v5061
        %v5063 = vpop.f32.mrb[0].mxu0
        %5064 = vmatprep.mubr.f32.mxu0 %v3234
        %5065 = vmatmul.mubr.f32.gmra.mrb[0].mxu0 %v1252
        %v5066 = vpop.f32.mrb[0].mxu0
        %v5067 = vadd.f32 %v4682, %v5066
        %v5068 = vpop.f32.mrb[0].mxu0
        %5069 = vmatprep.mubr.f32.mxu0 %v3237
        %5070 = vmatmul.mubr.f32.gmra.mrb[0].mxu0 %v1262
        %v5071 = vpop.f32.mrb[0].mxu0
        %v5072 = vadd.f32 %v4687, %v5071
        %v5073 = vpop.f32.mrb[0].mxu0
        %5074 = vmatprep.mubr.f32.mxu0 %v3240
        %5075 = vmatmul.mubr.f32.gmra.mrb[0].mxu0 %v1272
        %v5076 = vpop.f32.mrb[0].mxu0
        %v5077 = vadd.f32 %v4692, %v5076
        %v5078 = vpop.f32.mrb[0].mxu0
        %5079 = vmatprep.mubr.f32.mxu0 %v3243
        %5080 = vmatmul.mubr.f32.gmra.mrb[0].mxu0 %v1282
        %v5081 = vpop.f32.mrb[0].mxu0
        %v5082 = vadd.f32 %v4697, %v5081
        %v5083 = vpop.f32.mrb[0].mxu0
        %5084 = vmatprep.mubr.f32.mxu0 %v3246
        %5085 = vmatmul.mubr.f32.gmra.mrb[0].mxu0 %v1292
        %v5086 = vpop.f32.mrb[0].mxu0
        %v5087 = vadd.f32 %v4702, %v5086
        %v5088 = vpop.f32.mrb[0].mxu0
        %5089 = vmatprep.mubr.f32.mxu0 %v3249
        %5090 = vmatmul.mubr.f32.gmra.mrb[0].mxu0 %v1302
        %v5091 = vpop.f32.mrb[0].mxu0
        %v5092 = vadd.f32 %v4707, %v5091
        %v5093 = vpop.f32.mrb[0].mxu0
        %5094 = vmatprep.mubr.f32.mxu0 %v3252
        %5095 = vmatmul.mubr.f32.gmra.mrb[0].mxu0 %v1312
        %v5096 = vpop.f32.mrb[0].mxu0
        %v5097 = vadd.f32 %v4712, %v5096
        %v5098 = vpop.f32.mrb[0].mxu0
        %5099 = vmatprep.mubr.f32.mxu0 %v3255
        %5100 = vmatmul.mubr.f32.gmra.mrb[0].mxu0 %v1322
        %v5101 = vpop.f32.mrb[0].mxu0
        %v5102 = vadd.f32 %v4717, %v5101
        %v5103 = vpop.f32.mrb[0].mxu0
        %5104 = vmatprep.mubr.f32.mxu0 %v3258
        %5105 = vmatmul.mubr.f32.gmra.mrb[0].mxu0 %v1332
        %v5106 = vpop.f32.mrb[0].mxu0
        %v5107 = vadd.f32 %v4722, %v5106
        %v5108 = vpop.f32.mrb[0].mxu0
        %5109 = vmatprep.mubr.f32.mxu0 %v3261
        %5110 = vmatmul.mubr.f32.gmra.mrb[0].mxu0 %v1342
        %v5111 = vpop.f32.mrb[0].mxu0
        %v5112 = vadd.f32 %v4727, %v5111
        %v5113 = vpop.f32.mrb[0].mxu0
        %5114 = vmatprep.mubr.f32.mxu0 %v3264
        %5115 = vmatmul.mubr.f32.gmra.mrb[0].mxu0 %v1352
        %v5116 = vpop.f32.mrb[0].mxu0
        %v5117 = vadd.f32 %v4732, %v5116
        %v5118 = vpop.f32.mrb[0].mxu0
        %5119 = vmatprep.mubr.f32.mxu0 %v3267
        %5120 = vmatmul.mubr.f32.gmra.mrb[0].mxu0 %v1362
        %v5121 = vpop.f32.mrb[0].mxu0
        %v5122 = vadd.f32 %v4737, %v5121
        %v5123 = vpop.f32.mrb[0].mxu0
        %5124 = vmatprep.mubr.f32.mxu0 %v3270
        %5125 = vmatmul.mubr.f32.gmra.mrb[0].mxu0 %v1372
        %v5126 = vpop.f32.mrb[0].mxu0
        %v5127 = vadd.f32 %v4742, %v5126
        %v5128 = vpop.f32.mrb[0].mxu0
        %5129 = vmatprep.mubr.f32.mxu0 %v3273
        %5130 = vmatmul.mubr.f32.gmra.mrb[0].mxu0 %v1382
        %v5131 = vpop.f32.mrb[0].mxu0
        %v5132 = vadd.f32 %v4747, %v5131
        %v5133 = vpop.f32.mrb[0].mxu0
        %5134 = vmatprep.mubr.f32.mxu0 %v3276
        %5135 = vmatmul.mubr.f32.gmra.mrb[0].mxu0 %v1392
        %v5136 = vpop.f32.mrb[0].mxu0
        %v5137 = vadd.f32 %v4752, %v5136
        %v5138 = vpop.f32.mrb[0].mxu0
        %5139 = vmatprep.mubr.f32.mxu0 %v3279
        %5140 = vmatmul.mubr.f32.gmra.mrb[0].mxu0 %v1402
        %v5141 = vpop.f32.mrb[0].mxu0
        %v5142 = vadd.f32 %v4757, %v5141
        %v5143 = vpop.f32.mrb[0].mxu0
        %5144 = vmatprep.mubr.f32.mxu0 %v3282
        %5145 = vmatmul.mubr.f32.gmra.mrb[0].mxu0 %v1412
        %v5146 = vpop.f32.mrb[0].mxu0
        %v5147 = vadd.f32 %v4762, %v5146
        %v5148 = vpop.f32.mrb[0].mxu0
        %5149 = vmatprep.mubr.f32.mxu0 %v3285
        %5150 = vmatmul.mubr.f32.gmra.mrb[0].mxu0 %v1422
        %v5151 = vpop.f32.mrb[0].mxu0
        %v5152 = vadd.f32 %v4767, %v5151
        %v5153 = vpop.f32.mrb[0].mxu0
        %5154 = vmatprep.mubr.f32.mxu0 %v3288
        %5155 = vmatmul.mubr.f32.gmra.mrb[0].mxu0 %v1432
        %v5156 = vpop.f32.mrb[0].mxu0
        %v5157 = vadd.f32 %v4772, %v5156
        %v5158 = vpop.f32.mrb[0].mxu0
        %5159 = vmatprep.mubr.f32.mxu0 %v3291
        %5160 = vmatmul.mubr.f32.gmra.mrb[0].mxu0 %v1442
        %v5161 = vpop.f32.mrb[0].mxu0
        %v5162 = vadd.f32 %v4777, %v5161
        %v5163 = vpop.f32.mrb[0].mxu0
        %5164 = vmatprep.mubr.f32.mxu0 %v3294
        %5165 = vmatmul.mubr.f32.gmra.mrb[0].mxu0 %v1452
        %v5166 = vpop.f32.mrb[0].mxu0
        %v5167 = vadd.f32 %v4782, %v5166
        %v5168 = vpop.f32.mrb[0].mxu0
        %5169 = vmatprep.mubr.f32.mxu0 %v3297
        %5170 = vmatmul.mubr.f32.gmra.mrb[0].mxu0 %v1462
        %v5171 = vpop.f32.mrb[0].mxu0
        %v5172 = vadd.f32 %v4787, %v5171
        %v5173 = vpop.f32.mrb[0].mxu0
        %5174 = vmatprep.mubr.f32.mxu0 %v3300
        %5175 = vmatmul.mubr.f32.gmra.mrb[0].mxu0 %v1472
        %v5176 = vpop.f32.mrb[0].mxu0
        %v5177 = vadd.f32 %v4792, %v5176
        %v5178 = vpop.f32.mrb[0].mxu0
        %5179 = vmatprep.mubr.f32.mxu0 %v3303
        %5180 = vmatmul.mubr.f32.gmra.mrb[0].mxu0 %v1482
        %v5181 = vpop.f32.mrb[0].mxu0
        %v5182 = vadd.f32 %v4797, %v5181
        %v5183 = vpop.f32.mrb[0].mxu0
        %5184 = vmatprep.mubr.f32.mxu0 %v3306
        %5185 = vmatmul.mubr.f32.gmra.mrb[0].mxu0 %v1492
        %v5186 = vpop.f32.mrb[0].mxu0
        %v5187 = vadd.f32 %v4802, %v5186
        %v5188 = vpop.f32.mrb[0].mxu0
        %5189 = vmatprep.mubr.f32.mxu0 %v3309
        %5190 = vmatmul.mubr.f32.gmra.mrb[0].mxu0 %v1502
        %v5191 = vpop.f32.mrb[0].mxu0
        %v5192 = vadd.f32 %v4807, %v5191
        %v5193 = vpop.f32.mrb[0].mxu0
        %5194 = vmatprep.mubr.f32.mxu0 %v3312
        %5195 = vmatmul.mubr.f32.gmra.mrb[0].mxu0 %v1512
        %v5196 = vpop.f32.mrb[0].mxu0
        %v5197 = vadd.f32 %v4812, %v5196
        %v5198 = vpop.f32.mrb[0].mxu0
        %5199 = vmatprep.mubr.f32.mxu0 %v3315
        %5200 = vmatmul.mubr.f32.gmra.mrb[0].mxu0 %v1522
        %v5201 = vpop.f32.mrb[0].mxu0
        %v5202 = vadd.f32 %v4817, %v5201
        %v5203 = vpop.f32.mrb[0].mxu0
        %5204 = vmatprep.mubr.f32.mxu0 %v3318
        %5205 = vmatmul.mubr.f32.gmra.mrb[0].mxu0 %v1532
        %v5206 = vpop.f32.mrb[0].mxu0
        %v5207 = vadd.f32 %v4822, %v5206
        %v5208 = vpop.f32.mrb[0].mxu0
        %5209 = vmatprep.mubr.f32.mxu0 %v3321
        %5210 = vmatmul.mubr.f32.gmra.mrb[0].mxu0 %v1542
        %v5211 = vpop.f32.mrb[0].mxu0
        %v5212 = vadd.f32 %v4827, %v5211
        %v5213 = vpop.f32.mrb[0].mxu0
        %5214 = vmatprep.mubr.f32.mxu0 %v3324
        %5215 = vmatmul.mubr.f32.gmra.mrb[0].mxu0 %v1552
        %v5216 = vpop.f32.mrb[0].mxu0
        %v5217 = vadd.f32 %v4832, %v5216
        %v5218 = vpop.f32.mrb[0].mxu0
        %5219 = vmatprep.mubr.f32.mxu0 %v3327
        %5220 = vmatmul.mubr.f32.gmra.mrb[0].mxu0 %v1562
        %v5221 = vpop.f32.mrb[0].mxu0
        %v5222 = vadd.f32 %v4837, %v5221
        %v5223 = vpop.f32.mrb[0].mxu0
        %5224 = vmatprep.mubr.f32.mxu0 %v3330
        %5225 = vmatmul.mubr.f32.gmra.mrb[0].mxu0 %v1572
        %v5226 = vpop.f32.mrb[0].mxu0
        %v5227 = vadd.f32 %v4842, %v5226
        %v5228 = vpop.f32.mrb[0].mxu0
        %5229 = vmatprep.mubr.f32.mxu0 %v3333
        %5230 = vmatmul.mubr.f32.gmra.mrb[0].mxu0 %v1582
        %v5231 = vpop.f32.mrb[0].mxu0
        %v5232 = vadd.f32 %v4847, %v5231
        %v5233 = vpop.f32.mrb[0].mxu0
        %5234 = vmatprep.mubr.f32.mxu0 %v3336
        %5235 = vmatmul.mubr.f32.gmra.mrb[0].mxu0 %v1592
        %v5236 = vpop.f32.mrb[0].mxu0
        %v5237 = vadd.f32 %v4852, %v5236
        %v5238 = vpop.f32.mrb[0].mxu0
        %5239 = vmatprep.mubr.f32.mxu0 %v3339
        %5240 = vmatmul.mubr.f32.gmra.mrb[0].mxu0 %v1602
        %v5241 = vpop.f32.mrb[0].mxu0
        %v5242 = vadd.f32 %v4857, %v5241
        %v5243 = vpop.f32.mrb[0].mxu0
        %5244 = vmatprep.mubr.f32.mxu0 %v3342
        %5245 = vmatmul.mubr.f32.gmra.mrb[0].mxu0 %v1612
        %v5246 = vpop.f32.mrb[0].mxu0
        %v5247 = vadd.f32 %v4862, %v5246
        %v5248 = vpop.f32.mrb[0].mxu0
        %5249 = vmatprep.mubr.f32.mxu0 %v3345
        %5250 = vmatmul.mubr.f32.gmra.mrb[0].mxu0 %v1622
        %v5251 = vpop.f32.mrb[0].mxu0
        %v5252 = vadd.f32 %v4867, %v5251
        %v5253 = vpop.f32.mrb[0].mxu0
        %5254 = vmatprep.mubr.f32.mxu0 %v3348
        %5255 = vmatmul.mubr.f32.gmra.mrb[0].mxu0 %v1632
        %v5256 = vpop.f32.mrb[0].mxu0
        %v5257 = vadd.f32 %v4872, %v5256
        %v5258 = vpop.f32.mrb[0].mxu0
        %5259 = vmatprep.mubr.f32.mxu0 %v3351
        %5260 = vmatmul.mubr.f32.gmra.mrb[0].mxu0 %v1642
        %v5261 = vpop.f32.mrb[0].mxu0
        %v5262 = vadd.f32 %v4877, %v5261
        %v5263 = vpop.f32.mrb[0].mxu0
        %5264 = vmatprep.mubr.f32.mxu0 %v3354
        %5265 = vmatmul.mubr.f32.gmra.mrb[0].mxu0 %v1652
        %v5266 = vpop.f32.mrb[0].mxu0
        %v5267 = vadd.f32 %v4882, %v5266
        %v5268 = vpop.f32.mrb[0].mxu0
        %5269 = vmatprep.mubr.f32.mxu0 %v3357
        %5270 = vmatmul.mubr.f32.gmra.mrb[0].mxu0 %v1662
        %v5271 = vpop.f32.mrb[0].mxu0
        %v5272 = vadd.f32 %v4887, %v5271
        %v5273 = vpop.f32.mrb[0].mxu0
        %5274 = vmatprep.mubr.f32.mxu0 %v3360
        %5275 = vmatmul.mubr.f32.gmra.mrb[0].mxu0 %v1672
        %v5276 = vpop.f32.mrb[0].mxu0
        %v5277 = vadd.f32 %v4892, %v5276
        %v5278 = vpop.f32.mrb[0].mxu0
        %5279 = vmatprep.mubr.f32.mxu0 %v3363
        %5280 = vmatmul.mubr.f32.gmra.mrb[0].mxu0 %v1682
        %v5281 = vpop.f32.mrb[0].mxu0
        %v5282 = vadd.f32 %v4897, %v5281
        %v5283 = vpop.f32.mrb[0].mxu0
        %5284 = vmatprep.mubr.f32.mxu0 %v3366
        %5285 = vmatmul.mubr.f32.gmra.mrb[0].mxu0 %v1692
        %v5286 = vpop.f32.mrb[0].mxu0
        %v5287 = vadd.f32 %v4902, %v5286
        %v5288 = vpop.f32.mrb[0].mxu0
        %5289 = vmatprep.mubr.f32.mxu0 %v3369
        %5290 = vmatmul.mubr.f32.gmra.mrb[0].mxu0 %v1702
        %v5291 = vpop.f32.mrb[0].mxu0
        %v5292 = vadd.f32 %v4907, %v5291
        %v5293 = vpop.f32.mrb[0].mxu0
        %5294 = vmatprep.mubr.f32.mxu0 %v3372
        %5295 = vmatmul.mubr.f32.gmra.mrb[0].mxu0 %v1712
        %v5296 = vpop.f32.mrb[0].mxu0
        %v5297 = vadd.f32 %v4912, %v5296
        %v5298 = vpop.f32.mrb[0].mxu0
        %5299 = vmatprep.mubr.f32.mxu0 %v3375
        %5300 = vmatmul.mubr.f32.gmra.mrb[0].mxu0 %v1722
        %v5301 = vpop.f32.mrb[0].mxu0
        %v5302 = vadd.f32 %v4917, %v5301
        %v5303 = vpop.f32.mrb[0].mxu0
        %5304 = vdwg.mxu0
        %v5305 = vld [vmem:[%s7] sm:$0xff]
        %v5306 = vld [vmem:[%s7 + $0x8] sm:$0xff]
        %v5307 = vld [vmem:[%s7 + $0x10] sm:$0xff]
        %v5308 = vld [vmem:[%s7 + $0x18] sm:$0xff]
        %v5309 = vld [vmem:[%s7 + $0x20] sm:$0xff]
        %v5310 = vld [vmem:[%s7 + $0x28] sm:$0xff]
        %v5311 = vld [vmem:[%s7 + $0x30] sm:$0xff]
        %v5312 = vld [vmem:[%s7 + $0x38] sm:$0xff]
        %v5313 = vld [vmem:[%s7 + $0x40] sm:$0xff]
        %v5314 = vld [vmem:[%s7 + $0x48] sm:$0xff]
        %v5315 = vld [vmem:[%s7 + $0x50] sm:$0xff]
        %v5316 = vld [vmem:[%s7 + $0x58] sm:$0xff]
        %v5317 = vld [vmem:[%s7 + $0x60] sm:$0xff]
        %v5318 = vld [vmem:[%s7 + $0x68] sm:$0xff]
        %v5319 = vld [vmem:[%s7 + $0x70] sm:$0xff]
        %v5320 = vld [vmem:[%s7 + $0x78] sm:$0xff]
        %v5321 = vld [vmem:[%s440] sm:$0xff]
        %v5322 = vld [vmem:[%s440 + $0x8] sm:$0xff]
        %v5323 = vld [vmem:[%s440 + $0x10] sm:$0xff]
        %v5324 = vld [vmem:[%s440 + $0x18] sm:$0xff]
        %5326 = vset.pattern.permute.xlu0 0
        %5327 = vperm.xlu0 %5326, %v5321
        %v5328 = vpop.permute.xlu0 %5327
        %5331 = vset.pattern.permute.xlu0 0
        %5332 = vperm.xlu0 %5331, %v5322
        %v5333 = vpop.permute.xlu0 %5332
        %5336 = vset.pattern.permute.xlu0 0
        %5337 = vperm.xlu0 %5336, %v5323
        %v5338 = vpop.permute.xlu0 %5337
        %5341 = vset.pattern.permute.xlu0 0
        %5342 = vperm.xlu0 %5341, %v5324
        %v5343 = vpop.permute.xlu0 %5342
        %5345 = vmatprep.subr.mxu0 0.0
        %5346 = vmatpush1.msra.mxu0 %v4987
        %5347 = vmatprep.subr.mxu0 0.0
        %5348 = vmatpush1.msra.mxu0 %v4992
        %5349 = vmatprep.subr.mxu0 0.0
        %5350 = vmatpush1.msra.mxu0 %v4997
        %5351 = vmatprep.subr.mxu0 0.0
        %5352 = vmatpush1.msra.mxu0 %v5002
        %5353 = vmatprep.subr.mxu0 0.0
        %5354 = vmatpush1.msra.mxu0 %v5007
        %5355 = vmatprep.subr.mxu0 0.0
        %5356 = vmatpush1.msra.mxu0 %v5012
        %5357 = vmatprep.subr.mxu0 0.0
        %5358 = vmatpush1.msra.mxu0 %v5017
        %5359 = vmatprep.subr.mxu0 0.0
        %5360 = vmatpush1.msra.mxu0 %v5022
        %5361 = vmatprep.subr.mxu0 0.0
        %5362 = vmatpush1.msra.mxu0 %v5027
        %5363 = vmatprep.subr.mxu0 0.0
        %5364 = vmatpush1.msra.mxu0 %v5032
        %5365 = vmatprep.subr.mxu0 0.0
        %5366 = vmatpush1.msra.mxu0 %v5037
        %5367 = vmatprep.subr.mxu0 0.0
        %5368 = vmatpush1.msra.mxu0 %v5042
        %5369 = vmatprep.subr.mxu0 0.0
        %5370 = vmatpush1.msra.mxu0 %v5047
        %5371 = vmatprep.subr.mxu0 0.0
        %5372 = vmatpush1.msra.mxu0 %v5052
        %5373 = vmatprep.subr.mxu0 0.0
        %5374 = vmatpush1.msra.mxu0 %v5057
        %5375 = vmatprep.subr.mxu0 0.0
        %5376 = vmatpush1.msra.mxu0 %v5062
        %5377 = vmatprep.subr.mxu0 0.0
        %5378 = vmatpush1.msra.mxu0 %v5067
        %5379 = vmatprep.subr.mxu0 0.0
        %5380 = vmatpush1.msra.mxu0 %v5072
        %5381 = vmatprep.subr.mxu0 0.0
        %5382 = vmatpush1.msra.mxu0 %v5077
        %5383 = vmatprep.subr.mxu0 0.0
        %5384 = vmatpush1.msra.mxu0 %v5082
        %5385 = vmatprep.subr.mxu0 0.0
        %5386 = vmatpush1.msra.mxu0 %v5087
        %5387 = vmatprep.subr.mxu0 0.0
        %5388 = vmatpush1.msra.mxu0 %v5092
        %5389 = vmatprep.subr.mxu0 0.0
        %5390 = vmatpush1.msra.mxu0 %v5097
        %5391 = vmatprep.subr.mxu0 0.0
        %5392 = vmatpush1.msra.mxu0 %v5102
        %5393 = vmatprep.subr.mxu0 0.0
        %5394 = vmatpush1.msra.mxu0 %v5107
        %5395 = vmatprep.subr.mxu0 0.0
        %5396 = vmatpush1.msra.mxu0 %v5112
        %5397 = vmatprep.subr.mxu0 0.0
        %5398 = vmatpush1.msra.mxu0 %v5117
        %5399 = vmatprep.subr.mxu0 0.0
        %5400 = vmatpush1.msra.mxu0 %v5122
        %5401 = vmatprep.subr.mxu0 0.0
        %5402 = vmatpush1.msra.mxu0 %v5127
        %5403 = vmatprep.subr.mxu0 0.0
        %5404 = vmatpush1.msra.mxu0 %v5132
        %5405 = vmatprep.subr.mxu0 0.0
        %5406 = vmatpush1.msra.mxu0 %v5137
        %5407 = vmatprep.subr.mxu0 0.0
        %5408 = vmatpush1.msra.mxu0 %v5142
        %5409 = vmatprep.mubr.f32.mxu0 %v5306
        %5410 = vmatmul.mubr.f32.gmra.mrb[0].mxu0 %v5305
        %v5411 = vpop.f32.mrb[0].mxu0
        %v5412 = vadd.f32 %v5328, %v5411
        %v5413 = vpop.f32.mrb[0].mxu0
        %5414 = vmatprep.mubr.f32.mxu0 %v5310
        %5415 = vmatmul.mubr.f32.gmra.mrb[0].mxu0 %v5309
        %v5416 = vpop.f32.mrb[0].mxu0
        %v5417 = vadd.f32 %v5333, %v5416
        %v5418 = vpop.f32.mrb[0].mxu0
        %5419 = vmatprep.mubr.f32.mxu0 %v5314
        %5420 = vmatmul.mubr.f32.gmra.mrb[0].mxu0 %v5313
        %v5421 = vpop.f32.mrb[0].mxu0
        %v5422 = vadd.f32 %v5338, %v5421
        %v5423 = vpop.f32.mrb[0].mxu0
        %5424 = vmatprep.mubr.f32.mxu0 %v5318
        %5425 = vmatmul.mubr.f32.gmra.mrb[0].mxu0 %v5317
        %v5426 = vpop.f32.mrb[0].mxu0
        %v5427 = vadd.f32 %v5343, %v5426
        %v5428 = vpop.f32.mrb[0].mxu0
        %5429 = vdwg.mxu0
        %5430 = vmatprep.subr.mxu0 0.0
        %5431 = vmatpush1.msra.mxu0 %v5147
        %5432 = vmatprep.subr.mxu0 0.0
        %5433 = vmatpush1.msra.mxu0 %v5152
        %5434 = vmatprep.subr.mxu0 0.0
        %5435 = vmatpush1.msra.mxu0 %v5157
        %5436 = vmatprep.subr.mxu0 0.0
        %5437 = vmatpush1.msra.mxu0 %v5162
        %5438 = vmatprep.subr.mxu0 0.0
        %5439 = vmatpush1.msra.mxu0 %v5167
        %5440 = vmatprep.subr.mxu0 0.0
        %5441 = vmatpush1.msra.mxu0 %v5172
        %5442 = vmatprep.subr.mxu0 0.0
        %5443 = vmatpush1.msra.mxu0 %v5177
        %5444 = vmatprep.subr.mxu0 0.0
        %5445 = vmatpush1.msra.mxu0 %v5182
        %5446 = vmatprep.subr.mxu0 0.0
        %5447 = vmatpush1.msra.mxu0 %v5187
        %5448 = vmatprep.subr.mxu0 0.0
        %5449 = vmatpush1.msra.mxu0 %v5192
        %5450 = vmatprep.subr.mxu0 0.0
        %5451 = vmatpush1.msra.mxu0 %v5197
        %5452 = vmatprep.subr.mxu0 0.0
        %5453 = vmatpush1.msra.mxu0 %v5202
        %5454 = vmatprep.subr.mxu0 0.0
        %5455 = vmatpush1.msra.mxu0 %v5207
        %5456 = vmatprep.subr.mxu0 0.0
        %5457 = vmatpush1.msra.mxu0 %v5212
        %5458 = vmatprep.subr.mxu0 0.0
        %5459 = vmatpush1.msra.mxu0 %v5217
        %5460 = vmatprep.subr.mxu0 0.0
        %5461 = vmatpush1.msra.mxu0 %v5222
        %5462 = vmatprep.subr.mxu0 0.0
        %5463 = vmatpush1.msra.mxu0 %v5227
        %5464 = vmatprep.subr.mxu0 0.0
        %5465 = vmatpush1.msra.mxu0 %v5232
        %5466 = vmatprep.subr.mxu0 0.0
        %5467 = vmatpush1.msra.mxu0 %v5237
        %5468 = vmatprep.subr.mxu0 0.0
        %5469 = vmatpush1.msra.mxu0 %v5242
        %5470 = vmatprep.subr.mxu0 0.0
        %5471 = vmatpush1.msra.mxu0 %v5247
        %5472 = vmatprep.subr.mxu0 0.0
        %5473 = vmatpush1.msra.mxu0 %v5252
        %5474 = vmatprep.subr.mxu0 0.0
        %5475 = vmatpush1.msra.mxu0 %v5257
        %5476 = vmatprep.subr.mxu0 0.0
        %5477 = vmatpush1.msra.mxu0 %v5262
        %5478 = vmatprep.subr.mxu0 0.0
        %5479 = vmatpush1.msra.mxu0 %v5267
        %5480 = vmatprep.subr.mxu0 0.0
        %5481 = vmatpush1.msra.mxu0 %v5272
        %5482 = vmatprep.subr.mxu0 0.0
        %5483 = vmatpush1.msra.mxu0 %v5277
        %5484 = vmatprep.subr.mxu0 0.0
        %5485 = vmatpush1.msra.mxu0 %v5282
        %5486 = vmatprep.subr.mxu0 0.0
        %5487 = vmatpush1.msra.mxu0 %v5287
        %5488 = vmatprep.subr.mxu0 0.0
        %5489 = vmatpush1.msra.mxu0 %v5292
        %5490 = vmatprep.subr.mxu0 0.0
        %5491 = vmatpush1.msra.mxu0 %v5297
        %5492 = vmatprep.subr.mxu0 0.0
        %5493 = vmatpush1.msra.mxu0 %v5302
        %5494 = vmatprep.mubr.f32.mxu0 %v5308
        %5495 = vmatmul.mubr.f32.gmra.mrb[0].mxu0 %v5307
        %v5496 = vpop.f32.mrb[0].mxu0
        %v5497 = vadd.f32 %v5412, %v5496
        %v5498 = vpop.f32.mrb[0].mxu0
        %5499 = vmatprep.mubr.f32.mxu0 %v5312
        %5500 = vmatmul.mubr.f32.gmra.mrb[0].mxu0 %v5311
        %v5501 = vpop.f32.mrb[0].mxu0
        %v5502 = vadd.f32 %v5417, %v5501
        %v5503 = vpop.f32.mrb[0].mxu0
        %5504 = vmatprep.mubr.f32.mxu0 %v5316
        %5505 = vmatmul.mubr.f32.gmra.mrb[0].mxu0 %v5315
        %v5506 = vpop.f32.mrb[0].mxu0
        %v5507 = vadd.f32 %v5422, %v5506
        %v5508 = vpop.f32.mrb[0].mxu0
        %5509 = vmatprep.mubr.f32.mxu0 %v5320
        %5510 = vmatmul.mubr.f32.gmra.mrb[0].mxu0 %v5319
        %v5511 = vpop.f32.mrb[0].mxu0
        %v5512 = vadd.f32 %v5427, %v5511
        %v5513 = vpop.f32.mrb[0].mxu0
        %5514 = vdwg.mxu0
        %v5515 = vtanh.pop %v5497
        %v5516 = vtanh.pop %v5502
        %v5517 = vtanh.pop %v5507
        %v5518 = vtanh.pop %v5512
        %v5519 = vld [vmem:[%s8] sm:$0xff]
        %v5520 = vld [vmem:[%s8 + $0x8] sm:$0xff]
        %v5521 = vld [vmem:[%s8 + $0x10] sm:$0xff]
        %v5522 = vld [vmem:[%s8 + $0x18] sm:$0xff]
        %5524 = vset.pattern.permute.xlu0 0
        %5525 = vperm.xlu0 %5524, %v5519
        %v5526 = vpop.permute.xlu0 %5525
        %5529 = vset.pattern.permute.xlu0 0
        %5530 = vperm.xlu0 %5529, %v5520
        %v5531 = vpop.permute.xlu0 %5530
        %5534 = vset.pattern.permute.xlu0 0
        %5535 = vperm.xlu0 %5534, %v5521
        %v5536 = vpop.permute.xlu0 %5535
        %5539 = vset.pattern.permute.xlu0 0
        %5540 = vperm.xlu0 %5539, %v5522
        %v5541 = vpop.permute.xlu0 %5540
        %v5543 = vmul.f32 %v5515, %v5526
        %v5544 = vmul.f32 %v5516, %v5531
        %v5545 = vmul.f32 %v5517, %v5536
        %v5546 = vmul.f32 %v5518, %v5541
        %vm5547 = vcmask 64512
        %v5548 = vsel %vm5547, %v5543, 0.0
        %v5549 = vsel %vm5547, %v5544, 0.0
        %v5550 = vadd.f32 %v5548, %v5549
        %v5551 = vsel %vm5547, %v5545, 0.0
        %v5552 = vadd.f32 %v5550, %v5551
        %v5553 = vsel %vm5547, %v5546, 0.0
        %v5554 = vadd.f32 %v5552, %v5553
        %v5555 = vrot.slane %v5554, 4
        %v5556 = vadd.f32 %v5554, %v5555
        %v5557 = vrot.slane %v5556, 2
        %v5558 = vadd.f32 %v5556, %v5557
        %v5559 = vrot.slane %v5558, 1
        %v5560 = vadd.f32 %v5558, %v5559
        %v5561 = vsel %vm5547, %v5560, -inf
        %5562 = vmax.xlane.f32.xlu0 %v5561
        %v5563 = vpop.xlane.xlu0 %5562
        %v5564 = vsub.f32 %v5560, %v5563
        %v5565 = vmul.f32 %v5564, 1.442695
        %v5566 = vpow.pop %v5565
        %v5567 = vsel %vm5547, %v5566, 0.0
        %5568 = vadd.xlane.f32.xlu0 %v5567
        %v5569 = vpop.xlane.xlu0 %5568
        %v5570 = vrcp.pop %v5569
        %v5571 = vmul.f32 %v5566, %v5570
        %v5573 = vsel %vm5547, %v5571, 0
        %5575 = vmatprep.subr.mxu0 %v2445
        %5576 = vmatpush1.msra.mxu0 %v2444
        %5577 = vmatprep.subr.mxu0 0.0
        %5578 = vmatpush1.msra.mxu0 0.0
        %5579 = vmatprep.subr.mxu0 0.0
        %5580 = vmatpush1.msra.mxu0 0.0
        %5581 = vmatprep.subr.mxu0 0.0
        %5582 = vmatpush1.msra.mxu0 0.0
        %5583 = vmatprep.subr.mxu0 0.0
        %5584 = vmatpush1.msra.mxu0 0.0
        %5585 = vmatprep.subr.mxu0 0.0
        %5586 = vmatpush1.msra.mxu0 0.0
        %5587 = vmatprep.subr.mxu0 0.0
        %5588 = vmatpush1.msra.mxu0 0.0
        %5589 = vmatprep.subr.mxu0 0.0
        %5590 = vmatpush1.msra.mxu0 0.0
        %5591 = vmatprep.subr.mxu0 0.0
        %5592 = vmatpush1.msra.mxu0 0.0
        %5593 = vmatprep.subr.mxu0 0.0
        %5594 = vmatpush1.msra.mxu0 0.0
        %5595 = vmatprep.subr.mxu0 0.0
        %5596 = vmatpush1.msra.mxu0 0.0
        %5597 = vmatprep.subr.mxu0 0.0
        %5598 = vmatpush1.msra.mxu0 0.0
        %5599 = vmatprep.subr.mxu0 0.0
        %5600 = vmatpush1.msra.mxu0 0.0
        %5601 = vmatprep.subr.mxu0 0.0
        %5602 = vmatpush1.msra.mxu0 0.0
        %5603 = vmatprep.subr.mxu0 0.0
        %5604 = vmatpush1.msra.mxu0 0.0
        %5605 = vmatprep.subr.mxu0 0.0
        %5606 = vmatpush1.msra.mxu0 0.0
        %5607 = vmatprep.subr.mxu0 0.0
        %5608 = vmatpush1.msra.mxu0 0.0
        %5609 = vmatprep.subr.mxu0 0.0
        %5610 = vmatpush1.msra.mxu0 0.0
        %5611 = vmatprep.subr.mxu0 0.0
        %5612 = vmatpush1.msra.mxu0 0.0
        %5613 = vmatprep.subr.mxu0 0.0
        %5614 = vmatpush1.msra.mxu0 0.0
        %5615 = vmatprep.subr.mxu0 0.0
        %5616 = vmatpush1.msra.mxu0 0.0
        %5617 = vmatprep.subr.mxu0 0.0
        %5618 = vmatpush1.msra.mxu0 0.0
        %5619 = vmatprep.subr.mxu0 0.0
        %5620 = vmatpush1.msra.mxu0 0.0
        %5621 = vmatprep.subr.mxu0 0.0
        %5622 = vmatpush1.msra.mxu0 0.0
        %5623 = vmatprep.subr.mxu0 0.0
        %5624 = vmatpush1.msra.mxu0 0.0
        %5625 = vmatprep.subr.mxu0 0.0
        %5626 = vmatpush1.msra.mxu0 0.0
        %5627 = vmatprep.subr.mxu0 0.0
        %5628 = vmatpush1.msra.mxu0 0.0
        %5629 = vmatprep.subr.mxu0 0.0
        %5630 = vmatpush1.msra.mxu0 0.0
        %5631 = vmatprep.subr.mxu0 0.0
        %5632 = vmatpush1.msra.mxu0 0.0
        %5633 = vmatprep.subr.mxu0 0.0
        %5634 = vmatpush1.msra.mxu0 0.0
        %5635 = vmatprep.subr.mxu0 0.0
        %5636 = vmatpush1.msra.mxu0 0.0
        %5637 = vmatprep.subr.mxu0 0.0
        %5638 = vmatpush1.msra.mxu0 0.0
        %5639 = vmatprep.mubr.f32.mxu0 0.0
        %5640 = vmatmul.mubr.f32.gmra.mrb[0].mxu0 %v5573
        %v5641 = vpop.f32.mrb[0].mxu0
        %v5642 = vadd.f32 0.0, %v5641
        %v5643 = vpop.f32.mrb[0].mxu0
        %v5644 = vadd.f32 0.0, %v5643
        %5645 = vdwg.mxu0
        %5646 = vmatprep.subr.mxu0 %v2447
        %5647 = vmatpush1.msra.mxu0 %v2446
        %5648 = vmatprep.subr.mxu0 0.0
        %5649 = vmatpush1.msra.mxu0 0.0
        %5650 = vmatprep.subr.mxu0 0.0
        %5651 = vmatpush1.msra.mxu0 0.0
        %5652 = vmatprep.subr.mxu0 0.0
        %5653 = vmatpush1.msra.mxu0 0.0
        %5654 = vmatprep.subr.mxu0 0.0
        %5655 = vmatpush1.msra.mxu0 0.0
        %5656 = vmatprep.subr.mxu0 0.0
        %5657 = vmatpush1.msra.mxu0 0.0
        %5658 = vmatprep.subr.mxu0 0.0
        %5659 = vmatpush1.msra.mxu0 0.0
        %5660 = vmatprep.subr.mxu0 0.0
        %5661 = vmatpush1.msra.mxu0 0.0
        %5662 = vmatprep.subr.mxu0 0.0
        %5663 = vmatpush1.msra.mxu0 0.0
        %5664 = vmatprep.subr.mxu0 0.0
        %5665 = vmatpush1.msra.mxu0 0.0
        %5666 = vmatprep.subr.mxu0 0.0
        %5667 = vmatpush1.msra.mxu0 0.0
        %5668 = vmatprep.subr.mxu0 0.0
        %5669 = vmatpush1.msra.mxu0 0.0
        %5670 = vmatprep.subr.mxu0 0.0
        %5671 = vmatpush1.msra.mxu0 0.0
        %5672 = vmatprep.subr.mxu0 0.0
        %5673 = vmatpush1.msra.mxu0 0.0
        %5674 = vmatprep.subr.mxu0 0.0
        %5675 = vmatpush1.msra.mxu0 0.0
        %5676 = vmatprep.subr.mxu0 0.0
        %5677 = vmatpush1.msra.mxu0 0.0
        %5678 = vmatprep.subr.mxu0 0.0
        %5679 = vmatpush1.msra.mxu0 0.0
        %5680 = vmatprep.subr.mxu0 0.0
        %5681 = vmatpush1.msra.mxu0 0.0
        %5682 = vmatprep.subr.mxu0 0.0
        %5683 = vmatpush1.msra.mxu0 0.0
        %5684 = vmatprep.subr.mxu0 0.0
        %5685 = vmatpush1.msra.mxu0 0.0
        %5686 = vmatprep.subr.mxu0 0.0
        %5687 = vmatpush1.msra.mxu0 0.0
        %5688 = vmatprep.subr.mxu0 0.0
        %5689 = vmatpush1.msra.mxu0 0.0
        %5690 = vmatprep.subr.mxu0 0.0
        %5691 = vmatpush1.msra.mxu0 0.0
        %5692 = vmatprep.subr.mxu0 0.0
        %5693 = vmatpush1.msra.mxu0 0.0
        %5694 = vmatprep.subr.mxu0 0.0
        %5695 = vmatpush1.msra.mxu0 0.0
        %5696 = vmatprep.subr.mxu0 0.0
        %5697 = vmatpush1.msra.mxu0 0.0
        %5698 = vmatprep.subr.mxu0 0.0
        %5699 = vmatpush1.msra.mxu0 0.0
        %5700 = vmatprep.subr.mxu0 0.0
        %5701 = vmatpush1.msra.mxu0 0.0
        %5702 = vmatprep.subr.mxu0 0.0
        %5703 = vmatpush1.msra.mxu0 0.0
        %5704 = vmatprep.subr.mxu0 0.0
        %5705 = vmatpush1.msra.mxu0 0.0
        %5706 = vmatprep.subr.mxu0 0.0
        %5707 = vmatpush1.msra.mxu0 0.0
        %5708 = vmatprep.subr.mxu0 0.0
        %5709 = vmatpush1.msra.mxu0 0.0
        %5710 = vmatprep.mubr.f32.mxu0 0.0
        %5711 = vmatmul.mubr.f32.gmra.mrb[0].mxu0 %v5573
        %v5712 = vpop.f32.mrb[0].mxu0
        %v5713 = vadd.f32 0.0, %v5712
        %v5714 = vpop.f32.mrb[0].mxu0
        %v5715 = vadd.f32 0.0, %v5714
        %5716 = vdwg.mxu0
        %5717 = vmatprep.subr.mxu0 %v2449
        %5718 = vmatpush1.msra.mxu0 %v2448
        %5719 = vmatprep.subr.mxu0 0.0
        %5720 = vmatpush1.msra.mxu0 0.0
        %5721 = vmatprep.subr.mxu0 0.0
        %5722 = vmatpush1.msra.mxu0 0.0
        %5723 = vmatprep.subr.mxu0 0.0
        %5724 = vmatpush1.msra.mxu0 0.0
        %5725 = vmatprep.subr.mxu0 0.0
        %5726 = vmatpush1.msra.mxu0 0.0
        %5727 = vmatprep.subr.mxu0 0.0
        %5728 = vmatpush1.msra.mxu0 0.0
        %5729 = vmatprep.subr.mxu0 0.0
        %5730 = vmatpush1.msra.mxu0 0.0
        %5731 = vmatprep.subr.mxu0 0.0
        %5732 = vmatpush1.msra.mxu0 0.0
        %5733 = vmatprep.subr.mxu0 0.0
        %5734 = vmatpush1.msra.mxu0 0.0
        %5735 = vmatprep.subr.mxu0 0.0
        %5736 = vmatpush1.msra.mxu0 0.0
        %5737 = vmatprep.subr.mxu0 0.0
        %5738 = vmatpush1.msra.mxu0 0.0
        %5739 = vmatprep.subr.mxu0 0.0
        %5740 = vmatpush1.msra.mxu0 0.0
        %5741 = vmatprep.subr.mxu0 0.0
        %5742 = vmatpush1.msra.mxu0 0.0
        %5743 = vmatprep.subr.mxu0 0.0
        %5744 = vmatpush1.msra.mxu0 0.0
        %5745 = vmatprep.subr.mxu0 0.0
        %5746 = vmatpush1.msra.mxu0 0.0
        %5747 = vmatprep.subr.mxu0 0.0
        %5748 = vmatpush1.msra.mxu0 0.0
        %5749 = vmatprep.subr.mxu0 0.0
        %5750 = vmatpush1.msra.mxu0 0.0
        %5751 = vmatprep.subr.mxu0 0.0
        %5752 = vmatpush1.msra.mxu0 0.0
        %5753 = vmatprep.subr.mxu0 0.0
        %5754 = vmatpush1.msra.mxu0 0.0
        %5755 = vmatprep.subr.mxu0 0.0
        %5756 = vmatpush1.msra.mxu0 0.0
        %5757 = vmatprep.subr.mxu0 0.0
        %5758 = vmatpush1.msra.mxu0 0.0
        %5759 = vmatprep.subr.mxu0 0.0
        %5760 = vmatpush1.msra.mxu0 0.0
        %5761 = vmatprep.subr.mxu0 0.0
        %5762 = vmatpush1.msra.mxu0 0.0
        %5763 = vmatprep.subr.mxu0 0.0
        %5764 = vmatpush1.msra.mxu0 0.0
        %5765 = vmatprep.subr.mxu0 0.0
        %5766 = vmatpush1.msra.mxu0 0.0
        %5767 = vmatprep.subr.mxu0 0.0
        %5768 = vmatpush1.msra.mxu0 0.0
        %5769 = vmatprep.subr.mxu0 0.0
        %5770 = vmatpush1.msra.mxu0 0.0
        %5771 = vmatprep.subr.mxu0 0.0
        %5772 = vmatpush1.msra.mxu0 0.0
        %5773 = vmatprep.subr.mxu0 0.0
        %5774 = vmatpush1.msra.mxu0 0.0
        %5775 = vmatprep.subr.mxu0 0.0
        %5776 = vmatpush1.msra.mxu0 0.0
        %5777 = vmatprep.subr.mxu0 0.0
        %5778 = vmatpush1.msra.mxu0 0.0
        %5779 = vmatprep.subr.mxu0 0.0
        %5780 = vmatpush1.msra.mxu0 0.0
        %5781 = vmatprep.mubr.f32.mxu0 0.0
        %5782 = vmatmul.mubr.f32.gmra.mrb[0].mxu0 %v5573
        %v5783 = vpop.f32.mrb[0].mxu0
        %v5784 = vadd.f32 0.0, %v5783
        %v5785 = vpop.f32.mrb[0].mxu0
        %v5786 = vadd.f32 0.0, %v5785
        %5787 = vdwg.mxu0
        %5788 = vmatprep.subr.mxu0 %v2451
        %5789 = vmatpush1.msra.mxu0 %v2450
        %5790 = vmatprep.subr.mxu0 0.0
        %5791 = vmatpush1.msra.mxu0 0.0
        %5792 = vmatprep.subr.mxu0 0.0
        %5793 = vmatpush1.msra.mxu0 0.0
        %5794 = vmatprep.subr.mxu0 0.0
        %5795 = vmatpush1.msra.mxu0 0.0
        %5796 = vmatprep.subr.mxu0 0.0
        %5797 = vmatpush1.msra.mxu0 0.0
        %5798 = vmatprep.subr.mxu0 0.0
        %5799 = vmatpush1.msra.mxu0 0.0
        %5800 = vmatprep.subr.mxu0 0.0
        %5801 = vmatpush1.msra.mxu0 0.0
        %5802 = vmatprep.subr.mxu0 0.0
        %5803 = vmatpush1.msra.mxu0 0.0
        %5804 = vmatprep.subr.mxu0 0.0
        %5805 = vmatpush1.msra.mxu0 0.0
        %5806 = vmatprep.subr.mxu0 0.0
        %5807 = vmatpush1.msra.mxu0 0.0
        %5808 = vmatprep.subr.mxu0 0.0
        %5809 = vmatpush1.msra.mxu0 0.0
        %5810 = vmatprep.subr.mxu0 0.0
        %5811 = vmatpush1.msra.mxu0 0.0
        %5812 = vmatprep.subr.mxu0 0.0
        %5813 = vmatpush1.msra.mxu0 0.0
        %5814 = vmatprep.subr.mxu0 0.0
        %5815 = vmatpush1.msra.mxu0 0.0
        %5816 = vmatprep.subr.mxu0 0.0
        %5817 = vmatpush1.msra.mxu0 0.0
        %5818 = vmatprep.subr.mxu0 0.0
        %5819 = vmatpush1.msra.mxu0 0.0
        %5820 = vmatprep.subr.mxu0 0.0
        %5821 = vmatpush1.msra.mxu0 0.0
        %5822 = vmatprep.subr.mxu0 0.0
        %5823 = vmatpush1.msra.mxu0 0.0
        %5824 = vmatprep.subr.mxu0 0.0
        %5825 = vmatpush1.msra.mxu0 0.0
        %5826 = vmatprep.subr.mxu0 0.0
        %5827 = vmatpush1.msra.mxu0 0.0
        %5828 = vmatprep.subr.mxu0 0.0
        %5829 = vmatpush1.msra.mxu0 0.0
        %5830 = vmatprep.subr.mxu0 0.0
        %5831 = vmatpush1.msra.mxu0 0.0
        %5832 = vmatprep.subr.mxu0 0.0
        %5833 = vmatpush1.msra.mxu0 0.0
        %5834 = vmatprep.subr.mxu0 0.0
        %5835 = vmatpush1.msra.mxu0 0.0
        %5836 = vmatprep.subr.mxu0 0.0
        %5837 = vmatpush1.msra.mxu0 0.0
        %5838 = vmatprep.subr.mxu0 0.0
        %5839 = vmatpush1.msra.mxu0 0.0
        %5840 = vmatprep.subr.mxu0 0.0
        %5841 = vmatpush1.msra.mxu0 0.0
        %5842 = vmatprep.subr.mxu0 0.0
        %5843 = vmatpush1.msra.mxu0 0.0
        %5844 = vmatprep.subr.mxu0 0.0
        %5845 = vmatpush1.msra.mxu0 0.0
        %5846 = vmatprep.subr.mxu0 0.0
        %5847 = vmatpush1.msra.mxu0 0.0
        %5848 = vmatprep.subr.mxu0 0.0
        %5849 = vmatpush1.msra.mxu0 0.0
        %5850 = vmatprep.subr.mxu0 0.0
        %5851 = vmatpush1.msra.mxu0 0.0
        %5852 = vmatprep.mubr.f32.mxu0 0.0
        %5853 = vmatmul.mubr.f32.gmra.mrb[0].mxu0 %v5573
        %v5854 = vpop.f32.mrb[0].mxu0
        %v5855 = vadd.f32 0.0, %v5854
        %v5856 = vpop.f32.mrb[0].mxu0
        %v5857 = vadd.f32 0.0, %v5856
        %5858 = vdwg.mxu0
        %5859 = vmatprep.subr.mxu0 %v2453
        %5860 = vmatpush1.msra.mxu0 %v2452
        %5861 = vmatprep.subr.mxu0 0.0
        %5862 = vmatpush1.msra.mxu0 0.0
        %5863 = vmatprep.subr.mxu0 0.0
        %5864 = vmatpush1.msra.mxu0 0.0
        %5865 = vmatprep.subr.mxu0 0.0
        %5866 = vmatpush1.msra.mxu0 0.0
        %5867 = vmatprep.subr.mxu0 0.0
        %5868 = vmatpush1.msra.mxu0 0.0
        %5869 = vmatprep.subr.mxu0 0.0
        %5870 = vmatpush1.msra.mxu0 0.0
        %5871 = vmatprep.subr.mxu0 0.0
        %5872 = vmatpush1.msra.mxu0 0.0
        %5873 = vmatprep.subr.mxu0 0.0
        %5874 = vmatpush1.msra.mxu0 0.0
        %5875 = vmatprep.subr.mxu0 0.0
        %5876 = vmatpush1.msra.mxu0 0.0
        %5877 = vmatprep.subr.mxu0 0.0
        %5878 = vmatpush1.msra.mxu0 0.0
        %5879 = vmatprep.subr.mxu0 0.0
        %5880 = vmatpush1.msra.mxu0 0.0
        %5881 = vmatprep.subr.mxu0 0.0
        %5882 = vmatpush1.msra.mxu0 0.0
        %5883 = vmatprep.subr.mxu0 0.0
        %5884 = vmatpush1.msra.mxu0 0.0
        %5885 = vmatprep.subr.mxu0 0.0
        %5886 = vmatpush1.msra.mxu0 0.0
        %5887 = vmatprep.subr.mxu0 0.0
        %5888 = vmatpush1.msra.mxu0 0.0
        %5889 = vmatprep.subr.mxu0 0.0
        %5890 = vmatpush1.msra.mxu0 0.0
        %5891 = vmatprep.subr.mxu0 0.0
        %5892 = vmatpush1.msra.mxu0 0.0
        %5893 = vmatprep.subr.mxu0 0.0
        %5894 = vmatpush1.msra.mxu0 0.0
        %5895 = vmatprep.subr.mxu0 0.0
        %5896 = vmatpush1.msra.mxu0 0.0
        %5897 = vmatprep.subr.mxu0 0.0
        %5898 = vmatpush1.msra.mxu0 0.0
        %5899 = vmatprep.subr.mxu0 0.0
        %5900 = vmatpush1.msra.mxu0 0.0
        %5901 = vmatprep.subr.mxu0 0.0
        %5902 = vmatpush1.msra.mxu0 0.0
        %5903 = vmatprep.subr.mxu0 0.0
        %5904 = vmatpush1.msra.mxu0 0.0
        %5905 = vmatprep.subr.mxu0 0.0
        %5906 = vmatpush1.msra.mxu0 0.0
        %5907 = vmatprep.subr.mxu0 0.0
        %5908 = vmatpush1.msra.mxu0 0.0
        %5909 = vmatprep.subr.mxu0 0.0
        %5910 = vmatpush1.msra.mxu0 0.0
        %5911 = vmatprep.subr.mxu0 0.0
        %5912 = vmatpush1.msra.mxu0 0.0
        %5913 = vmatprep.subr.mxu0 0.0
        %5914 = vmatpush1.msra.mxu0 0.0
        %5915 = vmatprep.subr.mxu0 0.0
        %5916 = vmatpush1.msra.mxu0 0.0
        %5917 = vmatprep.subr.mxu0 0.0
        %5918 = vmatpush1.msra.mxu0 0.0
        %5919 = vmatprep.subr.mxu0 0.0
        %5920 = vmatpush1.msra.mxu0 0.0
        %5921 = vmatprep.subr.mxu0 0.0
        %5922 = vmatpush1.msra.mxu0 0.0
        %5923 = vmatprep.mubr.f32.mxu0 0.0
        %5924 = vmatmul.mubr.f32.gmra.mrb[0].mxu0 %v5573
        %v5925 = vpop.f32.mrb[0].mxu0
        %v5926 = vadd.f32 0.0, %v5925
        %v5927 = vpop.f32.mrb[0].mxu0
        %v5928 = vadd.f32 0.0, %v5927
        %5929 = vdwg.mxu0
        %v5940 = vcombine.low %v5642, %v5644
        %v5941 = vcombine.low %v5713, %v5715
        %v5942 = vcombine.low %v5784, %v5786
        %v5943 = vcombine.low %v5855, %v5857
        %v5945 = vunpack.c.l.s4 1966171168
        %v5946 = vunpack.c.0.s8 %v5945
        %v5947 = vlaneseq
        %v5948 = vshrl.u32 %v5947, 7
        %v5949 = vsub.s32 %v5946, %v5948
        %v5950 = vrot.slane %v5940, %v5949
        %v5952 = vunpack.c.l.s4 1966171168
        %v5953 = vunpack.c.0.s8 %v5952
        %v5954 = vlaneseq
        %v5955 = vshrl.u32 %v5954, 7
        %v5956 = vsub.s32 %v5953, %v5955
        %v5957 = vrot.slane %v5941, %v5956
        %v5959 = vunpack.c.l.s4 1966171168
        %v5960 = vunpack.c.0.s8 %v5959
        %v5961 = vlaneseq
        %v5962 = vshrl.u32 %v5961, 7
        %v5963 = vsub.s32 %v5960, %v5962
        %v5964 = vrot.slane %v5942, %v5963
        %v5966 = vunpack.c.l.s4 1966171168
        %v5967 = vunpack.c.0.s8 %v5966
        %v5968 = vlaneseq
        %v5969 = vshrl.u32 %v5968, 7
        %v5970 = vsub.s32 %v5967, %v5969
        %v5971 = vrot.slane %v5943, %v5970
        %v5972 = vcombine.low %v5950, %v5957
        %v5973 = vcombine.low %v5964, %v5971
        %v5975 = vunpack.c.l.s4 1966171168
        %v5976 = vunpack.c.0.s8 %v5975
        %v5977 = vlaneseq
        %v5978 = vshrl.u32 %v5977, 7
        %v5979 = vsub.s32 %v5976, %v5978
        %v5980 = vrot.slane %v5972, %v5979
        %v5982 = vunpack.c.l.s4 1966171168
        %v5983 = vunpack.c.0.s8 %v5982
        %v5984 = vlaneseq
        %v5985 = vshrl.u32 %v5984, 7
        %v5986 = vsub.s32 %v5983, %v5985
        %v5987 = vrot.slane %v5973, %v5986
        %v5988 = vcombine.low %v5980, %v5987
        %v5989 = vcombine.low %v5926, %v5928
        %v5991 = vunpack.c.l.s4 1966171168
        %v5992 = vunpack.c.0.s8 %v5991
        %v5993 = vlaneseq
        %v5994 = vshrl.u32 %v5993, 7
        %v5995 = vsub.s32 %v5992, %v5994
        %v5996 = vrot.slane %v5989, %v5995
        %v5998 = vunpack.c.l.s4 1966171168
        %v5999 = vunpack.c.0.s8 %v5998
        %v6000 = vlaneseq
        %v6001 = vshrl.u32 %v6000, 7
        %v6002 = vsub.s32 %v5999, %v6001
        %v6003 = vrot.slane %v5996, %v6002
        %6006 = vst [vmem:[%s420] sm:$0xff] %v5988
        %v6007 = vlaneseq
        %vm6008 = vcmp.ge.s32.totalorder %v6007, 0
        %vm6009 = vcmp.lt.s32.totalorder %v6007, 176
        %vm6010 = vmand %vm6008, %vm6009
        %6011 = vst.msk [vmem:[%s420 + $0x8] sm:$0x3] %vm6010, %v6003
        %6012 = vmatprep.subr.mxu0 %v2615
        %6013 = vmatpush1.msra.mxu0 %v2613
        %6014 = vmatprep.subr.mxu0 0.0
        %6015 = vmatpush1.msra.mxu0 0.0
        %6016 = vmatprep.subr.mxu0 0.0
        %6017 = vmatpush1.msra.mxu0 0.0
        %6018 = vmatprep.subr.mxu0 0.0
        %6019 = vmatpush1.msra.mxu0 0.0
        %6020 = vmatprep.subr.mxu0 0.0
        %6021 = vmatpush1.msra.mxu0 0.0
        %6022 = vmatprep.subr.mxu0 0.0
        %6023 = vmatpush1.msra.mxu0 0.0
        %6024 = vmatprep.subr.mxu0 0.0
        %6025 = vmatpush1.msra.mxu0 0.0
        %6026 = vmatprep.subr.mxu0 0.0
        %6027 = vmatpush1.msra.mxu0 0.0
        %6028 = vmatprep.subr.mxu0 0.0
        %6029 = vmatpush1.msra.mxu0 0.0
        %6030 = vmatprep.subr.mxu0 0.0
        %6031 = vmatpush1.msra.mxu0 0.0
        %6032 = vmatprep.subr.mxu0 0.0
        %6033 = vmatpush1.msra.mxu0 0.0
        %6034 = vmatprep.subr.mxu0 0.0
        %6035 = vmatpush1.msra.mxu0 0.0
        %6036 = vmatprep.subr.mxu0 0.0
        %6037 = vmatpush1.msra.mxu0 0.0
        %6038 = vmatprep.subr.mxu0 0.0
        %6039 = vmatpush1.msra.mxu0 0.0
        %6040 = vmatprep.subr.mxu0 0.0
        %6041 = vmatpush1.msra.mxu0 0.0
        %6042 = vmatprep.subr.mxu0 0.0
        %6043 = vmatpush1.msra.mxu0 0.0
        %6044 = vmatprep.subr.mxu0 0.0
        %6045 = vmatpush1.msra.mxu0 0.0
        %6046 = vmatprep.subr.mxu0 0.0
        %6047 = vmatpush1.msra.mxu0 0.0
        %6048 = vmatprep.subr.mxu0 0.0
        %6049 = vmatpush1.msra.mxu0 0.0
        %6050 = vmatprep.subr.mxu0 0.0
        %6051 = vmatpush1.msra.mxu0 0.0
        %6052 = vmatprep.subr.mxu0 0.0
        %6053 = vmatpush1.msra.mxu0 0.0
        %6054 = vmatprep.subr.mxu0 0.0
        %6055 = vmatpush1.msra.mxu0 0.0
        %6056 = vmatprep.subr.mxu0 0.0
        %6057 = vmatpush1.msra.mxu0 0.0
        %6058 = vmatprep.subr.mxu0 0.0
        %6059 = vmatpush1.msra.mxu0 0.0
        %6060 = vmatprep.subr.mxu0 0.0
        %6061 = vmatpush1.msra.mxu0 0.0
        %6062 = vmatprep.subr.mxu0 0.0
        %6063 = vmatpush1.msra.mxu0 0.0
        %6064 = vmatprep.subr.mxu0 0.0
        %6065 = vmatpush1.msra.mxu0 0.0
        %6066 = vmatprep.subr.mxu0 0.0
        %6067 = vmatpush1.msra.mxu0 0.0
        %6068 = vmatprep.subr.mxu0 0.0
        %6069 = vmatpush1.msra.mxu0 0.0
        %6070 = vmatprep.subr.mxu0 0.0
        %6071 = vmatpush1.msra.mxu0 0.0
        %6072 = vmatprep.subr.mxu0 0.0
        %6073 = vmatpush1.msra.mxu0 0.0
        %6074 = vmatprep.subr.mxu0 0.0
        %6075 = vmatpush1.msra.mxu0 0.0
        %6076 = vmatprep.mubr.f32.mxu0 0.0
        %6077 = vmatmul.mubr.f32.gmra.mrb[0].mxu0 %v5573
        %v6078 = vpop.f32.mrb[0].mxu0
        %v6079 = vadd.f32 0.0, %v6078
        %v6080 = vpop.f32.mrb[0].mxu0
        %v6081 = vadd.f32 0.0, %v6080
        %6082 = vdwg.mxu0
        %6083 = vmatprep.subr.mxu0 %v2757
        %6084 = vmatpush1.msra.mxu0 %v2755
        %6085 = vmatprep.subr.mxu0 0.0
        %6086 = vmatpush1.msra.mxu0 0.0
        %6087 = vmatprep.subr.mxu0 0.0
        %6088 = vmatpush1.msra.mxu0 0.0
        %6089 = vmatprep.subr.mxu0 0.0
        %6090 = vmatpush1.msra.mxu0 0.0
        %6091 = vmatprep.subr.mxu0 0.0
        %6092 = vmatpush1.msra.mxu0 0.0
        %6093 = vmatprep.subr.mxu0 0.0
        %6094 = vmatpush1.msra.mxu0 0.0
        %6095 = vmatprep.subr.mxu0 0.0
        %6096 = vmatpush1.msra.mxu0 0.0
        %6097 = vmatprep.subr.mxu0 0.0
        %6098 = vmatpush1.msra.mxu0 0.0
        %6099 = vmatprep.subr.mxu0 0.0
        %6100 = vmatpush1.msra.mxu0 0.0
        %6101 = vmatprep.subr.mxu0 0.0
        %6102 = vmatpush1.msra.mxu0 0.0
        %6103 = vmatprep.subr.mxu0 0.0
        %6104 = vmatpush1.msra.mxu0 0.0
        %6105 = vmatprep.subr.mxu0 0.0
        %6106 = vmatpush1.msra.mxu0 0.0
        %6107 = vmatprep.subr.mxu0 0.0
        %6108 = vmatpush1.msra.mxu0 0.0
        %6109 = vmatprep.subr.mxu0 0.0
        %6110 = vmatpush1.msra.mxu0 0.0
        %6111 = vmatprep.subr.mxu0 0.0
        %6112 = vmatpush1.msra.mxu0 0.0
        %6113 = vmatprep.subr.mxu0 0.0
        %6114 = vmatpush1.msra.mxu0 0.0
        %6115 = vmatprep.subr.mxu0 0.0
        %6116 = vmatpush1.msra.mxu0 0.0
        %6117 = vmatprep.subr.mxu0 0.0
        %6118 = vmatpush1.msra.mxu0 0.0
        %6119 = vmatprep.subr.mxu0 0.0
        %6120 = vmatpush1.msra.mxu0 0.0
        %6121 = vmatprep.subr.mxu0 0.0
        %6122 = vmatpush1.msra.mxu0 0.0
        %6123 = vmatprep.subr.mxu0 0.0
        %6124 = vmatpush1.msra.mxu0 0.0
        %6125 = vmatprep.subr.mxu0 0.0
        %6126 = vmatpush1.msra.mxu0 0.0
        %6127 = vmatprep.subr.mxu0 0.0
        %6128 = vmatpush1.msra.mxu0 0.0
        %6129 = vmatprep.subr.mxu0 0.0
        %6130 = vmatpush1.msra.mxu0 0.0
        %6131 = vmatprep.subr.mxu0 0.0
        %6132 = vmatpush1.msra.mxu0 0.0
        %6133 = vmatprep.subr.mxu0 0.0
        %6134 = vmatpush1.msra.mxu0 0.0
        %6135 = vmatprep.subr.mxu0 0.0
        %6136 = vmatpush1.msra.mxu0 0.0
        %6137 = vmatprep.subr.mxu0 0.0
        %6138 = vmatpush1.msra.mxu0 0.0
        %6139 = vmatprep.subr.mxu0 0.0
        %6140 = vmatpush1.msra.mxu0 0.0
        %6141 = vmatprep.subr.mxu0 0.0
        %6142 = vmatpush1.msra.mxu0 0.0
        %6143 = vmatprep.subr.mxu0 0.0
        %6144 = vmatpush1.msra.mxu0 0.0
        %6145 = vmatprep.subr.mxu0 0.0
        %6146 = vmatpush1.msra.mxu0 0.0
        %6147 = vmatprep.mubr.f32.mxu0 0.0
        %6148 = vmatmul.mubr.f32.gmra.mrb[0].mxu0 %v5573
        %v6149 = vpop.f32.mrb[0].mxu0
        %v6150 = vadd.f32 0.0, %v6149
        %v6151 = vpop.f32.mrb[0].mxu0
        %v6152 = vadd.f32 0.0, %v6151
        %6153 = vdwg.mxu0
        %6154 = vmatprep.subr.mxu0 %v2899
        %6155 = vmatpush1.msra.mxu0 %v2897
        %6156 = vmatprep.subr.mxu0 0.0
        %6157 = vmatpush1.msra.mxu0 0.0
        %6158 = vmatprep.subr.mxu0 0.0
        %6159 = vmatpush1.msra.mxu0 0.0
        %6160 = vmatprep.subr.mxu0 0.0
        %6161 = vmatpush1.msra.mxu0 0.0
        %6162 = vmatprep.subr.mxu0 0.0
        %6163 = vmatpush1.msra.mxu0 0.0
        %6164 = vmatprep.subr.mxu0 0.0
        %6165 = vmatpush1.msra.mxu0 0.0
        %6166 = vmatprep.subr.mxu0 0.0
        %6167 = vmatpush1.msra.mxu0 0.0
        %6168 = vmatprep.subr.mxu0 0.0
        %6169 = vmatpush1.msra.mxu0 0.0
        %6170 = vmatprep.subr.mxu0 0.0
        %6171 = vmatpush1.msra.mxu0 0.0
        %6172 = vmatprep.subr.mxu0 0.0
        %6173 = vmatpush1.msra.mxu0 0.0
        %6174 = vmatprep.subr.mxu0 0.0
        %6175 = vmatpush1.msra.mxu0 0.0
        %6176 = vmatprep.subr.mxu0 0.0
        %6177 = vmatpush1.msra.mxu0 0.0
        %6178 = vmatprep.subr.mxu0 0.0
        %6179 = vmatpush1.msra.mxu0 0.0
        %6180 = vmatprep.subr.mxu0 0.0
        %6181 = vmatpush1.msra.mxu0 0.0
        %6182 = vmatprep.subr.mxu0 0.0
        %6183 = vmatpush1.msra.mxu0 0.0
        %6184 = vmatprep.subr.mxu0 0.0
        %6185 = vmatpush1.msra.mxu0 0.0
        %6186 = vmatprep.subr.mxu0 0.0
        %6187 = vmatpush1.msra.mxu0 0.0
        %6188 = vmatprep.subr.mxu0 0.0
        %6189 = vmatpush1.msra.mxu0 0.0
        %6190 = vmatprep.subr.mxu0 0.0
        %6191 = vmatpush1.msra.mxu0 0.0
        %6192 = vmatprep.subr.mxu0 0.0
        %6193 = vmatpush1.msra.mxu0 0.0
        %6194 = vmatprep.subr.mxu0 0.0
        %6195 = vmatpush1.msra.mxu0 0.0
        %6196 = vmatprep.subr.mxu0 0.0
        %6197 = vmatpush1.msra.mxu0 0.0
        %6198 = vmatprep.subr.mxu0 0.0
        %6199 = vmatpush1.msra.mxu0 0.0
        %6200 = vmatprep.subr.mxu0 0.0
        %6201 = vmatpush1.msra.mxu0 0.0
        %6202 = vmatprep.subr.mxu0 0.0
        %6203 = vmatpush1.msra.mxu0 0.0
        %6204 = vmatprep.subr.mxu0 0.0
        %6205 = vmatpush1.msra.mxu0 0.0
        %6206 = vmatprep.subr.mxu0 0.0
        %6207 = vmatpush1.msra.mxu0 0.0
        %6208 = vmatprep.subr.mxu0 0.0
        %6209 = vmatpush1.msra.mxu0 0.0
        %6210 = vmatprep.subr.mxu0 0.0
        %6211 = vmatpush1.msra.mxu0 0.0
        %6212 = vmatprep.subr.mxu0 0.0
        %6213 = vmatpush1.msra.mxu0 0.0
        %6214 = vmatprep.subr.mxu0 0.0
        %6215 = vmatpush1.msra.mxu0 0.0
        %6216 = vmatprep.subr.mxu0 0.0
        %6217 = vmatpush1.msra.mxu0 0.0
        %6218 = vmatprep.mubr.f32.mxu0 0.0
        %6219 = vmatmul.mubr.f32.gmra.mrb[0].mxu0 %v5573
        %v6220 = vpop.f32.mrb[0].mxu0
        %v6221 = vadd.f32 0.0, %v6220
        %v6222 = vpop.f32.mrb[0].mxu0
        %v6223 = vadd.f32 0.0, %v6222
        %6224 = vdwg.mxu0
        %6225 = vmatprep.subr.mxu0 %v3041
        %6226 = vmatpush1.msra.mxu0 %v3039
        %6227 = vmatprep.subr.mxu0 0.0
        %6228 = vmatpush1.msra.mxu0 0.0
        %6229 = vmatprep.subr.mxu0 0.0
        %6230 = vmatpush1.msra.mxu0 0.0
        %6231 = vmatprep.subr.mxu0 0.0
        %6232 = vmatpush1.msra.mxu0 0.0
        %6233 = vmatprep.subr.mxu0 0.0
        %6234 = vmatpush1.msra.mxu0 0.0
        %6235 = vmatprep.subr.mxu0 0.0
        %6236 = vmatpush1.msra.mxu0 0.0
        %6237 = vmatprep.subr.mxu0 0.0
        %6238 = vmatpush1.msra.mxu0 0.0
        %6239 = vmatprep.subr.mxu0 0.0
        %6240 = vmatpush1.msra.mxu0 0.0
        %6241 = vmatprep.subr.mxu0 0.0
        %6242 = vmatpush1.msra.mxu0 0.0
        %6243 = vmatprep.subr.mxu0 0.0
        %6244 = vmatpush1.msra.mxu0 0.0
        %6245 = vmatprep.subr.mxu0 0.0
        %6246 = vmatpush1.msra.mxu0 0.0
        %6247 = vmatprep.subr.mxu0 0.0
        %6248 = vmatpush1.msra.mxu0 0.0
        %6249 = vmatprep.subr.mxu0 0.0
        %6250 = vmatpush1.msra.mxu0 0.0
        %6251 = vmatprep.subr.mxu0 0.0
        %6252 = vmatpush1.msra.mxu0 0.0
        %6253 = vmatprep.subr.mxu0 0.0
        %6254 = vmatpush1.msra.mxu0 0.0
        %6255 = vmatprep.subr.mxu0 0.0
        %6256 = vmatpush1.msra.mxu0 0.0
        %6257 = vmatprep.subr.mxu0 0.0
        %6258 = vmatpush1.msra.mxu0 0.0
        %6259 = vmatprep.subr.mxu0 0.0
        %6260 = vmatpush1.msra.mxu0 0.0
        %6261 = vmatprep.subr.mxu0 0.0
        %6262 = vmatpush1.msra.mxu0 0.0
        %6263 = vmatprep.subr.mxu0 0.0
        %6264 = vmatpush1.msra.mxu0 0.0
        %6265 = vmatprep.subr.mxu0 0.0
        %6266 = vmatpush1.msra.mxu0 0.0
        %6267 = vmatprep.subr.mxu0 0.0
        %6268 = vmatpush1.msra.mxu0 0.0
        %6269 = vmatprep.subr.mxu0 0.0
        %6270 = vmatpush1.msra.mxu0 0.0
        %6271 = vmatprep.subr.mxu0 0.0
        %6272 = vmatpush1.msra.mxu0 0.0
        %6273 = vmatprep.subr.mxu0 0.0
        %6274 = vmatpush1.msra.mxu0 0.0
        %6275 = vmatprep.subr.mxu0 0.0
        %6276 = vmatpush1.msra.mxu0 0.0
        %6277 = vmatprep.subr.mxu0 0.0
        %6278 = vmatpush1.msra.mxu0 0.0
        %6279 = vmatprep.subr.mxu0 0.0
        %6280 = vmatpush1.msra.mxu0 0.0
        %6281 = vmatprep.subr.mxu0 0.0
        %6282 = vmatpush1.msra.mxu0 0.0
        %6283 = vmatprep.subr.mxu0 0.0
        %6284 = vmatpush1.msra.mxu0 0.0
        %6285 = vmatprep.subr.mxu0 0.0
        %6286 = vmatpush1.msra.mxu0 0.0
        %6287 = vmatprep.subr.mxu0 0.0
        %6288 = vmatpush1.msra.mxu0 0.0
        %6289 = vmatprep.mubr.f32.mxu0 0.0
        %6290 = vmatmul.mubr.f32.gmra.mrb[0].mxu0 %v5573
        %v6291 = vpop.f32.mrb[0].mxu0
        %v6292 = vadd.f32 0.0, %v6291
        %v6293 = vpop.f32.mrb[0].mxu0
        %v6294 = vadd.f32 0.0, %v6293
        %6295 = vdwg.mxu0
        %6296 = vmatprep.subr.mxu0 %v3183
        %6297 = vmatpush1.msra.mxu0 %v3181
        %6298 = vmatprep.subr.mxu0 0.0
        %6299 = vmatpush1.msra.mxu0 0.0
        %6300 = vmatprep.subr.mxu0 0.0
        %6301 = vmatpush1.msra.mxu0 0.0
        %6302 = vmatprep.subr.mxu0 0.0
        %6303 = vmatpush1.msra.mxu0 0.0
        %6304 = vmatprep.subr.mxu0 0.0
        %6305 = vmatpush1.msra.mxu0 0.0
        %6306 = vmatprep.subr.mxu0 0.0
        %6307 = vmatpush1.msra.mxu0 0.0
        %6308 = vmatprep.subr.mxu0 0.0
        %6309 = vmatpush1.msra.mxu0 0.0
        %6310 = vmatprep.subr.mxu0 0.0
        %6311 = vmatpush1.msra.mxu0 0.0
        %6312 = vmatprep.subr.mxu0 0.0
        %6313 = vmatpush1.msra.mxu0 0.0
        %6314 = vmatprep.subr.mxu0 0.0
        %6315 = vmatpush1.msra.mxu0 0.0
        %6316 = vmatprep.subr.mxu0 0.0
        %6317 = vmatpush1.msra.mxu0 0.0
        %6318 = vmatprep.subr.mxu0 0.0
        %6319 = vmatpush1.msra.mxu0 0.0
        %6320 = vmatprep.subr.mxu0 0.0
        %6321 = vmatpush1.msra.mxu0 0.0
        %6322 = vmatprep.subr.mxu0 0.0
        %6323 = vmatpush1.msra.mxu0 0.0
        %6324 = vmatprep.subr.mxu0 0.0
        %6325 = vmatpush1.msra.mxu0 0.0
        %6326 = vmatprep.subr.mxu0 0.0
        %6327 = vmatpush1.msra.mxu0 0.0
        %6328 = vmatprep.subr.mxu0 0.0
        %6329 = vmatpush1.msra.mxu0 0.0
        %6330 = vmatprep.subr.mxu0 0.0
        %6331 = vmatpush1.msra.mxu0 0.0
        %6332 = vmatprep.subr.mxu0 0.0
        %6333 = vmatpush1.msra.mxu0 0.0
        %6334 = vmatprep.subr.mxu0 0.0
        %6335 = vmatpush1.msra.mxu0 0.0
        %6336 = vmatprep.subr.mxu0 0.0
        %6337 = vmatpush1.msra.mxu0 0.0
        %6338 = vmatprep.subr.mxu0 0.0
        %6339 = vmatpush1.msra.mxu0 0.0
        %6340 = vmatprep.subr.mxu0 0.0
        %6341 = vmatpush1.msra.mxu0 0.0
        %6342 = vmatprep.subr.mxu0 0.0
        %6343 = vmatpush1.msra.mxu0 0.0
        %6344 = vmatprep.subr.mxu0 0.0
        %6345 = vmatpush1.msra.mxu0 0.0
        %6346 = vmatprep.subr.mxu0 0.0
        %6347 = vmatpush1.msra.mxu0 0.0
        %6348 = vmatprep.subr.mxu0 0.0
        %6349 = vmatpush1.msra.mxu0 0.0
        %6350 = vmatprep.subr.mxu0 0.0
        %6351 = vmatpush1.msra.mxu0 0.0
        %6352 = vmatprep.subr.mxu0 0.0
        %6353 = vmatpush1.msra.mxu0 0.0
        %6354 = vmatprep.subr.mxu0 0.0
        %6355 = vmatpush1.msra.mxu0 0.0
        %6356 = vmatprep.subr.mxu0 0.0
        %6357 = vmatpush1.msra.mxu0 0.0
        %6358 = vmatprep.subr.mxu0 0.0
        %6359 = vmatpush1.msra.mxu0 0.0
        %6360 = vmatprep.mubr.f32.mxu0 0.0
        %6361 = vmatmul.mubr.f32.gmra.mrb[0].mxu0 %v5573
        %v6362 = vpop.f32.mrb[0].mxu0
        %v6363 = vadd.f32 0.0, %v6362
        %v6364 = vpop.f32.mrb[0].mxu0
        %v6365 = vadd.f32 0.0, %v6364
        %6366 = vdwg.mxu0
        %vm6367 = vcmask 1040384
        %v6368 = vsel %vm6367, %v6079, 0.0
        %v6369 = vsel %vm6367, %v6081, 0.0
        %v6370 = vadd.f32 %v6368, %v6369
        %v6371 = vsel %vm6367, %v6150, 0.0
        %v6372 = vadd.f32 %v6370, %v6371
        %v6373 = vsel %vm6367, %v6152, 0.0
        %v6374 = vadd.f32 %v6372, %v6373
        %v6375 = vsel %vm6367, %v6221, 0.0
        %v6376 = vadd.f32 %v6374, %v6375
        %v6377 = vsel %vm6367, %v6223, 0.0
        %v6378 = vadd.f32 %v6376, %v6377
        %v6379 = vsel %vm6367, %v6292, 0.0
        %v6380 = vadd.f32 %v6378, %v6379
        %v6381 = vsel %vm6367, %v6294, 0.0
        %v6382 = vadd.f32 %v6380, %v6381
        %v6383 = vsel %vm6367, %v6363, 0.0
        %v6384 = vadd.f32 %v6382, %v6383
        %vm6385 = vcmask 385024
        %v6386 = vsel %vm6385, %v6365, 0.0
        %v6387 = vadd.f32 %v6384, %v6386
        %6388 = vadd.xlane.f32.xlu0 %v6387
        %v6389 = vpop.xlane.xlu0 %6388
        %v6390 = vrcp.pop 1200.0
        %v6391 = vmul.f32 %v6389, %v6390
        %vm6392 = vcmask 0
        %6393 = vst.msk [vmem:[%s443] sm:$0x1] %vm6392, %v6391
        %s6394 = sand.u32 %s241, 1
        %s6395 = scalar_lea.sflag [#allocation3], %s6394
        %s6396 = sand.u32 %s241, 1
        %s6397 = smul.addr %s6396, 80
        %s6398 = scalar_lea.vmem [#allocation2], %s6397
        %s6399 = sand.u32 %s267, 1
        %s6400 = scalar_lea.sflag [#allocation5], %s6399
        %s6401 = sand.u32 %s267, 1
        %s6402 = smul.addr %s6401, 10
        %s6403 = scalar_lea.vmem [#allocation4], %s6402
        %p6404 = scmp.lt.s32.totalorder %s29, 1
        %s6405 = scalar_select %p6404, %s29, 1
        %s6406 = scalar_lea.vmem %s11, %s6405
        // Predicated region
        $region57: #{tpu_custom_call.1} parent=55 // pred_check
          %p6407 = pneg %p251
        $region58: #{tpu_custom_call.1} parent=55 // pred_check_branch
          %6409 = sbr.rel (%p6407) target = $region60
        $region59: #{tpu_custom_call.1} parent=55 // pred_region
          %s6411 = ssub.s32 1280, 1280
          %6412 = vsyncadd %s6395, %s6411
          %s6413 = smul.addr %s29, 10
          %s6414 = smul.addr %s6413, 128
          %s6415 = scalar_lea.hbm %s9, %s6414
          %s6417 = sshll.u32 %s6398, 4
          %s6418 = int_to_ptr.vmem [resolvable:$true] %s6417
          %6420 = dma.vmem_to_hbm [thread:$0]  %s6418, 1280, %s6415, %s6395
        $region60: #{tpu_custom_call.1} parent=55 // pred_fallthru
          _
        // Predicated region
        $region61: #{tpu_custom_call.1} parent=55 // pred_check
          %p6421 = pneg %p277
        $region62: #{tpu_custom_call.1} parent=55 // pred_check_branch
          %6423 = sbr.rel (%p6421) target = $region64
        $region63: #{tpu_custom_call.1} parent=55 // pred_region
          %s6425 = ssub.s32 160, 160
          %6426 = vsyncadd %s6400, %s6425
          %s6427 = smul.addr %s29, 10
          %s6428 = smul.addr %s6427, 16
          %s6429 = scalar_lea.hbm %s10, %s6428
          %s6431 = sshll.u32 %s6403, 4
          %s6432 = int_to_ptr.vmem [resolvable:$true] %s6431
          %6434 = dma.vmem_to_hbm [thread:$0]  %s6432, 160, %s6429, %s6400
        $region64: #{tpu_custom_call.1} parent=55 // pred_fallthru
          _
        // Predicated region
        $region65: #{tpu_custom_call.1} parent=55 // pred_check
          %p6435 = pneg %p303
        $region66: #{tpu_custom_call.1} parent=55 // pred_check_branch
          %6437 = sbr.rel (%p6435) target = $region68
        $region67: #{tpu_custom_call.1} parent=55 // pred_region
          _
        $region68: #{tpu_custom_call.1} parent=55 // pred_fallthru
          _
      $region56: #{tpu_custom_call.1} parent=5 // pred_fallthru
        _
      %p6438 = scmp.le.s32.totalorder 2, %s24
      // Predicated region
      $region69: #{tpu_custom_call.1} parent=5 // pred_check
        %p6439 = pneg %p6438
      $region70: #{tpu_custom_call.1} parent=5 // pred_check_branch
        %6441 = sbr.rel (%p6439) target = $region72
      $region71: #{tpu_custom_call.1} parent=5 // pred_region
        %s6442 = ssub.s32 %s24, 2
        // Predicated region
        $region73: #{tpu_custom_call.1} parent=71 // pred_check
          %p6443 = pneg %p257
        $region74: #{tpu_custom_call.1} parent=71 // pred_check_branch
          %6445 = sbr.rel (%p6443) target = $region76
        $region75: #{tpu_custom_call.1} parent=71 // pred_region
          %s6446 = sand.u32 %s242, 1
          %s6447 = scalar_lea.sflag [#allocation3], %s6446
          %s6448 = sand.u32 %s242, 1
          %s6449 = smul.addr %s6448, 80
          %s6450 = scalar_lea.vmem [#allocation2], %s6449
          %6451 = dma.done %s6447, 1280
        $region76: #{tpu_custom_call.1} parent=71 // pred_fallthru
          _
        // Predicated region
        $region77: #{tpu_custom_call.1} parent=71 // pred_check
          %p6452 = pneg %p283
        $region78: #{tpu_custom_call.1} parent=71 // pred_check_branch
          %6454 = sbr.rel (%p6452) target = $region80
        $region79: #{tpu_custom_call.1} parent=71 // pred_region
          %s6455 = sand.u32 %s268, 1
          %s6456 = scalar_lea.sflag [#allocation5], %s6455
          %s6457 = sand.u32 %s268, 1
          %s6458 = smul.addr %s6457, 10
          %s6459 = scalar_lea.vmem [#allocation4], %s6458
          %6460 = dma.done %s6456, 160
        $region80: #{tpu_custom_call.1} parent=71 // pred_fallthru
          _
        // Predicated region
        $region81: #{tpu_custom_call.1} parent=71 // pred_check
          %p6461 = pneg %p309
        $region82: #{tpu_custom_call.1} parent=71 // pred_check_branch
          %6463 = sbr.rel (%p6461) target = $region84
        $region83: #{tpu_custom_call.1} parent=71 // pred_region
          %p6464 = scmp.lt.s32.totalorder %s30, 1
          %s6465 = scalar_select %p6464, %s30, 1
          %s6466 = scalar_lea.vmem %s11, %s6465
        $region84: #{tpu_custom_call.1} parent=71 // pred_fallthru
          _
      $region72: #{tpu_custom_call.1} parent=5 // pred_fallthru
        _
    $region6: #{tpu_custom_call.1} parent=1 // loop_footer
      %s28 = sadd.s32 1, %s24
    $region7: #{tpu_custom_call.1} parent=1 // loop_footer_branch
      %23 = sbr.rel target = $region3
    $region8: #{tpu_custom_call.1} parent=1 // loop_exit
      _
    %6467 = vsyncpa [#allocation3], 1
    %s6468 = scalar_lea.sflag [#allocation3], 1
    %6469 = vsyncpa %s6468, 1
    %6470 = vsyncpa [#allocation5], 1
    %s6471 = scalar_lea.sflag [#allocation5], 1
    %6472 = vsyncpa %s6471, 1

</llo_original>
